<compile_context>
chip_gen: v7x
topology: tpu7x:2x2x1
jax: 0.10.0
libtpu: 0.0.40
codegen_flags: <defaults>
</compile_context>

<pallas_src>
import jax
import jax.numpy as jnp
import numpy as np
from jax import lax
from jax.experimental import pallas as pl
from jax.experimental.pallas import tpu as pltpu

BN_EPS = 1e-5
VMEM_LIMIT = 32 * 1024 * 1024  # safe on v5e (raises 16MiB default) and v7x (64MiB phys)


def _round_up(x, m):
    return (x + m - 1) // m * m


def _pick_tiles(m, target):
    """Balanced row tiling: number of steps = cdiv(m, target), tile multiple of 8."""
    steps = max(1, pl.cdiv(m, target))
    tm = _round_up(pl.cdiv(m, steps), 8)
    return tm, steps * tm


# ----------------------------------------------------------------------------
# Pallas kernels
# ----------------------------------------------------------------------------
def _conv_bn_relu_pool_kernel(t_ref, w_ref, shift_ref, o_ref):
    """Fused conv (as matmul) + BN affine + ReLU + 2x2 maxpool for a row block.

    t_ref    : (4, TM, K) bf16  im2col rows of the 4 pool taps (TM = rows of
               flattened (batch, pooled-spatial))
    w_ref    : (K, C)     bf16  HWIO conv weights with BN scale folded in
    shift_ref: (1, C)     f32   conv bias + BN shift
    o_ref    : (TM, C)    bf16

    The per-channel shift and ReLU are monotone, so they commute with the max
    over the four pool taps: pool first, apply the epilogue once.
    """
    w = w_ref[...]
    y = jnp.dot(t_ref[0], w, preferred_element_type=jnp.float32)
    y = jnp.maximum(y, jnp.dot(t_ref[1], w, preferred_element_type=jnp.float32))
    y = jnp.maximum(y, jnp.dot(t_ref[2], w, preferred_element_type=jnp.float32))
    y = jnp.maximum(y, jnp.dot(t_ref[3], w, preferred_element_type=jnp.float32))
    o_ref[...] = jnp.maximum(y + shift_ref[...], 0.0).astype(o_ref.dtype)


def conv_bn_relu_pool(taps, w, shift, *, tm_target):
    """taps: (4, M, K) bf16; w: (K, C) bf16; shift: (1, C) f32 -> (M, C) bf16."""
    _, M, K = taps.shape
    C = w.shape[1]
    tm, M_pad = _pick_tiles(M, tm_target)
    if M_pad != M:
        taps = jnp.pad(taps, ((0, 0), (0, M_pad - M), (0, 0)))
    flops = 2 * 4 * M_pad * K * C
    bytes_acc = (taps.size * taps.dtype.itemsize + w.size * w.dtype.itemsize
                 + shift.size * 4 + M_pad * C * 2)
    out = pl.pallas_call(
        _conv_bn_relu_pool_kernel,
        out_shape=jax.ShapeDtypeStruct((M_pad, C), jnp.bfloat16),
        grid_spec=pltpu.PrefetchScalarGridSpec(
            num_scalar_prefetch=0,
            grid=(M_pad // tm,),
            in_specs=[pl.BlockSpec((4, tm, K), lambda i: (0, i, 0)),
                      pl.BlockSpec((K, C), lambda i: (0, 0)),
                      pl.BlockSpec((1, C), lambda i: (0, 0))],
            out_specs=pl.BlockSpec((tm, C), lambda i: (i, 0)),
        ),
        compiler_params=pltpu.CompilerParams(
            dimension_semantics=("parallel",),
            vmem_limit_bytes=VMEM_LIMIT),
        cost_estimate=pl.CostEstimate(flops=flops, transcendentals=0,
                                      bytes_accessed=bytes_acc),
    )(taps, w, shift)
    return out[:M]


def _fc_fused_kernel(x_ref, w1_ref, b1_ref, w2_ref, b2_ref, w3_ref, b3_ref,
                     o_ref):
    """fc1 -> dropout(eval identity) -> fc2 -> fc3, all resident in VMEM.

    bf16 MXU inputs, f32 accumulation; intermediates re-cast to bf16 before
    the next dot (halves the (tm, 640) temporary).
    """
    h = jnp.dot(x_ref[...], w1_ref[...],
                preferred_element_type=jnp.float32) + b1_ref[...]
    # TODO(synk): nn.Dropout(0.25) is treated as eval-mode identity (no RNG mask).
    h = h.astype(jnp.bfloat16)
    h = jnp.dot(h, w2_ref[...],
                preferred_element_type=jnp.float32) + b2_ref[...]
    h = h.astype(jnp.bfloat16)
    o_ref[...] = (jnp.dot(h, w3_ref[...],
                          preferred_element_type=jnp.float32) + b3_ref[...])


def fc_fused(x, w1, b1, w2, b2, w3, b3):
    """x: (M, K1) bf16.  Weight dims already padded to multiples of 128."""
    M, K1 = x.shape
    H1, H2, H3 = w1.shape[1], w2.shape[1], w3.shape[1]
    tm, M_pad = _pick_tiles(M, 256)
    if M_pad != M:
        x = jnp.pad(x, ((0, M_pad - M), (0, 0)))
    flops = 2 * M_pad * (K1 * H1 + H1 * H2 + H2 * H3)
    bytes_acc = (x.size * x.dtype.itemsize
                 + (w1.size + w2.size + w3.size) * 2
                 + (H1 + H2 + H3) * 4 + M_pad * H3 * 4)
    out = pl.pallas_call(
        _fc_fused_kernel,
        out_shape=jax.ShapeDtypeStruct((M_pad, H3), jnp.float32),
        grid_spec=pltpu.PrefetchScalarGridSpec(
            num_scalar_prefetch=0,
            grid=(M_pad // tm,),
            in_specs=[
                pl.BlockSpec((tm, K1), lambda i: (i, 0)),
                pl.BlockSpec((K1, H1), lambda i: (0, 0)),
                pl.BlockSpec((1, H1), lambda i: (0, 0)),
                pl.BlockSpec((H1, H2), lambda i: (0, 0)),
                pl.BlockSpec((1, H2), lambda i: (0, 0)),
                pl.BlockSpec((H2, H3), lambda i: (0, 0)),
                pl.BlockSpec((1, H3), lambda i: (0, 0)),
            ],
            out_specs=pl.BlockSpec((tm, H3), lambda i: (i, 0)),
        ),
        compiler_params=pltpu.CompilerParams(
            dimension_semantics=("parallel",),
            vmem_limit_bytes=VMEM_LIMIT),
        cost_estimate=pl.CostEstimate(flops=flops, transcendentals=0,
                                      bytes_accessed=bytes_acc),
    )(x, w1, b1, w2, b2, w3, b3)
    return out[:M]


# ----------------------------------------------------------------------------
# Glue: pool-grouped im2col, parameter init/prep, forward
# ----------------------------------------------------------------------------
def _im2col_pooled(x_nhwc, kh, kw, pad):
    """im2col with rows grouped by 2x2 maxpool tap, flattened over batch.

    Returns ((4, N*Ho*Wo, kh*kw*C), (N, Ho, Wo)) where Ho/Wo are the POOLED
    output dims; taking the elementwise max of the four conv results equals
    MaxPool2d(2, 2) of the full conv output.  dtype follows the input (bf16).
    """
    if pad:
        x_nhwc = jnp.pad(x_nhwc, ((0, 0), (pad, pad), (pad, pad), (0, 0)))
    N, H, W, C = x_nhwc.shape
    Ho, Wo = (H - kh + 1) // 2, (W - kw + 1) // 2
    taps = []
    for dy in (0, 1):
        for dx in (0, 1):
            cols = [x_nhwc[:, dy + i: dy + i + 2 * Ho: 2,
                           dx + j: dx + j + 2 * Wo: 2, :]
                    for i in range(kh) for j in range(kw)]
            patch = jnp.stack(cols, axis=3)              # (N, Ho, Wo, kh*kw, C)
            taps.append(patch.reshape(N * Ho * Wo, kh * kw * C))
    return jnp.stack(taps, axis=0), (N, Ho, Wo)          # (4, N*Ho*Wo, K)


def init_params(key):
    keys = iter(jax.random.split(key, 18))

    def u(shape, fan_in):
        bnd = 1.0 / float(np.sqrt(fan_in))
        return jax.random.uniform(next(keys), shape, jnp.float32, -bnd, bnd)

    p = {}
    # layer1: Conv2d(1, 32, 3, padding=1) + BatchNorm2d(32)
    p["w1"] = u((32, 1, 3, 3), 1 * 3 * 3)          # PyTorch OIHW layout
    p["b1"] = u((32,), 1 * 3 * 3)
    p["bn1_gamma"] = jax.random.uniform(next(keys), (32,), jnp.float32, 0.5, 1.5)
    p["bn1_beta"] = jax.random.uniform(next(keys), (32,), jnp.float32, -0.5, 0.5)
    p["bn1_mean"] = jax.random.uniform(next(keys), (32,), jnp.float32, -0.5, 0.5)
    p["bn1_var"] = jax.random.uniform(next(keys), (32,), jnp.float32, 0.5, 1.5)
    # layer2: Conv2d(32, 64, 3) + BatchNorm2d(64)
    p["w2"] = u((64, 32, 3, 3), 32 * 3 * 3)
    p["b2"] = u((64,), 32 * 3 * 3)
    p["bn2_gamma"] = jax.random.uniform(next(keys), (64,), jnp.float32, 0.5, 1.5)
    p["bn2_beta"] = jax.random.uniform(next(keys), (64,), jnp.float32, -0.5, 0.5)
    p["bn2_mean"] = jax.random.uniform(next(keys), (64,), jnp.float32, -0.5, 0.5)
    p["bn2_var"] = jax.random.uniform(next(keys), (64,), jnp.float32, 0.5, 1.5)
    # fc layers, stored as (in, out); fc1 in-index follows PyTorch NCHW flatten.
    p["fc1_w"] = u((64 * 6 * 6, 600), 64 * 6 * 6)
    p["fc1_b"] = u((600,), 64 * 6 * 6)
    p["fc2_w"] = u((600, 120), 600)
    p["fc2_b"] = u((120,), 600)
    p["fc3_w"] = u((120, 10), 120)
    p["fc3_b"] = u((10,), 120)
    return p


def prepare_params(p):
    """One-time prep: fold BN into conv weights, cast matmul operands to bf16,
    pad FC dims to multiples of 128, and permute fc1's rows to the NHWC
    flatten order used by the kernels.  Padded weight columns/rows are exactly
    zero so padded lanes stay zero through the whole FC chain."""
    kp = {}
    # conv1: fold BN scale into weights, bias+BN shift into an additive term.
    s1 = p["bn1_gamma"] / jnp.sqrt(p["bn1_var"] + BN_EPS)
    w1 = jnp.transpose(p["w1"], (2, 3, 1, 0)).reshape(9, 32) * s1[None, :]
    kp["conv1_w"] = w1.astype(jnp.bfloat16)
    shift1 = (p["b1"] - p["bn1_mean"]) * s1 + p["bn1_beta"]
    kp["conv1_shift"] = shift1.reshape(1, 32).astype(jnp.float32)
    # conv2
    s2 = p["bn2_gamma"] / jnp.sqrt(p["bn2_var"] + BN_EPS)
    w2 = jnp.transpose(p["w2"], (2, 3, 1, 0)).reshape(288, 64) * s2[None, :]
    kp["conv2_w"] = w2.astype(jnp.bfloat16)
    shift2 = (p["b2"] - p["bn2_mean"]) * s2 + p["bn2_beta"]
    kp["conv2_shift"] = shift2.reshape(1, 64).astype(jnp.float32)
    # fc1: permute rows from PyTorch NCHW order (c*36 + s) to NHWC order
    # (s*64 + c) so the runtime flatten needs no transpose; pad 600 -> 640 cols.
    fw1 = jnp.transpose(p["fc1_w"].reshape(64, 6, 6, 600), (1, 2, 0, 3))
    fw1 = fw1.reshape(2304, 600)
    kp["fc1_w"] = jnp.pad(fw1, ((0, 0), (0, 40))).astype(jnp.bfloat16)
    kp["fc1_b"] = jnp.pad(p["fc1_b"], (0, 40)).reshape(1, 640)
    # fc2: pad rows 600 -> 640 (zeros), cols 120 -> 128.
    kp["fc2_w"] = jnp.pad(p["fc2_w"], ((0, 40), (0, 8))).astype(jnp.bfloat16)
    kp["fc2_b"] = jnp.pad(p["fc2_b"], (0, 8)).reshape(1, 128)
    # fc3: pad rows 120 -> 128, cols 10 -> 128.
    kp["fc3_w"] = jnp.pad(p["fc3_w"], ((0, 8), (0, 118))).astype(jnp.bfloat16)
    kp["fc3_b"] = jnp.pad(p["fc3_b"], (0, 118)).reshape(1, 128)
    return kp


def mnist_cnn_forward(x, kp):
    # x: any shape reshapable to (-1, 1, 28, 28), PyTorch NCHW convention.
    x = x.reshape(-1, 1, 28, 28).astype(jnp.float32)
    x = jnp.transpose(x, (0, 2, 3, 1)).astype(jnp.bfloat16)   # NCHW -> NHWC, bf16
    N = x.shape[0]

    # ---- layer1: conv(1->32, 3x3, pad=1) + BN + ReLU + maxpool (fused) ----
    taps, (_, Ho, Wo) = _im2col_pooled(x, 3, 3, pad=1)        # (4, N*196, 9) bf16
    y1 = conv_bn_relu_pool(taps, kp["conv1_w"], kp["conv1_shift"],
                           tm_target=2048)                    # (N*196, 32) bf16
    y1 = y1.reshape(N, Ho, Wo, 32)                            # (N, 14, 14, 32)

    # ---- layer2: conv(32->64, 3x3) + BN + ReLU + maxpool (fused) ----
    # TODO(synk): this im2col is still materialized by XLA (~6.6x y1's bytes);
    # a fully in-kernel 9-tap accumulation was deferred (see header).
    taps, (_, Ho, Wo) = _im2col_pooled(y1, 3, 3, pad=0)       # (4, N*36, 288) bf16
    y2 = conv_bn_relu_pool(taps, kp["conv2_w"], kp["conv2_shift"],
                           tm_target=1024)                    # (N*36, 64) bf16

    # Flatten in (spatial, channel) order; fc1_w rows were permuted to match,
    # so this reshape is copy-free and no runtime NCHW transpose is needed.
    feat = y2.reshape(N, 36 * 64)                             # (N, 2304) bf16

    # ---- fused fc1 -> dropout(eval) -> fc2 -> fc3 ----
    logits = fc_fused(feat, kp["fc1_w"], kp["fc1_b"], kp["fc2_w"], kp["fc2_b"],
                      kp["fc3_w"], kp["fc3_b"])               # (N, 128) f32
    return logits[:, :10]


# ----------------------------------------------------------------------------
# Pure-JAX reference (for correctness check only, f32 throughout)
# ----------------------------------------------------------------------------
def reference_forward(x, p):
    x = x.reshape(-1, 1, 28, 28).astype(jnp.float32)
    x = jnp.transpose(x, (0, 2, 3, 1))

    def conv_bn_relu(y, wt, b, g, be, mu, var, pad):
        w_hwio = jnp.transpose(wt, (2, 3, 1, 0))
        y = lax.conv_general_dilated(y, w_hwio, (1, 1), [(pad, pad), (pad, pad)],
                                     dimension_numbers=("NHWC", "HWIO", "NHWC"))
        y = y + b
        y = (y - mu) / jnp.sqrt(var + BN_EPS) * g + be
        return jnp.maximum(y, 0.0)

    def pool(y):
        N, H, W, C = y.shape
        return y.reshape(N, H // 2, 2, W // 2, 2, C).max(axis=(2, 4))

    y = pool(conv_bn_relu(x, p["w1"], p["b1"], p["bn1_gamma"], p["bn1_beta"],
                          p["bn1_mean"], p["bn1_var"], 1))
    y = pool(conv_bn_relu(y, p["w2"], p["b2"], p["bn2_gamma"], p["bn2_beta"],
                          p["bn2_mean"], p["bn2_var"], 0))
    y = jnp.transpose(y, (0, 3, 1, 2)).reshape(y.shape[0], -1)   # NCHW flatten
    y = y @ p["fc1_w"] + p["fc1_b"]
    y = y @ p["fc2_w"] + p["fc2_b"]
    y = y @ p["fc3_w"] + p["fc3_b"]
    return y


if __name__ == "__main__":
    key = jax.random.PRNGKey(0)
    k_params, k_x = jax.random.split(key)
    params = init_params(k_params)
    kparams = prepare_params(params)                          # one-time prep
    x = jax.random.normal(k_x, (2, 1, 28, 28), jnp.float32)   # batch=2, MNIST

    out = jax.jit(mnist_cnn_forward)(x, kparams)
    out = jax.block_until_ready(out)
    assert out.shape == (2, 10), out.shape

    # bf16 MXU inputs with f32 accumulation: 5e-2 tolerance leaves ~5x margin
    # over the expected compounded rounding error on these magnitudes.
    ref = jax.block_until_ready(reference_forward(x, params))
    np.testing.assert_allclose(np.asarray(out), np.asarray(ref),
                               rtol=5e-2, atol=5e-2)
    print("KERNEL_OK")
</pallas_src>

<mosaic_0001>
module attributes {stable_mosaic.version = 11 : i64} {
  func.func @_conv_bn_relu_pool_kernel(%arg0: i32, %arg1: memref<4x392x9xbf16, #tpu.memory_space<vmem>>, %arg2: memref<9x32xbf16, #tpu.memory_space<vmem>>, %arg3: memref<1x32xf32, #tpu.memory_space<vmem>>, %arg4: memref<392x32xbf16, #tpu.memory_space<vmem>>) attributes {dimension_semantics = [#tpu.dimension_semantics<parallel>], iteration_bounds = array<i64: 1>, scalar_prefetch = 0 : i64, scratch_operands = 0 : i64, tpu.core_type = #tpu.core_type<tc>, window_params = [{transform_indices = @transform_0, window_bounds = array<i64: 4, 392, 9>}, {pipeline_mode = #tpu.pipeline_mode<synchronous>, transform_indices = @transform_1, window_bounds = array<i64: 9, 32>}, {pipeline_mode = #tpu.pipeline_mode<synchronous>, transform_indices = @transform_2, window_bounds = array<i64: 1, 32>}, {transform_indices = @transform_3, window_bounds = array<i64: 392, 32>}]} {
    %c0 = arith.constant 0 : index
    %c0_0 = arith.constant 0 : index
    %0 = vector.load %arg2[%c0, %c0_0] : memref<9x32xbf16, #tpu.memory_space<vmem>>, vector<9x32xbf16>
    %c0_1 = arith.constant 0 : index
    %c0_2 = arith.constant 0 : index
    %c0_3 = arith.constant 0 : index
    %1 = vector.load %arg1[%c0_1, %c0_2, %c0_3] : memref<4x392x9xbf16, #tpu.memory_space<vmem>>, vector<1x392x9xbf16>
    %2 = vector.shape_cast %1 : vector<1x392x9xbf16> to vector<392x9xbf16>
    %cst = arith.constant dense<0.000000e+00> : vector<392x32xf32>
    %3 = tpu.matmul %2, %0, %cst {dimension_numbers = #tpu.dot_dimension_numbers<[1], [0], [0], [1], [0, 0, 1, 1], [], []>} : vector<392x9xbf16>, vector<9x32xbf16>, vector<392x32xf32> -> vector<392x32xf32>
    %c1 = arith.constant 1 : index
    %c0_4 = arith.constant 0 : index
    %c0_5 = arith.constant 0 : index
    %4 = vector.load %arg1[%c1, %c0_4, %c0_5] : memref<4x392x9xbf16, #tpu.memory_space<vmem>>, vector<1x392x9xbf16>
    %5 = vector.shape_cast %4 : vector<1x392x9xbf16> to vector<392x9xbf16>
    %cst_6 = arith.constant dense<0.000000e+00> : vector<392x32xf32>
    %6 = tpu.matmul %5, %0, %cst_6 {dimension_numbers = #tpu.dot_dimension_numbers<[1], [0], [0], [1], [0, 0, 1, 1], [], []>} : vector<392x9xbf16>, vector<9x32xbf16>, vector<392x32xf32> -> vector<392x32xf32>
    %7 = arith.maximumf %3, %6 : vector<392x32xf32>
    %c2 = arith.constant 2 : index
    %c0_7 = arith.constant 0 : index
    %c0_8 = arith.constant 0 : index
    %8 = vector.load %arg1[%c2, %c0_7, %c0_8] : memref<4x392x9xbf16, #tpu.memory_space<vmem>>, vector<1x392x9xbf16>
    %9 = vector.shape_cast %8 : vector<1x392x9xbf16> to vector<392x9xbf16>
    %cst_9 = arith.constant dense<0.000000e+00> : vector<392x32xf32>
    %10 = tpu.matmul %9, %0, %cst_9 {dimension_numbers = #tpu.dot_dimension_numbers<[1], [0], [0], [1], [0, 0, 1, 1], [], []>} : vector<392x9xbf16>, vector<9x32xbf16>, vector<392x32xf32> -> vector<392x32xf32>
    %11 = arith.maximumf %7, %10 : vector<392x32xf32>
    %c3 = arith.constant 3 : index
    %c0_10 = arith.constant 0 : index
    %c0_11 = arith.constant 0 : index
    %12 = vector.load %arg1[%c3, %c0_10, %c0_11] : memref<4x392x9xbf16, #tpu.memory_space<vmem>>, vector<1x392x9xbf16>
    %13 = vector.shape_cast %12 : vector<1x392x9xbf16> to vector<392x9xbf16>
    %cst_12 = arith.constant dense<0.000000e+00> : vector<392x32xf32>
    %14 = tpu.matmul %13, %0, %cst_12 {dimension_numbers = #tpu.dot_dimension_numbers<[1], [0], [0], [1], [0, 0, 1, 1], [], []>} : vector<392x9xbf16>, vector<9x32xbf16>, vector<392x32xf32> -> vector<392x32xf32>
    %15 = arith.maximumf %11, %14 : vector<392x32xf32>
    %c0_13 = arith.constant 0 : index
    %c0_14 = arith.constant 0 : index
    %16 = vector.load %arg3[%c0_13, %c0_14] : memref<1x32xf32, #tpu.memory_space<vmem>>, vector<1x32xf32>
    %17 = vector.broadcast %16 : vector<1x32xf32> to vector<392x32xf32>
    %18 = arith.addf %15, %17 : vector<392x32xf32>
    %cst_15 = arith.constant 0.000000e+00 : f32
    %19 = vector.broadcast %cst_15 : f32 to vector<392x32xf32>
    %20 = arith.maximumf %18, %19 : vector<392x32xf32>
    %21 = arith.truncf %20 : vector<392x32xf32> to vector<392x32xbf16>
    %c0_16 = arith.constant 0 : index
    %c0_17 = arith.constant 0 : index
    %22 = vector.load %arg4[%c0_16, %c0_17] : memref<392x32xbf16, #tpu.memory_space<vmem>>, vector<392x32xbf16>
    tpu.vector_store %arg4[%c0_16, %c0_17], %21 {strides = array<i32>} : memref<392x32xbf16, #tpu.memory_space<vmem>>, vector<392x32xbf16>,
    return
  }
  func.func @transform_0(%arg0: i32) -> (i32, i32, i32) {
    %c0_i32 = arith.constant 0 : i32
    %c0_i32_0 = arith.constant 0 : i32
    %c0_i32_1 = arith.constant 0 : i32
    return %c0_i32, %arg0, %c0_i32_0 : i32, i32, i32
  }
  func.func @transform_1(%arg0: i32) -> (i32, i32) {
    %c0_i32 = arith.constant 0 : i32
    %c0_i32_0 = arith.constant 0 : i32
    %c0_i32_1 = arith.constant 0 : i32
    return %c0_i32, %c0_i32_0 : i32, i32
  }
  func.func @transform_2(%arg0: i32) -> (i32, i32) {
    %c0_i32 = arith.constant 0 : i32
    %c0_i32_0 = arith.constant 0 : i32
    %c0_i32_1 = arith.constant 0 : i32
    return %c0_i32, %c0_i32_0 : i32, i32
  }
  func.func @transform_3(%arg0: i32) -> (i32, i32) {
    %c0_i32 = arith.constant 0 : i32
    %c0_i32_0 = arith.constant 0 : i32
    return %arg0, %c0_i32 : i32, i32
  }
}

module attributes {stable_mosaic.version = 11 : i64} {
  func.func @_conv_bn_relu_pool_kernel(%arg0: i32, %arg1: memref<4x72x288xbf16, #tpu.memory_space<vmem>>, %arg2: memref<288x64xbf16, #tpu.memory_space<vmem>>, %arg3: memref<1x64xf32, #tpu.memory_space<vmem>>, %arg4: memref<72x64xbf16, #tpu.memory_space<vmem>>) attributes {dimension_semantics = [#tpu.dimension_semantics<parallel>], iteration_bounds = array<i64: 1>, scalar_prefetch = 0 : i64, scratch_operands = 0 : i64, tpu.core_type = #tpu.core_type<tc>, window_params = [{transform_indices = @transform_0, window_bounds = array<i64: 4, 72, 288>}, {pipeline_mode = #tpu.pipeline_mode<synchronous>, transform_indices = @transform_1, window_bounds = array<i64: 288, 64>}, {pipeline_mode = #tpu.pipeline_mode<synchronous>, transform_indices = @transform_2, window_bounds = array<i64: 1, 64>}, {transform_indices = @transform_3, window_bounds = array<i64: 72, 64>}]} {
    %c0 = arith.constant 0 : index
    %c0_0 = arith.constant 0 : index
    %0 = vector.load %arg2[%c0, %c0_0] : memref<288x64xbf16, #tpu.memory_space<vmem>>, vector<288x64xbf16>
    %c0_1 = arith.constant 0 : index
    %c0_2 = arith.constant 0 : index
    %c0_3 = arith.constant 0 : index
    %1 = vector.load %arg1[%c0_1, %c0_2, %c0_3] : memref<4x72x288xbf16, #tpu.memory_space<vmem>>, vector<1x72x288xbf16>
    %2 = vector.shape_cast %1 : vector<1x72x288xbf16> to vector<72x288xbf16>
    %cst = arith.constant dense<0.000000e+00> : vector<72x64xf32>
    %3 = tpu.matmul %2, %0, %cst {dimension_numbers = #tpu.dot_dimension_numbers<[1], [0], [0], [1], [0, 0, 1, 1], [], []>} : vector<72x288xbf16>, vector<288x64xbf16>, vector<72x64xf32> -> vector<72x64xf32>
    %c1 = arith.constant 1 : index
    %c0_4 = arith.constant 0 : index
    %c0_5 = arith.constant 0 : index
    %4 = vector.load %arg1[%c1, %c0_4, %c0_5] : memref<4x72x288xbf16, #tpu.memory_space<vmem>>, vector<1x72x288xbf16>
    %5 = vector.shape_cast %4 : vector<1x72x288xbf16> to vector<72x288xbf16>
    %cst_6 = arith.constant dense<0.000000e+00> : vector<72x64xf32>
    %6 = tpu.matmul %5, %0, %cst_6 {dimension_numbers = #tpu.dot_dimension_numbers<[1], [0], [0], [1], [0, 0, 1, 1], [], []>} : vector<72x288xbf16>, vector<288x64xbf16>, vector<72x64xf32> -> vector<72x64xf32>
    %7 = arith.maximumf %3, %6 : vector<72x64xf32>
    %c2 = arith.constant 2 : index
    %c0_7 = arith.constant 0 : index
    %c0_8 = arith.constant 0 : index
    %8 = vector.load %arg1[%c2, %c0_7, %c0_8] : memref<4x72x288xbf16, #tpu.memory_space<vmem>>, vector<1x72x288xbf16>
    %9 = vector.shape_cast %8 : vector<1x72x288xbf16> to vector<72x288xbf16>
    %cst_9 = arith.constant dense<0.000000e+00> : vector<72x64xf32>
    %10 = tpu.matmul %9, %0, %cst_9 {dimension_numbers = #tpu.dot_dimension_numbers<[1], [0], [0], [1], [0, 0, 1, 1], [], []>} : vector<72x288xbf16>, vector<288x64xbf16>, vector<72x64xf32> -> vector<72x64xf32>
    %11 = arith.maximumf %7, %10 : vector<72x64xf32>
    %c3 = arith.constant 3 : index
    %c0_10 = arith.constant 0 : index
    %c0_11 = arith.constant 0 : index
    %12 = vector.load %arg1[%c3, %c0_10, %c0_11] : memref<4x72x288xbf16, #tpu.memory_space<vmem>>, vector<1x72x288xbf16>
    %13 = vector.shape_cast %12 : vector<1x72x288xbf16> to vector<72x288xbf16>
    %cst_12 = arith.constant dense<0.000000e+00> : vector<72x64xf32>
    %14 = tpu.matmul %13, %0, %cst_12 {dimension_numbers = #tpu.dot_dimension_numbers<[1], [0], [0], [1], [0, 0, 1, 1], [], []>} : vector<72x288xbf16>, vector<288x64xbf16>, vector<72x64xf32> -> vector<72x64xf32>
    %15 = arith.maximumf %11, %14 : vector<72x64xf32>
    %c0_13 = arith.constant 0 : index
    %c0_14 = arith.constant 0 : index
    %16 = vector.load %arg3[%c0_13, %c0_14] : memref<1x64xf32, #tpu.memory_space<vmem>>, vector<1x64xf32>
    %17 = vector.broadcast %16 : vector<1x64xf32> to vector<72x64xf32>
    %18 = arith.addf %15, %17 : vector<72x64xf32>
    %cst_15 = arith.constant 0.000000e+00 : f32
    %19 = vector.broadcast %cst_15 : f32 to vector<72x64xf32>
    %20 = arith.maximumf %18, %19 : vector<72x64xf32>
    %21 = arith.truncf %20 : vector<72x64xf32> to vector<72x64xbf16>
    %c0_16 = arith.constant 0 : index
    %c0_17 = arith.constant 0 : index
    %22 = vector.load %arg4[%c0_16, %c0_17] : memref<72x64xbf16, #tpu.memory_space<vmem>>, vector<72x64xbf16>
    tpu.vector_store %arg4[%c0_16, %c0_17], %21 {strides = array<i32>} : memref<72x64xbf16, #tpu.memory_space<vmem>>, vector<72x64xbf16>,
    return
  }
  func.func @transform_0(%arg0: i32) -> (i32, i32, i32) {
    %c0_i32 = arith.constant 0 : i32
    %c0_i32_0 = arith.constant 0 : i32
    %c0_i32_1 = arith.constant 0 : i32
    return %c0_i32, %arg0, %c0_i32_0 : i32, i32, i32
  }
  func.func @transform_1(%arg0: i32) -> (i32, i32) {
    %c0_i32 = arith.constant 0 : i32
    %c0_i32_0 = arith.constant 0 : i32
    %c0_i32_1 = arith.constant 0 : i32
    return %c0_i32, %c0_i32_0 : i32, i32
  }
  func.func @transform_2(%arg0: i32) -> (i32, i32) {
    %c0_i32 = arith.constant 0 : i32
    %c0_i32_0 = arith.constant 0 : i32
    %c0_i32_1 = arith.constant 0 : i32
    return %c0_i32, %c0_i32_0 : i32, i32
  }
  func.func @transform_3(%arg0: i32) -> (i32, i32) {
    %c0_i32 = arith.constant 0 : i32
    %c0_i32_0 = arith.constant 0 : i32
    return %arg0, %c0_i32 : i32, i32
  }
}

module attributes {stable_mosaic.version = 11 : i64} {
  func.func @_fc_fused_kernel(%arg0: i32, %arg1: memref<8x2304xbf16, #tpu.memory_space<vmem>>, %arg2: memref<2304x640xbf16, #tpu.memory_space<vmem>>, %arg3: memref<1x640xf32, #tpu.memory_space<vmem>>, %arg4: memref<640x128xbf16, #tpu.memory_space<vmem>>, %arg5: memref<1x128xf32, #tpu.memory_space<vmem>>, %arg6: memref<128x128xbf16, #tpu.memory_space<vmem>>, %arg7: memref<1x128xf32, #tpu.memory_space<vmem>>, %arg8: memref<8x128xf32, #tpu.memory_space<vmem>>) attributes {dimension_semantics = [#tpu.dimension_semantics<parallel>], iteration_bounds = array<i64: 1>, scalar_prefetch = 0 : i64, scratch_operands = 0 : i64, tpu.core_type = #tpu.core_type<tc>, window_params = [{transform_indices = @transform_0, window_bounds = array<i64: 8, 2304>}, {pipeline_mode = #tpu.pipeline_mode<synchronous>, transform_indices = @transform_1, window_bounds = array<i64: 2304, 640>}, {pipeline_mode = #tpu.pipeline_mode<synchronous>, transform_indices = @transform_2, window_bounds = array<i64: 1, 640>}, {pipeline_mode = #tpu.pipeline_mode<synchronous>, transform_indices = @transform_3, window_bounds = array<i64: 640, 128>}, {pipeline_mode = #tpu.pipeline_mode<synchronous>, transform_indices = @transform_4, window_bounds = array<i64: 1, 128>}, {pipeline_mode = #tpu.pipeline_mode<synchronous>, transform_indices = @transform_5, window_bounds = array<i64: 128, 128>}, {pipeline_mode = #tpu.pipeline_mode<synchronous>, transform_indices = @transform_6, window_bounds = array<i64: 1, 128>}, {transform_indices = @transform_7, window_bounds = array<i64: 8, 128>}]} {
    %c0 = arith.constant 0 : index
    %c0_0 = arith.constant 0 : index
    %0 = vector.load %arg1[%c0, %c0_0] : memref<8x2304xbf16, #tpu.memory_space<vmem>>, vector<8x2304xbf16>
    %c0_1 = arith.constant 0 : index
    %c0_2 = arith.constant 0 : index
    %1 = vector.load %arg2[%c0_1, %c0_2] : memref<2304x640xbf16, #tpu.memory_space<vmem>>, vector<2304x640xbf16>
    %cst = arith.constant dense<0.000000e+00> : vector<8x640xf32>
    %2 = tpu.matmul %0, %1, %cst {dimension_numbers = #tpu.dot_dimension_numbers<[1], [0], [0], [1], [0, 0, 1, 1], [], []>} : vector<8x2304xbf16>, vector<2304x640xbf16>, vector<8x640xf32> -> vector<8x640xf32>
    %c0_3 = arith.constant 0 : index
    %c0_4 = arith.constant 0 : index
    %3 = vector.load %arg3[%c0_3, %c0_4] : memref<1x640xf32, #tpu.memory_space<vmem>>, vector<1x640xf32>
    %4 = vector.broadcast %3 : vector<1x640xf32> to vector<8x640xf32>
    %5 = arith.addf %2, %4 : vector<8x640xf32>
    %6 = arith.truncf %5 : vector<8x640xf32> to vector<8x640xbf16>
    %c0_5 = arith.constant 0 : index
    %c0_6 = arith.constant 0 : index
    %7 = vector.load %arg4[%c0_5, %c0_6] : memref<640x128xbf16, #tpu.memory_space<vmem>>, vector<640x128xbf16>
    %cst_7 = arith.constant dense<0.000000e+00> : vector<8x128xf32>
    %8 = tpu.matmul %6, %7, %cst_7 {dimension_numbers = #tpu.dot_dimension_numbers<[1], [0], [0], [1], [0, 0, 1, 1], [], []>} : vector<8x640xbf16>, vector<640x128xbf16>, vector<8x128xf32> -> vector<8x128xf32>
    %c0_8 = arith.constant 0 : index
    %c0_9 = arith.constant 0 : index
    %9 = vector.load %arg5[%c0_8, %c0_9] : memref<1x128xf32, #tpu.memory_space<vmem>>, vector<1x128xf32>
    %10 = vector.broadcast %9 : vector<1x128xf32> to vector<8x128xf32>
    %11 = arith.addf %8, %10 : vector<8x128xf32>
    %12 = arith.truncf %11 : vector<8x128xf32> to vector<8x128xbf16>
    %c0_10 = arith.constant 0 : index
    %c0_11 = arith.constant 0 : index
    %13 = vector.load %arg6[%c0_10, %c0_11] : memref<128x128xbf16, #tpu.memory_space<vmem>>, vector<128x128xbf16>
    %cst_12 = arith.constant dense<0.000000e+00> : vector<8x128xf32>
    %14 = tpu.matmul %12, %13, %cst_12 {dimension_numbers = #tpu.dot_dimension_numbers<[1], [0], [0], [1], [0, 0, 1, 1], [], []>} : vector<8x128xbf16>, vector<128x128xbf16>, vector<8x128xf32> -> vector<8x128xf32>
    %c0_13 = arith.constant 0 : index
    %c0_14 = arith.constant 0 : index
    %15 = vector.load %arg7[%c0_13, %c0_14] : memref<1x128xf32, #tpu.memory_space<vmem>>, vector<1x128xf32>
    %16 = vector.broadcast %15 : vector<1x128xf32> to vector<8x128xf32>
    %17 = arith.addf %14, %16 : vector<8x128xf32>
    %c0_15 = arith.constant 0 : index
    %c0_16 = arith.constant 0 : index
    %18 = vector.load %arg8[%c0_15, %c0_16] : memref<8x128xf32, #tpu.memory_space<vmem>>, vector<8x128xf32>
    tpu.vector_store %arg8[%c0_15, %c0_16], %17 {strides = array<i32>} : memref<8x128xf32, #tpu.memory_space<vmem>>, vector<8x128xf32>,
    return
  }
  func.func @transform_0(%arg0: i32) -> (i32, i32) {
    %c0_i32 = arith.constant 0 : i32
    %c0_i32_0 = arith.constant 0 : i32
    return %arg0, %c0_i32 : i32, i32
  }
  func.func @transform_1(%arg0: i32) -> (i32, i32) {
    %c0_i32 = arith.constant 0 : i32
    %c0_i32_0 = arith.constant 0 : i32
    %c0_i32_1 = arith.constant 0 : i32
    return %c0_i32, %c0_i32_0 : i32, i32
  }
  func.func @transform_2(%arg0: i32) -> (i32, i32) {
    %c0_i32 = arith.constant 0 : i32
    %c0_i32_0 = arith.constant 0 : i32
    %c0_i32_1 = arith.constant 0 : i32
    return %c0_i32, %c0_i32_0 : i32, i32
  }
  func.func @transform_3(%arg0: i32) -> (i32, i32) {
    %c0_i32 = arith.constant 0 : i32
    %c0_i32_0 = arith.constant 0 : i32
    %c0_i32_1 = arith.constant 0 : i32
    return %c0_i32, %c0_i32_0 : i32, i32
  }
  func.func @transform_4(%arg0: i32) -> (i32, i32) {
    %c0_i32 = arith.constant 0 : i32
    %c0_i32_0 = arith.constant 0 : i32
    %c0_i32_1 = arith.constant 0 : i32
    return %c0_i32, %c0_i32_0 : i32, i32
  }
  func.func @transform_5(%arg0: i32) -> (i32, i32) {
    %c0_i32 = arith.constant 0 : i32
    %c0_i32_0 = arith.constant 0 : i32
    %c0_i32_1 = arith.constant 0 : i32
    return %c0_i32, %c0_i32_0 : i32, i32
  }
  func.func @transform_6(%arg0: i32) -> (i32, i32) {
    %c0_i32 = arith.constant 0 : i32
    %c0_i32_0 = arith.constant 0 : i32
    %c0_i32_1 = arith.constant 0 : i32
    return %c0_i32, %c0_i32_0 : i32, i32
  }
  func.func @transform_7(%arg0: i32) -> (i32, i32) {
    %c0_i32 = arith.constant 0 : i32
    %c0_i32_0 = arith.constant 0 : i32
    return %arg0, %c0_i32 : i32, i32
  }
}

</mosaic_0001>

<llo_original>
// kernel: mnist_cnn_forward.3
$region0: #{mnist_cnn_forward.3}
  #allocation0 [shape = 'u32[]', space=smem, size = 0x4, offset = 0x4, fixed_abs, tag = 'smem constant byte address 0x4 - core index']
  #allocation1 [shape = 'u32[144,128]{1,0:T(1,128)}', space=vmem, size = 0x12000, scoped, tag = 'internal scratch']
  %s0 = inlined_call_operand.vmem [shape: bf16[4,392,9], index: 0, kind: input, shape index: {}]
  %s1 = inlined_call_operand.hbm [shape: bf16[9,32], index: 1, kind: input, shape index: {}]
  %s2 = inlined_call_operand.hbm [shape: f32[1,32], index: 2, kind: input, shape index: {}]
  %s3 = inlined_call_operand.vmem [shape: bf16[392,32], index: 3, kind: output, shape index: {}]
  %s4 = sld [smem:[#allocation0]]
  $region30: #{mnist_cnn_forward.3} parent=0
    _
  %s6 = ssub.s32 1, %s4
  %s7 = scalar_select 0, %s6, %s4
  $region1: #{mnist_cnn_forward.3} parent=0
    #allocation2 [shape = 'u8[4096]{0}', space=vmem, size = 0x1000, scoped, tag = 'input window, operand 1, single buffered']
    #allocation3 [shape = 's32[1]{0}', space=sflag, size = 0x4, scoped, tag = 'scoped memory for mnist_cnn_forward.3']
    #allocation4 [shape = 'u8[512]{0}', space=vmem, size = 0x400, scoped, tag = 'input window, operand 2, single buffered']
    #allocation5 [shape = 's32[1]{0}', space=sflag, size = 0x4, scoped, tag = 'scoped memory for mnist_cnn_forward.3']
    %8 = vsyncpa [#allocation3], 0
    %9 = vsyncpa [#allocation5], 0
    // Predicated region
    $region2: #{mnist_cnn_forward.3} parent=1 // pred_check
      _
    $region3: #{mnist_cnn_forward.3} parent=1 // pred_check_branch
      %11 = sbr.rel (0) target = $region5
    $region4: #{mnist_cnn_forward.3} parent=1 // pred_region
      _
    $region5: #{mnist_cnn_forward.3} parent=1 // pred_fallthru
      _
    // Predicated region
    $region6: #{mnist_cnn_forward.3} parent=1 // pred_check
      _
    $region7: #{mnist_cnn_forward.3} parent=1 // pred_check_branch
      %13 = sbr.rel (0) target = $region9
    $region8: #{mnist_cnn_forward.3} parent=1 // pred_region
      %s15 = ssub.s32 128, 128
      %16 = vsyncadd [#allocation3], %s15
      %s17 = sshll.u32 [#allocation2], 4
      %s18 = int_to_ptr.vmem [resolvable:$true] %s17
      %23 = dma.hbm_to_vmem [thread:$0]  %s1, 128, %s18, [#allocation3], 64, 64, 4
    $region9: #{mnist_cnn_forward.3} parent=1 // pred_fallthru
      _
    // Predicated region
    $region10: #{mnist_cnn_forward.3} parent=1 // pred_check
      _
    $region11: #{mnist_cnn_forward.3} parent=1 // pred_check_branch
      %25 = sbr.rel (0) target = $region13
    $region12: #{mnist_cnn_forward.3} parent=1 // pred_region
      %s27 = ssub.s32 16, 16
      %28 = vsyncadd [#allocation5], %s27
      %s30 = sshll.u32 [#allocation4], 4
      %s31 = int_to_ptr.vmem [resolvable:$true] %s30
      %33 = dma.hbm_to_vmem [thread:$0]  %s2, 16, %s31, [#allocation5]
    $region13: #{mnist_cnn_forward.3} parent=1 // pred_fallthru
      _
    // Predicated region
    $region14: #{mnist_cnn_forward.3} parent=1 // pred_check
      _
    $region15: #{mnist_cnn_forward.3} parent=1 // pred_check_branch
      %35 = sbr.rel (0) target = $region17
    $region16: #{mnist_cnn_forward.3} parent=1 // pred_region
      %36 = dma.done [#allocation3], 128
    $region17: #{mnist_cnn_forward.3} parent=1 // pred_fallthru
      _
    // Predicated region
    $region18: #{mnist_cnn_forward.3} parent=1 // pred_check
      _
    $region19: #{mnist_cnn_forward.3} parent=1 // pred_check_branch
      %38 = sbr.rel (0) target = $region21
    $region20: #{mnist_cnn_forward.3} parent=1 // pred_region
      %39 = dma.done [#allocation5], 16
    $region21: #{mnist_cnn_forward.3} parent=1 // pred_fallthru
      _
    %v41 = vld [vmem:[#allocation2] sm:$0xf]
    %v42 = vld [vmem:[#allocation2 + $0x4] sm:$0x1]
    %v43 = vld [vmem:[%s0] sm:$0xf]
    %v44 = vld [vmem:[%s0 + $0x4] sm:$0xf]
    %v45 = vld [vmem:[%s0 + $0x8] sm:$0xf]
    %v46 = vld [vmem:[%s0 + $0xc] sm:$0xf]
    %v47 = vld [vmem:[%s0 + $0x10] sm:$0xf]
    %v48 = vld [vmem:[%s0 + $0x14] sm:$0xf]
    %v49 = vld [vmem:[%s0 + $0x18] sm:$0xf]
    %v50 = vld [vmem:[%s0 + $0x1c] sm:$0xf]
    %v51 = vld [vmem:[%s0 + $0x20] sm:$0xf]
    %v52 = vld [vmem:[%s0 + $0x24] sm:$0xf]
    %v53 = vld [vmem:[%s0 + $0x28] sm:$0xf]
    %v54 = vld [vmem:[%s0 + $0x2c] sm:$0xf]
    %v55 = vld [vmem:[%s0 + $0x30] sm:$0xf]
    %v56 = vld [vmem:[%s0 + $0x34] sm:$0xf]
    %v57 = vld [vmem:[%s0 + $0x38] sm:$0xf]
    %v58 = vld [vmem:[%s0 + $0x3c] sm:$0xf]
    %v59 = vld [vmem:[%s0 + $0x40] sm:$0xf]
    %v60 = vld [vmem:[%s0 + $0x44] sm:$0xf]
    %v61 = vld [vmem:[%s0 + $0x48] sm:$0xf]
    %v62 = vld [vmem:[%s0 + $0x4c] sm:$0xf]
    %v63 = vld [vmem:[%s0 + $0x50] sm:$0xf]
    %v64 = vld [vmem:[%s0 + $0x54] sm:$0xf]
    %v65 = vld [vmem:[%s0 + $0x58] sm:$0xf]
    %v66 = vld [vmem:[%s0 + $0x5c] sm:$0xf]
    %v67 = vld [vmem:[%s0 + $0x60] sm:$0xf]
    %v68 = vld [vmem:[%s0 + $0x64] sm:$0xf]
    %v69 = vld [vmem:[%s0 + $0x68] sm:$0xf]
    %v70 = vld [vmem:[%s0 + $0x6c] sm:$0xf]
    %v71 = vld [vmem:[%s0 + $0x70] sm:$0xf]
    %v72 = vld [vmem:[%s0 + $0x74] sm:$0xf]
    %v73 = vld [vmem:[%s0 + $0x78] sm:$0xf]
    %v74 = vld [vmem:[%s0 + $0x7c] sm:$0xf]
    %v75 = vld [vmem:[%s0 + $0x80] sm:$0xf]
    %v76 = vld [vmem:[%s0 + $0x84] sm:$0xf]
    %v77 = vld [vmem:[%s0 + $0x88] sm:$0xf]
    %v78 = vld [vmem:[%s0 + $0x8c] sm:$0xf]
    %v79 = vld [vmem:[%s0 + $0x90] sm:$0xf]
    %v80 = vld [vmem:[%s0 + $0x94] sm:$0xf]
    %v81 = vld [vmem:[%s0 + $0x98] sm:$0xf]
    %v82 = vld [vmem:[%s0 + $0x9c] sm:$0xf]
    %v83 = vld [vmem:[%s0 + $0xa0] sm:$0xf]
    %v84 = vld [vmem:[%s0 + $0xa4] sm:$0xf]
    %v85 = vld [vmem:[%s0 + $0xa8] sm:$0xf]
    %v86 = vld [vmem:[%s0 + $0xac] sm:$0xf]
    %v87 = vld [vmem:[%s0 + $0xb0] sm:$0xf]
    %v88 = vld [vmem:[%s0 + $0xb4] sm:$0xf]
    %v89 = vld [vmem:[%s0 + $0xb8] sm:$0xf]
    %v90 = vld [vmem:[%s0 + $0xbc] sm:$0xf]
    %v91 = vld [vmem:[%s0 + $0xc0] sm:$0xf]
    %v141 = vunpack.c.l.b16 %v43
    %v142 = vunpack.c.l.b16 %v44
    %v143 = vunpack.c.l.b16 %v45
    %v144 = vunpack.c.l.b16 %v46
    %v145 = vunpack.c.l.b16 %v47
    %v146 = vunpack.c.l.b16 %v48
    %v147 = vunpack.c.l.b16 %v49
    %v148 = vunpack.c.l.b16 %v50
    %v149 = vunpack.c.l.b16 %v51
    %v150 = vunpack.c.l.b16 %v52
    %v151 = vunpack.c.l.b16 %v53
    %v152 = vunpack.c.l.b16 %v54
    %v153 = vunpack.c.l.b16 %v55
    %v154 = vunpack.c.l.b16 %v56
    %v155 = vunpack.c.l.b16 %v57
    %v156 = vunpack.c.l.b16 %v58
    %v157 = vunpack.c.l.b16 %v59
    %v158 = vunpack.c.l.b16 %v60
    %v159 = vunpack.c.l.b16 %v61
    %v160 = vunpack.c.l.b16 %v62
    %v161 = vunpack.c.l.b16 %v63
    %v162 = vunpack.c.l.b16 %v64
    %v163 = vunpack.c.l.b16 %v65
    %v164 = vunpack.c.l.b16 %v66
    %v165 = vunpack.c.l.b16 %v67
    %v166 = vunpack.c.l.b16 %v68
    %v167 = vunpack.c.l.b16 %v69
    %v168 = vunpack.c.l.b16 %v70
    %v169 = vunpack.c.l.b16 %v71
    %v170 = vunpack.c.l.b16 %v72
    %v171 = vunpack.c.l.b16 %v73
    %v172 = vunpack.c.l.b16 %v74
    %v173 = vunpack.c.l.b16 %v75
    %v174 = vunpack.c.l.b16 %v76
    %v175 = vunpack.c.l.b16 %v77
    %v176 = vunpack.c.l.b16 %v78
    %v177 = vunpack.c.l.b16 %v79
    %v178 = vunpack.c.l.b16 %v80
    %v179 = vunpack.c.l.b16 %v81
    %v180 = vunpack.c.l.b16 %v82
    %v181 = vunpack.c.l.b16 %v83
    %v182 = vunpack.c.l.b16 %v84
    %v183 = vunpack.c.l.b16 %v85
    %v184 = vunpack.c.l.b16 %v86
    %v185 = vunpack.c.l.b16 %v87
    %v186 = vunpack.c.l.b16 %v88
    %v187 = vunpack.c.l.b16 %v89
    %v188 = vunpack.c.l.b16 %v90
    %v189 = vunpack.c.l.b16 %v91
    %v190 = vpack.c.b16 %v142, %v141
    %v191 = vpack.c.b16 %v144, %v143
    %v192 = vpack.c.b16 %v146, %v145
    %v193 = vpack.c.b16 %v148, %v147
    %v194 = vpack.c.b16 %v150, %v149
    %v195 = vpack.c.b16 %v152, %v151
    %v196 = vpack.c.b16 %v154, %v153
    %v197 = vpack.c.b16 %v156, %v155
    %v198 = vpack.c.b16 %v158, %v157
    %v199 = vpack.c.b16 %v160, %v159
    %v200 = vpack.c.b16 %v162, %v161
    %v201 = vpack.c.b16 %v164, %v163
    %v202 = vpack.c.b16 %v166, %v165
    %v203 = vpack.c.b16 %v168, %v167
    %v204 = vpack.c.b16 %v170, %v169
    %v205 = vpack.c.b16 %v172, %v171
    %v206 = vpack.c.b16 %v174, %v173
    %v207 = vpack.c.b16 %v176, %v175
    %v208 = vpack.c.b16 %v178, %v177
    %v209 = vpack.c.b16 %v180, %v179
    %v210 = vpack.c.b16 %v182, %v181
    %v211 = vpack.c.b16 %v184, %v183
    %v212 = vpack.c.b16 %v186, %v185
    %v213 = vpack.c.b16 %v188, %v187
    %v214 = vpack.c.b16 %v189, %v189
    %v217 = vunpack.c.l.b16 %v41
    %v218 = vunpack.c.l.b16 %v42
    %v219 = vpack.c.b16 %v218, %v217
    %vm220 = vcmask 72704
    %v222 = vsel %vm220, %v190, 0
    %v225 = vsel %vm220, %v191, 0
    %v228 = vsel %vm220, %v192, 0
    %v231 = vsel %vm220, %v193, 0
    %v234 = vsel %vm220, %v194, 0
    %v237 = vsel %vm220, %v195, 0
    %v240 = vsel %vm220, %v196, 0
    %v243 = vsel %vm220, %v197, 0
    %v246 = vsel %vm220, %v198, 0
    %v249 = vsel %vm220, %v199, 0
    %v252 = vsel %vm220, %v200, 0
    %v255 = vsel %vm220, %v201, 0
    %v258 = vsel %vm220, %v202, 0
    %v261 = vsel %vm220, %v203, 0
    %v264 = vsel %vm220, %v204, 0
    %v267 = vsel %vm220, %v205, 0
    %v270 = vsel %vm220, %v206, 0
    %v273 = vsel %vm220, %v207, 0
    %v276 = vsel %vm220, %v208, 0
    %v279 = vsel %vm220, %v209, 0
    %v282 = vsel %vm220, %v210, 0
    %v285 = vsel %vm220, %v211, 0
    %v288 = vsel %vm220, %v212, 0
    %v291 = vsel %vm220, %v213, 0
    %v294 = vsel %vm220, %v214, 0
    %vm296 = vcmask 1043456
    %vm297 = vcmask 1044480
    %v298 = vsel %vm296, 4294967295, 65535
    %v299 = vsel %vm297, %v298, 0
    %v301 = vand.u32 %v219, %v299
    %303 = vmatprep.subr.bf16.mxu0 0
    %304 = vmatpush1.bf16.msra.mxu0 %v301
    %305 = vmatprep.subr.bf16.mxu0 0
    %306 = vmatpush1.bf16.msra.mxu0 0
    %307 = vmatprep.subr.bf16.mxu0 0
    %308 = vmatpush1.bf16.msra.mxu0 0
    %309 = vmatprep.subr.bf16.mxu0 0
    %310 = vmatpush1.bf16.msra.mxu0 0
    %311 = vmatprep.subr.bf16.mxu0 0
    %312 = vmatpush1.bf16.msra.mxu0 0
    %313 = vmatprep.subr.bf16.mxu0 0
    %314 = vmatpush1.bf16.msra.mxu0 0
    %315 = vmatprep.subr.bf16.mxu0 0
    %316 = vmatpush1.bf16.msra.mxu0 0
    %317 = vmatprep.subr.bf16.mxu0 0
    %318 = vmatpush1.bf16.msra.mxu0 0
    %319 = vmatprep.subr.bf16.mxu0 0
    %320 = vmatpush1.bf16.msra.mxu0 0
    %321 = vmatprep.subr.bf16.mxu0 0
    %322 = vmatpush1.bf16.msra.mxu0 0
    %323 = vmatprep.subr.bf16.mxu0 0
    %324 = vmatpush1.bf16.msra.mxu0 0
    %325 = vmatprep.subr.bf16.mxu0 0
    %326 = vmatpush1.bf16.msra.mxu0 0
    %327 = vmatprep.subr.bf16.mxu0 0
    %328 = vmatpush1.bf16.msra.mxu0 0
    %329 = vmatprep.subr.bf16.mxu0 0
    %330 = vmatpush1.bf16.msra.mxu0 0
    %331 = vmatprep.subr.bf16.mxu0 0
    %332 = vmatpush1.bf16.msra.mxu0 0
    %333 = vmatprep.subr.bf16.mxu0 0
    %334 = vmatpush1.bf16.msra.mxu0 0
    %335 = vmatprep.mubr.bf16.mxu0 0
    %336 = vmatmul.mubr.bf16.gmra.mrb[0].mxu0 %v222
    %v337 = vpop.f32.mrb[0].mxu0
    %v338 = vadd.f32 0.0, %v337
    %v339 = vpop.f32.mrb[0].mxu0
    %v340 = vpop.f32.mrb[0].mxu0
    %v341 = vadd.f32 0.0, %v340
    %v342 = vpop.f32.mrb[0].mxu0
    %343 = vmatprep.mubr.bf16.mxu0 0
    %344 = vmatmul.mubr.bf16.gmra.mrb[0].mxu0 %v225
    %v345 = vpop.f32.mrb[0].mxu0
    %v346 = vadd.f32 0.0, %v345
    %v347 = vpop.f32.mrb[0].mxu0
    %v348 = vpop.f32.mrb[0].mxu0
    %v349 = vadd.f32 0.0, %v348
    %v350 = vpop.f32.mrb[0].mxu0
    %351 = vmatprep.mubr.bf16.mxu0 0
    %352 = vmatmul.mubr.bf16.gmra.mrb[0].mxu0 %v228
    %v353 = vpop.f32.mrb[0].mxu0
    %v354 = vadd.f32 0.0, %v353
    %v355 = vpop.f32.mrb[0].mxu0
    %v356 = vpop.f32.mrb[0].mxu0
    %v357 = vadd.f32 0.0, %v356
    %v358 = vpop.f32.mrb[0].mxu0
    %359 = vmatprep.mubr.bf16.mxu0 0
    %360 = vmatmul.mubr.bf16.gmra.mrb[0].mxu0 %v231
    %v361 = vpop.f32.mrb[0].mxu0
    %v362 = vadd.f32 0.0, %v361
    %v363 = vpop.f32.mrb[0].mxu0
    %v364 = vpop.f32.mrb[0].mxu0
    %v365 = vadd.f32 0.0, %v364
    %v366 = vpop.f32.mrb[0].mxu0
    %367 = vmatprep.mubr.bf16.mxu0 0
    %368 = vmatmul.mubr.bf16.gmra.mrb[0].mxu0 %v234
    %v369 = vpop.f32.mrb[0].mxu0
    %v370 = vadd.f32 0.0, %v369
    %v371 = vpop.f32.mrb[0].mxu0
    %v372 = vpop.f32.mrb[0].mxu0
    %v373 = vadd.f32 0.0, %v372
    %v374 = vpop.f32.mrb[0].mxu0
    %375 = vmatprep.mubr.bf16.mxu0 0
    %376 = vmatmul.mubr.bf16.gmra.mrb[0].mxu0 %v237
    %v377 = vpop.f32.mrb[0].mxu0
    %v378 = vadd.f32 0.0, %v377
    %v379 = vpop.f32.mrb[0].mxu0
    %v380 = vpop.f32.mrb[0].mxu0
    %v381 = vadd.f32 0.0, %v380
    %v382 = vpop.f32.mrb[0].mxu0
    %383 = vmatprep.mubr.bf16.mxu0 0
    %384 = vmatmul.mubr.bf16.gmra.mrb[0].mxu0 %v240
    %v385 = vpop.f32.mrb[0].mxu0
    %v386 = vadd.f32 0.0, %v385
    %v387 = vpop.f32.mrb[0].mxu0
    %v388 = vpop.f32.mrb[0].mxu0
    %v389 = vadd.f32 0.0, %v388
    %v390 = vpop.f32.mrb[0].mxu0
    %391 = vmatprep.mubr.bf16.mxu0 0
    %392 = vmatmul.mubr.bf16.gmra.mrb[0].mxu0 %v243
    %v393 = vpop.f32.mrb[0].mxu0
    %v394 = vadd.f32 0.0, %v393
    %v395 = vpop.f32.mrb[0].mxu0
    %v396 = vpop.f32.mrb[0].mxu0
    %v397 = vadd.f32 0.0, %v396
    %v398 = vpop.f32.mrb[0].mxu0
    %399 = vmatprep.mubr.bf16.mxu0 0
    %400 = vmatmul.mubr.bf16.gmra.mrb[0].mxu0 %v246
    %v401 = vpop.f32.mrb[0].mxu0
    %v402 = vadd.f32 0.0, %v401
    %v403 = vpop.f32.mrb[0].mxu0
    %v404 = vpop.f32.mrb[0].mxu0
    %v405 = vadd.f32 0.0, %v404
    %v406 = vpop.f32.mrb[0].mxu0
    %407 = vmatprep.mubr.bf16.mxu0 0
    %408 = vmatmul.mubr.bf16.gmra.mrb[0].mxu0 %v249
    %v409 = vpop.f32.mrb[0].mxu0
    %v410 = vadd.f32 0.0, %v409
    %v411 = vpop.f32.mrb[0].mxu0
    %v412 = vpop.f32.mrb[0].mxu0
    %v413 = vadd.f32 0.0, %v412
    %v414 = vpop.f32.mrb[0].mxu0
    %415 = vmatprep.mubr.bf16.mxu0 0
    %416 = vmatmul.mubr.bf16.gmra.mrb[0].mxu0 %v252
    %v417 = vpop.f32.mrb[0].mxu0
    %v418 = vadd.f32 0.0, %v417
    %v419 = vpop.f32.mrb[0].mxu0
    %v420 = vpop.f32.mrb[0].mxu0
    %v421 = vadd.f32 0.0, %v420
    %v422 = vpop.f32.mrb[0].mxu0
    %423 = vmatprep.mubr.bf16.mxu0 0
    %424 = vmatmul.mubr.bf16.gmra.mrb[0].mxu0 %v255
    %v425 = vpop.f32.mrb[0].mxu0
    %v426 = vadd.f32 0.0, %v425
    %v427 = vpop.f32.mrb[0].mxu0
    %v428 = vpop.f32.mrb[0].mxu0
    %v429 = vadd.f32 0.0, %v428
    %v430 = vpop.f32.mrb[0].mxu0
    %431 = vmatprep.mubr.bf16.mxu0 0
    %432 = vmatmul.mubr.bf16.gmra.mrb[0].mxu0 %v258
    %v433 = vpop.f32.mrb[0].mxu0
    %v434 = vadd.f32 0.0, %v433
    %v435 = vpop.f32.mrb[0].mxu0
    %v436 = vpop.f32.mrb[0].mxu0
    %v437 = vadd.f32 0.0, %v436
    %v438 = vpop.f32.mrb[0].mxu0
    %439 = vmatprep.mubr.bf16.mxu0 0
    %440 = vmatmul.mubr.bf16.gmra.mrb[0].mxu0 %v261
    %v441 = vpop.f32.mrb[0].mxu0
    %v442 = vadd.f32 0.0, %v441
    %v443 = vpop.f32.mrb[0].mxu0
    %v444 = vpop.f32.mrb[0].mxu0
    %v445 = vadd.f32 0.0, %v444
    %v446 = vpop.f32.mrb[0].mxu0
    %447 = vmatprep.mubr.bf16.mxu0 0
    %448 = vmatmul.mubr.bf16.gmra.mrb[0].mxu0 %v264
    %v449 = vpop.f32.mrb[0].mxu0
    %v450 = vadd.f32 0.0, %v449
    %v451 = vpop.f32.mrb[0].mxu0
    %v452 = vpop.f32.mrb[0].mxu0
    %v453 = vadd.f32 0.0, %v452
    %v454 = vpop.f32.mrb[0].mxu0
    %455 = vmatprep.mubr.bf16.mxu0 0
    %456 = vmatmul.mubr.bf16.gmra.mrb[0].mxu0 %v267
    %v457 = vpop.f32.mrb[0].mxu0
    %v458 = vadd.f32 0.0, %v457
    %v459 = vpop.f32.mrb[0].mxu0
    %v460 = vpop.f32.mrb[0].mxu0
    %v461 = vadd.f32 0.0, %v460
    %v462 = vpop.f32.mrb[0].mxu0
    %463 = vmatprep.mubr.bf16.mxu0 0
    %464 = vmatmul.mubr.bf16.gmra.mrb[0].mxu0 %v270
    %v465 = vpop.f32.mrb[0].mxu0
    %v466 = vadd.f32 0.0, %v465
    %v467 = vpop.f32.mrb[0].mxu0
    %v468 = vpop.f32.mrb[0].mxu0
    %v469 = vadd.f32 0.0, %v468
    %v470 = vpop.f32.mrb[0].mxu0
    %471 = vmatprep.mubr.bf16.mxu0 0
    %472 = vmatmul.mubr.bf16.gmra.mrb[0].mxu0 %v273
    %v473 = vpop.f32.mrb[0].mxu0
    %v474 = vadd.f32 0.0, %v473
    %v475 = vpop.f32.mrb[0].mxu0
    %v476 = vpop.f32.mrb[0].mxu0
    %v477 = vadd.f32 0.0, %v476
    %v478 = vpop.f32.mrb[0].mxu0
    %479 = vmatprep.mubr.bf16.mxu0 0
    %480 = vmatmul.mubr.bf16.gmra.mrb[0].mxu0 %v276
    %v481 = vpop.f32.mrb[0].mxu0
    %v482 = vadd.f32 0.0, %v481
    %v483 = vpop.f32.mrb[0].mxu0
    %v484 = vpop.f32.mrb[0].mxu0
    %v485 = vadd.f32 0.0, %v484
    %v486 = vpop.f32.mrb[0].mxu0
    %487 = vmatprep.mubr.bf16.mxu0 0
    %488 = vmatmul.mubr.bf16.gmra.mrb[0].mxu0 %v279
    %v489 = vpop.f32.mrb[0].mxu0
    %v490 = vadd.f32 0.0, %v489
    %v491 = vpop.f32.mrb[0].mxu0
    %v492 = vpop.f32.mrb[0].mxu0
    %v493 = vadd.f32 0.0, %v492
    %v494 = vpop.f32.mrb[0].mxu0
    %495 = vmatprep.mubr.bf16.mxu0 0
    %496 = vmatmul.mubr.bf16.gmra.mrb[0].mxu0 %v282
    %v497 = vpop.f32.mrb[0].mxu0
    %v498 = vadd.f32 0.0, %v497
    %v499 = vpop.f32.mrb[0].mxu0
    %v500 = vpop.f32.mrb[0].mxu0
    %v501 = vadd.f32 0.0, %v500
    %v502 = vpop.f32.mrb[0].mxu0
    %503 = vmatprep.mubr.bf16.mxu0 0
    %504 = vmatmul.mubr.bf16.gmra.mrb[0].mxu0 %v285
    %v505 = vpop.f32.mrb[0].mxu0
    %v506 = vadd.f32 0.0, %v505
    %v507 = vpop.f32.mrb[0].mxu0
    %v508 = vpop.f32.mrb[0].mxu0
    %v509 = vadd.f32 0.0, %v508
    %v510 = vpop.f32.mrb[0].mxu0
    %511 = vmatprep.mubr.bf16.mxu0 0
    %512 = vmatmul.mubr.bf16.gmra.mrb[0].mxu0 %v288
    %v513 = vpop.f32.mrb[0].mxu0
    %v514 = vadd.f32 0.0, %v513
    %v515 = vpop.f32.mrb[0].mxu0
    %v516 = vpop.f32.mrb[0].mxu0
    %v517 = vadd.f32 0.0, %v516
    %v518 = vpop.f32.mrb[0].mxu0
    %519 = vmatprep.mubr.bf16.mxu0 0
    %520 = vmatmul.mubr.bf16.gmra.mrb[0].mxu0 %v291
    %v521 = vpop.f32.mrb[0].mxu0
    %v522 = vadd.f32 0.0, %v521
    %v523 = vpop.f32.mrb[0].mxu0
    %v524 = vpop.f32.mrb[0].mxu0
    %v525 = vadd.f32 0.0, %v524
    %v526 = vpop.f32.mrb[0].mxu0
    %527 = vmatprep.mubr.bf16.mxu0 0
    %528 = vmatmul.mubr.bf16.gmra.mrb[0].mxu0 %v294
    %v529 = vpop.f32.mrb[0].mxu0
    %v530 = vadd.f32 0.0, %v529
    %v531 = vpop.f32.mrb[0].mxu0
    %v532 = vpop.f32.mrb[0].mxu0
    %v533 = vpop.f32.mrb[0].mxu0
    %534 = vdwg.mxu0
    %s535 = scalar_lea.vmem %s0, 196
    %v536 = vld [vmem:[%s535] sm:$0xf]
    %v537 = vld [vmem:[%s535 + $0x4] sm:$0xf]
    %v538 = vld [vmem:[%s535 + $0x8] sm:$0xf]
    %v539 = vld [vmem:[%s535 + $0xc] sm:$0xf]
    %v540 = vld [vmem:[%s535 + $0x10] sm:$0xf]
    %v541 = vld [vmem:[%s535 + $0x14] sm:$0xf]
    %v542 = vld [vmem:[%s535 + $0x18] sm:$0xf]
    %v543 = vld [vmem:[%s535 + $0x1c] sm:$0xf]
    %v544 = vld [vmem:[%s535 + $0x20] sm:$0xf]
    %v545 = vld [vmem:[%s535 + $0x24] sm:$0xf]
    %v546 = vld [vmem:[%s535 + $0x28] sm:$0xf]
    %v547 = vld [vmem:[%s535 + $0x2c] sm:$0xf]
    %v548 = vld [vmem:[%s535 + $0x30] sm:$0xf]
    %v549 = vld [vmem:[%s535 + $0x34] sm:$0xf]
    %v550 = vld [vmem:[%s535 + $0x38] sm:$0xf]
    %v551 = vld [vmem:[%s535 + $0x3c] sm:$0xf]
    %v552 = vld [vmem:[%s535 + $0x40] sm:$0xf]
    %v553 = vld [vmem:[%s535 + $0x44] sm:$0xf]
    %v554 = vld [vmem:[%s535 + $0x48] sm:$0xf]
    %v555 = vld [vmem:[%s535 + $0x4c] sm:$0xf]
    %v556 = vld [vmem:[%s535 + $0x50] sm:$0xf]
    %v557 = vld [vmem:[%s535 + $0x54] sm:$0xf]
    %v558 = vld [vmem:[%s535 + $0x58] sm:$0xf]
    %v559 = vld [vmem:[%s535 + $0x5c] sm:$0xf]
    %v560 = vld [vmem:[%s535 + $0x60] sm:$0xf]
    %v561 = vld [vmem:[%s535 + $0x64] sm:$0xf]
    %v562 = vld [vmem:[%s535 + $0x68] sm:$0xf]
    %v563 = vld [vmem:[%s535 + $0x6c] sm:$0xf]
    %v564 = vld [vmem:[%s535 + $0x70] sm:$0xf]
    %v565 = vld [vmem:[%s535 + $0x74] sm:$0xf]
    %v566 = vld [vmem:[%s535 + $0x78] sm:$0xf]
    %v567 = vld [vmem:[%s535 + $0x7c] sm:$0xf]
    %v568 = vld [vmem:[%s535 + $0x80] sm:$0xf]
    %v569 = vld [vmem:[%s535 + $0x84] sm:$0xf]
    %v570 = vld [vmem:[%s535 + $0x88] sm:$0xf]
    %v571 = vld [vmem:[%s535 + $0x8c] sm:$0xf]
    %v572 = vld [vmem:[%s535 + $0x90] sm:$0xf]
    %v573 = vld [vmem:[%s535 + $0x94] sm:$0xf]
    %v574 = vld [vmem:[%s535 + $0x98] sm:$0xf]
    %v575 = vld [vmem:[%s535 + $0x9c] sm:$0xf]
    %v576 = vld [vmem:[%s535 + $0xa0] sm:$0xf]
    %v577 = vld [vmem:[%s535 + $0xa4] sm:$0xf]
    %v578 = vld [vmem:[%s535 + $0xa8] sm:$0xf]
    %v579 = vld [vmem:[%s535 + $0xac] sm:$0xf]
    %v580 = vld [vmem:[%s535 + $0xb0] sm:$0xf]
    %v581 = vld [vmem:[%s535 + $0xb4] sm:$0xf]
    %v582 = vld [vmem:[%s535 + $0xb8] sm:$0xf]
    %v583 = vld [vmem:[%s535 + $0xbc] sm:$0xf]
    %v584 = vld [vmem:[%s535 + $0xc0] sm:$0xf]
    %v634 = vunpack.c.l.b16 %v536
    %v635 = vunpack.c.l.b16 %v537
    %v636 = vunpack.c.l.b16 %v538
    %v637 = vunpack.c.l.b16 %v539
    %v638 = vunpack.c.l.b16 %v540
    %v639 = vunpack.c.l.b16 %v541
    %v640 = vunpack.c.l.b16 %v542
    %v641 = vunpack.c.l.b16 %v543
    %v642 = vunpack.c.l.b16 %v544
    %v643 = vunpack.c.l.b16 %v545
    %v644 = vunpack.c.l.b16 %v546
    %v645 = vunpack.c.l.b16 %v547
    %v646 = vunpack.c.l.b16 %v548
    %v647 = vunpack.c.l.b16 %v549
    %v648 = vunpack.c.l.b16 %v550
    %v649 = vunpack.c.l.b16 %v551
    %v650 = vunpack.c.l.b16 %v552
    %v651 = vunpack.c.l.b16 %v553
    %v652 = vunpack.c.l.b16 %v554
    %v653 = vunpack.c.l.b16 %v555
    %v654 = vunpack.c.l.b16 %v556
    %v655 = vunpack.c.l.b16 %v557
    %v656 = vunpack.c.l.b16 %v558
    %v657 = vunpack.c.l.b16 %v559
    %v658 = vunpack.c.l.b16 %v560
    %v659 = vunpack.c.l.b16 %v561
    %v660 = vunpack.c.l.b16 %v562
    %v661 = vunpack.c.l.b16 %v563
    %v662 = vunpack.c.l.b16 %v564
    %v663 = vunpack.c.l.b16 %v565
    %v664 = vunpack.c.l.b16 %v566
    %v665 = vunpack.c.l.b16 %v567
    %v666 = vunpack.c.l.b16 %v568
    %v667 = vunpack.c.l.b16 %v569
    %v668 = vunpack.c.l.b16 %v570
    %v669 = vunpack.c.l.b16 %v571
    %v670 = vunpack.c.l.b16 %v572
    %v671 = vunpack.c.l.b16 %v573
    %v672 = vunpack.c.l.b16 %v574
    %v673 = vunpack.c.l.b16 %v575
    %v674 = vunpack.c.l.b16 %v576
    %v675 = vunpack.c.l.b16 %v577
    %v676 = vunpack.c.l.b16 %v578
    %v677 = vunpack.c.l.b16 %v579
    %v678 = vunpack.c.l.b16 %v580
    %v679 = vunpack.c.l.b16 %v581
    %v680 = vunpack.c.l.b16 %v582
    %v681 = vunpack.c.l.b16 %v583
    %v682 = vunpack.c.l.b16 %v584
    %v683 = vpack.c.b16 %v635, %v634
    %v684 = vpack.c.b16 %v637, %v636
    %v685 = vpack.c.b16 %v639, %v638
    %v686 = vpack.c.b16 %v641, %v640
    %v687 = vpack.c.b16 %v643, %v642
    %v688 = vpack.c.b16 %v645, %v644
    %v689 = vpack.c.b16 %v647, %v646
    %v690 = vpack.c.b16 %v649, %v648
    %v691 = vpack.c.b16 %v651, %v650
    %v692 = vpack.c.b16 %v653, %v652
    %v693 = vpack.c.b16 %v655, %v654
    %v694 = vpack.c.b16 %v657, %v656
    %v695 = vpack.c.b16 %v659, %v658
    %v696 = vpack.c.b16 %v661, %v660
    %v697 = vpack.c.b16 %v663, %v662
    %v698 = vpack.c.b16 %v665, %v664
    %v699 = vpack.c.b16 %v667, %v666
    %v700 = vpack.c.b16 %v669, %v668
    %v701 = vpack.c.b16 %v671, %v670
    %v702 = vpack.c.b16 %v673, %v672
    %v703 = vpack.c.b16 %v675, %v674
    %v704 = vpack.c.b16 %v677, %v676
    %v705 = vpack.c.b16 %v679, %v678
    %v706 = vpack.c.b16 %v681, %v680
    %v707 = vpack.c.b16 %v682, %v682
    %v709 = vsel %vm220, %v683, 0
    %v712 = vsel %vm220, %v684, 0
    %v715 = vsel %vm220, %v685, 0
    %v718 = vsel %vm220, %v686, 0
    %v721 = vsel %vm220, %v687, 0
    %v724 = vsel %vm220, %v688, 0
    %v727 = vsel %vm220, %v689, 0
    %v730 = vsel %vm220, %v690, 0
    %v733 = vsel %vm220, %v691, 0
    %v736 = vsel %vm220, %v692, 0
    %v739 = vsel %vm220, %v693, 0
    %v742 = vsel %vm220, %v694, 0
    %v745 = vsel %vm220, %v695, 0
    %v748 = vsel %vm220, %v696, 0
    %v751 = vsel %vm220, %v697, 0
    %v754 = vsel %vm220, %v698, 0
    %v757 = vsel %vm220, %v699, 0
    %v760 = vsel %vm220, %v700, 0
    %v763 = vsel %vm220, %v701, 0
    %v766 = vsel %vm220, %v702, 0
    %v769 = vsel %vm220, %v703, 0
    %v772 = vsel %vm220, %v704, 0
    %v775 = vsel %vm220, %v705, 0
    %v778 = vsel %vm220, %v706, 0
    %v781 = vsel %vm220, %v707, 0
    %783 = vmatprep.subr.bf16.mxu0 0
    %784 = vmatpush1.bf16.msra.mxu0 %v301
    %785 = vmatprep.subr.bf16.mxu0 0
    %786 = vmatpush1.bf16.msra.mxu0 0
    %787 = vmatprep.subr.bf16.mxu0 0
    %788 = vmatpush1.bf16.msra.mxu0 0
    %789 = vmatprep.subr.bf16.mxu0 0
    %790 = vmatpush1.bf16.msra.mxu0 0
    %791 = vmatprep.subr.bf16.mxu0 0
    %792 = vmatpush1.bf16.msra.mxu0 0
    %793 = vmatprep.subr.bf16.mxu0 0
    %794 = vmatpush1.bf16.msra.mxu0 0
    %795 = vmatprep.subr.bf16.mxu0 0
    %796 = vmatpush1.bf16.msra.mxu0 0
    %797 = vmatprep.subr.bf16.mxu0 0
    %798 = vmatpush1.bf16.msra.mxu0 0
    %799 = vmatprep.subr.bf16.mxu0 0
    %800 = vmatpush1.bf16.msra.mxu0 0
    %801 = vmatprep.subr.bf16.mxu0 0
    %802 = vmatpush1.bf16.msra.mxu0 0
    %803 = vmatprep.subr.bf16.mxu0 0
    %804 = vmatpush1.bf16.msra.mxu0 0
    %805 = vmatprep.subr.bf16.mxu0 0
    %806 = vmatpush1.bf16.msra.mxu0 0
    %807 = vmatprep.subr.bf16.mxu0 0
    %808 = vmatpush1.bf16.msra.mxu0 0
    %809 = vmatprep.subr.bf16.mxu0 0
    %810 = vmatpush1.bf16.msra.mxu0 0
    %811 = vmatprep.subr.bf16.mxu0 0
    %812 = vmatpush1.bf16.msra.mxu0 0
    %813 = vmatprep.subr.bf16.mxu0 0
    %814 = vmatpush1.bf16.msra.mxu0 0
    %815 = vmatprep.mubr.bf16.mxu0 0
    %816 = vmatmul.mubr.bf16.gmra.mrb[0].mxu0 %v709
    %v817 = vpop.f32.mrb[0].mxu0
    %v818 = vadd.f32 0.0, %v817
    %v819 = vpop.f32.mrb[0].mxu0
    %v820 = vpop.f32.mrb[0].mxu0
    %v821 = vadd.f32 0.0, %v820
    %v822 = vpop.f32.mrb[0].mxu0
    %823 = vmatprep.mubr.bf16.mxu0 0
    %824 = vmatmul.mubr.bf16.gmra.mrb[0].mxu0 %v712
    %v825 = vpop.f32.mrb[0].mxu0
    %v826 = vadd.f32 0.0, %v825
    %v827 = vpop.f32.mrb[0].mxu0
    %v828 = vpop.f32.mrb[0].mxu0
    %v829 = vadd.f32 0.0, %v828
    %v830 = vpop.f32.mrb[0].mxu0
    %831 = vmatprep.mubr.bf16.mxu0 0
    %832 = vmatmul.mubr.bf16.gmra.mrb[0].mxu0 %v715
    %v833 = vpop.f32.mrb[0].mxu0
    %v834 = vadd.f32 0.0, %v833
    %v835 = vpop.f32.mrb[0].mxu0
    %v836 = vpop.f32.mrb[0].mxu0
    %v837 = vadd.f32 0.0, %v836
    %v838 = vpop.f32.mrb[0].mxu0
    %839 = vmatprep.mubr.bf16.mxu0 0
    %840 = vmatmul.mubr.bf16.gmra.mrb[0].mxu0 %v718
    %v841 = vpop.f32.mrb[0].mxu0
    %v842 = vadd.f32 0.0, %v841
    %v843 = vpop.f32.mrb[0].mxu0
    %v844 = vpop.f32.mrb[0].mxu0
    %v845 = vadd.f32 0.0, %v844
    %v846 = vpop.f32.mrb[0].mxu0
    %847 = vmatprep.mubr.bf16.mxu0 0
    %848 = vmatmul.mubr.bf16.gmra.mrb[0].mxu0 %v721
    %v849 = vpop.f32.mrb[0].mxu0
    %v850 = vadd.f32 0.0, %v849
    %v851 = vpop.f32.mrb[0].mxu0
    %v852 = vpop.f32.mrb[0].mxu0
    %v853 = vadd.f32 0.0, %v852
    %v854 = vpop.f32.mrb[0].mxu0
    %855 = vmatprep.mubr.bf16.mxu0 0
    %856 = vmatmul.mubr.bf16.gmra.mrb[0].mxu0 %v724
    %v857 = vpop.f32.mrb[0].mxu0
    %v858 = vadd.f32 0.0, %v857
    %v859 = vpop.f32.mrb[0].mxu0
    %v860 = vpop.f32.mrb[0].mxu0
    %v861 = vadd.f32 0.0, %v860
    %v862 = vpop.f32.mrb[0].mxu0
    %863 = vmatprep.mubr.bf16.mxu0 0
    %864 = vmatmul.mubr.bf16.gmra.mrb[0].mxu0 %v727
    %v865 = vpop.f32.mrb[0].mxu0
    %v866 = vadd.f32 0.0, %v865
    %v867 = vpop.f32.mrb[0].mxu0
    %v868 = vpop.f32.mrb[0].mxu0
    %v869 = vadd.f32 0.0, %v868
    %v870 = vpop.f32.mrb[0].mxu0
    %871 = vmatprep.mubr.bf16.mxu0 0
    %872 = vmatmul.mubr.bf16.gmra.mrb[0].mxu0 %v730
    %v873 = vpop.f32.mrb[0].mxu0
    %v874 = vadd.f32 0.0, %v873
    %v875 = vpop.f32.mrb[0].mxu0
    %v876 = vpop.f32.mrb[0].mxu0
    %v877 = vadd.f32 0.0, %v876
    %v878 = vpop.f32.mrb[0].mxu0
    %879 = vmatprep.mubr.bf16.mxu0 0
    %880 = vmatmul.mubr.bf16.gmra.mrb[0].mxu0 %v733
    %v881 = vpop.f32.mrb[0].mxu0
    %v882 = vadd.f32 0.0, %v881
    %v883 = vpop.f32.mrb[0].mxu0
    %v884 = vpop.f32.mrb[0].mxu0
    %v885 = vadd.f32 0.0, %v884
    %v886 = vpop.f32.mrb[0].mxu0
    %887 = vmatprep.mubr.bf16.mxu0 0
    %888 = vmatmul.mubr.bf16.gmra.mrb[0].mxu0 %v736
    %v889 = vpop.f32.mrb[0].mxu0
    %v890 = vadd.f32 0.0, %v889
    %v891 = vpop.f32.mrb[0].mxu0
    %v892 = vpop.f32.mrb[0].mxu0
    %v893 = vadd.f32 0.0, %v892
    %v894 = vpop.f32.mrb[0].mxu0
    %895 = vmatprep.mubr.bf16.mxu0 0
    %896 = vmatmul.mubr.bf16.gmra.mrb[0].mxu0 %v739
    %v897 = vpop.f32.mrb[0].mxu0
    %v898 = vadd.f32 0.0, %v897
    %v899 = vpop.f32.mrb[0].mxu0
    %v900 = vpop.f32.mrb[0].mxu0
    %v901 = vadd.f32 0.0, %v900
    %v902 = vpop.f32.mrb[0].mxu0
    %903 = vmatprep.mubr.bf16.mxu0 0
    %904 = vmatmul.mubr.bf16.gmra.mrb[0].mxu0 %v742
    %v905 = vpop.f32.mrb[0].mxu0
    %v906 = vadd.f32 0.0, %v905
    %v907 = vpop.f32.mrb[0].mxu0
    %v908 = vpop.f32.mrb[0].mxu0
    %v909 = vadd.f32 0.0, %v908
    %v910 = vpop.f32.mrb[0].mxu0
    %911 = vmatprep.mubr.bf16.mxu0 0
    %912 = vmatmul.mubr.bf16.gmra.mrb[0].mxu0 %v745
    %v913 = vpop.f32.mrb[0].mxu0
    %v914 = vadd.f32 0.0, %v913
    %v915 = vpop.f32.mrb[0].mxu0
    %v916 = vpop.f32.mrb[0].mxu0
    %v917 = vadd.f32 0.0, %v916
    %v918 = vpop.f32.mrb[0].mxu0
    %919 = vmatprep.mubr.bf16.mxu0 0
    %920 = vmatmul.mubr.bf16.gmra.mrb[0].mxu0 %v748
    %v921 = vpop.f32.mrb[0].mxu0
    %v922 = vadd.f32 0.0, %v921
    %v923 = vpop.f32.mrb[0].mxu0
    %v924 = vpop.f32.mrb[0].mxu0
    %v925 = vadd.f32 0.0, %v924
    %v926 = vpop.f32.mrb[0].mxu0
    %927 = vmatprep.mubr.bf16.mxu0 0
    %928 = vmatmul.mubr.bf16.gmra.mrb[0].mxu0 %v751
    %v929 = vpop.f32.mrb[0].mxu0
    %v930 = vadd.f32 0.0, %v929
    %v931 = vpop.f32.mrb[0].mxu0
    %v932 = vpop.f32.mrb[0].mxu0
    %v933 = vadd.f32 0.0, %v932
    %v934 = vpop.f32.mrb[0].mxu0
    %935 = vmatprep.mubr.bf16.mxu0 0
    %936 = vmatmul.mubr.bf16.gmra.mrb[0].mxu0 %v754
    %v937 = vpop.f32.mrb[0].mxu0
    %v938 = vadd.f32 0.0, %v937
    %v939 = vpop.f32.mrb[0].mxu0
    %v940 = vpop.f32.mrb[0].mxu0
    %v941 = vadd.f32 0.0, %v940
    %v942 = vpop.f32.mrb[0].mxu0
    %943 = vmatprep.mubr.bf16.mxu0 0
    %944 = vmatmul.mubr.bf16.gmra.mrb[0].mxu0 %v757
    %v945 = vpop.f32.mrb[0].mxu0
    %v946 = vadd.f32 0.0, %v945
    %v947 = vpop.f32.mrb[0].mxu0
    %v948 = vpop.f32.mrb[0].mxu0
    %v949 = vadd.f32 0.0, %v948
    %v950 = vpop.f32.mrb[0].mxu0
    %951 = vmatprep.mubr.bf16.mxu0 0
    %952 = vmatmul.mubr.bf16.gmra.mrb[0].mxu0 %v760
    %v953 = vpop.f32.mrb[0].mxu0
    %v954 = vadd.f32 0.0, %v953
    %v955 = vpop.f32.mrb[0].mxu0
    %v956 = vpop.f32.mrb[0].mxu0
    %v957 = vadd.f32 0.0, %v956
    %v958 = vpop.f32.mrb[0].mxu0
    %959 = vmatprep.mubr.bf16.mxu0 0
    %960 = vmatmul.mubr.bf16.gmra.mrb[0].mxu0 %v763
    %v961 = vpop.f32.mrb[0].mxu0
    %v962 = vadd.f32 0.0, %v961
    %v963 = vpop.f32.mrb[0].mxu0
    %v964 = vpop.f32.mrb[0].mxu0
    %v965 = vadd.f32 0.0, %v964
    %v966 = vpop.f32.mrb[0].mxu0
    %967 = vmatprep.mubr.bf16.mxu0 0
    %968 = vmatmul.mubr.bf16.gmra.mrb[0].mxu0 %v766
    %v969 = vpop.f32.mrb[0].mxu0
    %v970 = vadd.f32 0.0, %v969
    %v971 = vpop.f32.mrb[0].mxu0
    %v972 = vpop.f32.mrb[0].mxu0
    %v973 = vadd.f32 0.0, %v972
    %v974 = vpop.f32.mrb[0].mxu0
    %975 = vmatprep.mubr.bf16.mxu0 0
    %976 = vmatmul.mubr.bf16.gmra.mrb[0].mxu0 %v769
    %v977 = vpop.f32.mrb[0].mxu0
    %v978 = vadd.f32 0.0, %v977
    %v979 = vpop.f32.mrb[0].mxu0
    %v980 = vpop.f32.mrb[0].mxu0
    %v981 = vadd.f32 0.0, %v980
    %v982 = vpop.f32.mrb[0].mxu0
    %983 = vmatprep.mubr.bf16.mxu0 0
    %984 = vmatmul.mubr.bf16.gmra.mrb[0].mxu0 %v772
    %v985 = vpop.f32.mrb[0].mxu0
    %v986 = vadd.f32 0.0, %v985
    %v987 = vpop.f32.mrb[0].mxu0
    %v988 = vpop.f32.mrb[0].mxu0
    %v989 = vadd.f32 0.0, %v988
    %v990 = vpop.f32.mrb[0].mxu0
    %991 = vmatprep.mubr.bf16.mxu0 0
    %992 = vmatmul.mubr.bf16.gmra.mrb[0].mxu0 %v775
    %v993 = vpop.f32.mrb[0].mxu0
    %v994 = vadd.f32 0.0, %v993
    %v995 = vpop.f32.mrb[0].mxu0
    %v996 = vpop.f32.mrb[0].mxu0
    %v997 = vadd.f32 0.0, %v996
    %v998 = vpop.f32.mrb[0].mxu0
    %999 = vmatprep.mubr.bf16.mxu0 0
    %1000 = vmatmul.mubr.bf16.gmra.mrb[0].mxu0 %v778
    %v1001 = vpop.f32.mrb[0].mxu0
    %v1002 = vadd.f32 0.0, %v1001
    %v1003 = vpop.f32.mrb[0].mxu0
    %v1004 = vpop.f32.mrb[0].mxu0
    %v1005 = vadd.f32 0.0, %v1004
    %v1006 = vpop.f32.mrb[0].mxu0
    %1007 = vmatprep.mubr.bf16.mxu0 0
    %1008 = vmatmul.mubr.bf16.gmra.mrb[0].mxu0 %v781
    %v1009 = vpop.f32.mrb[0].mxu0
    %v1010 = vadd.f32 0.0, %v1009
    %v1011 = vpop.f32.mrb[0].mxu0
    %v1012 = vpop.f32.mrb[0].mxu0
    %v1013 = vpop.f32.mrb[0].mxu0
    %1014 = vdwg.mxu0
    %v1015 = vmax.f32 %v338, %v818
    %v1016 = vmax.f32 %v341, %v821
    %v1017 = vmax.f32 %v346, %v826
    %v1018 = vmax.f32 %v349, %v829
    %v1019 = vmax.f32 %v354, %v834
    %v1020 = vmax.f32 %v357, %v837
    %v1021 = vmax.f32 %v362, %v842
    %v1022 = vmax.f32 %v365, %v845
    %v1023 = vmax.f32 %v370, %v850
    %v1024 = vmax.f32 %v373, %v853
    %v1025 = vmax.f32 %v378, %v858
    %v1026 = vmax.f32 %v381, %v861
    %v1027 = vmax.f32 %v386, %v866
    %v1028 = vmax.f32 %v389, %v869
    %v1029 = vmax.f32 %v394, %v874
    %v1030 = vmax.f32 %v397, %v877
    %v1031 = vmax.f32 %v402, %v882
    %v1032 = vmax.f32 %v405, %v885
    %v1033 = vmax.f32 %v410, %v890
    %v1034 = vmax.f32 %v413, %v893
    %v1035 = vmax.f32 %v418, %v898
    %v1036 = vmax.f32 %v421, %v901
    %v1037 = vmax.f32 %v426, %v906
    %v1038 = vmax.f32 %v429, %v909
    %v1039 = vmax.f32 %v434, %v914
    %v1040 = vmax.f32 %v437, %v917
    %v1041 = vmax.f32 %v442, %v922
    %v1042 = vmax.f32 %v445, %v925
    %v1043 = vmax.f32 %v450, %v930
    %v1044 = vmax.f32 %v453, %v933
    %v1045 = vmax.f32 %v458, %v938
    %v1046 = vmax.f32 %v461, %v941
    %v1047 = vmax.f32 %v466, %v946
    %v1048 = vmax.f32 %v469, %v949
    %v1049 = vmax.f32 %v474, %v954
    %v1050 = vmax.f32 %v477, %v957
    %v1051 = vmax.f32 %v482, %v962
    %v1052 = vmax.f32 %v485, %v965
    %v1053 = vmax.f32 %v490, %v970
    %v1054 = vmax.f32 %v493, %v973
    %v1055 = vmax.f32 %v498, %v978
    %v1056 = vmax.f32 %v501, %v981
    %v1057 = vmax.f32 %v506, %v986
    %v1058 = vmax.f32 %v509, %v989
    %v1059 = vmax.f32 %v514, %v994
    %v1060 = vmax.f32 %v517, %v997
    %v1061 = vmax.f32 %v522, %v1002
    %v1062 = vmax.f32 %v525, %v1005
    %v1063 = vmax.f32 %v530, %v1010
    %s1064 = scalar_lea.vmem %s0, 392
    %v1065 = vld [vmem:[%s1064] sm:$0xf]
    %v1066 = vld [vmem:[%s1064 + $0x4] sm:$0xf]
    %v1067 = vld [vmem:[%s1064 + $0x8] sm:$0xf]
    %v1068 = vld [vmem:[%s1064 + $0xc] sm:$0xf]
    %v1069 = vld [vmem:[%s1064 + $0x10] sm:$0xf]
    %v1070 = vld [vmem:[%s1064 + $0x14] sm:$0xf]
    %v1071 = vld [vmem:[%s1064 + $0x18] sm:$0xf]
    %v1072 = vld [vmem:[%s1064 + $0x1c] sm:$0xf]
    %v1073 = vld [vmem:[%s1064 + $0x20] sm:$0xf]
    %v1074 = vld [vmem:[%s1064 + $0x24] sm:$0xf]
    %v1075 = vld [vmem:[%s1064 + $0x28] sm:$0xf]
    %v1076 = vld [vmem:[%s1064 + $0x2c] sm:$0xf]
    %v1077 = vld [vmem:[%s1064 + $0x30] sm:$0xf]
    %v1078 = vld [vmem:[%s1064 + $0x34] sm:$0xf]
    %v1079 = vld [vmem:[%s1064 + $0x38] sm:$0xf]
    %v1080 = vld [vmem:[%s1064 + $0x3c] sm:$0xf]
    %v1081 = vld [vmem:[%s1064 + $0x40] sm:$0xf]
    %v1082 = vld [vmem:[%s1064 + $0x44] sm:$0xf]
    %v1083 = vld [vmem:[%s1064 + $0x48] sm:$0xf]
    %v1084 = vld [vmem:[%s1064 + $0x4c] sm:$0xf]
    %v1085 = vld [vmem:[%s1064 + $0x50] sm:$0xf]
    %v1086 = vld [vmem:[%s1064 + $0x54] sm:$0xf]
    %v1087 = vld [vmem:[%s1064 + $0x58] sm:$0xf]
    %v1088 = vld [vmem:[%s1064 + $0x5c] sm:$0xf]
    %v1089 = vld [vmem:[%s1064 + $0x60] sm:$0xf]
    %v1090 = vld [vmem:[%s1064 + $0x64] sm:$0xf]
    %v1091 = vld [vmem:[%s1064 + $0x68] sm:$0xf]
    %v1092 = vld [vmem:[%s1064 + $0x6c] sm:$0xf]
    %v1093 = vld [vmem:[%s1064 + $0x70] sm:$0xf]
    %v1094 = vld [vmem:[%s1064 + $0x74] sm:$0xf]
    %v1095 = vld [vmem:[%s1064 + $0x78] sm:$0xf]
    %v1096 = vld [vmem:[%s1064 + $0x7c] sm:$0xf]
    %v1097 = vld [vmem:[%s1064 + $0x80] sm:$0xf]
    %v1098 = vld [vmem:[%s1064 + $0x84] sm:$0xf]
    %v1099 = vld [vmem:[%s1064 + $0x88] sm:$0xf]
    %v1100 = vld [vmem:[%s1064 + $0x8c] sm:$0xf]
    %v1101 = vld [vmem:[%s1064 + $0x90] sm:$0xf]
    %v1102 = vld [vmem:[%s1064 + $0x94] sm:$0xf]
    %v1103 = vld [vmem:[%s1064 + $0x98] sm:$0xf]
    %v1104 = vld [vmem:[%s1064 + $0x9c] sm:$0xf]
    %v1105 = vld [vmem:[%s1064 + $0xa0] sm:$0xf]
    %v1106 = vld [vmem:[%s1064 + $0xa4] sm:$0xf]
    %v1107 = vld [vmem:[%s1064 + $0xa8] sm:$0xf]
    %v1108 = vld [vmem:[%s1064 + $0xac] sm:$0xf]
    %v1109 = vld [vmem:[%s1064 + $0xb0] sm:$0xf]
    %v1110 = vld [vmem:[%s1064 + $0xb4] sm:$0xf]
    %v1111 = vld [vmem:[%s1064 + $0xb8] sm:$0xf]
    %v1112 = vld [vmem:[%s1064 + $0xbc] sm:$0xf]
    %v1113 = vld [vmem:[%s1064 + $0xc0] sm:$0xf]
    %v1163 = vunpack.c.l.b16 %v1065
    %v1164 = vunpack.c.l.b16 %v1066
    %v1165 = vunpack.c.l.b16 %v1067
    %v1166 = vunpack.c.l.b16 %v1068
    %v1167 = vunpack.c.l.b16 %v1069
    %v1168 = vunpack.c.l.b16 %v1070
    %v1169 = vunpack.c.l.b16 %v1071
    %v1170 = vunpack.c.l.b16 %v1072
    %v1171 = vunpack.c.l.b16 %v1073
    %v1172 = vunpack.c.l.b16 %v1074
    %v1173 = vunpack.c.l.b16 %v1075
    %v1174 = vunpack.c.l.b16 %v1076
    %v1175 = vunpack.c.l.b16 %v1077
    %v1176 = vunpack.c.l.b16 %v1078
    %v1177 = vunpack.c.l.b16 %v1079
    %v1178 = vunpack.c.l.b16 %v1080
    %v1179 = vunpack.c.l.b16 %v1081
    %v1180 = vunpack.c.l.b16 %v1082
    %v1181 = vunpack.c.l.b16 %v1083
    %v1182 = vunpack.c.l.b16 %v1084
    %v1183 = vunpack.c.l.b16 %v1085
    %v1184 = vunpack.c.l.b16 %v1086
    %v1185 = vunpack.c.l.b16 %v1087
    %v1186 = vunpack.c.l.b16 %v1088
    %v1187 = vunpack.c.l.b16 %v1089
    %v1188 = vunpack.c.l.b16 %v1090
    %v1189 = vunpack.c.l.b16 %v1091
    %v1190 = vunpack.c.l.b16 %v1092
    %v1191 = vunpack.c.l.b16 %v1093
    %v1192 = vunpack.c.l.b16 %v1094
    %v1193 = vunpack.c.l.b16 %v1095
    %v1194 = vunpack.c.l.b16 %v1096
    %v1195 = vunpack.c.l.b16 %v1097
    %v1196 = vunpack.c.l.b16 %v1098
    %v1197 = vunpack.c.l.b16 %v1099
    %v1198 = vunpack.c.l.b16 %v1100
    %v1199 = vunpack.c.l.b16 %v1101
    %v1200 = vunpack.c.l.b16 %v1102
    %v1201 = vunpack.c.l.b16 %v1103
    %v1202 = vunpack.c.l.b16 %v1104
    %v1203 = vunpack.c.l.b16 %v1105
    %v1204 = vunpack.c.l.b16 %v1106
    %v1205 = vunpack.c.l.b16 %v1107
    %v1206 = vunpack.c.l.b16 %v1108
    %v1207 = vunpack.c.l.b16 %v1109
    %v1208 = vunpack.c.l.b16 %v1110
    %v1209 = vunpack.c.l.b16 %v1111
    %v1210 = vunpack.c.l.b16 %v1112
    %v1211 = vunpack.c.l.b16 %v1113
    %v1212 = vpack.c.b16 %v1164, %v1163
    %v1213 = vpack.c.b16 %v1166, %v1165
    %v1214 = vpack.c.b16 %v1168, %v1167
    %v1215 = vpack.c.b16 %v1170, %v1169
    %v1216 = vpack.c.b16 %v1172, %v1171
    %v1217 = vpack.c.b16 %v1174, %v1173
    %v1218 = vpack.c.b16 %v1176, %v1175
    %v1219 = vpack.c.b16 %v1178, %v1177
    %v1220 = vpack.c.b16 %v1180, %v1179
    %v1221 = vpack.c.b16 %v1182, %v1181
    %v1222 = vpack.c.b16 %v1184, %v1183
    %v1223 = vpack.c.b16 %v1186, %v1185
    %v1224 = vpack.c.b16 %v1188, %v1187
    %v1225 = vpack.c.b16 %v1190, %v1189
    %v1226 = vpack.c.b16 %v1192, %v1191
    %v1227 = vpack.c.b16 %v1194, %v1193
    %v1228 = vpack.c.b16 %v1196, %v1195
    %v1229 = vpack.c.b16 %v1198, %v1197
    %v1230 = vpack.c.b16 %v1200, %v1199
    %v1231 = vpack.c.b16 %v1202, %v1201
    %v1232 = vpack.c.b16 %v1204, %v1203
    %v1233 = vpack.c.b16 %v1206, %v1205
    %v1234 = vpack.c.b16 %v1208, %v1207
    %v1235 = vpack.c.b16 %v1210, %v1209
    %v1236 = vpack.c.b16 %v1211, %v1211
    %v1238 = vsel %vm220, %v1212, 0
    %v1241 = vsel %vm220, %v1213, 0
    %v1244 = vsel %vm220, %v1214, 0
    %v1247 = vsel %vm220, %v1215, 0
    %v1250 = vsel %vm220, %v1216, 0
    %v1253 = vsel %vm220, %v1217, 0
    %v1256 = vsel %vm220, %v1218, 0
    %v1259 = vsel %vm220, %v1219, 0
    %v1262 = vsel %vm220, %v1220, 0
    %v1265 = vsel %vm220, %v1221, 0
    %v1268 = vsel %vm220, %v1222, 0
    %v1271 = vsel %vm220, %v1223, 0
    %v1274 = vsel %vm220, %v1224, 0
    %v1277 = vsel %vm220, %v1225, 0
    %v1280 = vsel %vm220, %v1226, 0
    %v1283 = vsel %vm220, %v1227, 0
    %v1286 = vsel %vm220, %v1228, 0
    %v1289 = vsel %vm220, %v1229, 0
    %v1292 = vsel %vm220, %v1230, 0
    %v1295 = vsel %vm220, %v1231, 0
    %v1298 = vsel %vm220, %v1232, 0
    %v1301 = vsel %vm220, %v1233, 0
    %v1304 = vsel %vm220, %v1234, 0
    %v1307 = vsel %vm220, %v1235, 0
    %v1310 = vsel %vm220, %v1236, 0
    %1312 = vmatprep.subr.bf16.mxu0 0
    %1313 = vmatpush1.bf16.msra.mxu0 %v301
    %1314 = vmatprep.subr.bf16.mxu0 0
    %1315 = vmatpush1.bf16.msra.mxu0 0
    %1316 = vmatprep.subr.bf16.mxu0 0
    %1317 = vmatpush1.bf16.msra.mxu0 0
    %1318 = vmatprep.subr.bf16.mxu0 0
    %1319 = vmatpush1.bf16.msra.mxu0 0
    %1320 = vmatprep.subr.bf16.mxu0 0
    %1321 = vmatpush1.bf16.msra.mxu0 0
    %1322 = vmatprep.subr.bf16.mxu0 0
    %1323 = vmatpush1.bf16.msra.mxu0 0
    %1324 = vmatprep.subr.bf16.mxu0 0
    %1325 = vmatpush1.bf16.msra.mxu0 0
    %1326 = vmatprep.subr.bf16.mxu0 0
    %1327 = vmatpush1.bf16.msra.mxu0 0
    %1328 = vmatprep.subr.bf16.mxu0 0
    %1329 = vmatpush1.bf16.msra.mxu0 0
    %1330 = vmatprep.subr.bf16.mxu0 0
    %1331 = vmatpush1.bf16.msra.mxu0 0
    %1332 = vmatprep.subr.bf16.mxu0 0
    %1333 = vmatpush1.bf16.msra.mxu0 0
    %1334 = vmatprep.subr.bf16.mxu0 0
    %1335 = vmatpush1.bf16.msra.mxu0 0
    %1336 = vmatprep.subr.bf16.mxu0 0
    %1337 = vmatpush1.bf16.msra.mxu0 0
    %1338 = vmatprep.subr.bf16.mxu0 0
    %1339 = vmatpush1.bf16.msra.mxu0 0
    %1340 = vmatprep.subr.bf16.mxu0 0
    %1341 = vmatpush1.bf16.msra.mxu0 0
    %1342 = vmatprep.subr.bf16.mxu0 0
    %1343 = vmatpush1.bf16.msra.mxu0 0
    %1344 = vmatprep.mubr.bf16.mxu0 0
    %1345 = vmatmul.mubr.bf16.gmra.mrb[0].mxu0 %v1238
    %v1346 = vpop.f32.mrb[0].mxu0
    %v1347 = vadd.f32 0.0, %v1346
    %v1348 = vpop.f32.mrb[0].mxu0
    %v1349 = vpop.f32.mrb[0].mxu0
    %v1350 = vadd.f32 0.0, %v1349
    %v1351 = vpop.f32.mrb[0].mxu0
    %1352 = vmatprep.mubr.bf16.mxu0 0
    %1353 = vmatmul.mubr.bf16.gmra.mrb[0].mxu0 %v1241
    %v1354 = vpop.f32.mrb[0].mxu0
    %v1355 = vadd.f32 0.0, %v1354
    %v1356 = vpop.f32.mrb[0].mxu0
    %v1357 = vpop.f32.mrb[0].mxu0
    %v1358 = vadd.f32 0.0, %v1357
    %v1359 = vpop.f32.mrb[0].mxu0
    %1360 = vmatprep.mubr.bf16.mxu0 0
    %1361 = vmatmul.mubr.bf16.gmra.mrb[0].mxu0 %v1244
    %v1362 = vpop.f32.mrb[0].mxu0
    %v1363 = vadd.f32 0.0, %v1362
    %v1364 = vpop.f32.mrb[0].mxu0
    %v1365 = vpop.f32.mrb[0].mxu0
    %v1366 = vadd.f32 0.0, %v1365
    %v1367 = vpop.f32.mrb[0].mxu0
    %1368 = vmatprep.mubr.bf16.mxu0 0
    %1369 = vmatmul.mubr.bf16.gmra.mrb[0].mxu0 %v1247
    %v1370 = vpop.f32.mrb[0].mxu0
    %v1371 = vadd.f32 0.0, %v1370
    %v1372 = vpop.f32.mrb[0].mxu0
    %v1373 = vpop.f32.mrb[0].mxu0
    %v1374 = vadd.f32 0.0, %v1373
    %v1375 = vpop.f32.mrb[0].mxu0
    %1376 = vmatprep.mubr.bf16.mxu0 0
    %1377 = vmatmul.mubr.bf16.gmra.mrb[0].mxu0 %v1250
    %v1378 = vpop.f32.mrb[0].mxu0
    %v1379 = vadd.f32 0.0, %v1378
    %v1380 = vpop.f32.mrb[0].mxu0
    %v1381 = vpop.f32.mrb[0].mxu0
    %v1382 = vadd.f32 0.0, %v1381
    %v1383 = vpop.f32.mrb[0].mxu0
    %1384 = vmatprep.mubr.bf16.mxu0 0
    %1385 = vmatmul.mubr.bf16.gmra.mrb[0].mxu0 %v1253
    %v1386 = vpop.f32.mrb[0].mxu0
    %v1387 = vadd.f32 0.0, %v1386
    %v1388 = vpop.f32.mrb[0].mxu0
    %v1389 = vpop.f32.mrb[0].mxu0
    %v1390 = vadd.f32 0.0, %v1389
    %v1391 = vpop.f32.mrb[0].mxu0
    %1392 = vmatprep.mubr.bf16.mxu0 0
    %1393 = vmatmul.mubr.bf16.gmra.mrb[0].mxu0 %v1256
    %v1394 = vpop.f32.mrb[0].mxu0
    %v1395 = vadd.f32 0.0, %v1394
    %v1396 = vpop.f32.mrb[0].mxu0
    %v1397 = vpop.f32.mrb[0].mxu0
    %v1398 = vadd.f32 0.0, %v1397
    %v1399 = vpop.f32.mrb[0].mxu0
    %1400 = vmatprep.mubr.bf16.mxu0 0
    %1401 = vmatmul.mubr.bf16.gmra.mrb[0].mxu0 %v1259
    %v1402 = vpop.f32.mrb[0].mxu0
    %v1403 = vadd.f32 0.0, %v1402
    %v1404 = vpop.f32.mrb[0].mxu0
    %v1405 = vpop.f32.mrb[0].mxu0
    %v1406 = vadd.f32 0.0, %v1405
    %v1407 = vpop.f32.mrb[0].mxu0
    %1408 = vmatprep.mubr.bf16.mxu0 0
    %1409 = vmatmul.mubr.bf16.gmra.mrb[0].mxu0 %v1262
    %v1410 = vpop.f32.mrb[0].mxu0
    %v1411 = vadd.f32 0.0, %v1410
    %v1412 = vpop.f32.mrb[0].mxu0
    %v1413 = vpop.f32.mrb[0].mxu0
    %v1414 = vadd.f32 0.0, %v1413
    %v1415 = vpop.f32.mrb[0].mxu0
    %1416 = vmatprep.mubr.bf16.mxu0 0
    %1417 = vmatmul.mubr.bf16.gmra.mrb[0].mxu0 %v1265
    %v1418 = vpop.f32.mrb[0].mxu0
    %v1419 = vadd.f32 0.0, %v1418
    %v1420 = vpop.f32.mrb[0].mxu0
    %v1421 = vpop.f32.mrb[0].mxu0
    %v1422 = vadd.f32 0.0, %v1421
    %v1423 = vpop.f32.mrb[0].mxu0
    %1424 = vmatprep.mubr.bf16.mxu0 0
    %1425 = vmatmul.mubr.bf16.gmra.mrb[0].mxu0 %v1268
    %v1426 = vpop.f32.mrb[0].mxu0
    %v1427 = vadd.f32 0.0, %v1426
    %v1428 = vpop.f32.mrb[0].mxu0
    %v1429 = vpop.f32.mrb[0].mxu0
    %v1430 = vadd.f32 0.0, %v1429
    %v1431 = vpop.f32.mrb[0].mxu0
    %1432 = vmatprep.mubr.bf16.mxu0 0
    %1433 = vmatmul.mubr.bf16.gmra.mrb[0].mxu0 %v1271
    %v1434 = vpop.f32.mrb[0].mxu0
    %v1435 = vadd.f32 0.0, %v1434
    %v1436 = vpop.f32.mrb[0].mxu0
    %v1437 = vpop.f32.mrb[0].mxu0
    %v1438 = vadd.f32 0.0, %v1437
    %v1439 = vpop.f32.mrb[0].mxu0
    %1440 = vmatprep.mubr.bf16.mxu0 0
    %1441 = vmatmul.mubr.bf16.gmra.mrb[0].mxu0 %v1274
    %v1442 = vpop.f32.mrb[0].mxu0
    %v1443 = vadd.f32 0.0, %v1442
    %v1444 = vpop.f32.mrb[0].mxu0
    %v1445 = vpop.f32.mrb[0].mxu0
    %v1446 = vadd.f32 0.0, %v1445
    %v1447 = vpop.f32.mrb[0].mxu0
    %1448 = vmatprep.mubr.bf16.mxu0 0
    %1449 = vmatmul.mubr.bf16.gmra.mrb[0].mxu0 %v1277
    %v1450 = vpop.f32.mrb[0].mxu0
    %v1451 = vadd.f32 0.0, %v1450
    %v1452 = vpop.f32.mrb[0].mxu0
    %v1453 = vpop.f32.mrb[0].mxu0
    %v1454 = vadd.f32 0.0, %v1453
    %v1455 = vpop.f32.mrb[0].mxu0
    %1456 = vmatprep.mubr.bf16.mxu0 0
    %1457 = vmatmul.mubr.bf16.gmra.mrb[0].mxu0 %v1280
    %v1458 = vpop.f32.mrb[0].mxu0
    %v1459 = vadd.f32 0.0, %v1458
    %v1460 = vpop.f32.mrb[0].mxu0
    %v1461 = vpop.f32.mrb[0].mxu0
    %v1462 = vadd.f32 0.0, %v1461
    %v1463 = vpop.f32.mrb[0].mxu0
    %1464 = vmatprep.mubr.bf16.mxu0 0
    %1465 = vmatmul.mubr.bf16.gmra.mrb[0].mxu0 %v1283
    %v1466 = vpop.f32.mrb[0].mxu0
    %v1467 = vadd.f32 0.0, %v1466
    %v1468 = vpop.f32.mrb[0].mxu0
    %v1469 = vpop.f32.mrb[0].mxu0
    %v1470 = vadd.f32 0.0, %v1469
    %v1471 = vpop.f32.mrb[0].mxu0
    %1472 = vmatprep.mubr.bf16.mxu0 0
    %1473 = vmatmul.mubr.bf16.gmra.mrb[0].mxu0 %v1286
    %v1474 = vpop.f32.mrb[0].mxu0
    %v1475 = vadd.f32 0.0, %v1474
    %v1476 = vpop.f32.mrb[0].mxu0
    %v1477 = vpop.f32.mrb[0].mxu0
    %v1478 = vadd.f32 0.0, %v1477
    %v1479 = vpop.f32.mrb[0].mxu0
    %1480 = vmatprep.mubr.bf16.mxu0 0
    %1481 = vmatmul.mubr.bf16.gmra.mrb[0].mxu0 %v1289
    %v1482 = vpop.f32.mrb[0].mxu0
    %v1483 = vadd.f32 0.0, %v1482
    %v1484 = vpop.f32.mrb[0].mxu0
    %v1485 = vpop.f32.mrb[0].mxu0
    %v1486 = vadd.f32 0.0, %v1485
    %v1487 = vpop.f32.mrb[0].mxu0
    %1488 = vmatprep.mubr.bf16.mxu0 0
    %1489 = vmatmul.mubr.bf16.gmra.mrb[0].mxu0 %v1292
    %v1490 = vpop.f32.mrb[0].mxu0
    %v1491 = vadd.f32 0.0, %v1490
    %v1492 = vpop.f32.mrb[0].mxu0
    %v1493 = vpop.f32.mrb[0].mxu0
    %v1494 = vadd.f32 0.0, %v1493
    %v1495 = vpop.f32.mrb[0].mxu0
    %1496 = vmatprep.mubr.bf16.mxu0 0
    %1497 = vmatmul.mubr.bf16.gmra.mrb[0].mxu0 %v1295
    %v1498 = vpop.f32.mrb[0].mxu0
    %v1499 = vadd.f32 0.0, %v1498
    %v1500 = vpop.f32.mrb[0].mxu0
    %v1501 = vpop.f32.mrb[0].mxu0
    %v1502 = vadd.f32 0.0, %v1501
    %v1503 = vpop.f32.mrb[0].mxu0
    %1504 = vmatprep.mubr.bf16.mxu0 0
    %1505 = vmatmul.mubr.bf16.gmra.mrb[0].mxu0 %v1298
    %v1506 = vpop.f32.mrb[0].mxu0
    %v1507 = vadd.f32 0.0, %v1506
    %v1508 = vpop.f32.mrb[0].mxu0
    %v1509 = vpop.f32.mrb[0].mxu0
    %v1510 = vadd.f32 0.0, %v1509
    %v1511 = vpop.f32.mrb[0].mxu0
    %1512 = vmatprep.mubr.bf16.mxu0 0
    %1513 = vmatmul.mubr.bf16.gmra.mrb[0].mxu0 %v1301
    %v1514 = vpop.f32.mrb[0].mxu0
    %v1515 = vadd.f32 0.0, %v1514
    %v1516 = vpop.f32.mrb[0].mxu0
    %v1517 = vpop.f32.mrb[0].mxu0
    %v1518 = vadd.f32 0.0, %v1517
    %v1519 = vpop.f32.mrb[0].mxu0
    %1520 = vmatprep.mubr.bf16.mxu0 0
    %1521 = vmatmul.mubr.bf16.gmra.mrb[0].mxu0 %v1304
    %v1522 = vpop.f32.mrb[0].mxu0
    %v1523 = vadd.f32 0.0, %v1522
    %v1524 = vpop.f32.mrb[0].mxu0
    %v1525 = vpop.f32.mrb[0].mxu0
    %v1526 = vadd.f32 0.0, %v1525
    %v1527 = vpop.f32.mrb[0].mxu0
    %1528 = vmatprep.mubr.bf16.mxu0 0
    %1529 = vmatmul.mubr.bf16.gmra.mrb[0].mxu0 %v1307
    %v1530 = vpop.f32.mrb[0].mxu0
    %v1531 = vadd.f32 0.0, %v1530
    %v1532 = vpop.f32.mrb[0].mxu0
    %v1533 = vpop.f32.mrb[0].mxu0
    %v1534 = vadd.f32 0.0, %v1533
    %v1535 = vpop.f32.mrb[0].mxu0
    %1536 = vmatprep.mubr.bf16.mxu0 0
    %1537 = vmatmul.mubr.bf16.gmra.mrb[0].mxu0 %v1310
    %v1538 = vpop.f32.mrb[0].mxu0
    %v1539 = vadd.f32 0.0, %v1538
    %v1540 = vpop.f32.mrb[0].mxu0
    %v1541 = vpop.f32.mrb[0].mxu0
    %v1542 = vpop.f32.mrb[0].mxu0
    %1543 = vdwg.mxu0
    %v1544 = vmax.f32 %v1015, %v1347
    %v1545 = vmax.f32 %v1016, %v1350
    %v1546 = vmax.f32 %v1017, %v1355
    %v1547 = vmax.f32 %v1018, %v1358
    %v1548 = vmax.f32 %v1019, %v1363
    %v1549 = vmax.f32 %v1020, %v1366
    %v1550 = vmax.f32 %v1021, %v1371
    %v1551 = vmax.f32 %v1022, %v1374
    %v1552 = vmax.f32 %v1023, %v1379
    %v1553 = vmax.f32 %v1024, %v1382
    %v1554 = vmax.f32 %v1025, %v1387
    %v1555 = vmax.f32 %v1026, %v1390
    %v1556 = vmax.f32 %v1027, %v1395
    %v1557 = vmax.f32 %v1028, %v1398
    %v1558 = vmax.f32 %v1029, %v1403
    %v1559 = vmax.f32 %v1030, %v1406
    %v1560 = vmax.f32 %v1031, %v1411
    %v1561 = vmax.f32 %v1032, %v1414
    %v1562 = vmax.f32 %v1033, %v1419
    %v1563 = vmax.f32 %v1034, %v1422
    %v1564 = vmax.f32 %v1035, %v1427
    %v1565 = vmax.f32 %v1036, %v1430
    %v1566 = vmax.f32 %v1037, %v1435
    %v1567 = vmax.f32 %v1038, %v1438
    %v1568 = vmax.f32 %v1039, %v1443
    %v1569 = vmax.f32 %v1040, %v1446
    %v1570 = vmax.f32 %v1041, %v1451
    %v1571 = vmax.f32 %v1042, %v1454
    %v1572 = vmax.f32 %v1043, %v1459
    %v1573 = vmax.f32 %v1044, %v1462
    %v1574 = vmax.f32 %v1045, %v1467
    %v1575 = vmax.f32 %v1046, %v1470
    %v1576 = vmax.f32 %v1047, %v1475
    %v1577 = vmax.f32 %v1048, %v1478
    %v1578 = vmax.f32 %v1049, %v1483
    %v1579 = vmax.f32 %v1050, %v1486
    %v1580 = vmax.f32 %v1051, %v1491
    %v1581 = vmax.f32 %v1052, %v1494
    %v1582 = vmax.f32 %v1053, %v1499
    %v1583 = vmax.f32 %v1054, %v1502
    %v1584 = vmax.f32 %v1055, %v1507
    %v1585 = vmax.f32 %v1056, %v1510
    %v1586 = vmax.f32 %v1057, %v1515
    %v1587 = vmax.f32 %v1058, %v1518
    %v1588 = vmax.f32 %v1059, %v1523
    %v1589 = vmax.f32 %v1060, %v1526
    %v1590 = vmax.f32 %v1061, %v1531
    %v1591 = vmax.f32 %v1062, %v1534
    %v1592 = vmax.f32 %v1063, %v1539
    %s1593 = scalar_lea.vmem %s0, 588
    %v1594 = vld [vmem:[%s1593] sm:$0xf]
    %v1595 = vld [vmem:[%s1593 + $0x4] sm:$0xf]
    %v1596 = vld [vmem:[%s1593 + $0x8] sm:$0xf]
    %v1597 = vld [vmem:[%s1593 + $0xc] sm:$0xf]
    %v1598 = vld [vmem:[%s1593 + $0x10] sm:$0xf]
    %v1599 = vld [vmem:[%s1593 + $0x14] sm:$0xf]
    %v1600 = vld [vmem:[%s1593 + $0x18] sm:$0xf]
    %v1601 = vld [vmem:[%s1593 + $0x1c] sm:$0xf]
    %v1602 = vld [vmem:[%s1593 + $0x20] sm:$0xf]
    %v1603 = vld [vmem:[%s1593 + $0x24] sm:$0xf]
    %v1604 = vld [vmem:[%s1593 + $0x28] sm:$0xf]
    %v1605 = vld [vmem:[%s1593 + $0x2c] sm:$0xf]
    %v1606 = vld [vmem:[%s1593 + $0x30] sm:$0xf]
    %v1607 = vld [vmem:[%s1593 + $0x34] sm:$0xf]
    %v1608 = vld [vmem:[%s1593 + $0x38] sm:$0xf]
    %v1609 = vld [vmem:[%s1593 + $0x3c] sm:$0xf]
    %v1610 = vld [vmem:[%s1593 + $0x40] sm:$0xf]
    %v1611 = vld [vmem:[%s1593 + $0x44] sm:$0xf]
    %v1612 = vld [vmem:[%s1593 + $0x48] sm:$0xf]
    %v1613 = vld [vmem:[%s1593 + $0x4c] sm:$0xf]
    %v1614 = vld [vmem:[%s1593 + $0x50] sm:$0xf]
    %v1615 = vld [vmem:[%s1593 + $0x54] sm:$0xf]
    %v1616 = vld [vmem:[%s1593 + $0x58] sm:$0xf]
    %v1617 = vld [vmem:[%s1593 + $0x5c] sm:$0xf]
    %v1618 = vld [vmem:[%s1593 + $0x60] sm:$0xf]
    %v1619 = vld [vmem:[%s1593 + $0x64] sm:$0xf]
    %v1620 = vld [vmem:[%s1593 + $0x68] sm:$0xf]
    %v1621 = vld [vmem:[%s1593 + $0x6c] sm:$0xf]
    %v1622 = vld [vmem:[%s1593 + $0x70] sm:$0xf]
    %v1623 = vld [vmem:[%s1593 + $0x74] sm:$0xf]
    %v1624 = vld [vmem:[%s1593 + $0x78] sm:$0xf]
    %v1625 = vld [vmem:[%s1593 + $0x7c] sm:$0xf]
    %v1626 = vld [vmem:[%s1593 + $0x80] sm:$0xf]
    %v1627 = vld [vmem:[%s1593 + $0x84] sm:$0xf]
    %v1628 = vld [vmem:[%s1593 + $0x88] sm:$0xf]
    %v1629 = vld [vmem:[%s1593 + $0x8c] sm:$0xf]
    %v1630 = vld [vmem:[%s1593 + $0x90] sm:$0xf]
    %v1631 = vld [vmem:[%s1593 + $0x94] sm:$0xf]
    %v1632 = vld [vmem:[%s1593 + $0x98] sm:$0xf]
    %v1633 = vld [vmem:[%s1593 + $0x9c] sm:$0xf]
    %v1634 = vld [vmem:[%s1593 + $0xa0] sm:$0xf]
    %v1635 = vld [vmem:[%s1593 + $0xa4] sm:$0xf]
    %v1636 = vld [vmem:[%s1593 + $0xa8] sm:$0xf]
    %v1637 = vld [vmem:[%s1593 + $0xac] sm:$0xf]
    %v1638 = vld [vmem:[%s1593 + $0xb0] sm:$0xf]
    %v1639 = vld [vmem:[%s1593 + $0xb4] sm:$0xf]
    %v1640 = vld [vmem:[%s1593 + $0xb8] sm:$0xf]
    %v1641 = vld [vmem:[%s1593 + $0xbc] sm:$0xf]
    %v1642 = vld [vmem:[%s1593 + $0xc0] sm:$0xf]
    %v1692 = vunpack.c.l.b16 %v1594
    %v1693 = vunpack.c.l.b16 %v1595
    %v1694 = vunpack.c.l.b16 %v1596
    %v1695 = vunpack.c.l.b16 %v1597
    %v1696 = vunpack.c.l.b16 %v1598
    %v1697 = vunpack.c.l.b16 %v1599
    %v1698 = vunpack.c.l.b16 %v1600
    %v1699 = vunpack.c.l.b16 %v1601
    %v1700 = vunpack.c.l.b16 %v1602
    %v1701 = vunpack.c.l.b16 %v1603
    %v1702 = vunpack.c.l.b16 %v1604
    %v1703 = vunpack.c.l.b16 %v1605
    %v1704 = vunpack.c.l.b16 %v1606
    %v1705 = vunpack.c.l.b16 %v1607
    %v1706 = vunpack.c.l.b16 %v1608
    %v1707 = vunpack.c.l.b16 %v1609
    %v1708 = vunpack.c.l.b16 %v1610
    %v1709 = vunpack.c.l.b16 %v1611
    %v1710 = vunpack.c.l.b16 %v1612
    %v1711 = vunpack.c.l.b16 %v1613
    %v1712 = vunpack.c.l.b16 %v1614
    %v1713 = vunpack.c.l.b16 %v1615
    %v1714 = vunpack.c.l.b16 %v1616
    %v1715 = vunpack.c.l.b16 %v1617
    %v1716 = vunpack.c.l.b16 %v1618
    %v1717 = vunpack.c.l.b16 %v1619
    %v1718 = vunpack.c.l.b16 %v1620
    %v1719 = vunpack.c.l.b16 %v1621
    %v1720 = vunpack.c.l.b16 %v1622
    %v1721 = vunpack.c.l.b16 %v1623
    %v1722 = vunpack.c.l.b16 %v1624
    %v1723 = vunpack.c.l.b16 %v1625
    %v1724 = vunpack.c.l.b16 %v1626
    %v1725 = vunpack.c.l.b16 %v1627
    %v1726 = vunpack.c.l.b16 %v1628
    %v1727 = vunpack.c.l.b16 %v1629
    %v1728 = vunpack.c.l.b16 %v1630
    %v1729 = vunpack.c.l.b16 %v1631
    %v1730 = vunpack.c.l.b16 %v1632
    %v1731 = vunpack.c.l.b16 %v1633
    %v1732 = vunpack.c.l.b16 %v1634
    %v1733 = vunpack.c.l.b16 %v1635
    %v1734 = vunpack.c.l.b16 %v1636
    %v1735 = vunpack.c.l.b16 %v1637
    %v1736 = vunpack.c.l.b16 %v1638
    %v1737 = vunpack.c.l.b16 %v1639
    %v1738 = vunpack.c.l.b16 %v1640
    %v1739 = vunpack.c.l.b16 %v1641
    %v1740 = vunpack.c.l.b16 %v1642
    %v1741 = vpack.c.b16 %v1693, %v1692
    %v1742 = vpack.c.b16 %v1695, %v1694
    %v1743 = vpack.c.b16 %v1697, %v1696
    %v1744 = vpack.c.b16 %v1699, %v1698
    %v1745 = vpack.c.b16 %v1701, %v1700
    %v1746 = vpack.c.b16 %v1703, %v1702
    %v1747 = vpack.c.b16 %v1705, %v1704
    %v1748 = vpack.c.b16 %v1707, %v1706
    %v1749 = vpack.c.b16 %v1709, %v1708
    %v1750 = vpack.c.b16 %v1711, %v1710
    %v1751 = vpack.c.b16 %v1713, %v1712
    %v1752 = vpack.c.b16 %v1715, %v1714
    %v1753 = vpack.c.b16 %v1717, %v1716
    %v1754 = vpack.c.b16 %v1719, %v1718
    %v1755 = vpack.c.b16 %v1721, %v1720
    %v1756 = vpack.c.b16 %v1723, %v1722
    %v1757 = vpack.c.b16 %v1725, %v1724
    %v1758 = vpack.c.b16 %v1727, %v1726
    %v1759 = vpack.c.b16 %v1729, %v1728
    %v1760 = vpack.c.b16 %v1731, %v1730
    %v1761 = vpack.c.b16 %v1733, %v1732
    %v1762 = vpack.c.b16 %v1735, %v1734
    %v1763 = vpack.c.b16 %v1737, %v1736
    %v1764 = vpack.c.b16 %v1739, %v1738
    %v1765 = vpack.c.b16 %v1740, %v1740
    %v1767 = vsel %vm220, %v1741, 0
    %v1770 = vsel %vm220, %v1742, 0
    %v1773 = vsel %vm220, %v1743, 0
    %v1776 = vsel %vm220, %v1744, 0
    %v1779 = vsel %vm220, %v1745, 0
    %v1782 = vsel %vm220, %v1746, 0
    %v1785 = vsel %vm220, %v1747, 0
    %v1788 = vsel %vm220, %v1748, 0
    %v1791 = vsel %vm220, %v1749, 0
    %v1794 = vsel %vm220, %v1750, 0
    %v1797 = vsel %vm220, %v1751, 0
    %v1800 = vsel %vm220, %v1752, 0
    %v1803 = vsel %vm220, %v1753, 0
    %v1806 = vsel %vm220, %v1754, 0
    %v1809 = vsel %vm220, %v1755, 0
    %v1812 = vsel %vm220, %v1756, 0
    %v1815 = vsel %vm220, %v1757, 0
    %v1818 = vsel %vm220, %v1758, 0
    %v1821 = vsel %vm220, %v1759, 0
    %v1824 = vsel %vm220, %v1760, 0
    %v1827 = vsel %vm220, %v1761, 0
    %v1830 = vsel %vm220, %v1762, 0
    %v1833 = vsel %vm220, %v1763, 0
    %v1836 = vsel %vm220, %v1764, 0
    %v1839 = vsel %vm220, %v1765, 0
    %1841 = vmatprep.subr.bf16.mxu0 0
    %1842 = vmatpush1.bf16.msra.mxu0 %v301
    %1843 = vmatprep.subr.bf16.mxu0 0
    %1844 = vmatpush1.bf16.msra.mxu0 0
    %1845 = vmatprep.subr.bf16.mxu0 0
    %1846 = vmatpush1.bf16.msra.mxu0 0
    %1847 = vmatprep.subr.bf16.mxu0 0
    %1848 = vmatpush1.bf16.msra.mxu0 0
    %1849 = vmatprep.subr.bf16.mxu0 0
    %1850 = vmatpush1.bf16.msra.mxu0 0
    %1851 = vmatprep.subr.bf16.mxu0 0
    %1852 = vmatpush1.bf16.msra.mxu0 0
    %1853 = vmatprep.subr.bf16.mxu0 0
    %1854 = vmatpush1.bf16.msra.mxu0 0
    %1855 = vmatprep.subr.bf16.mxu0 0
    %1856 = vmatpush1.bf16.msra.mxu0 0
    %1857 = vmatprep.subr.bf16.mxu0 0
    %1858 = vmatpush1.bf16.msra.mxu0 0
    %1859 = vmatprep.subr.bf16.mxu0 0
    %1860 = vmatpush1.bf16.msra.mxu0 0
    %1861 = vmatprep.subr.bf16.mxu0 0
    %1862 = vmatpush1.bf16.msra.mxu0 0
    %1863 = vmatprep.subr.bf16.mxu0 0
    %1864 = vmatpush1.bf16.msra.mxu0 0
    %1865 = vmatprep.subr.bf16.mxu0 0
    %1866 = vmatpush1.bf16.msra.mxu0 0
    %1867 = vmatprep.subr.bf16.mxu0 0
    %1868 = vmatpush1.bf16.msra.mxu0 0
    %1869 = vmatprep.subr.bf16.mxu0 0
    %1870 = vmatpush1.bf16.msra.mxu0 0
    %1871 = vmatprep.subr.bf16.mxu0 0
    %1872 = vmatpush1.bf16.msra.mxu0 0
    %1873 = vmatprep.mubr.bf16.mxu0 0
    %1874 = vmatmul.mubr.bf16.gmra.mrb[0].mxu0 %v1767
    %v1875 = vpop.f32.mrb[0].mxu0
    %v1876 = vadd.f32 0.0, %v1875
    %v1877 = vpop.f32.mrb[0].mxu0
    %v1878 = vpop.f32.mrb[0].mxu0
    %v1879 = vadd.f32 0.0, %v1878
    %v1880 = vpop.f32.mrb[0].mxu0
    %1881 = vmatprep.mubr.bf16.mxu0 0
    %1882 = vmatmul.mubr.bf16.gmra.mrb[0].mxu0 %v1770
    %v1883 = vpop.f32.mrb[0].mxu0
    %v1884 = vadd.f32 0.0, %v1883
    %v1885 = vpop.f32.mrb[0].mxu0
    %v1886 = vpop.f32.mrb[0].mxu0
    %v1887 = vadd.f32 0.0, %v1886
    %v1888 = vpop.f32.mrb[0].mxu0
    %1889 = vmatprep.mubr.bf16.mxu0 0
    %1890 = vmatmul.mubr.bf16.gmra.mrb[0].mxu0 %v1773
    %v1891 = vpop.f32.mrb[0].mxu0
    %v1892 = vadd.f32 0.0, %v1891
    %v1893 = vpop.f32.mrb[0].mxu0
    %v1894 = vpop.f32.mrb[0].mxu0
    %v1895 = vadd.f32 0.0, %v1894
    %v1896 = vpop.f32.mrb[0].mxu0
    %1897 = vmatprep.mubr.bf16.mxu0 0
    %1898 = vmatmul.mubr.bf16.gmra.mrb[0].mxu0 %v1776
    %v1899 = vpop.f32.mrb[0].mxu0
    %v1900 = vadd.f32 0.0, %v1899
    %v1901 = vpop.f32.mrb[0].mxu0
    %v1902 = vpop.f32.mrb[0].mxu0
    %v1903 = vadd.f32 0.0, %v1902
    %v1904 = vpop.f32.mrb[0].mxu0
    %1905 = vmatprep.mubr.bf16.mxu0 0
    %1906 = vmatmul.mubr.bf16.gmra.mrb[0].mxu0 %v1779
    %v1907 = vpop.f32.mrb[0].mxu0
    %v1908 = vadd.f32 0.0, %v1907
    %v1909 = vpop.f32.mrb[0].mxu0
    %v1910 = vpop.f32.mrb[0].mxu0
    %v1911 = vadd.f32 0.0, %v1910
    %v1912 = vpop.f32.mrb[0].mxu0
    %1913 = vmatprep.mubr.bf16.mxu0 0
    %1914 = vmatmul.mubr.bf16.gmra.mrb[0].mxu0 %v1782
    %v1915 = vpop.f32.mrb[0].mxu0
    %v1916 = vadd.f32 0.0, %v1915
    %v1917 = vpop.f32.mrb[0].mxu0
    %v1918 = vpop.f32.mrb[0].mxu0
    %v1919 = vadd.f32 0.0, %v1918
    %v1920 = vpop.f32.mrb[0].mxu0
    %1921 = vmatprep.mubr.bf16.mxu0 0
    %1922 = vmatmul.mubr.bf16.gmra.mrb[0].mxu0 %v1785
    %v1923 = vpop.f32.mrb[0].mxu0
    %v1924 = vadd.f32 0.0, %v1923
    %v1925 = vpop.f32.mrb[0].mxu0
    %v1926 = vpop.f32.mrb[0].mxu0
    %v1927 = vadd.f32 0.0, %v1926
    %v1928 = vpop.f32.mrb[0].mxu0
    %1929 = vmatprep.mubr.bf16.mxu0 0
    %1930 = vmatmul.mubr.bf16.gmra.mrb[0].mxu0 %v1788
    %v1931 = vpop.f32.mrb[0].mxu0
    %v1932 = vadd.f32 0.0, %v1931
    %v1933 = vpop.f32.mrb[0].mxu0
    %v1934 = vpop.f32.mrb[0].mxu0
    %v1935 = vadd.f32 0.0, %v1934
    %v1936 = vpop.f32.mrb[0].mxu0
    %1937 = vmatprep.mubr.bf16.mxu0 0
    %1938 = vmatmul.mubr.bf16.gmra.mrb[0].mxu0 %v1791
    %v1939 = vpop.f32.mrb[0].mxu0
    %v1940 = vadd.f32 0.0, %v1939
    %v1941 = vpop.f32.mrb[0].mxu0
    %v1942 = vpop.f32.mrb[0].mxu0
    %v1943 = vadd.f32 0.0, %v1942
    %v1944 = vpop.f32.mrb[0].mxu0
    %1945 = vmatprep.mubr.bf16.mxu0 0
    %1946 = vmatmul.mubr.bf16.gmra.mrb[0].mxu0 %v1794
    %v1947 = vpop.f32.mrb[0].mxu0
    %v1948 = vadd.f32 0.0, %v1947
    %v1949 = vpop.f32.mrb[0].mxu0
    %v1950 = vpop.f32.mrb[0].mxu0
    %v1951 = vadd.f32 0.0, %v1950
    %v1952 = vpop.f32.mrb[0].mxu0
    %1953 = vmatprep.mubr.bf16.mxu0 0
    %1954 = vmatmul.mubr.bf16.gmra.mrb[0].mxu0 %v1797
    %v1955 = vpop.f32.mrb[0].mxu0
    %v1956 = vadd.f32 0.0, %v1955
    %v1957 = vpop.f32.mrb[0].mxu0
    %v1958 = vpop.f32.mrb[0].mxu0
    %v1959 = vadd.f32 0.0, %v1958
    %v1960 = vpop.f32.mrb[0].mxu0
    %1961 = vmatprep.mubr.bf16.mxu0 0
    %1962 = vmatmul.mubr.bf16.gmra.mrb[0].mxu0 %v1800
    %v1963 = vpop.f32.mrb[0].mxu0
    %v1964 = vadd.f32 0.0, %v1963
    %v1965 = vpop.f32.mrb[0].mxu0
    %v1966 = vpop.f32.mrb[0].mxu0
    %v1967 = vadd.f32 0.0, %v1966
    %v1968 = vpop.f32.mrb[0].mxu0
    %1969 = vmatprep.mubr.bf16.mxu0 0
    %1970 = vmatmul.mubr.bf16.gmra.mrb[0].mxu0 %v1803
    %v1971 = vpop.f32.mrb[0].mxu0
    %v1972 = vadd.f32 0.0, %v1971
    %v1973 = vpop.f32.mrb[0].mxu0
    %v1974 = vpop.f32.mrb[0].mxu0
    %v1975 = vadd.f32 0.0, %v1974
    %v1976 = vpop.f32.mrb[0].mxu0
    %1977 = vmatprep.mubr.bf16.mxu0 0
    %1978 = vmatmul.mubr.bf16.gmra.mrb[0].mxu0 %v1806
    %v1979 = vpop.f32.mrb[0].mxu0
    %v1980 = vadd.f32 0.0, %v1979
    %v1981 = vpop.f32.mrb[0].mxu0
    %v1982 = vpop.f32.mrb[0].mxu0
    %v1983 = vadd.f32 0.0, %v1982
    %v1984 = vpop.f32.mrb[0].mxu0
    %1985 = vmatprep.mubr.bf16.mxu0 0
    %1986 = vmatmul.mubr.bf16.gmra.mrb[0].mxu0 %v1809
    %v1987 = vpop.f32.mrb[0].mxu0
    %v1988 = vadd.f32 0.0, %v1987
    %v1989 = vpop.f32.mrb[0].mxu0
    %v1990 = vpop.f32.mrb[0].mxu0
    %v1991 = vadd.f32 0.0, %v1990
    %v1992 = vpop.f32.mrb[0].mxu0
    %1993 = vmatprep.mubr.bf16.mxu0 0
    %1994 = vmatmul.mubr.bf16.gmra.mrb[0].mxu0 %v1812
    %v1995 = vpop.f32.mrb[0].mxu0
    %v1996 = vadd.f32 0.0, %v1995
    %v1997 = vpop.f32.mrb[0].mxu0
    %v1998 = vpop.f32.mrb[0].mxu0
    %v1999 = vadd.f32 0.0, %v1998
    %v2000 = vpop.f32.mrb[0].mxu0
    %2001 = vmatprep.mubr.bf16.mxu0 0
    %2002 = vmatmul.mubr.bf16.gmra.mrb[0].mxu0 %v1815
    %v2003 = vpop.f32.mrb[0].mxu0
    %v2004 = vadd.f32 0.0, %v2003
    %v2005 = vpop.f32.mrb[0].mxu0
    %v2006 = vpop.f32.mrb[0].mxu0
    %v2007 = vadd.f32 0.0, %v2006
    %v2008 = vpop.f32.mrb[0].mxu0
    %2009 = vmatprep.mubr.bf16.mxu0 0
    %2010 = vmatmul.mubr.bf16.gmra.mrb[0].mxu0 %v1818
    %v2011 = vpop.f32.mrb[0].mxu0
    %v2012 = vadd.f32 0.0, %v2011
    %v2013 = vpop.f32.mrb[0].mxu0
    %v2014 = vpop.f32.mrb[0].mxu0
    %v2015 = vadd.f32 0.0, %v2014
    %v2016 = vpop.f32.mrb[0].mxu0
    %2017 = vmatprep.mubr.bf16.mxu0 0
    %2018 = vmatmul.mubr.bf16.gmra.mrb[0].mxu0 %v1821
    %v2019 = vpop.f32.mrb[0].mxu0
    %v2020 = vadd.f32 0.0, %v2019
    %v2021 = vpop.f32.mrb[0].mxu0
    %v2022 = vpop.f32.mrb[0].mxu0
    %v2023 = vadd.f32 0.0, %v2022
    %v2024 = vpop.f32.mrb[0].mxu0
    %2025 = vmatprep.mubr.bf16.mxu0 0
    %2026 = vmatmul.mubr.bf16.gmra.mrb[0].mxu0 %v1824
    %v2027 = vpop.f32.mrb[0].mxu0
    %v2028 = vadd.f32 0.0, %v2027
    %v2029 = vpop.f32.mrb[0].mxu0
    %v2030 = vpop.f32.mrb[0].mxu0
    %v2031 = vadd.f32 0.0, %v2030
    %v2032 = vpop.f32.mrb[0].mxu0
    %2033 = vmatprep.mubr.bf16.mxu0 0
    %2034 = vmatmul.mubr.bf16.gmra.mrb[0].mxu0 %v1827
    %v2035 = vpop.f32.mrb[0].mxu0
    %v2036 = vadd.f32 0.0, %v2035
    %v2037 = vpop.f32.mrb[0].mxu0
    %v2038 = vpop.f32.mrb[0].mxu0
    %v2039 = vadd.f32 0.0, %v2038
    %v2040 = vpop.f32.mrb[0].mxu0
    %2041 = vmatprep.mubr.bf16.mxu0 0
    %2042 = vmatmul.mubr.bf16.gmra.mrb[0].mxu0 %v1830
    %v2043 = vpop.f32.mrb[0].mxu0
    %v2044 = vadd.f32 0.0, %v2043
    %v2045 = vpop.f32.mrb[0].mxu0
    %v2046 = vpop.f32.mrb[0].mxu0
    %v2047 = vadd.f32 0.0, %v2046
    %v2048 = vpop.f32.mrb[0].mxu0
    %2049 = vmatprep.mubr.bf16.mxu0 0
    %2050 = vmatmul.mubr.bf16.gmra.mrb[0].mxu0 %v1833
    %v2051 = vpop.f32.mrb[0].mxu0
    %v2052 = vadd.f32 0.0, %v2051
    %v2053 = vpop.f32.mrb[0].mxu0
    %v2054 = vpop.f32.mrb[0].mxu0
    %v2055 = vadd.f32 0.0, %v2054
    %v2056 = vpop.f32.mrb[0].mxu0
    %2057 = vmatprep.mubr.bf16.mxu0 0
    %2058 = vmatmul.mubr.bf16.gmra.mrb[0].mxu0 %v1836
    %v2059 = vpop.f32.mrb[0].mxu0
    %v2060 = vadd.f32 0.0, %v2059
    %v2061 = vpop.f32.mrb[0].mxu0
    %v2062 = vpop.f32.mrb[0].mxu0
    %v2063 = vadd.f32 0.0, %v2062
    %v2064 = vpop.f32.mrb[0].mxu0
    %2065 = vmatprep.mubr.bf16.mxu0 0
    %2066 = vmatmul.mubr.bf16.gmra.mrb[0].mxu0 %v1839
    %v2067 = vpop.f32.mrb[0].mxu0
    %v2068 = vadd.f32 0.0, %v2067
    %v2069 = vpop.f32.mrb[0].mxu0
    %v2070 = vpop.f32.mrb[0].mxu0
    %v2071 = vpop.f32.mrb[0].mxu0
    %2072 = vdwg.mxu0
    %v2073 = vmax.f32 %v1544, %v1876
    %v2074 = vmax.f32 %v1545, %v1879
    %v2075 = vmax.f32 %v1546, %v1884
    %v2076 = vmax.f32 %v1547, %v1887
    %v2077 = vmax.f32 %v1548, %v1892
    %v2078 = vmax.f32 %v1549, %v1895
    %v2079 = vmax.f32 %v1550, %v1900
    %v2080 = vmax.f32 %v1551, %v1903
    %v2081 = vmax.f32 %v1552, %v1908
    %v2082 = vmax.f32 %v1553, %v1911
    %v2083 = vmax.f32 %v1554, %v1916
    %v2084 = vmax.f32 %v1555, %v1919
    %v2085 = vmax.f32 %v1556, %v1924
    %v2086 = vmax.f32 %v1557, %v1927
    %v2087 = vmax.f32 %v1558, %v1932
    %v2088 = vmax.f32 %v1559, %v1935
    %v2089 = vmax.f32 %v1560, %v1940
    %v2090 = vmax.f32 %v1561, %v1943
    %v2091 = vmax.f32 %v1562, %v1948
    %v2092 = vmax.f32 %v1563, %v1951
    %v2093 = vmax.f32 %v1564, %v1956
    %v2094 = vmax.f32 %v1565, %v1959
    %v2095 = vmax.f32 %v1566, %v1964
    %v2096 = vmax.f32 %v1567, %v1967
    %v2097 = vmax.f32 %v1568, %v1972
    %v2098 = vmax.f32 %v1569, %v1975
    %v2099 = vmax.f32 %v1570, %v1980
    %v2100 = vmax.f32 %v1571, %v1983
    %v2101 = vmax.f32 %v1572, %v1988
    %v2102 = vmax.f32 %v1573, %v1991
    %v2103 = vmax.f32 %v1574, %v1996
    %v2104 = vmax.f32 %v1575, %v1999
    %v2105 = vmax.f32 %v1576, %v2004
    %v2106 = vmax.f32 %v1577, %v2007
    %v2107 = vmax.f32 %v1578, %v2012
    %v2108 = vmax.f32 %v1579, %v2015
    %v2109 = vmax.f32 %v1580, %v2020
    %v2110 = vmax.f32 %v1581, %v2023
    %v2111 = vmax.f32 %v1582, %v2028
    %v2112 = vmax.f32 %v1583, %v2031
    %v2113 = vmax.f32 %v1584, %v2036
    %v2114 = vmax.f32 %v1585, %v2039
    %v2115 = vmax.f32 %v1586, %v2044
    %v2116 = vmax.f32 %v1587, %v2047
    %v2117 = vmax.f32 %v1588, %v2052
    %v2118 = vmax.f32 %v1589, %v2055
    %v2119 = vmax.f32 %v1590, %v2060
    %v2120 = vmax.f32 %v1591, %v2063
    %v2121 = vmax.f32 %v1592, %v2068
    %v2122 = vld [vmem:[#allocation4] sm:$0x1]
    %v2124 = vlaneseq
    %v2125 = vshrl.u32 %v2124, 7
    %v2126 = vsub.s32 0, %v2125
    %v2127 = vrot.slane %v2122, %v2126
    %v2129 = vadd.f32 %v2073, %v2127
    %v2130 = vadd.f32 %v2074, %v2127
    %v2131 = vadd.f32 %v2075, %v2127
    %v2132 = vadd.f32 %v2076, %v2127
    %v2133 = vadd.f32 %v2077, %v2127
    %v2134 = vadd.f32 %v2078, %v2127
    %v2135 = vadd.f32 %v2079, %v2127
    %v2136 = vadd.f32 %v2080, %v2127
    %v2137 = vadd.f32 %v2081, %v2127
    %v2138 = vadd.f32 %v2082, %v2127
    %v2139 = vadd.f32 %v2083, %v2127
    %v2140 = vadd.f32 %v2084, %v2127
    %v2141 = vadd.f32 %v2085, %v2127
    %v2142 = vadd.f32 %v2086, %v2127
    %v2143 = vadd.f32 %v2087, %v2127
    %v2144 = vadd.f32 %v2088, %v2127
    %v2145 = vadd.f32 %v2089, %v2127
    %v2146 = vadd.f32 %v2090, %v2127
    %v2147 = vadd.f32 %v2091, %v2127
    %v2148 = vadd.f32 %v2092, %v2127
    %v2149 = vadd.f32 %v2093, %v2127
    %v2150 = vadd.f32 %v2094, %v2127
    %v2151 = vadd.f32 %v2095, %v2127
    %v2152 = vadd.f32 %v2096, %v2127
    %v2153 = vadd.f32 %v2097, %v2127
    %v2154 = vadd.f32 %v2098, %v2127
    %v2155 = vadd.f32 %v2099, %v2127
    %v2156 = vadd.f32 %v2100, %v2127
    %v2157 = vadd.f32 %v2101, %v2127
    %v2158 = vadd.f32 %v2102, %v2127
    %v2159 = vadd.f32 %v2103, %v2127
    %v2160 = vadd.f32 %v2104, %v2127
    %v2161 = vadd.f32 %v2105, %v2127
    %v2162 = vadd.f32 %v2106, %v2127
    %v2163 = vadd.f32 %v2107, %v2127
    %v2164 = vadd.f32 %v2108, %v2127
    %v2165 = vadd.f32 %v2109, %v2127
    %v2166 = vadd.f32 %v2110, %v2127
    %v2167 = vadd.f32 %v2111, %v2127
    %v2168 = vadd.f32 %v2112, %v2127
    %v2169 = vadd.f32 %v2113, %v2127
    %v2170 = vadd.f32 %v2114, %v2127
    %v2171 = vadd.f32 %v2115, %v2127
    %v2172 = vadd.f32 %v2116, %v2127
    %v2173 = vadd.f32 %v2117, %v2127
    %v2174 = vadd.f32 %v2118, %v2127
    %v2175 = vadd.f32 %v2119, %v2127
    %v2176 = vadd.f32 %v2120, %v2127
    %v2177 = vadd.f32 %v2121, %v2127
    %v2178 = vmax.f32 %v2129, 0.0
    %v2179 = vmax.f32 %v2130, 0.0
    %v2180 = vmax.f32 %v2131, 0.0
    %v2181 = vmax.f32 %v2132, 0.0
    %v2182 = vmax.f32 %v2133, 0.0
    %v2183 = vmax.f32 %v2134, 0.0
    %v2184 = vmax.f32 %v2135, 0.0
    %v2185 = vmax.f32 %v2136, 0.0
    %v2186 = vmax.f32 %v2137, 0.0
    %v2187 = vmax.f32 %v2138, 0.0
    %v2188 = vmax.f32 %v2139, 0.0
    %v2189 = vmax.f32 %v2140, 0.0
    %v2190 = vmax.f32 %v2141, 0.0
    %v2191 = vmax.f32 %v2142, 0.0
    %v2192 = vmax.f32 %v2143, 0.0
    %v2193 = vmax.f32 %v2144, 0.0
    %v2194 = vmax.f32 %v2145, 0.0
    %v2195 = vmax.f32 %v2146, 0.0
    %v2196 = vmax.f32 %v2147, 0.0
    %v2197 = vmax.f32 %v2148, 0.0
    %v2198 = vmax.f32 %v2149, 0.0
    %v2199 = vmax.f32 %v2150, 0.0
    %v2200 = vmax.f32 %v2151, 0.0
    %v2201 = vmax.f32 %v2152, 0.0
    %v2202 = vmax.f32 %v2153, 0.0
    %v2203 = vmax.f32 %v2154, 0.0
    %v2204 = vmax.f32 %v2155, 0.0
    %v2205 = vmax.f32 %v2156, 0.0
    %v2206 = vmax.f32 %v2157, 0.0
    %v2207 = vmax.f32 %v2158, 0.0
    %v2208 = vmax.f32 %v2159, 0.0
    %v2209 = vmax.f32 %v2160, 0.0
    %v2210 = vmax.f32 %v2161, 0.0
    %v2211 = vmax.f32 %v2162, 0.0
    %v2212 = vmax.f32 %v2163, 0.0
    %v2213 = vmax.f32 %v2164, 0.0
    %v2214 = vmax.f32 %v2165, 0.0
    %v2215 = vmax.f32 %v2166, 0.0
    %v2216 = vmax.f32 %v2167, 0.0
    %v2217 = vmax.f32 %v2168, 0.0
    %v2218 = vmax.f32 %v2169, 0.0
    %v2219 = vmax.f32 %v2170, 0.0
    %v2220 = vmax.f32 %v2171, 0.0
    %v2221 = vmax.f32 %v2172, 0.0
    %v2222 = vmax.f32 %v2173, 0.0
    %v2223 = vmax.f32 %v2174, 0.0
    %v2224 = vmax.f32 %v2175, 0.0
    %v2225 = vmax.f32 %v2176, 0.0
    %v2226 = vmax.f32 %v2177, 0.0
    %v2227 = vpack.c.bf16 %v2179, %v2178
    %v2228 = vpack.c.bf16 %v2181, %v2180
    %v2229 = vpack.c.bf16 %v2183, %v2182
    %v2230 = vpack.c.bf16 %v2185, %v2184
    %v2231 = vpack.c.bf16 %v2187, %v2186
    %v2232 = vpack.c.bf16 %v2189, %v2188
    %v2233 = vpack.c.bf16 %v2191, %v2190
    %v2234 = vpack.c.bf16 %v2193, %v2192
    %v2235 = vpack.c.bf16 %v2195, %v2194
    %v2236 = vpack.c.bf16 %v2197, %v2196
    %v2237 = vpack.c.bf16 %v2199, %v2198
    %v2238 = vpack.c.bf16 %v2201, %v2200
    %v2239 = vpack.c.bf16 %v2203, %v2202
    %v2240 = vpack.c.bf16 %v2205, %v2204
    %v2241 = vpack.c.bf16 %v2207, %v2206
    %v2242 = vpack.c.bf16 %v2209, %v2208
    %v2243 = vpack.c.bf16 %v2211, %v2210
    %v2244 = vpack.c.bf16 %v2213, %v2212
    %v2245 = vpack.c.bf16 %v2215, %v2214
    %v2246 = vpack.c.bf16 %v2217, %v2216
    %v2247 = vpack.c.bf16 %v2219, %v2218
    %v2248 = vpack.c.bf16 %v2221, %v2220
    %v2249 = vpack.c.bf16 %v2223, %v2222
    %v2250 = vpack.c.bf16 %v2225, %v2224
    %v2251 = vpack.c.bf16 %v2226, %v2226
    %v2277 = vunpack.c.l.b16 %v2227
    %v2278 = vunpack.c.h.b16 %v2227
    %v2279 = vunpack.c.l.b16 %v2228
    %v2280 = vunpack.c.h.b16 %v2228
    %v2281 = vunpack.c.l.b16 %v2229
    %v2282 = vunpack.c.h.b16 %v2229
    %v2283 = vunpack.c.l.b16 %v2230
    %v2284 = vunpack.c.h.b16 %v2230
    %v2285 = vunpack.c.l.b16 %v2231
    %v2286 = vunpack.c.h.b16 %v2231
    %v2287 = vunpack.c.l.b16 %v2232
    %v2288 = vunpack.c.h.b16 %v2232
    %v2289 = vunpack.c.l.b16 %v2233
    %v2290 = vunpack.c.h.b16 %v2233
    %v2291 = vunpack.c.l.b16 %v2234
    %v2292 = vunpack.c.h.b16 %v2234
    %v2293 = vunpack.c.l.b16 %v2235
    %v2294 = vunpack.c.h.b16 %v2235
    %v2295 = vunpack.c.l.b16 %v2236
    %v2296 = vunpack.c.h.b16 %v2236
    %v2297 = vunpack.c.l.b16 %v2237
    %v2298 = vunpack.c.h.b16 %v2237
    %v2299 = vunpack.c.l.b16 %v2238
    %v2300 = vunpack.c.h.b16 %v2238
    %v2301 = vunpack.c.l.b16 %v2239
    %v2302 = vunpack.c.h.b16 %v2239
    %v2303 = vunpack.c.l.b16 %v2240
    %v2304 = vunpack.c.h.b16 %v2240
    %v2305 = vunpack.c.l.b16 %v2241
    %v2306 = vunpack.c.h.b16 %v2241
    %v2307 = vunpack.c.l.b16 %v2242
    %v2308 = vunpack.c.h.b16 %v2242
    %v2309 = vunpack.c.l.b16 %v2243
    %v2310 = vunpack.c.h.b16 %v2243
    %v2311 = vunpack.c.l.b16 %v2244
    %v2312 = vunpack.c.h.b16 %v2244
    %v2313 = vunpack.c.l.b16 %v2245
    %v2314 = vunpack.c.h.b16 %v2245
    %v2315 = vunpack.c.l.b16 %v2246
    %v2316 = vunpack.c.h.b16 %v2246
    %v2317 = vunpack.c.l.b16 %v2247
    %v2318 = vunpack.c.h.b16 %v2247
    %v2319 = vunpack.c.l.b16 %v2248
    %v2320 = vunpack.c.h.b16 %v2248
    %v2321 = vunpack.c.l.b16 %v2249
    %v2322 = vunpack.c.h.b16 %v2249
    %v2323 = vunpack.c.l.b16 %v2250
    %v2324 = vunpack.c.h.b16 %v2250
    %v2325 = vunpack.c.l.b16 %v2251
    %v2326 = vpack.c.b16 %v2277, %v2277
    %v2327 = vpack.c.b16 %v2278, %v2278
    %v2328 = vpack.c.b16 %v2279, %v2279
    %v2329 = vpack.c.b16 %v2280, %v2280
    %v2330 = vpack.c.b16 %v2281, %v2281
    %v2331 = vpack.c.b16 %v2282, %v2282
    %v2332 = vpack.c.b16 %v2283, %v2283
    %v2333 = vpack.c.b16 %v2284, %v2284
    %v2334 = vpack.c.b16 %v2285, %v2285
    %v2335 = vpack.c.b16 %v2286, %v2286
    %v2336 = vpack.c.b16 %v2287, %v2287
    %v2337 = vpack.c.b16 %v2288, %v2288
    %v2338 = vpack.c.b16 %v2289, %v2289
    %v2339 = vpack.c.b16 %v2290, %v2290
    %v2340 = vpack.c.b16 %v2291, %v2291
    %v2341 = vpack.c.b16 %v2292, %v2292
    %v2342 = vpack.c.b16 %v2293, %v2293
    %v2343 = vpack.c.b16 %v2294, %v2294
    %v2344 = vpack.c.b16 %v2295, %v2295
    %v2345 = vpack.c.b16 %v2296, %v2296
    %v2346 = vpack.c.b16 %v2297, %v2297
    %v2347 = vpack.c.b16 %v2298, %v2298
    %v2348 = vpack.c.b16 %v2299, %v2299
    %v2349 = vpack.c.b16 %v2300, %v2300
    %v2350 = vpack.c.b16 %v2301, %v2301
    %v2351 = vpack.c.b16 %v2302, %v2302
    %v2352 = vpack.c.b16 %v2303, %v2303
    %v2353 = vpack.c.b16 %v2304, %v2304
    %v2354 = vpack.c.b16 %v2305, %v2305
    %v2355 = vpack.c.b16 %v2306, %v2306
    %v2356 = vpack.c.b16 %v2307, %v2307
    %v2357 = vpack.c.b16 %v2308, %v2308
    %v2358 = vpack.c.b16 %v2309, %v2309
    %v2359 = vpack.c.b16 %v2310, %v2310
    %v2360 = vpack.c.b16 %v2311, %v2311
    %v2361 = vpack.c.b16 %v2312, %v2312
    %v2362 = vpack.c.b16 %v2313, %v2313
    %v2363 = vpack.c.b16 %v2314, %v2314
    %v2364 = vpack.c.b16 %v2315, %v2315
    %v2365 = vpack.c.b16 %v2316, %v2316
    %v2366 = vpack.c.b16 %v2317, %v2317
    %v2367 = vpack.c.b16 %v2318, %v2318
    %v2368 = vpack.c.b16 %v2319, %v2319
    %v2369 = vpack.c.b16 %v2320, %v2320
    %v2370 = vpack.c.b16 %v2321, %v2321
    %v2371 = vpack.c.b16 %v2322, %v2322
    %v2372 = vpack.c.b16 %v2323, %v2323
    %v2373 = vpack.c.b16 %v2324, %v2324
    %v2374 = vpack.c.b16 %v2325, %v2325
    %vm2424 = vcmask 257024
    %2425 = vst.msk [vmem:[%s3] sm:$0xf] %vm2424, %v2326
    %2426 = vst.msk [vmem:[%s3 + $0x4] sm:$0xf] %vm2424, %v2327
    %2427 = vst.msk [vmem:[%s3 + $0x8] sm:$0xf] %vm2424, %v2328
    %2428 = vst.msk [vmem:[%s3 + $0xc] sm:$0xf] %vm2424, %v2329
    %2429 = vst.msk [vmem:[%s3 + $0x10] sm:$0xf] %vm2424, %v2330
    %2430 = vst.msk [vmem:[%s3 + $0x14] sm:$0xf] %vm2424, %v2331
    %2431 = vst.msk [vmem:[%s3 + $0x18] sm:$0xf] %vm2424, %v2332
    %2432 = vst.msk [vmem:[%s3 + $0x1c] sm:$0xf] %vm2424, %v2333
    %2433 = vst.msk [vmem:[%s3 + $0x20] sm:$0xf] %vm2424, %v2334
    %2434 = vst.msk [vmem:[%s3 + $0x24] sm:$0xf] %vm2424, %v2335
    %2435 = vst.msk [vmem:[%s3 + $0x28] sm:$0xf] %vm2424, %v2336
    %2436 = vst.msk [vmem:[%s3 + $0x2c] sm:$0xf] %vm2424, %v2337
    %2437 = vst.msk [vmem:[%s3 + $0x30] sm:$0xf] %vm2424, %v2338
    %2438 = vst.msk [vmem:[%s3 + $0x34] sm:$0xf] %vm2424, %v2339
    %2439 = vst.msk [vmem:[%s3 + $0x38] sm:$0xf] %vm2424, %v2340
    %2440 = vst.msk [vmem:[%s3 + $0x3c] sm:$0xf] %vm2424, %v2341
    %2441 = vst.msk [vmem:[%s3 + $0x40] sm:$0xf] %vm2424, %v2342
    %2442 = vst.msk [vmem:[%s3 + $0x44] sm:$0xf] %vm2424, %v2343
    %2443 = vst.msk [vmem:[%s3 + $0x48] sm:$0xf] %vm2424, %v2344
    %2444 = vst.msk [vmem:[%s3 + $0x4c] sm:$0xf] %vm2424, %v2345
    %2445 = vst.msk [vmem:[%s3 + $0x50] sm:$0xf] %vm2424, %v2346
    %2446 = vst.msk [vmem:[%s3 + $0x54] sm:$0xf] %vm2424, %v2347
    %2447 = vst.msk [vmem:[%s3 + $0x58] sm:$0xf] %vm2424, %v2348
    %2448 = vst.msk [vmem:[%s3 + $0x5c] sm:$0xf] %vm2424, %v2349
    %2449 = vst.msk [vmem:[%s3 + $0x60] sm:$0xf] %vm2424, %v2350
    %2450 = vst.msk [vmem:[%s3 + $0x64] sm:$0xf] %vm2424, %v2351
    %2451 = vst.msk [vmem:[%s3 + $0x68] sm:$0xf] %vm2424, %v2352
    %2452 = vst.msk [vmem:[%s3 + $0x6c] sm:$0xf] %vm2424, %v2353
    %2453 = vst.msk [vmem:[%s3 + $0x70] sm:$0xf] %vm2424, %v2354
    %2454 = vst.msk [vmem:[%s3 + $0x74] sm:$0xf] %vm2424, %v2355
    %2455 = vst.msk [vmem:[%s3 + $0x78] sm:$0xf] %vm2424, %v2356
    %2456 = vst.msk [vmem:[%s3 + $0x7c] sm:$0xf] %vm2424, %v2357
    %2457 = vst.msk [vmem:[%s3 + $0x80] sm:$0xf] %vm2424, %v2358
    %2458 = vst.msk [vmem:[%s3 + $0x84] sm:$0xf] %vm2424, %v2359
    %2459 = vst.msk [vmem:[%s3 + $0x88] sm:$0xf] %vm2424, %v2360
    %2460 = vst.msk [vmem:[%s3 + $0x8c] sm:$0xf] %vm2424, %v2361
    %2461 = vst.msk [vmem:[%s3 + $0x90] sm:$0xf] %vm2424, %v2362
    %2462 = vst.msk [vmem:[%s3 + $0x94] sm:$0xf] %vm2424, %v2363
    %2463 = vst.msk [vmem:[%s3 + $0x98] sm:$0xf] %vm2424, %v2364
    %2464 = vst.msk [vmem:[%s3 + $0x9c] sm:$0xf] %vm2424, %v2365
    %2465 = vst.msk [vmem:[%s3 + $0xa0] sm:$0xf] %vm2424, %v2366
    %2466 = vst.msk [vmem:[%s3 + $0xa4] sm:$0xf] %vm2424, %v2367
    %2467 = vst.msk [vmem:[%s3 + $0xa8] sm:$0xf] %vm2424, %v2368
    %2468 = vst.msk [vmem:[%s3 + $0xac] sm:$0xf] %vm2424, %v2369
    %2469 = vst.msk [vmem:[%s3 + $0xb0] sm:$0xf] %vm2424, %v2370
    %2470 = vst.msk [vmem:[%s3 + $0xb4] sm:$0xf] %vm2424, %v2371
    %2471 = vst.msk [vmem:[%s3 + $0xb8] sm:$0xf] %vm2424, %v2372
    %2472 = vst.msk [vmem:[%s3 + $0xbc] sm:$0xf] %vm2424, %v2373
    %2473 = vst.msk [vmem:[%s3 + $0xc0] sm:$0xf] %vm2424, %v2374
    // Predicated region
    $region22: #{mnist_cnn_forward.3} parent=1 // pred_check
      _
    $region23: #{mnist_cnn_forward.3} parent=1 // pred_check_branch
      %2475 = sbr.rel (0) target = $region25
    $region24: #{mnist_cnn_forward.3} parent=1 // pred_region
      _
    $region25: #{mnist_cnn_forward.3} parent=1 // pred_fallthru
      _
    // Predicated region
    $region26: #{mnist_cnn_forward.3} parent=1 // pred_check
      _
    $region27: #{mnist_cnn_forward.3} parent=1 // pred_check_branch
      %2477 = sbr.rel (0) target = $region29
    $region28: #{mnist_cnn_forward.3} parent=1 // pred_region
      _
    $region29: #{mnist_cnn_forward.3} parent=1 // pred_fallthru
      _
    %2478 = vsyncpa [#allocation3], 1
    %2479 = vsyncpa [#allocation5], 1

// kernel: mnist_cnn_forward.4
$region0: #{mnist_cnn_forward.4}
  #allocation0 [shape = 'u32[]', space=smem, size = 0x4, offset = 0x4, fixed_abs, tag = 'smem constant byte address 0x4 - core index']
  #allocation1 [shape = 'u32[144,128]{1,0:T(1,128)}', space=vmem, size = 0x12000, scoped, tag = 'internal scratch']
  %s0 = inlined_call_operand.vmem [shape: bf16[4,72,288], index: 0, kind: input, shape index: {}]
  %s1 = inlined_call_operand.vmem [shape: bf16[288,64], index: 1, kind: input, shape index: {}]
  %s2 = inlined_call_operand.vmem [shape: f32[1,64], index: 2, kind: input, shape index: {}]
  %s3 = inlined_call_operand.vmem [shape: bf16[72,64], index: 3, kind: output, shape index: {}]
  %s4 = sld [smem:[#allocation0]]
  $region22: #{mnist_cnn_forward.4} parent=0
    _
  %s6 = ssub.s32 1, %s4
  %s7 = scalar_select 0, %s6, %s4
  // Predicated region
  $region2: #{mnist_cnn_forward.4} parent=0 // pred_check
    _
  $region3: #{mnist_cnn_forward.4} parent=0 // pred_check_branch
    %9 = sbr.rel (0) target = $region5
  $region4: #{mnist_cnn_forward.4} parent=0 // pred_region
    _
  $region5: #{mnist_cnn_forward.4} parent=0 // pred_fallthru
    _
  // Predicated region
  $region6: #{mnist_cnn_forward.4} parent=0 // pred_check
    _
  $region7: #{mnist_cnn_forward.4} parent=0 // pred_check_branch
    %11 = sbr.rel (0) target = $region9
  $region8: #{mnist_cnn_forward.4} parent=0 // pred_region
    _
  $region9: #{mnist_cnn_forward.4} parent=0 // pred_fallthru
    _
  // Predicated region
  $region10: #{mnist_cnn_forward.4} parent=0 // pred_check
    _
  $region11: #{mnist_cnn_forward.4} parent=0 // pred_check_branch
    %13 = sbr.rel (0) target = $region13
  $region12: #{mnist_cnn_forward.4} parent=0 // pred_region
    _
  $region13: #{mnist_cnn_forward.4} parent=0 // pred_fallthru
    _
  %v15 = vld [vmem:[%s1] sm:$0xf]
  %v16 = vld [vmem:[%s1 + $0x4] sm:$0xf]
  %v17 = vld [vmem:[%s1 + $0x8] sm:$0xf]
  %v18 = vld [vmem:[%s1 + $0xc] sm:$0xf]
  %v19 = vld [vmem:[%s1 + $0x10] sm:$0xf]
  %v20 = vld [vmem:[%s1 + $0x14] sm:$0xf]
  %v21 = vld [vmem:[%s1 + $0x18] sm:$0xf]
  %v22 = vld [vmem:[%s1 + $0x1c] sm:$0xf]
  %v23 = vld [vmem:[%s1 + $0x20] sm:$0xf]
  %v24 = vld [vmem:[%s1 + $0x24] sm:$0xf]
  %v25 = vld [vmem:[%s1 + $0x28] sm:$0xf]
  %v26 = vld [vmem:[%s1 + $0x2c] sm:$0xf]
  %v27 = vld [vmem:[%s1 + $0x30] sm:$0xf]
  %v28 = vld [vmem:[%s1 + $0x34] sm:$0xf]
  %v29 = vld [vmem:[%s1 + $0x38] sm:$0xf]
  %v30 = vld [vmem:[%s1 + $0x3c] sm:$0xf]
  %v31 = vld [vmem:[%s1 + $0x40] sm:$0xf]
  %v32 = vld [vmem:[%s1 + $0x44] sm:$0xf]
  %v33 = vld [vmem:[%s1 + $0x48] sm:$0xf]
  %v34 = vld [vmem:[%s1 + $0x4c] sm:$0xf]
  %v35 = vld [vmem:[%s1 + $0x50] sm:$0xf]
  %v36 = vld [vmem:[%s1 + $0x54] sm:$0xf]
  %v37 = vld [vmem:[%s1 + $0x58] sm:$0xf]
  %v38 = vld [vmem:[%s1 + $0x5c] sm:$0xf]
  %v39 = vld [vmem:[%s1 + $0x60] sm:$0xf]
  %v40 = vld [vmem:[%s1 + $0x64] sm:$0xf]
  %v41 = vld [vmem:[%s1 + $0x68] sm:$0xf]
  %v42 = vld [vmem:[%s1 + $0x6c] sm:$0xf]
  %v43 = vld [vmem:[%s1 + $0x70] sm:$0xf]
  %v44 = vld [vmem:[%s1 + $0x74] sm:$0xf]
  %v45 = vld [vmem:[%s1 + $0x78] sm:$0xf]
  %v46 = vld [vmem:[%s1 + $0x7c] sm:$0xf]
  %v47 = vld [vmem:[%s1 + $0x80] sm:$0xf]
  %v48 = vld [vmem:[%s1 + $0x84] sm:$0xf]
  %v49 = vld [vmem:[%s1 + $0x88] sm:$0xf]
  %v50 = vld [vmem:[%s1 + $0x8c] sm:$0xf]
  %v51 = vld [vmem:[%s0] sm:$0xff]
  %v52 = vld [vmem:[%s0 + $0x8] sm:$0xf]
  %v53 = vld [vmem:[%s0 + $0xc] sm:$0xff]
  %v54 = vld [vmem:[%s0 + $0x14] sm:$0xf]
  %v55 = vld [vmem:[%s0 + $0x18] sm:$0xff]
  %v56 = vld [vmem:[%s0 + $0x20] sm:$0xf]
  %v57 = vld [vmem:[%s0 + $0x24] sm:$0xff]
  %v58 = vld [vmem:[%s0 + $0x2c] sm:$0xf]
  %v59 = vld [vmem:[%s0 + $0x30] sm:$0xff]
  %v60 = vld [vmem:[%s0 + $0x38] sm:$0xf]
  %v61 = vld [vmem:[%s0 + $0x3c] sm:$0xff]
  %v62 = vld [vmem:[%s0 + $0x44] sm:$0xf]
  %v63 = vld [vmem:[%s0 + $0x48] sm:$0xff]
  %v64 = vld [vmem:[%s0 + $0x50] sm:$0xf]
  %v65 = vld [vmem:[%s0 + $0x54] sm:$0xff]
  %v66 = vld [vmem:[%s0 + $0x5c] sm:$0xf]
  %v67 = vld [vmem:[%s0 + $0x60] sm:$0xff]
  %v68 = vld [vmem:[%s0 + $0x68] sm:$0xf]
  %v87 = vunpack.c.l.b16 %v51
  %v88 = vunpack.c.h.b16 %v51
  %v89 = vunpack.c.l.b16 %v52
  %v90 = vunpack.c.l.b16 %v53
  %v91 = vunpack.c.h.b16 %v53
  %v92 = vunpack.c.l.b16 %v54
  %v93 = vunpack.c.l.b16 %v55
  %v94 = vunpack.c.h.b16 %v55
  %v95 = vunpack.c.l.b16 %v56
  %v96 = vunpack.c.l.b16 %v57
  %v97 = vunpack.c.h.b16 %v57
  %v98 = vunpack.c.l.b16 %v58
  %v99 = vunpack.c.l.b16 %v59
  %v100 = vunpack.c.h.b16 %v59
  %v101 = vunpack.c.l.b16 %v60
  %v102 = vunpack.c.l.b16 %v61
  %v103 = vunpack.c.h.b16 %v61
  %v104 = vunpack.c.l.b16 %v62
  %v105 = vunpack.c.l.b16 %v63
  %v106 = vunpack.c.h.b16 %v63
  %v107 = vunpack.c.l.b16 %v64
  %v108 = vunpack.c.l.b16 %v65
  %v109 = vunpack.c.h.b16 %v65
  %v110 = vunpack.c.l.b16 %v66
  %v111 = vunpack.c.l.b16 %v67
  %v112 = vunpack.c.h.b16 %v67
  %v113 = vunpack.c.l.b16 %v68
  %v114 = vpack.c.b16 %v90, %v87
  %v115 = vpack.c.b16 %v91, %v88
  %v116 = vpack.c.b16 %v92, %v89
  %v117 = vpack.c.b16 %v96, %v93
  %v118 = vpack.c.b16 %v97, %v94
  %v119 = vpack.c.b16 %v98, %v95
  %v120 = vpack.c.b16 %v102, %v99
  %v121 = vpack.c.b16 %v103, %v100
  %v122 = vpack.c.b16 %v104, %v101
  %v123 = vpack.c.b16 %v108, %v105
  %v124 = vpack.c.b16 %v109, %v106
  %v125 = vpack.c.b16 %v110, %v107
  %v126 = vpack.c.b16 %v111, %v111
  %v127 = vpack.c.b16 %v112, %v112
  %v128 = vpack.c.b16 %v113, %v113
  %v175 = vunpack.c.l.b16 %v15
  %v176 = vunpack.c.l.b16 %v16
  %v177 = vunpack.c.l.b16 %v17
  %v178 = vunpack.c.l.b16 %v18
  %v179 = vunpack.c.l.b16 %v19
  %v180 = vunpack.c.l.b16 %v20
  %v181 = vunpack.c.l.b16 %v21
  %v182 = vunpack.c.l.b16 %v22
  %v183 = vunpack.c.l.b16 %v23
  %v184 = vunpack.c.l.b16 %v24
  %v185 = vunpack.c.l.b16 %v25
  %v186 = vunpack.c.l.b16 %v26
  %v187 = vunpack.c.l.b16 %v27
  %v188 = vunpack.c.l.b16 %v28
  %v189 = vunpack.c.l.b16 %v29
  %v190 = vunpack.c.l.b16 %v30
  %v191 = vunpack.c.l.b16 %v31
  %v192 = vunpack.c.l.b16 %v32
  %v193 = vunpack.c.l.b16 %v33
  %v194 = vunpack.c.l.b16 %v34
  %v195 = vunpack.c.l.b16 %v35
  %v196 = vunpack.c.l.b16 %v36
  %v197 = vunpack.c.l.b16 %v37
  %v198 = vunpack.c.l.b16 %v38
  %v199 = vunpack.c.l.b16 %v39
  %v200 = vunpack.c.l.b16 %v40
  %v201 = vunpack.c.l.b16 %v41
  %v202 = vunpack.c.l.b16 %v42
  %v203 = vunpack.c.l.b16 %v43
  %v204 = vunpack.c.l.b16 %v44
  %v205 = vunpack.c.l.b16 %v45
  %v206 = vunpack.c.l.b16 %v46
  %v207 = vunpack.c.l.b16 %v47
  %v208 = vunpack.c.l.b16 %v48
  %v209 = vunpack.c.l.b16 %v49
  %v210 = vunpack.c.l.b16 %v50
  %v211 = vpack.c.b16 %v176, %v175
  %v212 = vpack.c.b16 %v178, %v177
  %v213 = vpack.c.b16 %v180, %v179
  %v214 = vpack.c.b16 %v182, %v181
  %v215 = vpack.c.b16 %v184, %v183
  %v216 = vpack.c.b16 %v186, %v185
  %v217 = vpack.c.b16 %v188, %v187
  %v218 = vpack.c.b16 %v190, %v189
  %v219 = vpack.c.b16 %v192, %v191
  %v220 = vpack.c.b16 %v194, %v193
  %v221 = vpack.c.b16 %v196, %v195
  %v222 = vpack.c.b16 %v198, %v197
  %v223 = vpack.c.b16 %v200, %v199
  %v224 = vpack.c.b16 %v202, %v201
  %v225 = vpack.c.b16 %v204, %v203
  %v226 = vpack.c.b16 %v206, %v205
  %v227 = vpack.c.b16 %v208, %v207
  %v228 = vpack.c.b16 %v210, %v209
  %vm247 = vcmask 261120
  %v249 = vsel %vm247, %v116, 0
  %v252 = vsel %vm247, %v119, 0
  %v255 = vsel %vm247, %v122, 0
  %v258 = vsel %vm247, %v125, 0
  %v261 = vsel %vm247, %v128, 0
  %263 = vmatprep.subr.bf16.mxu0 0
  %264 = vmatpush1.bf16.msra.mxu0 %v211
  %265 = vmatprep.subr.bf16.mxu0 0
  %266 = vmatpush1.bf16.msra.mxu0 %v212
  %267 = vmatprep.subr.bf16.mxu0 0
  %268 = vmatpush1.bf16.msra.mxu0 %v213
  %269 = vmatprep.subr.bf16.mxu0 0
  %270 = vmatpush1.bf16.msra.mxu0 %v214
  %271 = vmatprep.subr.bf16.mxu0 0
  %272 = vmatpush1.bf16.msra.mxu0 %v215
  %273 = vmatprep.subr.bf16.mxu0 0
  %274 = vmatpush1.bf16.msra.mxu0 %v216
  %275 = vmatprep.subr.bf16.mxu0 0
  %276 = vmatpush1.bf16.msra.mxu0 %v217
  %277 = vmatprep.subr.bf16.mxu0 0
  %278 = vmatpush1.bf16.msra.mxu0 %v218
  %279 = vmatprep.subr.bf16.mxu0 0
  %280 = vmatpush1.bf16.msra.mxu0 %v219
  %281 = vmatprep.subr.bf16.mxu0 0
  %282 = vmatpush1.bf16.msra.mxu0 %v220
  %283 = vmatprep.subr.bf16.mxu0 0
  %284 = vmatpush1.bf16.msra.mxu0 %v221
  %285 = vmatprep.subr.bf16.mxu0 0
  %286 = vmatpush1.bf16.msra.mxu0 %v222
  %287 = vmatprep.subr.bf16.mxu0 0
  %288 = vmatpush1.bf16.msra.mxu0 %v223
  %289 = vmatprep.subr.bf16.mxu0 0
  %290 = vmatpush1.bf16.msra.mxu0 %v224
  %291 = vmatprep.subr.bf16.mxu0 0
  %292 = vmatpush1.bf16.msra.mxu0 %v225
  %293 = vmatprep.subr.bf16.mxu0 0
  %294 = vmatpush1.bf16.msra.mxu0 %v226
  %295 = vmatprep.mubr.bf16.mxu0 %v115
  %296 = vmatmul.mubr.bf16.gmra.mrb[0].mxu0 %v114
  %v297 = vpop.f32.mrb[0].mxu0
  %v298 = vadd.f32 0.0, %v297
  %v299 = vpop.f32.mrb[0].mxu0
  %v300 = vpop.f32.mrb[0].mxu0
  %v301 = vadd.f32 0.0, %v300
  %v302 = vpop.f32.mrb[0].mxu0
  %303 = vmatprep.mubr.bf16.mxu0 %v118
  %304 = vmatmul.mubr.bf16.gmra.mrb[0].mxu0 %v117
  %v305 = vpop.f32.mrb[0].mxu0
  %v306 = vadd.f32 0.0, %v305
  %v307 = vpop.f32.mrb[0].mxu0
  %v308 = vpop.f32.mrb[0].mxu0
  %v309 = vadd.f32 0.0, %v308
  %v310 = vpop.f32.mrb[0].mxu0
  %311 = vmatprep.mubr.bf16.mxu0 %v121
  %312 = vmatmul.mubr.bf16.gmra.mrb[0].mxu0 %v120
  %v313 = vpop.f32.mrb[0].mxu0
  %v314 = vadd.f32 0.0, %v313
  %v315 = vpop.f32.mrb[0].mxu0
  %v316 = vpop.f32.mrb[0].mxu0
  %v317 = vadd.f32 0.0, %v316
  %v318 = vpop.f32.mrb[0].mxu0
  %319 = vmatprep.mubr.bf16.mxu0 %v124
  %320 = vmatmul.mubr.bf16.gmra.mrb[0].mxu0 %v123
  %v321 = vpop.f32.mrb[0].mxu0
  %v322 = vadd.f32 0.0, %v321
  %v323 = vpop.f32.mrb[0].mxu0
  %v324 = vpop.f32.mrb[0].mxu0
  %v325 = vadd.f32 0.0, %v324
  %v326 = vpop.f32.mrb[0].mxu0
  %327 = vmatprep.mubr.bf16.mxu0 %v127
  %328 = vmatmul.mubr.bf16.gmra.mrb[0].mxu0 %v126
  %v329 = vpop.f32.mrb[0].mxu0
  %v330 = vadd.f32 0.0, %v329
  %v331 = vpop.f32.mrb[0].mxu0
  %v332 = vpop.f32.mrb[0].mxu0
  %v333 = vpop.f32.mrb[0].mxu0
  %334 = vdwg.mxu0
  %335 = vmatprep.subr.bf16.mxu0 0
  %336 = vmatpush1.bf16.msra.mxu0 %v227
  %337 = vmatprep.subr.bf16.mxu0 0
  %338 = vmatpush1.bf16.msra.mxu0 %v228
  %339 = vmatprep.subr.bf16.mxu0 0
  %340 = vmatpush1.bf16.msra.mxu0 0
  %341 = vmatprep.subr.bf16.mxu0 0
  %342 = vmatpush1.bf16.msra.mxu0 0
  %343 = vmatprep.subr.bf16.mxu0 0
  %344 = vmatpush1.bf16.msra.mxu0 0
  %345 = vmatprep.subr.bf16.mxu0 0
  %346 = vmatpush1.bf16.msra.mxu0 0
  %347 = vmatprep.subr.bf16.mxu0 0
  %348 = vmatpush1.bf16.msra.mxu0 0
  %349 = vmatprep.subr.bf16.mxu0 0
  %350 = vmatpush1.bf16.msra.mxu0 0
  %351 = vmatprep.subr.bf16.mxu0 0
  %352 = vmatpush1.bf16.msra.mxu0 0
  %353 = vmatprep.subr.bf16.mxu0 0
  %354 = vmatpush1.bf16.msra.mxu0 0
  %355 = vmatprep.subr.bf16.mxu0 0
  %356 = vmatpush1.bf16.msra.mxu0 0
  %357 = vmatprep.subr.bf16.mxu0 0
  %358 = vmatpush1.bf16.msra.mxu0 0
  %359 = vmatprep.subr.bf16.mxu0 0
  %360 = vmatpush1.bf16.msra.mxu0 0
  %361 = vmatprep.subr.bf16.mxu0 0
  %362 = vmatpush1.bf16.msra.mxu0 0
  %363 = vmatprep.subr.bf16.mxu0 0
  %364 = vmatpush1.bf16.msra.mxu0 0
  %365 = vmatprep.subr.bf16.mxu0 0
  %366 = vmatpush1.bf16.msra.mxu0 0
  %367 = vmatprep.mubr.bf16.mxu0 0
  %368 = vmatmul.mubr.bf16.gmra.mrb[0].mxu0 %v249
  %v369 = vpop.f32.mrb[0].mxu0
  %v370 = vadd.f32 %v298, %v369
  %v371 = vpop.f32.mrb[0].mxu0
  %v372 = vpop.f32.mrb[0].mxu0
  %v373 = vadd.f32 %v301, %v372
  %v374 = vpop.f32.mrb[0].mxu0
  %375 = vmatprep.mubr.bf16.mxu0 0
  %376 = vmatmul.mubr.bf16.gmra.mrb[0].mxu0 %v252
  %v377 = vpop.f32.mrb[0].mxu0
  %v378 = vadd.f32 %v306, %v377
  %v379 = vpop.f32.mrb[0].mxu0
  %v380 = vpop.f32.mrb[0].mxu0
  %v381 = vadd.f32 %v309, %v380
  %v382 = vpop.f32.mrb[0].mxu0
  %383 = vmatprep.mubr.bf16.mxu0 0
  %384 = vmatmul.mubr.bf16.gmra.mrb[0].mxu0 %v255
  %v385 = vpop.f32.mrb[0].mxu0
  %v386 = vadd.f32 %v314, %v385
  %v387 = vpop.f32.mrb[0].mxu0
  %v388 = vpop.f32.mrb[0].mxu0
  %v389 = vadd.f32 %v317, %v388
  %v390 = vpop.f32.mrb[0].mxu0
  %391 = vmatprep.mubr.bf16.mxu0 0
  %392 = vmatmul.mubr.bf16.gmra.mrb[0].mxu0 %v258
  %v393 = vpop.f32.mrb[0].mxu0
  %v394 = vadd.f32 %v322, %v393
  %v395 = vpop.f32.mrb[0].mxu0
  %v396 = vpop.f32.mrb[0].mxu0
  %v397 = vadd.f32 %v325, %v396
  %v398 = vpop.f32.mrb[0].mxu0
  %399 = vmatprep.mubr.bf16.mxu0 0
  %400 = vmatmul.mubr.bf16.gmra.mrb[0].mxu0 %v261
  %v401 = vpop.f32.mrb[0].mxu0
  %v402 = vadd.f32 %v330, %v401
  %v403 = vpop.f32.mrb[0].mxu0
  %v404 = vpop.f32.mrb[0].mxu0
  %v405 = vpop.f32.mrb[0].mxu0
  %406 = vdwg.mxu0
  %s407 = scalar_lea.vmem %s0, 108
  %v408 = vld [vmem:[%s407] sm:$0xff]
  %v409 = vld [vmem:[%s407 + $0x8] sm:$0xf]
  %v410 = vld [vmem:[%s407 + $0xc] sm:$0xff]
  %v411 = vld [vmem:[%s407 + $0x14] sm:$0xf]
  %v412 = vld [vmem:[%s407 + $0x18] sm:$0xff]
  %v413 = vld [vmem:[%s407 + $0x20] sm:$0xf]
  %v414 = vld [vmem:[%s407 + $0x24] sm:$0xff]
  %v415 = vld [vmem:[%s407 + $0x2c] sm:$0xf]
  %v416 = vld [vmem:[%s407 + $0x30] sm:$0xff]
  %v417 = vld [vmem:[%s407 + $0x38] sm:$0xf]
  %v418 = vld [vmem:[%s407 + $0x3c] sm:$0xff]
  %v419 = vld [vmem:[%s407 + $0x44] sm:$0xf]
  %v420 = vld [vmem:[%s407 + $0x48] sm:$0xff]
  %v421 = vld [vmem:[%s407 + $0x50] sm:$0xf]
  %v422 = vld [vmem:[%s407 + $0x54] sm:$0xff]
  %v423 = vld [vmem:[%s407 + $0x5c] sm:$0xf]
  %v424 = vld [vmem:[%s407 + $0x60] sm:$0xff]
  %v425 = vld [vmem:[%s407 + $0x68] sm:$0xf]
  %v444 = vunpack.c.l.b16 %v408
  %v445 = vunpack.c.h.b16 %v408
  %v446 = vunpack.c.l.b16 %v409
  %v447 = vunpack.c.l.b16 %v410
  %v448 = vunpack.c.h.b16 %v410
  %v449 = vunpack.c.l.b16 %v411
  %v450 = vunpack.c.l.b16 %v412
  %v451 = vunpack.c.h.b16 %v412
  %v452 = vunpack.c.l.b16 %v413
  %v453 = vunpack.c.l.b16 %v414
  %v454 = vunpack.c.h.b16 %v414
  %v455 = vunpack.c.l.b16 %v415
  %v456 = vunpack.c.l.b16 %v416
  %v457 = vunpack.c.h.b16 %v416
  %v458 = vunpack.c.l.b16 %v417
  %v459 = vunpack.c.l.b16 %v418
  %v460 = vunpack.c.h.b16 %v418
  %v461 = vunpack.c.l.b16 %v419
  %v462 = vunpack.c.l.b16 %v420
  %v463 = vunpack.c.h.b16 %v420
  %v464 = vunpack.c.l.b16 %v421
  %v465 = vunpack.c.l.b16 %v422
  %v466 = vunpack.c.h.b16 %v422
  %v467 = vunpack.c.l.b16 %v423
  %v468 = vunpack.c.l.b16 %v424
  %v469 = vunpack.c.h.b16 %v424
  %v470 = vunpack.c.l.b16 %v425
  %v471 = vpack.c.b16 %v447, %v444
  %v472 = vpack.c.b16 %v448, %v445
  %v473 = vpack.c.b16 %v449, %v446
  %v474 = vpack.c.b16 %v453, %v450
  %v475 = vpack.c.b16 %v454, %v451
  %v476 = vpack.c.b16 %v455, %v452
  %v477 = vpack.c.b16 %v459, %v456
  %v478 = vpack.c.b16 %v460, %v457
  %v479 = vpack.c.b16 %v461, %v458
  %v480 = vpack.c.b16 %v465, %v462
  %v481 = vpack.c.b16 %v466, %v463
  %v482 = vpack.c.b16 %v467, %v464
  %v483 = vpack.c.b16 %v468, %v468
  %v484 = vpack.c.b16 %v469, %v469
  %v485 = vpack.c.b16 %v470, %v470
  %v497 = vsel %vm247, %v473, 0
  %v500 = vsel %vm247, %v476, 0
  %v503 = vsel %vm247, %v479, 0
  %v506 = vsel %vm247, %v482, 0
  %v509 = vsel %vm247, %v485, 0
  %511 = vmatprep.subr.bf16.mxu0 0
  %512 = vmatpush1.bf16.msra.mxu0 %v211
  %513 = vmatprep.subr.bf16.mxu0 0
  %514 = vmatpush1.bf16.msra.mxu0 %v212
  %515 = vmatprep.subr.bf16.mxu0 0
  %516 = vmatpush1.bf16.msra.mxu0 %v213
  %517 = vmatprep.subr.bf16.mxu0 0
  %518 = vmatpush1.bf16.msra.mxu0 %v214
  %519 = vmatprep.subr.bf16.mxu0 0
  %520 = vmatpush1.bf16.msra.mxu0 %v215
  %521 = vmatprep.subr.bf16.mxu0 0
  %522 = vmatpush1.bf16.msra.mxu0 %v216
  %523 = vmatprep.subr.bf16.mxu0 0
  %524 = vmatpush1.bf16.msra.mxu0 %v217
  %525 = vmatprep.subr.bf16.mxu0 0
  %526 = vmatpush1.bf16.msra.mxu0 %v218
  %527 = vmatprep.subr.bf16.mxu0 0
  %528 = vmatpush1.bf16.msra.mxu0 %v219
  %529 = vmatprep.subr.bf16.mxu0 0
  %530 = vmatpush1.bf16.msra.mxu0 %v220
  %531 = vmatprep.subr.bf16.mxu0 0
  %532 = vmatpush1.bf16.msra.mxu0 %v221
  %533 = vmatprep.subr.bf16.mxu0 0
  %534 = vmatpush1.bf16.msra.mxu0 %v222
  %535 = vmatprep.subr.bf16.mxu0 0
  %536 = vmatpush1.bf16.msra.mxu0 %v223
  %537 = vmatprep.subr.bf16.mxu0 0
  %538 = vmatpush1.bf16.msra.mxu0 %v224
  %539 = vmatprep.subr.bf16.mxu0 0
  %540 = vmatpush1.bf16.msra.mxu0 %v225
  %541 = vmatprep.subr.bf16.mxu0 0
  %542 = vmatpush1.bf16.msra.mxu0 %v226
  %543 = vmatprep.mubr.bf16.mxu0 %v472
  %544 = vmatmul.mubr.bf16.gmra.mrb[0].mxu0 %v471
  %v545 = vpop.f32.mrb[0].mxu0
  %v546 = vadd.f32 0.0, %v545
  %v547 = vpop.f32.mrb[0].mxu0
  %v548 = vpop.f32.mrb[0].mxu0
  %v549 = vadd.f32 0.0, %v548
  %v550 = vpop.f32.mrb[0].mxu0
  %551 = vmatprep.mubr.bf16.mxu0 %v475
  %552 = vmatmul.mubr.bf16.gmra.mrb[0].mxu0 %v474
  %v553 = vpop.f32.mrb[0].mxu0
  %v554 = vadd.f32 0.0, %v553
  %v555 = vpop.f32.mrb[0].mxu0
  %v556 = vpop.f32.mrb[0].mxu0
  %v557 = vadd.f32 0.0, %v556
  %v558 = vpop.f32.mrb[0].mxu0
  %559 = vmatprep.mubr.bf16.mxu0 %v478
  %560 = vmatmul.mubr.bf16.gmra.mrb[0].mxu0 %v477
  %v561 = vpop.f32.mrb[0].mxu0
  %v562 = vadd.f32 0.0, %v561
  %v563 = vpop.f32.mrb[0].mxu0
  %v564 = vpop.f32.mrb[0].mxu0
  %v565 = vadd.f32 0.0, %v564
  %v566 = vpop.f32.mrb[0].mxu0
  %567 = vmatprep.mubr.bf16.mxu0 %v481
  %568 = vmatmul.mubr.bf16.gmra.mrb[0].mxu0 %v480
  %v569 = vpop.f32.mrb[0].mxu0
  %v570 = vadd.f32 0.0, %v569
  %v571 = vpop.f32.mrb[0].mxu0
  %v572 = vpop.f32.mrb[0].mxu0
  %v573 = vadd.f32 0.0, %v572
  %v574 = vpop.f32.mrb[0].mxu0
  %575 = vmatprep.mubr.bf16.mxu0 %v484
  %576 = vmatmul.mubr.bf16.gmra.mrb[0].mxu0 %v483
  %v577 = vpop.f32.mrb[0].mxu0
  %v578 = vadd.f32 0.0, %v577
  %v579 = vpop.f32.mrb[0].mxu0
  %v580 = vpop.f32.mrb[0].mxu0
  %v581 = vpop.f32.mrb[0].mxu0
  %582 = vdwg.mxu0
  %583 = vmatprep.subr.bf16.mxu0 0
  %584 = vmatpush1.bf16.msra.mxu0 %v227
  %585 = vmatprep.subr.bf16.mxu0 0
  %586 = vmatpush1.bf16.msra.mxu0 %v228
  %587 = vmatprep.subr.bf16.mxu0 0
  %588 = vmatpush1.bf16.msra.mxu0 0
  %589 = vmatprep.subr.bf16.mxu0 0
  %590 = vmatpush1.bf16.msra.mxu0 0
  %591 = vmatprep.subr.bf16.mxu0 0
  %592 = vmatpush1.bf16.msra.mxu0 0
  %593 = vmatprep.subr.bf16.mxu0 0
  %594 = vmatpush1.bf16.msra.mxu0 0
  %595 = vmatprep.subr.bf16.mxu0 0
  %596 = vmatpush1.bf16.msra.mxu0 0
  %597 = vmatprep.subr.bf16.mxu0 0
  %598 = vmatpush1.bf16.msra.mxu0 0
  %599 = vmatprep.subr.bf16.mxu0 0
  %600 = vmatpush1.bf16.msra.mxu0 0
  %601 = vmatprep.subr.bf16.mxu0 0
  %602 = vmatpush1.bf16.msra.mxu0 0
  %603 = vmatprep.subr.bf16.mxu0 0
  %604 = vmatpush1.bf16.msra.mxu0 0
  %605 = vmatprep.subr.bf16.mxu0 0
  %606 = vmatpush1.bf16.msra.mxu0 0
  %607 = vmatprep.subr.bf16.mxu0 0
  %608 = vmatpush1.bf16.msra.mxu0 0
  %609 = vmatprep.subr.bf16.mxu0 0
  %610 = vmatpush1.bf16.msra.mxu0 0
  %611 = vmatprep.subr.bf16.mxu0 0
  %612 = vmatpush1.bf16.msra.mxu0 0
  %613 = vmatprep.subr.bf16.mxu0 0
  %614 = vmatpush1.bf16.msra.mxu0 0
  %615 = vmatprep.mubr.bf16.mxu0 0
  %616 = vmatmul.mubr.bf16.gmra.mrb[0].mxu0 %v497
  %v617 = vpop.f32.mrb[0].mxu0
  %v618 = vadd.f32 %v546, %v617
  %v619 = vpop.f32.mrb[0].mxu0
  %v620 = vpop.f32.mrb[0].mxu0
  %v621 = vadd.f32 %v549, %v620
  %v622 = vpop.f32.mrb[0].mxu0
  %623 = vmatprep.mubr.bf16.mxu0 0
  %624 = vmatmul.mubr.bf16.gmra.mrb[0].mxu0 %v500
  %v625 = vpop.f32.mrb[0].mxu0
  %v626 = vadd.f32 %v554, %v625
  %v627 = vpop.f32.mrb[0].mxu0
  %v628 = vpop.f32.mrb[0].mxu0
  %v629 = vadd.f32 %v557, %v628
  %v630 = vpop.f32.mrb[0].mxu0
  %631 = vmatprep.mubr.bf16.mxu0 0
  %632 = vmatmul.mubr.bf16.gmra.mrb[0].mxu0 %v503
  %v633 = vpop.f32.mrb[0].mxu0
  %v634 = vadd.f32 %v562, %v633
  %v635 = vpop.f32.mrb[0].mxu0
  %v636 = vpop.f32.mrb[0].mxu0
  %v637 = vadd.f32 %v565, %v636
  %v638 = vpop.f32.mrb[0].mxu0
  %639 = vmatprep.mubr.bf16.mxu0 0
  %640 = vmatmul.mubr.bf16.gmra.mrb[0].mxu0 %v506
  %v641 = vpop.f32.mrb[0].mxu0
  %v642 = vadd.f32 %v570, %v641
  %v643 = vpop.f32.mrb[0].mxu0
  %v644 = vpop.f32.mrb[0].mxu0
  %v645 = vadd.f32 %v573, %v644
  %v646 = vpop.f32.mrb[0].mxu0
  %647 = vmatprep.mubr.bf16.mxu0 0
  %648 = vmatmul.mubr.bf16.gmra.mrb[0].mxu0 %v509
  %v649 = vpop.f32.mrb[0].mxu0
  %v650 = vadd.f32 %v578, %v649
  %v651 = vpop.f32.mrb[0].mxu0
  %v652 = vpop.f32.mrb[0].mxu0
  %v653 = vpop.f32.mrb[0].mxu0
  %654 = vdwg.mxu0
  %v655 = vmax.f32 %v370, %v618
  %v656 = vmax.f32 %v373, %v621
  %v657 = vmax.f32 %v378, %v626
  %v658 = vmax.f32 %v381, %v629
  %v659 = vmax.f32 %v386, %v634
  %v660 = vmax.f32 %v389, %v637
  %v661 = vmax.f32 %v394, %v642
  %v662 = vmax.f32 %v397, %v645
  %v663 = vmax.f32 %v402, %v650
  %s664 = scalar_lea.vmem %s0, 216
  %v665 = vld [vmem:[%s664] sm:$0xff]
  %v666 = vld [vmem:[%s664 + $0x8] sm:$0xf]
  %v667 = vld [vmem:[%s664 + $0xc] sm:$0xff]
  %v668 = vld [vmem:[%s664 + $0x14] sm:$0xf]
  %v669 = vld [vmem:[%s664 + $0x18] sm:$0xff]
  %v670 = vld [vmem:[%s664 + $0x20] sm:$0xf]
  %v671 = vld [vmem:[%s664 + $0x24] sm:$0xff]
  %v672 = vld [vmem:[%s664 + $0x2c] sm:$0xf]
  %v673 = vld [vmem:[%s664 + $0x30] sm:$0xff]
  %v674 = vld [vmem:[%s664 + $0x38] sm:$0xf]
  %v675 = vld [vmem:[%s664 + $0x3c] sm:$0xff]
  %v676 = vld [vmem:[%s664 + $0x44] sm:$0xf]
  %v677 = vld [vmem:[%s664 + $0x48] sm:$0xff]
  %v678 = vld [vmem:[%s664 + $0x50] sm:$0xf]
  %v679 = vld [vmem:[%s664 + $0x54] sm:$0xff]
  %v680 = vld [vmem:[%s664 + $0x5c] sm:$0xf]
  %v681 = vld [vmem:[%s664 + $0x60] sm:$0xff]
  %v682 = vld [vmem:[%s664 + $0x68] sm:$0xf]
  %v701 = vunpack.c.l.b16 %v665
  %v702 = vunpack.c.h.b16 %v665
  %v703 = vunpack.c.l.b16 %v666
  %v704 = vunpack.c.l.b16 %v667
  %v705 = vunpack.c.h.b16 %v667
  %v706 = vunpack.c.l.b16 %v668
  %v707 = vunpack.c.l.b16 %v669
  %v708 = vunpack.c.h.b16 %v669
  %v709 = vunpack.c.l.b16 %v670
  %v710 = vunpack.c.l.b16 %v671
  %v711 = vunpack.c.h.b16 %v671
  %v712 = vunpack.c.l.b16 %v672
  %v713 = vunpack.c.l.b16 %v673
  %v714 = vunpack.c.h.b16 %v673
  %v715 = vunpack.c.l.b16 %v674
  %v716 = vunpack.c.l.b16 %v675
  %v717 = vunpack.c.h.b16 %v675
  %v718 = vunpack.c.l.b16 %v676
  %v719 = vunpack.c.l.b16 %v677
  %v720 = vunpack.c.h.b16 %v677
  %v721 = vunpack.c.l.b16 %v678
  %v722 = vunpack.c.l.b16 %v679
  %v723 = vunpack.c.h.b16 %v679
  %v724 = vunpack.c.l.b16 %v680
  %v725 = vunpack.c.l.b16 %v681
  %v726 = vunpack.c.h.b16 %v681
  %v727 = vunpack.c.l.b16 %v682
  %v728 = vpack.c.b16 %v704, %v701
  %v729 = vpack.c.b16 %v705, %v702
  %v730 = vpack.c.b16 %v706, %v703
  %v731 = vpack.c.b16 %v710, %v707
  %v732 = vpack.c.b16 %v711, %v708
  %v733 = vpack.c.b16 %v712, %v709
  %v734 = vpack.c.b16 %v716, %v713
  %v735 = vpack.c.b16 %v717, %v714
  %v736 = vpack.c.b16 %v718, %v715
  %v737 = vpack.c.b16 %v722, %v719
  %v738 = vpack.c.b16 %v723, %v720
  %v739 = vpack.c.b16 %v724, %v721
  %v740 = vpack.c.b16 %v725, %v725
  %v741 = vpack.c.b16 %v726, %v726
  %v742 = vpack.c.b16 %v727, %v727
  %v754 = vsel %vm247, %v730, 0
  %v757 = vsel %vm247, %v733, 0
  %v760 = vsel %vm247, %v736, 0
  %v763 = vsel %vm247, %v739, 0
  %v766 = vsel %vm247, %v742, 0
  %768 = vmatprep.subr.bf16.mxu0 0
  %769 = vmatpush1.bf16.msra.mxu0 %v211
  %770 = vmatprep.subr.bf16.mxu0 0
  %771 = vmatpush1.bf16.msra.mxu0 %v212
  %772 = vmatprep.subr.bf16.mxu0 0
  %773 = vmatpush1.bf16.msra.mxu0 %v213
  %774 = vmatprep.subr.bf16.mxu0 0
  %775 = vmatpush1.bf16.msra.mxu0 %v214
  %776 = vmatprep.subr.bf16.mxu0 0
  %777 = vmatpush1.bf16.msra.mxu0 %v215
  %778 = vmatprep.subr.bf16.mxu0 0
  %779 = vmatpush1.bf16.msra.mxu0 %v216
  %780 = vmatprep.subr.bf16.mxu0 0
  %781 = vmatpush1.bf16.msra.mxu0 %v217
  %782 = vmatprep.subr.bf16.mxu0 0
  %783 = vmatpush1.bf16.msra.mxu0 %v218
  %784 = vmatprep.subr.bf16.mxu0 0
  %785 = vmatpush1.bf16.msra.mxu0 %v219
  %786 = vmatprep.subr.bf16.mxu0 0
  %787 = vmatpush1.bf16.msra.mxu0 %v220
  %788 = vmatprep.subr.bf16.mxu0 0
  %789 = vmatpush1.bf16.msra.mxu0 %v221
  %790 = vmatprep.subr.bf16.mxu0 0
  %791 = vmatpush1.bf16.msra.mxu0 %v222
  %792 = vmatprep.subr.bf16.mxu0 0
  %793 = vmatpush1.bf16.msra.mxu0 %v223
  %794 = vmatprep.subr.bf16.mxu0 0
  %795 = vmatpush1.bf16.msra.mxu0 %v224
  %796 = vmatprep.subr.bf16.mxu0 0
  %797 = vmatpush1.bf16.msra.mxu0 %v225
  %798 = vmatprep.subr.bf16.mxu0 0
  %799 = vmatpush1.bf16.msra.mxu0 %v226
  %800 = vmatprep.mubr.bf16.mxu0 %v729
  %801 = vmatmul.mubr.bf16.gmra.mrb[0].mxu0 %v728
  %v802 = vpop.f32.mrb[0].mxu0
  %v803 = vadd.f32 0.0, %v802
  %v804 = vpop.f32.mrb[0].mxu0
  %v805 = vpop.f32.mrb[0].mxu0
  %v806 = vadd.f32 0.0, %v805
  %v807 = vpop.f32.mrb[0].mxu0
  %808 = vmatprep.mubr.bf16.mxu0 %v732
  %809 = vmatmul.mubr.bf16.gmra.mrb[0].mxu0 %v731
  %v810 = vpop.f32.mrb[0].mxu0
  %v811 = vadd.f32 0.0, %v810
  %v812 = vpop.f32.mrb[0].mxu0
  %v813 = vpop.f32.mrb[0].mxu0
  %v814 = vadd.f32 0.0, %v813
  %v815 = vpop.f32.mrb[0].mxu0
  %816 = vmatprep.mubr.bf16.mxu0 %v735
  %817 = vmatmul.mubr.bf16.gmra.mrb[0].mxu0 %v734
  %v818 = vpop.f32.mrb[0].mxu0
  %v819 = vadd.f32 0.0, %v818
  %v820 = vpop.f32.mrb[0].mxu0
  %v821 = vpop.f32.mrb[0].mxu0
  %v822 = vadd.f32 0.0, %v821
  %v823 = vpop.f32.mrb[0].mxu0
  %824 = vmatprep.mubr.bf16.mxu0 %v738
  %825 = vmatmul.mubr.bf16.gmra.mrb[0].mxu0 %v737
  %v826 = vpop.f32.mrb[0].mxu0
  %v827 = vadd.f32 0.0, %v826
  %v828 = vpop.f32.mrb[0].mxu0
  %v829 = vpop.f32.mrb[0].mxu0
  %v830 = vadd.f32 0.0, %v829
  %v831 = vpop.f32.mrb[0].mxu0
  %832 = vmatprep.mubr.bf16.mxu0 %v741
  %833 = vmatmul.mubr.bf16.gmra.mrb[0].mxu0 %v740
  %v834 = vpop.f32.mrb[0].mxu0
  %v835 = vadd.f32 0.0, %v834
  %v836 = vpop.f32.mrb[0].mxu0
  %v837 = vpop.f32.mrb[0].mxu0
  %v838 = vpop.f32.mrb[0].mxu0
  %839 = vdwg.mxu0
  %840 = vmatprep.subr.bf16.mxu0 0
  %841 = vmatpush1.bf16.msra.mxu0 %v227
  %842 = vmatprep.subr.bf16.mxu0 0
  %843 = vmatpush1.bf16.msra.mxu0 %v228
  %844 = vmatprep.subr.bf16.mxu0 0
  %845 = vmatpush1.bf16.msra.mxu0 0
  %846 = vmatprep.subr.bf16.mxu0 0
  %847 = vmatpush1.bf16.msra.mxu0 0
  %848 = vmatprep.subr.bf16.mxu0 0
  %849 = vmatpush1.bf16.msra.mxu0 0
  %850 = vmatprep.subr.bf16.mxu0 0
  %851 = vmatpush1.bf16.msra.mxu0 0
  %852 = vmatprep.subr.bf16.mxu0 0
  %853 = vmatpush1.bf16.msra.mxu0 0
  %854 = vmatprep.subr.bf16.mxu0 0
  %855 = vmatpush1.bf16.msra.mxu0 0
  %856 = vmatprep.subr.bf16.mxu0 0
  %857 = vmatpush1.bf16.msra.mxu0 0
  %858 = vmatprep.subr.bf16.mxu0 0
  %859 = vmatpush1.bf16.msra.mxu0 0
  %860 = vmatprep.subr.bf16.mxu0 0
  %861 = vmatpush1.bf16.msra.mxu0 0
  %862 = vmatprep.subr.bf16.mxu0 0
  %863 = vmatpush1.bf16.msra.mxu0 0
  %864 = vmatprep.subr.bf16.mxu0 0
  %865 = vmatpush1.bf16.msra.mxu0 0
  %866 = vmatprep.subr.bf16.mxu0 0
  %867 = vmatpush1.bf16.msra.mxu0 0
  %868 = vmatprep.subr.bf16.mxu0 0
  %869 = vmatpush1.bf16.msra.mxu0 0
  %870 = vmatprep.subr.bf16.mxu0 0
  %871 = vmatpush1.bf16.msra.mxu0 0
  %872 = vmatprep.mubr.bf16.mxu0 0
  %873 = vmatmul.mubr.bf16.gmra.mrb[0].mxu0 %v754
  %v874 = vpop.f32.mrb[0].mxu0
  %v875 = vadd.f32 %v803, %v874
  %v876 = vpop.f32.mrb[0].mxu0
  %v877 = vpop.f32.mrb[0].mxu0
  %v878 = vadd.f32 %v806, %v877
  %v879 = vpop.f32.mrb[0].mxu0
  %880 = vmatprep.mubr.bf16.mxu0 0
  %881 = vmatmul.mubr.bf16.gmra.mrb[0].mxu0 %v757
  %v882 = vpop.f32.mrb[0].mxu0
  %v883 = vadd.f32 %v811, %v882
  %v884 = vpop.f32.mrb[0].mxu0
  %v885 = vpop.f32.mrb[0].mxu0
  %v886 = vadd.f32 %v814, %v885
  %v887 = vpop.f32.mrb[0].mxu0
  %888 = vmatprep.mubr.bf16.mxu0 0
  %889 = vmatmul.mubr.bf16.gmra.mrb[0].mxu0 %v760
  %v890 = vpop.f32.mrb[0].mxu0
  %v891 = vadd.f32 %v819, %v890
  %v892 = vpop.f32.mrb[0].mxu0
  %v893 = vpop.f32.mrb[0].mxu0
  %v894 = vadd.f32 %v822, %v893
  %v895 = vpop.f32.mrb[0].mxu0
  %896 = vmatprep.mubr.bf16.mxu0 0
  %897 = vmatmul.mubr.bf16.gmra.mrb[0].mxu0 %v763
  %v898 = vpop.f32.mrb[0].mxu0
  %v899 = vadd.f32 %v827, %v898
  %v900 = vpop.f32.mrb[0].mxu0
  %v901 = vpop.f32.mrb[0].mxu0
  %v902 = vadd.f32 %v830, %v901
  %v903 = vpop.f32.mrb[0].mxu0
  %904 = vmatprep.mubr.bf16.mxu0 0
  %905 = vmatmul.mubr.bf16.gmra.mrb[0].mxu0 %v766
  %v906 = vpop.f32.mrb[0].mxu0
  %v907 = vadd.f32 %v835, %v906
  %v908 = vpop.f32.mrb[0].mxu0
  %v909 = vpop.f32.mrb[0].mxu0
  %v910 = vpop.f32.mrb[0].mxu0
  %911 = vdwg.mxu0
  %v912 = vmax.f32 %v655, %v875
  %v913 = vmax.f32 %v656, %v878
  %v914 = vmax.f32 %v657, %v883
  %v915 = vmax.f32 %v658, %v886
  %v916 = vmax.f32 %v659, %v891
  %v917 = vmax.f32 %v660, %v894
  %v918 = vmax.f32 %v661, %v899
  %v919 = vmax.f32 %v662, %v902
  %v920 = vmax.f32 %v663, %v907
  %s921 = scalar_lea.vmem %s0, 324
  %v922 = vld [vmem:[%s921] sm:$0xff]
  %v923 = vld [vmem:[%s921 + $0x8] sm:$0xf]
  %v924 = vld [vmem:[%s921 + $0xc] sm:$0xff]
  %v925 = vld [vmem:[%s921 + $0x14] sm:$0xf]
  %v926 = vld [vmem:[%s921 + $0x18] sm:$0xff]
  %v927 = vld [vmem:[%s921 + $0x20] sm:$0xf]
  %v928 = vld [vmem:[%s921 + $0x24] sm:$0xff]
  %v929 = vld [vmem:[%s921 + $0x2c] sm:$0xf]
  %v930 = vld [vmem:[%s921 + $0x30] sm:$0xff]
  %v931 = vld [vmem:[%s921 + $0x38] sm:$0xf]
  %v932 = vld [vmem:[%s921 + $0x3c] sm:$0xff]
  %v933 = vld [vmem:[%s921 + $0x44] sm:$0xf]
  %v934 = vld [vmem:[%s921 + $0x48] sm:$0xff]
  %v935 = vld [vmem:[%s921 + $0x50] sm:$0xf]
  %v936 = vld [vmem:[%s921 + $0x54] sm:$0xff]
  %v937 = vld [vmem:[%s921 + $0x5c] sm:$0xf]
  %v938 = vld [vmem:[%s921 + $0x60] sm:$0xff]
  %v939 = vld [vmem:[%s921 + $0x68] sm:$0xf]
  %v958 = vunpack.c.l.b16 %v922
  %v959 = vunpack.c.h.b16 %v922
  %v960 = vunpack.c.l.b16 %v923
  %v961 = vunpack.c.l.b16 %v924
  %v962 = vunpack.c.h.b16 %v924
  %v963 = vunpack.c.l.b16 %v925
  %v964 = vunpack.c.l.b16 %v926
  %v965 = vunpack.c.h.b16 %v926
  %v966 = vunpack.c.l.b16 %v927
  %v967 = vunpack.c.l.b16 %v928
  %v968 = vunpack.c.h.b16 %v928
  %v969 = vunpack.c.l.b16 %v929
  %v970 = vunpack.c.l.b16 %v930
  %v971 = vunpack.c.h.b16 %v930
  %v972 = vunpack.c.l.b16 %v931
  %v973 = vunpack.c.l.b16 %v932
  %v974 = vunpack.c.h.b16 %v932
  %v975 = vunpack.c.l.b16 %v933
  %v976 = vunpack.c.l.b16 %v934
  %v977 = vunpack.c.h.b16 %v934
  %v978 = vunpack.c.l.b16 %v935
  %v979 = vunpack.c.l.b16 %v936
  %v980 = vunpack.c.h.b16 %v936
  %v981 = vunpack.c.l.b16 %v937
  %v982 = vunpack.c.l.b16 %v938
  %v983 = vunpack.c.h.b16 %v938
  %v984 = vunpack.c.l.b16 %v939
  %v985 = vpack.c.b16 %v961, %v958
  %v986 = vpack.c.b16 %v962, %v959
  %v987 = vpack.c.b16 %v963, %v960
  %v988 = vpack.c.b16 %v967, %v964
  %v989 = vpack.c.b16 %v968, %v965
  %v990 = vpack.c.b16 %v969, %v966
  %v991 = vpack.c.b16 %v973, %v970
  %v992 = vpack.c.b16 %v974, %v971
  %v993 = vpack.c.b16 %v975, %v972
  %v994 = vpack.c.b16 %v979, %v976
  %v995 = vpack.c.b16 %v980, %v977
  %v996 = vpack.c.b16 %v981, %v978
  %v997 = vpack.c.b16 %v982, %v982
  %v998 = vpack.c.b16 %v983, %v983
  %v999 = vpack.c.b16 %v984, %v984
  %v1011 = vsel %vm247, %v987, 0
  %v1014 = vsel %vm247, %v990, 0
  %v1017 = vsel %vm247, %v993, 0
  %v1020 = vsel %vm247, %v996, 0
  %v1023 = vsel %vm247, %v999, 0
  %1025 = vmatprep.subr.bf16.mxu0 0
  %1026 = vmatpush1.bf16.msra.mxu0 %v211
  %1027 = vmatprep.subr.bf16.mxu0 0
  %1028 = vmatpush1.bf16.msra.mxu0 %v212
  %1029 = vmatprep.subr.bf16.mxu0 0
  %1030 = vmatpush1.bf16.msra.mxu0 %v213
  %1031 = vmatprep.subr.bf16.mxu0 0
  %1032 = vmatpush1.bf16.msra.mxu0 %v214
  %1033 = vmatprep.subr.bf16.mxu0 0
  %1034 = vmatpush1.bf16.msra.mxu0 %v215
  %1035 = vmatprep.subr.bf16.mxu0 0
  %1036 = vmatpush1.bf16.msra.mxu0 %v216
  %1037 = vmatprep.subr.bf16.mxu0 0
  %1038 = vmatpush1.bf16.msra.mxu0 %v217
  %1039 = vmatprep.subr.bf16.mxu0 0
  %1040 = vmatpush1.bf16.msra.mxu0 %v218
  %1041 = vmatprep.subr.bf16.mxu0 0
  %1042 = vmatpush1.bf16.msra.mxu0 %v219
  %1043 = vmatprep.subr.bf16.mxu0 0
  %1044 = vmatpush1.bf16.msra.mxu0 %v220
  %1045 = vmatprep.subr.bf16.mxu0 0
  %1046 = vmatpush1.bf16.msra.mxu0 %v221
  %1047 = vmatprep.subr.bf16.mxu0 0
  %1048 = vmatpush1.bf16.msra.mxu0 %v222
  %1049 = vmatprep.subr.bf16.mxu0 0
  %1050 = vmatpush1.bf16.msra.mxu0 %v223
  %1051 = vmatprep.subr.bf16.mxu0 0
  %1052 = vmatpush1.bf16.msra.mxu0 %v224
  %1053 = vmatprep.subr.bf16.mxu0 0
  %1054 = vmatpush1.bf16.msra.mxu0 %v225
  %1055 = vmatprep.subr.bf16.mxu0 0
  %1056 = vmatpush1.bf16.msra.mxu0 %v226
  %1057 = vmatprep.mubr.bf16.mxu0 %v986
  %1058 = vmatmul.mubr.bf16.gmra.mrb[0].mxu0 %v985
  %v1059 = vpop.f32.mrb[0].mxu0
  %v1060 = vadd.f32 0.0, %v1059
  %v1061 = vpop.f32.mrb[0].mxu0
  %v1062 = vpop.f32.mrb[0].mxu0
  %v1063 = vadd.f32 0.0, %v1062
  %v1064 = vpop.f32.mrb[0].mxu0
  %1065 = vmatprep.mubr.bf16.mxu0 %v989
  %1066 = vmatmul.mubr.bf16.gmra.mrb[0].mxu0 %v988
  %v1067 = vpop.f32.mrb[0].mxu0
  %v1068 = vadd.f32 0.0, %v1067
  %v1069 = vpop.f32.mrb[0].mxu0
  %v1070 = vpop.f32.mrb[0].mxu0
  %v1071 = vadd.f32 0.0, %v1070
  %v1072 = vpop.f32.mrb[0].mxu0
  %1073 = vmatprep.mubr.bf16.mxu0 %v992
  %1074 = vmatmul.mubr.bf16.gmra.mrb[0].mxu0 %v991
  %v1075 = vpop.f32.mrb[0].mxu0
  %v1076 = vadd.f32 0.0, %v1075
  %v1077 = vpop.f32.mrb[0].mxu0
  %v1078 = vpop.f32.mrb[0].mxu0
  %v1079 = vadd.f32 0.0, %v1078
  %v1080 = vpop.f32.mrb[0].mxu0
  %1081 = vmatprep.mubr.bf16.mxu0 %v995
  %1082 = vmatmul.mubr.bf16.gmra.mrb[0].mxu0 %v994
  %v1083 = vpop.f32.mrb[0].mxu0
  %v1084 = vadd.f32 0.0, %v1083
  %v1085 = vpop.f32.mrb[0].mxu0
  %v1086 = vpop.f32.mrb[0].mxu0
  %v1087 = vadd.f32 0.0, %v1086
  %v1088 = vpop.f32.mrb[0].mxu0
  %1089 = vmatprep.mubr.bf16.mxu0 %v998
  %1090 = vmatmul.mubr.bf16.gmra.mrb[0].mxu0 %v997
  %v1091 = vpop.f32.mrb[0].mxu0
  %v1092 = vadd.f32 0.0, %v1091
  %v1093 = vpop.f32.mrb[0].mxu0
  %v1094 = vpop.f32.mrb[0].mxu0
  %v1095 = vpop.f32.mrb[0].mxu0
  %1096 = vdwg.mxu0
  %1097 = vmatprep.subr.bf16.mxu0 0
  %1098 = vmatpush1.bf16.msra.mxu0 %v227
  %1099 = vmatprep.subr.bf16.mxu0 0
  %1100 = vmatpush1.bf16.msra.mxu0 %v228
  %1101 = vmatprep.subr.bf16.mxu0 0
  %1102 = vmatpush1.bf16.msra.mxu0 0
  %1103 = vmatprep.subr.bf16.mxu0 0
  %1104 = vmatpush1.bf16.msra.mxu0 0
  %1105 = vmatprep.subr.bf16.mxu0 0
  %1106 = vmatpush1.bf16.msra.mxu0 0
  %1107 = vmatprep.subr.bf16.mxu0 0
  %1108 = vmatpush1.bf16.msra.mxu0 0
  %1109 = vmatprep.subr.bf16.mxu0 0
  %1110 = vmatpush1.bf16.msra.mxu0 0
  %1111 = vmatprep.subr.bf16.mxu0 0
  %1112 = vmatpush1.bf16.msra.mxu0 0
  %1113 = vmatprep.subr.bf16.mxu0 0
  %1114 = vmatpush1.bf16.msra.mxu0 0
  %1115 = vmatprep.subr.bf16.mxu0 0
  %1116 = vmatpush1.bf16.msra.mxu0 0
  %1117 = vmatprep.subr.bf16.mxu0 0
  %1118 = vmatpush1.bf16.msra.mxu0 0
  %1119 = vmatprep.subr.bf16.mxu0 0
  %1120 = vmatpush1.bf16.msra.mxu0 0
  %1121 = vmatprep.subr.bf16.mxu0 0
  %1122 = vmatpush1.bf16.msra.mxu0 0
  %1123 = vmatprep.subr.bf16.mxu0 0
  %1124 = vmatpush1.bf16.msra.mxu0 0
  %1125 = vmatprep.subr.bf16.mxu0 0
  %1126 = vmatpush1.bf16.msra.mxu0 0
  %1127 = vmatprep.subr.bf16.mxu0 0
  %1128 = vmatpush1.bf16.msra.mxu0 0
  %1129 = vmatprep.mubr.bf16.mxu0 0
  %1130 = vmatmul.mubr.bf16.gmra.mrb[0].mxu0 %v1011
  %v1131 = vpop.f32.mrb[0].mxu0
  %v1132 = vadd.f32 %v1060, %v1131
  %v1133 = vpop.f32.mrb[0].mxu0
  %v1134 = vpop.f32.mrb[0].mxu0
  %v1135 = vadd.f32 %v1063, %v1134
  %v1136 = vpop.f32.mrb[0].mxu0
  %1137 = vmatprep.mubr.bf16.mxu0 0
  %1138 = vmatmul.mubr.bf16.gmra.mrb[0].mxu0 %v1014
  %v1139 = vpop.f32.mrb[0].mxu0
  %v1140 = vadd.f32 %v1068, %v1139
  %v1141 = vpop.f32.mrb[0].mxu0
  %v1142 = vpop.f32.mrb[0].mxu0
  %v1143 = vadd.f32 %v1071, %v1142
  %v1144 = vpop.f32.mrb[0].mxu0
  %1145 = vmatprep.mubr.bf16.mxu0 0
  %1146 = vmatmul.mubr.bf16.gmra.mrb[0].mxu0 %v1017
  %v1147 = vpop.f32.mrb[0].mxu0
  %v1148 = vadd.f32 %v1076, %v1147
  %v1149 = vpop.f32.mrb[0].mxu0
  %v1150 = vpop.f32.mrb[0].mxu0
  %v1151 = vadd.f32 %v1079, %v1150
  %v1152 = vpop.f32.mrb[0].mxu0
  %1153 = vmatprep.mubr.bf16.mxu0 0
  %1154 = vmatmul.mubr.bf16.gmra.mrb[0].mxu0 %v1020
  %v1155 = vpop.f32.mrb[0].mxu0
  %v1156 = vadd.f32 %v1084, %v1155
  %v1157 = vpop.f32.mrb[0].mxu0
  %v1158 = vpop.f32.mrb[0].mxu0
  %v1159 = vadd.f32 %v1087, %v1158
  %v1160 = vpop.f32.mrb[0].mxu0
  %1161 = vmatprep.mubr.bf16.mxu0 0
  %1162 = vmatmul.mubr.bf16.gmra.mrb[0].mxu0 %v1023
  %v1163 = vpop.f32.mrb[0].mxu0
  %v1164 = vadd.f32 %v1092, %v1163
  %v1165 = vpop.f32.mrb[0].mxu0
  %v1166 = vpop.f32.mrb[0].mxu0
  %v1167 = vpop.f32.mrb[0].mxu0
  %1168 = vdwg.mxu0
  %v1169 = vmax.f32 %v912, %v1132
  %v1170 = vmax.f32 %v913, %v1135
  %v1171 = vmax.f32 %v914, %v1140
  %v1172 = vmax.f32 %v915, %v1143
  %v1173 = vmax.f32 %v916, %v1148
  %v1174 = vmax.f32 %v917, %v1151
  %v1175 = vmax.f32 %v918, %v1156
  %v1176 = vmax.f32 %v919, %v1159
  %v1177 = vmax.f32 %v920, %v1164
  %v1178 = vld [vmem:[%s2] sm:$0x1]
  %v1180 = vlaneseq
  %v1181 = vshrl.u32 %v1180, 7
  %v1182 = vsub.s32 0, %v1181
  %v1183 = vrot.slane %v1178, %v1182
  %v1185 = vadd.f32 %v1169, %v1183
  %v1186 = vadd.f32 %v1170, %v1183
  %v1187 = vadd.f32 %v1171, %v1183
  %v1188 = vadd.f32 %v1172, %v1183
  %v1189 = vadd.f32 %v1173, %v1183
  %v1190 = vadd.f32 %v1174, %v1183
  %v1191 = vadd.f32 %v1175, %v1183
  %v1192 = vadd.f32 %v1176, %v1183
  %v1193 = vadd.f32 %v1177, %v1183
  %v1194 = vmax.f32 %v1185, 0.0
  %v1195 = vmax.f32 %v1186, 0.0
  %v1196 = vmax.f32 %v1187, 0.0
  %v1197 = vmax.f32 %v1188, 0.0
  %v1198 = vmax.f32 %v1189, 0.0
  %v1199 = vmax.f32 %v1190, 0.0
  %v1200 = vmax.f32 %v1191, 0.0
  %v1201 = vmax.f32 %v1192, 0.0
  %v1202 = vmax.f32 %v1193, 0.0
  %v1203 = vpack.c.bf16 %v1195, %v1194
  %v1204 = vpack.c.bf16 %v1197, %v1196
  %v1205 = vpack.c.bf16 %v1199, %v1198
  %v1206 = vpack.c.bf16 %v1201, %v1200
  %v1207 = vpack.c.bf16 %v1202, %v1202
  %v1213 = vunpack.c.l.b16 %v1203
  %v1214 = vunpack.c.h.b16 %v1203
  %v1215 = vunpack.c.l.b16 %v1204
  %v1216 = vunpack.c.h.b16 %v1204
  %v1217 = vunpack.c.l.b16 %v1205
  %v1218 = vunpack.c.h.b16 %v1205
  %v1219 = vunpack.c.l.b16 %v1206
  %v1220 = vunpack.c.h.b16 %v1206
  %v1221 = vunpack.c.l.b16 %v1207
  %v1222 = vpack.c.b16 %v1213, %v1213
  %v1223 = vpack.c.b16 %v1214, %v1214
  %v1224 = vpack.c.b16 %v1215, %v1215
  %v1225 = vpack.c.b16 %v1216, %v1216
  %v1226 = vpack.c.b16 %v1217, %v1217
  %v1227 = vpack.c.b16 %v1218, %v1218
  %v1228 = vpack.c.b16 %v1219, %v1219
  %v1229 = vpack.c.b16 %v1220, %v1220
  %v1230 = vpack.c.b16 %v1221, %v1221
  %vm1240 = vcmask 519168
  %1241 = vst.msk [vmem:[%s3] sm:$0xf] %vm1240, %v1222
  %1242 = vst.msk [vmem:[%s3 + $0x4] sm:$0xf] %vm1240, %v1223
  %1243 = vst.msk [vmem:[%s3 + $0x8] sm:$0xf] %vm1240, %v1224
  %1244 = vst.msk [vmem:[%s3 + $0xc] sm:$0xf] %vm1240, %v1225
  %1245 = vst.msk [vmem:[%s3 + $0x10] sm:$0xf] %vm1240, %v1226
  %1246 = vst.msk [vmem:[%s3 + $0x14] sm:$0xf] %vm1240, %v1227
  %1247 = vst.msk [vmem:[%s3 + $0x18] sm:$0xf] %vm1240, %v1228
  %1248 = vst.msk [vmem:[%s3 + $0x1c] sm:$0xf] %vm1240, %v1229
  %1249 = vst.msk [vmem:[%s3 + $0x20] sm:$0xf] %vm1240, %v1230
  // Predicated region
  $region14: #{mnist_cnn_forward.4} parent=0 // pred_check
    _
  $region15: #{mnist_cnn_forward.4} parent=0 // pred_check_branch
    %1251 = sbr.rel (0) target = $region17
  $region16: #{mnist_cnn_forward.4} parent=0 // pred_region
    _
  $region17: #{mnist_cnn_forward.4} parent=0 // pred_fallthru
    _
  // Predicated region
  $region18: #{mnist_cnn_forward.4} parent=0 // pred_check
    _
  $region19: #{mnist_cnn_forward.4} parent=0 // pred_check_branch
    %1253 = sbr.rel (0) target = $region21
  $region20: #{mnist_cnn_forward.4} parent=0 // pred_region
    _
  $region21: #{mnist_cnn_forward.4} parent=0 // pred_fallthru
    _

// kernel: mnist_cnn_forward.5
$region0: #{mnist_cnn_forward.5}
  #allocation0 [shape = 'u32[]', space=smem, size = 0x4, offset = 0x4, fixed_abs, tag = 'smem constant byte address 0x4 - core index']
  #allocation1 [shape = 'u32[144,128]{1,0:T(1,128)}', space=vmem, size = 0x12000, scoped, tag = 'internal scratch']
  %s0 = inlined_call_operand.vmem [shape: bf16[8,2304], index: 0, kind: input, shape index: {}]
  %s1 = inlined_call_operand.vmem [shape: bf16[2304,640], index: 1, kind: input, shape index: {}]
  %s2 = inlined_call_operand.vmem [shape: f32[1,640], index: 2, kind: input, shape index: {}]
  %s3 = inlined_call_operand.vmem [shape: bf16[640,128], index: 3, kind: input, shape index: {}]
  %s4 = inlined_call_operand.vmem [shape: f32[1,128], index: 4, kind: input, shape index: {}]
  %s5 = inlined_call_operand.vmem [shape: bf16[128,128], index: 5, kind: input, shape index: {}]
  %s6 = inlined_call_operand.vmem [shape: f32[1,128], index: 6, kind: input, shape index: {}]
  %s7 = inlined_call_operand.vmem [shape: f32[8,128], index: 7, kind: output, shape index: {}]
  %s8 = sld [smem:[#allocation0]]
  $region38: #{mnist_cnn_forward.5} parent=0
    _
  %s10 = ssub.s32 1, %s8
  %s11 = scalar_select 0, %s10, %s8
  // Predicated region
  $region2: #{mnist_cnn_forward.5} parent=0 // pred_check
    _
  $region3: #{mnist_cnn_forward.5} parent=0 // pred_check_branch
    %13 = sbr.rel (0) target = $region5
  $region4: #{mnist_cnn_forward.5} parent=0 // pred_region
    _
  $region5: #{mnist_cnn_forward.5} parent=0 // pred_fallthru
    _
  // Predicated region
  $region6: #{mnist_cnn_forward.5} parent=0 // pred_check
    _
  $region7: #{mnist_cnn_forward.5} parent=0 // pred_check_branch
    %15 = sbr.rel (0) target = $region9
  $region8: #{mnist_cnn_forward.5} parent=0 // pred_region
    _
  $region9: #{mnist_cnn_forward.5} parent=0 // pred_fallthru
    _
  // Predicated region
  $region10: #{mnist_cnn_forward.5} parent=0 // pred_check
    _
  $region11: #{mnist_cnn_forward.5} parent=0 // pred_check_branch
    %17 = sbr.rel (0) target = $region13
  $region12: #{mnist_cnn_forward.5} parent=0 // pred_region
    _
  $region13: #{mnist_cnn_forward.5} parent=0 // pred_fallthru
    _
  // Predicated region
  $region14: #{mnist_cnn_forward.5} parent=0 // pred_check
    _
  $region15: #{mnist_cnn_forward.5} parent=0 // pred_check_branch
    %19 = sbr.rel (0) target = $region17
  $region16: #{mnist_cnn_forward.5} parent=0 // pred_region
    _
  $region17: #{mnist_cnn_forward.5} parent=0 // pred_fallthru
    _
  // Predicated region
  $region18: #{mnist_cnn_forward.5} parent=0 // pred_check
    _
  $region19: #{mnist_cnn_forward.5} parent=0 // pred_check_branch
    %21 = sbr.rel (0) target = $region21
  $region20: #{mnist_cnn_forward.5} parent=0 // pred_region
    _
  $region21: #{mnist_cnn_forward.5} parent=0 // pred_fallthru
    _
  // Predicated region
  $region22: #{mnist_cnn_forward.5} parent=0 // pred_check
    _
  $region23: #{mnist_cnn_forward.5} parent=0 // pred_check_branch
    %23 = sbr.rel (0) target = $region25
  $region24: #{mnist_cnn_forward.5} parent=0 // pred_region
    _
  $region25: #{mnist_cnn_forward.5} parent=0 // pred_fallthru
    _
  // Predicated region
  $region26: #{mnist_cnn_forward.5} parent=0 // pred_check
    _
  $region27: #{mnist_cnn_forward.5} parent=0 // pred_check_branch
    %25 = sbr.rel (0) target = $region29
  $region28: #{mnist_cnn_forward.5} parent=0 // pred_region
    _
  $region29: #{mnist_cnn_forward.5} parent=0 // pred_fallthru
    _
  %v27 = vld [vmem:[%s0] sm:$0xff]
  %v28 = vld [vmem:[%s0 + $0x8] sm:$0xff]
  %v29 = vld [vmem:[%s0 + $0x10] sm:$0xff]
  %v30 = vld [vmem:[%s0 + $0x18] sm:$0xff]
  %v31 = vld [vmem:[%s0 + $0x20] sm:$0xff]
  %v32 = vld [vmem:[%s0 + $0x28] sm:$0xff]
  %v33 = vld [vmem:[%s0 + $0x30] sm:$0xff]
  %v34 = vld [vmem:[%s0 + $0x38] sm:$0xff]
  %v35 = vld [vmem:[%s0 + $0x40] sm:$0xff]
  %v36 = vld [vmem:[%s1] sm:$0xff]
  %v37 = vld [vmem:[%s1 + $0x8] sm:$0xff]
  %v38 = vld [vmem:[%s1 + $0x10] sm:$0xf]
  %v39 = vld [vmem:[%s1 + $0x14] sm:$0xff]
  %v40 = vld [vmem:[%s1 + $0x1c] sm:$0xff]
  %v41 = vld [vmem:[%s1 + $0x24] sm:$0xf]
  %v42 = vld [vmem:[%s1 + $0x28] sm:$0xff]
  %v43 = vld [vmem:[%s1 + $0x30] sm:$0xff]
  %v44 = vld [vmem:[%s1 + $0x38] sm:$0xf]
  %v45 = vld [vmem:[%s1 + $0x3c] sm:$0xff]
  %v46 = vld [vmem:[%s1 + $0x44] sm:$0xff]
  %v47 = vld [vmem:[%s1 + $0x4c] sm:$0xf]
  %v48 = vld [vmem:[%s1 + $0x50] sm:$0xff]
  %v49 = vld [vmem:[%s1 + $0x58] sm:$0xff]
  %v50 = vld [vmem:[%s1 + $0x60] sm:$0xf]
  %v51 = vld [vmem:[%s1 + $0x64] sm:$0xff]
  %v52 = vld [vmem:[%s1 + $0x6c] sm:$0xff]
  %v53 = vld [vmem:[%s1 + $0x74] sm:$0xf]
  %v54 = vld [vmem:[%s1 + $0x78] sm:$0xff]
  %v55 = vld [vmem:[%s1 + $0x80] sm:$0xff]
  %v56 = vld [vmem:[%s1 + $0x88] sm:$0xf]
  %v57 = vld [vmem:[%s1 + $0x8c] sm:$0xff]
  %v58 = vld [vmem:[%s1 + $0x94] sm:$0xff]
  %v59 = vld [vmem:[%s1 + $0x9c] sm:$0xf]
  %v60 = vld [vmem:[%s1 + $0xa0] sm:$0xff]
  %v61 = vld [vmem:[%s1 + $0xa8] sm:$0xff]
  %v62 = vld [vmem:[%s1 + $0xb0] sm:$0xf]
  %v63 = vld [vmem:[%s1 + $0xb4] sm:$0xff]
  %v64 = vld [vmem:[%s1 + $0xbc] sm:$0xff]
  %v65 = vld [vmem:[%s1 + $0xc4] sm:$0xf]
  %v66 = vld [vmem:[%s1 + $0xc8] sm:$0xff]
  %v67 = vld [vmem:[%s1 + $0xd0] sm:$0xff]
  %v68 = vld [vmem:[%s1 + $0xd8] sm:$0xf]
  %v69 = vld [vmem:[%s1 + $0xdc] sm:$0xff]
  %v70 = vld [vmem:[%s1 + $0xe4] sm:$0xff]
  %v71 = vld [vmem:[%s1 + $0xec] sm:$0xf]
  %v72 = vld [vmem:[%s1 + $0xf0] sm:$0xff]
  %v73 = vld [vmem:[%s1 + $0xf8] sm:$0xff]
  %v74 = vld [vmem:[%s1 + $0x100] sm:$0xf]
  %v75 = vld [vmem:[%s1 + $0x104] sm:$0xff]
  %v76 = vld [vmem:[%s1 + $0x10c] sm:$0xff]
  %v77 = vld [vmem:[%s1 + $0x114] sm:$0xf]
  %v78 = vld [vmem:[%s1 + $0x118] sm:$0xff]
  %v79 = vld [vmem:[%s1 + $0x120] sm:$0xff]
  %v80 = vld [vmem:[%s1 + $0x128] sm:$0xf]
  %v81 = vld [vmem:[%s1 + $0x12c] sm:$0xff]
  %v82 = vld [vmem:[%s1 + $0x134] sm:$0xff]
  %v83 = vld [vmem:[%s1 + $0x13c] sm:$0xf]
  %v84 = vld [vmem:[%s1 + $0x140] sm:$0xff]
  %v85 = vld [vmem:[%s1 + $0x148] sm:$0xff]
  %v86 = vld [vmem:[%s1 + $0x150] sm:$0xf]
  %v87 = vld [vmem:[%s1 + $0x154] sm:$0xff]
  %v88 = vld [vmem:[%s1 + $0x15c] sm:$0xff]
  %v89 = vld [vmem:[%s1 + $0x164] sm:$0xf]
  %v90 = vld [vmem:[%s1 + $0x168] sm:$0xff]
  %v91 = vld [vmem:[%s1 + $0x170] sm:$0xff]
  %v92 = vld [vmem:[%s1 + $0x178] sm:$0xf]
  %v93 = vld [vmem:[%s1 + $0x17c] sm:$0xff]
  %v94 = vld [vmem:[%s1 + $0x184] sm:$0xff]
  %v95 = vld [vmem:[%s1 + $0x18c] sm:$0xf]
  %v96 = vld [vmem:[%s1 + $0x190] sm:$0xff]
  %v97 = vld [vmem:[%s1 + $0x198] sm:$0xff]
  %v98 = vld [vmem:[%s1 + $0x1a0] sm:$0xf]
  %v99 = vld [vmem:[%s1 + $0x1a4] sm:$0xff]
  %v100 = vld [vmem:[%s1 + $0x1ac] sm:$0xff]
  %v101 = vld [vmem:[%s1 + $0x1b4] sm:$0xf]
  %v102 = vld [vmem:[%s1 + $0x1b8] sm:$0xff]
  %v103 = vld [vmem:[%s1 + $0x1c0] sm:$0xff]
  %v104 = vld [vmem:[%s1 + $0x1c8] sm:$0xf]
  %v105 = vld [vmem:[%s1 + $0x1cc] sm:$0xff]
  %v106 = vld [vmem:[%s1 + $0x1d4] sm:$0xff]
  %v107 = vld [vmem:[%s1 + $0x1dc] sm:$0xf]
  %v108 = vld [vmem:[%s1 + $0x1e0] sm:$0xff]
  %v109 = vld [vmem:[%s1 + $0x1e8] sm:$0xff]
  %v110 = vld [vmem:[%s1 + $0x1f0] sm:$0xf]
  %v111 = vld [vmem:[%s1 + $0x1f4] sm:$0xff]
  %v112 = vld [vmem:[%s1 + $0x1fc] sm:$0xff]
  %v113 = vld [vmem:[%s1 + $0x204] sm:$0xf]
  %v114 = vld [vmem:[%s1 + $0x208] sm:$0xff]
  %v115 = vld [vmem:[%s1 + $0x210] sm:$0xff]
  %v116 = vld [vmem:[%s1 + $0x218] sm:$0xf]
  %v117 = vld [vmem:[%s1 + $0x21c] sm:$0xff]
  %v118 = vld [vmem:[%s1 + $0x224] sm:$0xff]
  %v119 = vld [vmem:[%s1 + $0x22c] sm:$0xf]
  %v120 = vld [vmem:[%s1 + $0x230] sm:$0xff]
  %v121 = vld [vmem:[%s1 + $0x238] sm:$0xff]
  %v122 = vld [vmem:[%s1 + $0x240] sm:$0xf]
  %v123 = vld [vmem:[%s1 + $0x244] sm:$0xff]
  %v124 = vld [vmem:[%s1 + $0x24c] sm:$0xff]
  %v125 = vld [vmem:[%s1 + $0x254] sm:$0xf]
  %v126 = vld [vmem:[%s1 + $0x258] sm:$0xff]
  %v127 = vld [vmem:[%s1 + $0x260] sm:$0xff]
  %v128 = vld [vmem:[%s1 + $0x268] sm:$0xf]
  %v129 = vld [vmem:[%s1 + $0x26c] sm:$0xff]
  %v130 = vld [vmem:[%s1 + $0x274] sm:$0xff]
  %v131 = vld [vmem:[%s1 + $0x27c] sm:$0xf]
  %v132 = vld [vmem:[%s1 + $0x280] sm:$0xff]
  %v133 = vld [vmem:[%s1 + $0x288] sm:$0xff]
  %v134 = vld [vmem:[%s1 + $0x290] sm:$0xf]
  %v135 = vld [vmem:[%s1 + $0x294] sm:$0xff]
  %v136 = vld [vmem:[%s1 + $0x29c] sm:$0xff]
  %v137 = vld [vmem:[%s1 + $0x2a4] sm:$0xf]
  %v138 = vld [vmem:[%s1 + $0x2a8] sm:$0xff]
  %v139 = vld [vmem:[%s1 + $0x2b0] sm:$0xff]
  %v140 = vld [vmem:[%s1 + $0x2b8] sm:$0xf]
  %v141 = vld [vmem:[%s1 + $0x2bc] sm:$0xff]
  %v142 = vld [vmem:[%s1 + $0x2c4] sm:$0xff]
  %v143 = vld [vmem:[%s1 + $0x2cc] sm:$0xf]
  %v144 = vld [vmem:[%s1 + $0x2d0] sm:$0xff]
  %v145 = vld [vmem:[%s1 + $0x2d8] sm:$0xff]
  %v146 = vld [vmem:[%s1 + $0x2e0] sm:$0xf]
  %v147 = vld [vmem:[%s1 + $0x2e4] sm:$0xff]
  %v148 = vld [vmem:[%s1 + $0x2ec] sm:$0xff]
  %v149 = vld [vmem:[%s1 + $0x2f4] sm:$0xf]
  %v150 = vld [vmem:[%s1 + $0x2f8] sm:$0xff]
  %v151 = vld [vmem:[%s1 + $0x300] sm:$0xff]
  %v152 = vld [vmem:[%s1 + $0x308] sm:$0xf]
  %v153 = vld [vmem:[%s1 + $0x30c] sm:$0xff]
  %v154 = vld [vmem:[%s1 + $0x314] sm:$0xff]
  %v155 = vld [vmem:[%s1 + $0x31c] sm:$0xf]
  %v156 = vld [vmem:[%s1 + $0x320] sm:$0xff]
  %v157 = vld [vmem:[%s1 + $0x328] sm:$0xff]
  %v158 = vld [vmem:[%s1 + $0x330] sm:$0xf]
  %v159 = vld [vmem:[%s1 + $0x334] sm:$0xff]
  %v160 = vld [vmem:[%s1 + $0x33c] sm:$0xff]
  %v161 = vld [vmem:[%s1 + $0x344] sm:$0xf]
  %v162 = vld [vmem:[%s1 + $0x348] sm:$0xff]
  %v163 = vld [vmem:[%s1 + $0x350] sm:$0xff]
  %v164 = vld [vmem:[%s1 + $0x358] sm:$0xf]
  %v165 = vld [vmem:[%s1 + $0x35c] sm:$0xff]
  %v166 = vld [vmem:[%s1 + $0x364] sm:$0xff]
  %v167 = vld [vmem:[%s1 + $0x36c] sm:$0xf]
  %v168 = vld [vmem:[%s1 + $0x370] sm:$0xff]
  %v169 = vld [vmem:[%s1 + $0x378] sm:$0xff]
  %v170 = vld [vmem:[%s1 + $0x380] sm:$0xf]
  %v171 = vld [vmem:[%s1 + $0x384] sm:$0xff]
  %v172 = vld [vmem:[%s1 + $0x38c] sm:$0xff]
  %v173 = vld [vmem:[%s1 + $0x394] sm:$0xf]
  %v174 = vld [vmem:[%s1 + $0x398] sm:$0xff]
  %v175 = vld [vmem:[%s1 + $0x3a0] sm:$0xff]
  %v176 = vld [vmem:[%s1 + $0x3a8] sm:$0xf]
  %v177 = vld [vmem:[%s1 + $0x3ac] sm:$0xff]
  %v178 = vld [vmem:[%s1 + $0x3b4] sm:$0xff]
  %v179 = vld [vmem:[%s1 + $0x3bc] sm:$0xf]
  %v180 = vld [vmem:[%s1 + $0x3c0] sm:$0xff]
  %v181 = vld [vmem:[%s1 + $0x3c8] sm:$0xff]
  %v182 = vld [vmem:[%s1 + $0x3d0] sm:$0xf]
  %v183 = vld [vmem:[%s1 + $0x3d4] sm:$0xff]
  %v184 = vld [vmem:[%s1 + $0x3dc] sm:$0xff]
  %v185 = vld [vmem:[%s1 + $0x3e4] sm:$0xf]
  %v186 = vld [vmem:[%s1 + $0x3e8] sm:$0xff]
  %v187 = vld [vmem:[%s1 + $0x3f0] sm:$0xff]
  %v188 = vld [vmem:[%s1 + $0x3f8] sm:$0xf]
  %v189 = vld [vmem:[%s1 + $0x3fc] sm:$0xff]
  %v190 = vld [vmem:[%s1 + $0x404] sm:$0xff]
  %v191 = vld [vmem:[%s1 + $0x40c] sm:$0xf]
  %v192 = vld [vmem:[%s1 + $0x410] sm:$0xff]
  %v193 = vld [vmem:[%s1 + $0x418] sm:$0xff]
  %v194 = vld [vmem:[%s1 + $0x420] sm:$0xf]
  %v195 = vld [vmem:[%s1 + $0x424] sm:$0xff]
  %v196 = vld [vmem:[%s1 + $0x42c] sm:$0xff]
  %v197 = vld [vmem:[%s1 + $0x434] sm:$0xf]
  %v198 = vld [vmem:[%s1 + $0x438] sm:$0xff]
  %v199 = vld [vmem:[%s1 + $0x440] sm:$0xff]
  %v200 = vld [vmem:[%s1 + $0x448] sm:$0xf]
  %v201 = vld [vmem:[%s1 + $0x44c] sm:$0xff]
  %v202 = vld [vmem:[%s1 + $0x454] sm:$0xff]
  %v203 = vld [vmem:[%s1 + $0x45c] sm:$0xf]
  %v204 = vld [vmem:[%s1 + $0x460] sm:$0xff]
  %v205 = vld [vmem:[%s1 + $0x468] sm:$0xff]
  %v206 = vld [vmem:[%s1 + $0x470] sm:$0xf]
  %v207 = vld [vmem:[%s1 + $0x474] sm:$0xff]
  %v208 = vld [vmem:[%s1 + $0x47c] sm:$0xff]
  %v209 = vld [vmem:[%s1 + $0x484] sm:$0xf]
  %v210 = vld [vmem:[%s1 + $0x488] sm:$0xff]
  %v211 = vld [vmem:[%s1 + $0x490] sm:$0xff]
  %v212 = vld [vmem:[%s1 + $0x498] sm:$0xf]
  %v213 = vld [vmem:[%s1 + $0x49c] sm:$0xff]
  %v214 = vld [vmem:[%s1 + $0x4a4] sm:$0xff]
  %v215 = vld [vmem:[%s1 + $0x4ac] sm:$0xf]
  %v216 = vld [vmem:[%s1 + $0x4b0] sm:$0xff]
  %v217 = vld [vmem:[%s1 + $0x4b8] sm:$0xff]
  %v218 = vld [vmem:[%s1 + $0x4c0] sm:$0xf]
  %v219 = vld [vmem:[%s1 + $0x4c4] sm:$0xff]
  %v220 = vld [vmem:[%s1 + $0x4cc] sm:$0xff]
  %v221 = vld [vmem:[%s1 + $0x4d4] sm:$0xf]
  %v222 = vld [vmem:[%s1 + $0x4d8] sm:$0xff]
  %v223 = vld [vmem:[%s1 + $0x4e0] sm:$0xff]
  %v224 = vld [vmem:[%s1 + $0x4e8] sm:$0xf]
  %v225 = vld [vmem:[%s1 + $0x4ec] sm:$0xff]
  %v226 = vld [vmem:[%s1 + $0x4f4] sm:$0xff]
  %v227 = vld [vmem:[%s1 + $0x4fc] sm:$0xf]
  %v228 = vld [vmem:[%s1 + $0x500] sm:$0xff]
  %v229 = vld [vmem:[%s1 + $0x508] sm:$0xff]
  %v230 = vld [vmem:[%s1 + $0x510] sm:$0xf]
  %v231 = vld [vmem:[%s1 + $0x514] sm:$0xff]
  %v232 = vld [vmem:[%s1 + $0x51c] sm:$0xff]
  %v233 = vld [vmem:[%s1 + $0x524] sm:$0xf]
  %v234 = vld [vmem:[%s1 + $0x528] sm:$0xff]
  %v235 = vld [vmem:[%s1 + $0x530] sm:$0xff]
  %v236 = vld [vmem:[%s1 + $0x538] sm:$0xf]
  %v237 = vld [vmem:[%s1 + $0x53c] sm:$0xff]
  %v238 = vld [vmem:[%s1 + $0x544] sm:$0xff]
  %v239 = vld [vmem:[%s1 + $0x54c] sm:$0xf]
  %v240 = vld [vmem:[%s1 + $0x550] sm:$0xff]
  %v241 = vld [vmem:[%s1 + $0x558] sm:$0xff]
  %v242 = vld [vmem:[%s1 + $0x560] sm:$0xf]
  %v243 = vld [vmem:[%s1 + $0x564] sm:$0xff]
  %v244 = vld [vmem:[%s1 + $0x56c] sm:$0xff]
  %v245 = vld [vmem:[%s1 + $0x574] sm:$0xf]
  %v246 = vld [vmem:[%s1 + $0x578] sm:$0xff]
  %v247 = vld [vmem:[%s1 + $0x580] sm:$0xff]
  %v248 = vld [vmem:[%s1 + $0x588] sm:$0xf]
  %v249 = vld [vmem:[%s1 + $0x58c] sm:$0xff]
  %v250 = vld [vmem:[%s1 + $0x594] sm:$0xff]
  %v251 = vld [vmem:[%s1 + $0x59c] sm:$0xf]
  %v252 = vld [vmem:[%s1 + $0x5a0] sm:$0xff]
  %v253 = vld [vmem:[%s1 + $0x5a8] sm:$0xff]
  %v254 = vld [vmem:[%s1 + $0x5b0] sm:$0xf]
  %v255 = vld [vmem:[%s1 + $0x5b4] sm:$0xff]
  %v256 = vld [vmem:[%s1 + $0x5bc] sm:$0xff]
  %v257 = vld [vmem:[%s1 + $0x5c4] sm:$0xf]
  %v258 = vld [vmem:[%s1 + $0x5c8] sm:$0xff]
  %v259 = vld [vmem:[%s1 + $0x5d0] sm:$0xff]
  %v260 = vld [vmem:[%s1 + $0x5d8] sm:$0xf]
  %v261 = vld [vmem:[%s1 + $0x5dc] sm:$0xff]
  %v262 = vld [vmem:[%s1 + $0x5e4] sm:$0xff]
  %v263 = vld [vmem:[%s1 + $0x5ec] sm:$0xf]
  %v264 = vld [vmem:[%s1 + $0x5f0] sm:$0xff]
  %v265 = vld [vmem:[%s1 + $0x5f8] sm:$0xff]
  %v266 = vld [vmem:[%s1 + $0x600] sm:$0xf]
  %v267 = vld [vmem:[%s1 + $0x604] sm:$0xff]
  %v268 = vld [vmem:[%s1 + $0x60c] sm:$0xff]
  %v269 = vld [vmem:[%s1 + $0x614] sm:$0xf]
  %v270 = vld [vmem:[%s1 + $0x618] sm:$0xff]
  %v271 = vld [vmem:[%s1 + $0x620] sm:$0xff]
  %v272 = vld [vmem:[%s1 + $0x628] sm:$0xf]
  %v273 = vld [vmem:[%s1 + $0x62c] sm:$0xff]
  %v274 = vld [vmem:[%s1 + $0x634] sm:$0xff]
  %v275 = vld [vmem:[%s1 + $0x63c] sm:$0xf]
  %v276 = vld [vmem:[%s1 + $0x640] sm:$0xff]
  %v277 = vld [vmem:[%s1 + $0x648] sm:$0xff]
  %v278 = vld [vmem:[%s1 + $0x650] sm:$0xf]
  %v279 = vld [vmem:[%s1 + $0x654] sm:$0xff]
  %v280 = vld [vmem:[%s1 + $0x65c] sm:$0xff]
  %v281 = vld [vmem:[%s1 + $0x664] sm:$0xf]
  %v282 = vld [vmem:[%s1 + $0x668] sm:$0xff]
  %v283 = vld [vmem:[%s1 + $0x670] sm:$0xff]
  %v284 = vld [vmem:[%s1 + $0x678] sm:$0xf]
  %v285 = vld [vmem:[%s1 + $0x67c] sm:$0xff]
  %v286 = vld [vmem:[%s1 + $0x684] sm:$0xff]
  %v287 = vld [vmem:[%s1 + $0x68c] sm:$0xf]
  %v288 = vld [vmem:[%s1 + $0x690] sm:$0xff]
  %v289 = vld [vmem:[%s1 + $0x698] sm:$0xff]
  %v290 = vld [vmem:[%s1 + $0x6a0] sm:$0xf]
  %v291 = vld [vmem:[%s1 + $0x6a4] sm:$0xff]
  %v292 = vld [vmem:[%s1 + $0x6ac] sm:$0xff]
  %v293 = vld [vmem:[%s1 + $0x6b4] sm:$0xf]
  %v294 = vld [vmem:[%s1 + $0x6b8] sm:$0xff]
  %v295 = vld [vmem:[%s1 + $0x6c0] sm:$0xff]
  %v296 = vld [vmem:[%s1 + $0x6c8] sm:$0xf]
  %v297 = vld [vmem:[%s1 + $0x6cc] sm:$0xff]
  %v298 = vld [vmem:[%s1 + $0x6d4] sm:$0xff]
  %v299 = vld [vmem:[%s1 + $0x6dc] sm:$0xf]
  %v300 = vld [vmem:[%s1 + $0x6e0] sm:$0xff]
  %v301 = vld [vmem:[%s1 + $0x6e8] sm:$0xff]
  %v302 = vld [vmem:[%s1 + $0x6f0] sm:$0xf]
  %v303 = vld [vmem:[%s1 + $0x6f4] sm:$0xff]
  %v304 = vld [vmem:[%s1 + $0x6fc] sm:$0xff]
  %v305 = vld [vmem:[%s1 + $0x704] sm:$0xf]
  %v306 = vld [vmem:[%s1 + $0x708] sm:$0xff]
  %v307 = vld [vmem:[%s1 + $0x710] sm:$0xff]
  %v308 = vld [vmem:[%s1 + $0x718] sm:$0xf]
  %v309 = vld [vmem:[%s1 + $0x71c] sm:$0xff]
  %v310 = vld [vmem:[%s1 + $0x724] sm:$0xff]
  %v311 = vld [vmem:[%s1 + $0x72c] sm:$0xf]
  %v312 = vld [vmem:[%s1 + $0x730] sm:$0xff]
  %v313 = vld [vmem:[%s1 + $0x738] sm:$0xff]
  %v314 = vld [vmem:[%s1 + $0x740] sm:$0xf]
  %v315 = vld [vmem:[%s1 + $0x744] sm:$0xff]
  %v316 = vld [vmem:[%s1 + $0x74c] sm:$0xff]
  %v317 = vld [vmem:[%s1 + $0x754] sm:$0xf]
  %v318 = vld [vmem:[%s1 + $0x758] sm:$0xff]
  %v319 = vld [vmem:[%s1 + $0x760] sm:$0xff]
  %v320 = vld [vmem:[%s1 + $0x768] sm:$0xf]
  %v321 = vld [vmem:[%s1 + $0x76c] sm:$0xff]
  %v322 = vld [vmem:[%s1 + $0x774] sm:$0xff]
  %v323 = vld [vmem:[%s1 + $0x77c] sm:$0xf]
  %v324 = vld [vmem:[%s1 + $0x780] sm:$0xff]
  %v325 = vld [vmem:[%s1 + $0x788] sm:$0xff]
  %v326 = vld [vmem:[%s1 + $0x790] sm:$0xf]
  %v327 = vld [vmem:[%s1 + $0x794] sm:$0xff]
  %v328 = vld [vmem:[%s1 + $0x79c] sm:$0xff]
  %v329 = vld [vmem:[%s1 + $0x7a4] sm:$0xf]
  %v330 = vld [vmem:[%s1 + $0x7a8] sm:$0xff]
  %v331 = vld [vmem:[%s1 + $0x7b0] sm:$0xff]
  %v332 = vld [vmem:[%s1 + $0x7b8] sm:$0xf]
  %v333 = vld [vmem:[%s1 + $0x7bc] sm:$0xff]
  %v334 = vld [vmem:[%s1 + $0x7c4] sm:$0xff]
  %v335 = vld [vmem:[%s1 + $0x7cc] sm:$0xf]
  %v336 = vld [vmem:[%s1 + $0x7d0] sm:$0xff]
  %v337 = vld [vmem:[%s1 + $0x7d8] sm:$0xff]
  %v338 = vld [vmem:[%s1 + $0x7e0] sm:$0xf]
  %v339 = vld [vmem:[%s1 + $0x7e4] sm:$0xff]
  %v340 = vld [vmem:[%s1 + $0x7ec] sm:$0xff]
  %v341 = vld [vmem:[%s1 + $0x7f4] sm:$0xf]
  %v342 = vld [vmem:[%s1 + $0x7f8] sm:$0xff]
  %v343 = vld [vmem:[%s1 + $0x800] sm:$0xff]
  %v344 = vld [vmem:[%s1 + $0x808] sm:$0xf]
  %v345 = vld [vmem:[%s1 + $0x80c] sm:$0xff]
  %v346 = vld [vmem:[%s1 + $0x814] sm:$0xff]
  %v347 = vld [vmem:[%s1 + $0x81c] sm:$0xf]
  %v348 = vld [vmem:[%s1 + $0x820] sm:$0xff]
  %v349 = vld [vmem:[%s1 + $0x828] sm:$0xff]
  %v350 = vld [vmem:[%s1 + $0x830] sm:$0xf]
  %v351 = vld [vmem:[%s1 + $0x834] sm:$0xff]
  %v352 = vld [vmem:[%s1 + $0x83c] sm:$0xff]
  %v353 = vld [vmem:[%s1 + $0x844] sm:$0xf]
  %v354 = vld [vmem:[%s1 + $0x848] sm:$0xff]
  %v355 = vld [vmem:[%s1 + $0x850] sm:$0xff]
  %v356 = vld [vmem:[%s1 + $0x858] sm:$0xf]
  %v357 = vld [vmem:[%s1 + $0x85c] sm:$0xff]
  %v358 = vld [vmem:[%s1 + $0x864] sm:$0xff]
  %v359 = vld [vmem:[%s1 + $0x86c] sm:$0xf]
  %v360 = vld [vmem:[%s1 + $0x870] sm:$0xff]
  %v361 = vld [vmem:[%s1 + $0x878] sm:$0xff]
  %v362 = vld [vmem:[%s1 + $0x880] sm:$0xf]
  %v363 = vld [vmem:[%s1 + $0x884] sm:$0xff]
  %v364 = vld [vmem:[%s1 + $0x88c] sm:$0xff]
  %v365 = vld [vmem:[%s1 + $0x894] sm:$0xf]
  %v366 = vld [vmem:[%s1 + $0x898] sm:$0xff]
  %v367 = vld [vmem:[%s1 + $0x8a0] sm:$0xff]
  %v368 = vld [vmem:[%s1 + $0x8a8] sm:$0xf]
  %v369 = vld [vmem:[%s1 + $0x8ac] sm:$0xff]
  %v370 = vld [vmem:[%s1 + $0x8b4] sm:$0xff]
  %v371 = vld [vmem:[%s1 + $0x8bc] sm:$0xf]
  %v372 = vld [vmem:[%s1 + $0x8c0] sm:$0xff]
  %v373 = vld [vmem:[%s1 + $0x8c8] sm:$0xff]
  %v374 = vld [vmem:[%s1 + $0x8d0] sm:$0xf]
  %v375 = vld [vmem:[%s1 + $0x8d4] sm:$0xff]
  %v376 = vld [vmem:[%s1 + $0x8dc] sm:$0xff]
  %v377 = vld [vmem:[%s1 + $0x8e4] sm:$0xf]
  %v378 = vld [vmem:[%s1 + $0x8e8] sm:$0xff]
  %v379 = vld [vmem:[%s1 + $0x8f0] sm:$0xff]
  %v380 = vld [vmem:[%s1 + $0x8f8] sm:$0xf]
  %v381 = vld [vmem:[%s1 + $0x8fc] sm:$0xff]
  %v382 = vld [vmem:[%s1 + $0x904] sm:$0xff]
  %v383 = vld [vmem:[%s1 + $0x90c] sm:$0xf]
  %v384 = vld [vmem:[%s1 + $0x910] sm:$0xff]
  %v385 = vld [vmem:[%s1 + $0x918] sm:$0xff]
  %v386 = vld [vmem:[%s1 + $0x920] sm:$0xf]
  %v387 = vld [vmem:[%s1 + $0x924] sm:$0xff]
  %v388 = vld [vmem:[%s1 + $0x92c] sm:$0xff]
  %v389 = vld [vmem:[%s1 + $0x934] sm:$0xf]
  %v390 = vld [vmem:[%s1 + $0x938] sm:$0xff]
  %v391 = vld [vmem:[%s1 + $0x940] sm:$0xff]
  %v392 = vld [vmem:[%s1 + $0x948] sm:$0xf]
  %v393 = vld [vmem:[%s1 + $0x94c] sm:$0xff]
  %v394 = vld [vmem:[%s1 + $0x954] sm:$0xff]
  %v395 = vld [vmem:[%s1 + $0x95c] sm:$0xf]
  %v396 = vld [vmem:[%s1 + $0x960] sm:$0xff]
  %v397 = vld [vmem:[%s1 + $0x968] sm:$0xff]
  %v398 = vld [vmem:[%s1 + $0x970] sm:$0xf]
  %v399 = vld [vmem:[%s1 + $0x974] sm:$0xff]
  %v400 = vld [vmem:[%s1 + $0x97c] sm:$0xff]
  %v401 = vld [vmem:[%s1 + $0x984] sm:$0xf]
  %v402 = vld [vmem:[%s1 + $0x988] sm:$0xff]
  %v403 = vld [vmem:[%s1 + $0x990] sm:$0xff]
  %v404 = vld [vmem:[%s1 + $0x998] sm:$0xf]
  %v405 = vld [vmem:[%s1 + $0x99c] sm:$0xff]
  %v406 = vld [vmem:[%s1 + $0x9a4] sm:$0xff]
  %v407 = vld [vmem:[%s1 + $0x9ac] sm:$0xf]
  %v408 = vld [vmem:[%s1 + $0x9b0] sm:$0xff]
  %v409 = vld [vmem:[%s1 + $0x9b8] sm:$0xff]
  %v410 = vld [vmem:[%s1 + $0x9c0] sm:$0xf]
  %v411 = vld [vmem:[%s1 + $0x9c4] sm:$0xff]
  %v412 = vld [vmem:[%s1 + $0x9cc] sm:$0xff]
  %v413 = vld [vmem:[%s1 + $0x9d4] sm:$0xf]
  %v414 = vld [vmem:[%s1 + $0x9d8] sm:$0xff]
  %v415 = vld [vmem:[%s1 + $0x9e0] sm:$0xff]
  %v416 = vld [vmem:[%s1 + $0x9e8] sm:$0xf]
  %v417 = vld [vmem:[%s1 + $0x9ec] sm:$0xff]
  %v418 = vld [vmem:[%s1 + $0x9f4] sm:$0xff]
  %v419 = vld [vmem:[%s1 + $0x9fc] sm:$0xf]
  %v420 = vld [vmem:[%s1 + $0xa00] sm:$0xff]
  %v421 = vld [vmem:[%s1 + $0xa08] sm:$0xff]
  %v422 = vld [vmem:[%s1 + $0xa10] sm:$0xf]
  %v423 = vld [vmem:[%s1 + $0xa14] sm:$0xff]
  %v424 = vld [vmem:[%s1 + $0xa1c] sm:$0xff]
  %v425 = vld [vmem:[%s1 + $0xa24] sm:$0xf]
  %v426 = vld [vmem:[%s1 + $0xa28] sm:$0xff]
  %v427 = vld [vmem:[%s1 + $0xa30] sm:$0xff]
  %v428 = vld [vmem:[%s1 + $0xa38] sm:$0xf]
  %v429 = vld [vmem:[%s1 + $0xa3c] sm:$0xff]
  %v430 = vld [vmem:[%s1 + $0xa44] sm:$0xff]
  %v431 = vld [vmem:[%s1 + $0xa4c] sm:$0xf]
  %v432 = vld [vmem:[%s1 + $0xa50] sm:$0xff]
  %v433 = vld [vmem:[%s1 + $0xa58] sm:$0xff]
  %v434 = vld [vmem:[%s1 + $0xa60] sm:$0xf]
  %v435 = vld [vmem:[%s1 + $0xa64] sm:$0xff]
  %v436 = vld [vmem:[%s1 + $0xa6c] sm:$0xff]
  %v437 = vld [vmem:[%s1 + $0xa74] sm:$0xf]
  %v438 = vld [vmem:[%s1 + $0xa78] sm:$0xff]
  %v439 = vld [vmem:[%s1 + $0xa80] sm:$0xff]
  %v440 = vld [vmem:[%s1 + $0xa88] sm:$0xf]
  %v441 = vld [vmem:[%s1 + $0xa8c] sm:$0xff]
  %v442 = vld [vmem:[%s1 + $0xa94] sm:$0xff]
  %v443 = vld [vmem:[%s1 + $0xa9c] sm:$0xf]
  %v444 = vld [vmem:[%s1 + $0xaa0] sm:$0xff]
  %v445 = vld [vmem:[%s1 + $0xaa8] sm:$0xff]
  %v446 = vld [vmem:[%s1 + $0xab0] sm:$0xf]
  %v447 = vld [vmem:[%s1 + $0xab4] sm:$0xff]
  %v448 = vld [vmem:[%s1 + $0xabc] sm:$0xff]
  %v449 = vld [vmem:[%s1 + $0xac4] sm:$0xf]
  %v450 = vld [vmem:[%s1 + $0xac8] sm:$0xff]
  %v451 = vld [vmem:[%s1 + $0xad0] sm:$0xff]
  %v452 = vld [vmem:[%s1 + $0xad8] sm:$0xf]
  %v453 = vld [vmem:[%s1 + $0xadc] sm:$0xff]
  %v454 = vld [vmem:[%s1 + $0xae4] sm:$0xff]
  %v455 = vld [vmem:[%s1 + $0xaec] sm:$0xf]
  %v456 = vld [vmem:[%s1 + $0xaf0] sm:$0xff]
  %v457 = vld [vmem:[%s1 + $0xaf8] sm:$0xff]
  %v458 = vld [vmem:[%s1 + $0xb00] sm:$0xf]
  %v459 = vld [vmem:[%s1 + $0xb04] sm:$0xff]
  %v460 = vld [vmem:[%s1 + $0xb0c] sm:$0xff]
  %v461 = vld [vmem:[%s1 + $0xb14] sm:$0xf]
  %v462 = vld [vmem:[%s1 + $0xb18] sm:$0xff]
  %v463 = vld [vmem:[%s1 + $0xb20] sm:$0xff]
  %v464 = vld [vmem:[%s1 + $0xb28] sm:$0xf]
  %v465 = vld [vmem:[%s1 + $0xb2c] sm:$0xff]
  %v466 = vld [vmem:[%s1 + $0xb34] sm:$0xff]
  %v467 = vld [vmem:[%s1 + $0xb3c] sm:$0xf]
  %v468 = vld [vmem:[%s1 + $0xb40] sm:$0xff]
  %v469 = vld [vmem:[%s1 + $0xb48] sm:$0xff]
  %v470 = vld [vmem:[%s1 + $0xb50] sm:$0xf]
  %v471 = vld [vmem:[%s1 + $0xb54] sm:$0xff]
  %v472 = vld [vmem:[%s1 + $0xb5c] sm:$0xff]
  %v473 = vld [vmem:[%s1 + $0xb64] sm:$0xf]
  %v474 = vld [vmem:[%s1 + $0xb68] sm:$0xff]
  %v475 = vld [vmem:[%s1 + $0xb70] sm:$0xff]
  %v476 = vld [vmem:[%s1 + $0xb78] sm:$0xf]
  %v477 = vld [vmem:[%s1 + $0xb7c] sm:$0xff]
  %v478 = vld [vmem:[%s1 + $0xb84] sm:$0xff]
  %v479 = vld [vmem:[%s1 + $0xb8c] sm:$0xf]
  %v480 = vld [vmem:[%s1 + $0xb90] sm:$0xff]
  %v481 = vld [vmem:[%s1 + $0xb98] sm:$0xff]
  %v482 = vld [vmem:[%s1 + $0xba0] sm:$0xf]
  %v483 = vld [vmem:[%s1 + $0xba4] sm:$0xff]
  %v484 = vld [vmem:[%s1 + $0xbac] sm:$0xff]
  %v485 = vld [vmem:[%s1 + $0xbb4] sm:$0xf]
  %v486 = vld [vmem:[%s1 + $0xbb8] sm:$0xff]
  %v487 = vld [vmem:[%s1 + $0xbc0] sm:$0xff]
  %v488 = vld [vmem:[%s1 + $0xbc8] sm:$0xf]
  %v489 = vld [vmem:[%s1 + $0xbcc] sm:$0xff]
  %v490 = vld [vmem:[%s1 + $0xbd4] sm:$0xff]
  %v491 = vld [vmem:[%s1 + $0xbdc] sm:$0xf]
  %v492 = vld [vmem:[%s1 + $0xbe0] sm:$0xff]
  %v493 = vld [vmem:[%s1 + $0xbe8] sm:$0xff]
  %v494 = vld [vmem:[%s1 + $0xbf0] sm:$0xf]
  %v495 = vld [vmem:[%s1 + $0xbf4] sm:$0xff]
  %v496 = vld [vmem:[%s1 + $0xbfc] sm:$0xff]
  %v497 = vld [vmem:[%s1 + $0xc04] sm:$0xf]
  %v498 = vld [vmem:[%s1 + $0xc08] sm:$0xff]
  %v499 = vld [vmem:[%s1 + $0xc10] sm:$0xff]
  %v500 = vld [vmem:[%s1 + $0xc18] sm:$0xf]
  %v501 = vld [vmem:[%s1 + $0xc1c] sm:$0xff]
  %v502 = vld [vmem:[%s1 + $0xc24] sm:$0xff]
  %v503 = vld [vmem:[%s1 + $0xc2c] sm:$0xf]
  %v504 = vld [vmem:[%s1 + $0xc30] sm:$0xff]
  %v505 = vld [vmem:[%s1 + $0xc38] sm:$0xff]
  %v506 = vld [vmem:[%s1 + $0xc40] sm:$0xf]
  %v507 = vld [vmem:[%s1 + $0xc44] sm:$0xff]
  %v508 = vld [vmem:[%s1 + $0xc4c] sm:$0xff]
  %v509 = vld [vmem:[%s1 + $0xc54] sm:$0xf]
  %v510 = vld [vmem:[%s1 + $0xc58] sm:$0xff]
  %v511 = vld [vmem:[%s1 + $0xc60] sm:$0xff]
  %v512 = vld [vmem:[%s1 + $0xc68] sm:$0xf]
  %v513 = vld [vmem:[%s1 + $0xc6c] sm:$0xff]
  %v514 = vld [vmem:[%s1 + $0xc74] sm:$0xff]
  %v515 = vld [vmem:[%s1 + $0xc7c] sm:$0xf]
  %v516 = vld [vmem:[%s1 + $0xc80] sm:$0xff]
  %v517 = vld [vmem:[%s1 + $0xc88] sm:$0xff]
  %v518 = vld [vmem:[%s1 + $0xc90] sm:$0xf]
  %v519 = vld [vmem:[%s1 + $0xc94] sm:$0xff]
  %v520 = vld [vmem:[%s1 + $0xc9c] sm:$0xff]
  %v521 = vld [vmem:[%s1 + $0xca4] sm:$0xf]
  %v522 = vld [vmem:[%s1 + $0xca8] sm:$0xff]
  %v523 = vld [vmem:[%s1 + $0xcb0] sm:$0xff]
  %v524 = vld [vmem:[%s1 + $0xcb8] sm:$0xf]
  %v525 = vld [vmem:[%s1 + $0xcbc] sm:$0xff]
  %v526 = vld [vmem:[%s1 + $0xcc4] sm:$0xff]
  %v527 = vld [vmem:[%s1 + $0xccc] sm:$0xf]
  %v528 = vld [vmem:[%s1 + $0xcd0] sm:$0xff]
  %v529 = vld [vmem:[%s1 + $0xcd8] sm:$0xff]
  %v530 = vld [vmem:[%s1 + $0xce0] sm:$0xf]
  %v531 = vld [vmem:[%s1 + $0xce4] sm:$0xff]
  %v532 = vld [vmem:[%s1 + $0xcec] sm:$0xff]
  %v533 = vld [vmem:[%s1 + $0xcf4] sm:$0xf]
  %v534 = vld [vmem:[%s1 + $0xcf8] sm:$0xff]
  %v535 = vld [vmem:[%s1 + $0xd00] sm:$0xff]
  %v536 = vld [vmem:[%s1 + $0xd08] sm:$0xf]
  %v537 = vld [vmem:[%s1 + $0xd0c] sm:$0xff]
  %v538 = vld [vmem:[%s1 + $0xd14] sm:$0xff]
  %v539 = vld [vmem:[%s1 + $0xd1c] sm:$0xf]
  %v540 = vld [vmem:[%s1 + $0xd20] sm:$0xff]
  %v541 = vld [vmem:[%s1 + $0xd28] sm:$0xff]
  %v542 = vld [vmem:[%s1 + $0xd30] sm:$0xf]
  %v543 = vld [vmem:[%s1 + $0xd34] sm:$0xff]
  %v544 = vld [vmem:[%s1 + $0xd3c] sm:$0xff]
  %v545 = vld [vmem:[%s1 + $0xd44] sm:$0xf]
  %v546 = vld [vmem:[%s1 + $0xd48] sm:$0xff]
  %v547 = vld [vmem:[%s1 + $0xd50] sm:$0xff]
  %v548 = vld [vmem:[%s1 + $0xd58] sm:$0xf]
  %v549 = vld [vmem:[%s1 + $0xd5c] sm:$0xff]
  %v550 = vld [vmem:[%s1 + $0xd64] sm:$0xff]
  %v551 = vld [vmem:[%s1 + $0xd6c] sm:$0xf]
  %v552 = vld [vmem:[%s1 + $0xd70] sm:$0xff]
  %v553 = vld [vmem:[%s1 + $0xd78] sm:$0xff]
  %v554 = vld [vmem:[%s1 + $0xd80] sm:$0xf]
  %v555 = vld [vmem:[%s1 + $0xd84] sm:$0xff]
  %v556 = vld [vmem:[%s1 + $0xd8c] sm:$0xff]
  %v557 = vld [vmem:[%s1 + $0xd94] sm:$0xf]
  %v558 = vld [vmem:[%s1 + $0xd98] sm:$0xff]
  %v559 = vld [vmem:[%s1 + $0xda0] sm:$0xff]
  %v560 = vld [vmem:[%s1 + $0xda8] sm:$0xf]
  %v561 = vld [vmem:[%s1 + $0xdac] sm:$0xff]
  %v562 = vld [vmem:[%s1 + $0xdb4] sm:$0xff]
  %v563 = vld [vmem:[%s1 + $0xdbc] sm:$0xf]
  %v564 = vld [vmem:[%s1 + $0xdc0] sm:$0xff]
  %v565 = vld [vmem:[%s1 + $0xdc8] sm:$0xff]
  %v566 = vld [vmem:[%s1 + $0xdd0] sm:$0xf]
  %v567 = vld [vmem:[%s1 + $0xdd4] sm:$0xff]
  %v568 = vld [vmem:[%s1 + $0xddc] sm:$0xff]
  %v569 = vld [vmem:[%s1 + $0xde4] sm:$0xf]
  %v570 = vld [vmem:[%s1 + $0xde8] sm:$0xff]
  %v571 = vld [vmem:[%s1 + $0xdf0] sm:$0xff]
  %v572 = vld [vmem:[%s1 + $0xdf8] sm:$0xf]
  %v573 = vld [vmem:[%s1 + $0xdfc] sm:$0xff]
  %v574 = vld [vmem:[%s1 + $0xe04] sm:$0xff]
  %v575 = vld [vmem:[%s1 + $0xe0c] sm:$0xf]
  %v576 = vld [vmem:[%s1 + $0xe10] sm:$0xff]
  %v577 = vld [vmem:[%s1 + $0xe18] sm:$0xff]
  %v578 = vld [vmem:[%s1 + $0xe20] sm:$0xf]
  %v579 = vld [vmem:[%s1 + $0xe24] sm:$0xff]
  %v580 = vld [vmem:[%s1 + $0xe2c] sm:$0xff]
  %v581 = vld [vmem:[%s1 + $0xe34] sm:$0xf]
  %v582 = vld [vmem:[%s1 + $0xe38] sm:$0xff]
  %v583 = vld [vmem:[%s1 + $0xe40] sm:$0xff]
  %v584 = vld [vmem:[%s1 + $0xe48] sm:$0xf]
  %v585 = vld [vmem:[%s1 + $0xe4c] sm:$0xff]
  %v586 = vld [vmem:[%s1 + $0xe54] sm:$0xff]
  %v587 = vld [vmem:[%s1 + $0xe5c] sm:$0xf]
  %v588 = vld [vmem:[%s1 + $0xe60] sm:$0xff]
  %v589 = vld [vmem:[%s1 + $0xe68] sm:$0xff]
  %v590 = vld [vmem:[%s1 + $0xe70] sm:$0xf]
  %v591 = vld [vmem:[%s1 + $0xe74] sm:$0xff]
  %v592 = vld [vmem:[%s1 + $0xe7c] sm:$0xff]
  %v593 = vld [vmem:[%s1 + $0xe84] sm:$0xf]
  %v594 = vld [vmem:[%s1 + $0xe88] sm:$0xff]
  %v595 = vld [vmem:[%s1 + $0xe90] sm:$0xff]
  %v596 = vld [vmem:[%s1 + $0xe98] sm:$0xf]
  %v597 = vld [vmem:[%s1 + $0xe9c] sm:$0xff]
  %v598 = vld [vmem:[%s1 + $0xea4] sm:$0xff]
  %v599 = vld [vmem:[%s1 + $0xeac] sm:$0xf]
  %v600 = vld [vmem:[%s1 + $0xeb0] sm:$0xff]
  %v601 = vld [vmem:[%s1 + $0xeb8] sm:$0xff]
  %v602 = vld [vmem:[%s1 + $0xec0] sm:$0xf]
  %v603 = vld [vmem:[%s1 + $0xec4] sm:$0xff]
  %v604 = vld [vmem:[%s1 + $0xecc] sm:$0xff]
  %v605 = vld [vmem:[%s1 + $0xed4] sm:$0xf]
  %v606 = vld [vmem:[%s1 + $0xed8] sm:$0xff]
  %v607 = vld [vmem:[%s1 + $0xee0] sm:$0xff]
  %v608 = vld [vmem:[%s1 + $0xee8] sm:$0xf]
  %v609 = vld [vmem:[%s1 + $0xeec] sm:$0xff]
  %v610 = vld [vmem:[%s1 + $0xef4] sm:$0xff]
  %v611 = vld [vmem:[%s1 + $0xefc] sm:$0xf]
  %v612 = vld [vmem:[%s1 + $0xf00] sm:$0xff]
  %v613 = vld [vmem:[%s1 + $0xf08] sm:$0xff]
  %v614 = vld [vmem:[%s1 + $0xf10] sm:$0xf]
  %v615 = vld [vmem:[%s1 + $0xf14] sm:$0xff]
  %v616 = vld [vmem:[%s1 + $0xf1c] sm:$0xff]
  %v617 = vld [vmem:[%s1 + $0xf24] sm:$0xf]
  %v618 = vld [vmem:[%s1 + $0xf28] sm:$0xff]
  %v619 = vld [vmem:[%s1 + $0xf30] sm:$0xff]
  %v620 = vld [vmem:[%s1 + $0xf38] sm:$0xf]
  %v621 = vld [vmem:[%s1 + $0xf3c] sm:$0xff]
  %v622 = vld [vmem:[%s1 + $0xf44] sm:$0xff]
  %v623 = vld [vmem:[%s1 + $0xf4c] sm:$0xf]
  %v624 = vld [vmem:[%s1 + $0xf50] sm:$0xff]
  %v625 = vld [vmem:[%s1 + $0xf58] sm:$0xff]
  %v626 = vld [vmem:[%s1 + $0xf60] sm:$0xf]
  %v627 = vld [vmem:[%s1 + $0xf64] sm:$0xff]
  %v628 = vld [vmem:[%s1 + $0xf6c] sm:$0xff]
  %v629 = vld [vmem:[%s1 + $0xf74] sm:$0xf]
  %v630 = vld [vmem:[%s1 + $0xf78] sm:$0xff]
  %v631 = vld [vmem:[%s1 + $0xf80] sm:$0xff]
  %v632 = vld [vmem:[%s1 + $0xf88] sm:$0xf]
  %v633 = vld [vmem:[%s1 + $0xf8c] sm:$0xff]
  %v634 = vld [vmem:[%s1 + $0xf94] sm:$0xff]
  %v635 = vld [vmem:[%s1 + $0xf9c] sm:$0xf]
  %v636 = vld [vmem:[%s1 + $0xfa0] sm:$0xff]
  %v637 = vld [vmem:[%s1 + $0xfa8] sm:$0xff]
  %v638 = vld [vmem:[%s1 + $0xfb0] sm:$0xf]
  %v639 = vld [vmem:[%s1 + $0xfb4] sm:$0xff]
  %v640 = vld [vmem:[%s1 + $0xfbc] sm:$0xff]
  %v641 = vld [vmem:[%s1 + $0xfc4] sm:$0xf]
  %v642 = vld [vmem:[%s1 + $0xfc8] sm:$0xff]
  %v643 = vld [vmem:[%s1 + $0xfd0] sm:$0xff]
  %v644 = vld [vmem:[%s1 + $0xfd8] sm:$0xf]
  %v645 = vld [vmem:[%s1 + $0xfdc] sm:$0xff]
  %v646 = vld [vmem:[%s1 + $0xfe4] sm:$0xff]
  %v647 = vld [vmem:[%s1 + $0xfec] sm:$0xf]
  %v648 = vld [vmem:[%s1 + $0xff0] sm:$0xff]
  %v649 = vld [vmem:[%s1 + $0xff8] sm:$0xff]
  %v650 = vld [vmem:[%s1 + $0x1000] sm:$0xf]
  %v651 = vld [vmem:[%s1 + $0x1004] sm:$0xff]
  %v652 = vld [vmem:[%s1 + $0x100c] sm:$0xff]
  %v653 = vld [vmem:[%s1 + $0x1014] sm:$0xf]
  %v654 = vld [vmem:[%s1 + $0x1018] sm:$0xff]
  %v655 = vld [vmem:[%s1 + $0x1020] sm:$0xff]
  %v656 = vld [vmem:[%s1 + $0x1028] sm:$0xf]
  %v657 = vld [vmem:[%s1 + $0x102c] sm:$0xff]
  %v658 = vld [vmem:[%s1 + $0x1034] sm:$0xff]
  %v659 = vld [vmem:[%s1 + $0x103c] sm:$0xf]
  %v660 = vld [vmem:[%s1 + $0x1040] sm:$0xff]
  %v661 = vld [vmem:[%s1 + $0x1048] sm:$0xff]
  %v662 = vld [vmem:[%s1 + $0x1050] sm:$0xf]
  %v663 = vld [vmem:[%s1 + $0x1054] sm:$0xff]
  %v664 = vld [vmem:[%s1 + $0x105c] sm:$0xff]
  %v665 = vld [vmem:[%s1 + $0x1064] sm:$0xf]
  %v666 = vld [vmem:[%s1 + $0x1068] sm:$0xff]
  %v667 = vld [vmem:[%s1 + $0x1070] sm:$0xff]
  %v668 = vld [vmem:[%s1 + $0x1078] sm:$0xf]
  %v669 = vld [vmem:[%s1 + $0x107c] sm:$0xff]
  %v670 = vld [vmem:[%s1 + $0x1084] sm:$0xff]
  %v671 = vld [vmem:[%s1 + $0x108c] sm:$0xf]
  %v672 = vld [vmem:[%s1 + $0x1090] sm:$0xff]
  %v673 = vld [vmem:[%s1 + $0x1098] sm:$0xff]
  %v674 = vld [vmem:[%s1 + $0x10a0] sm:$0xf]
  %v675 = vld [vmem:[%s1 + $0x10a4] sm:$0xff]
  %v676 = vld [vmem:[%s1 + $0x10ac] sm:$0xff]
  %v677 = vld [vmem:[%s1 + $0x10b4] sm:$0xf]
  %v678 = vld [vmem:[%s1 + $0x10b8] sm:$0xff]
  %v679 = vld [vmem:[%s1 + $0x10c0] sm:$0xff]
  %v680 = vld [vmem:[%s1 + $0x10c8] sm:$0xf]
  %v681 = vld [vmem:[%s1 + $0x10cc] sm:$0xff]
  %v682 = vld [vmem:[%s1 + $0x10d4] sm:$0xff]
  %v683 = vld [vmem:[%s1 + $0x10dc] sm:$0xf]
  %v684 = vld [vmem:[%s1 + $0x10e0] sm:$0xff]
  %v685 = vld [vmem:[%s1 + $0x10e8] sm:$0xff]
  %v686 = vld [vmem:[%s1 + $0x10f0] sm:$0xf]
  %v687 = vld [vmem:[%s1 + $0x10f4] sm:$0xff]
  %v688 = vld [vmem:[%s1 + $0x10fc] sm:$0xff]
  %v689 = vld [vmem:[%s1 + $0x1104] sm:$0xf]
  %v690 = vld [vmem:[%s1 + $0x1108] sm:$0xff]
  %v691 = vld [vmem:[%s1 + $0x1110] sm:$0xff]
  %v692 = vld [vmem:[%s1 + $0x1118] sm:$0xf]
  %v693 = vld [vmem:[%s1 + $0x111c] sm:$0xff]
  %v694 = vld [vmem:[%s1 + $0x1124] sm:$0xff]
  %v695 = vld [vmem:[%s1 + $0x112c] sm:$0xf]
  %v696 = vld [vmem:[%s1 + $0x1130] sm:$0xff]
  %v697 = vld [vmem:[%s1 + $0x1138] sm:$0xff]
  %v698 = vld [vmem:[%s1 + $0x1140] sm:$0xf]
  %v699 = vld [vmem:[%s1 + $0x1144] sm:$0xff]
  %v700 = vld [vmem:[%s1 + $0x114c] sm:$0xff]
  %v701 = vld [vmem:[%s1 + $0x1154] sm:$0xf]
  %v702 = vld [vmem:[%s1 + $0x1158] sm:$0xff]
  %v703 = vld [vmem:[%s1 + $0x1160] sm:$0xff]
  %v704 = vld [vmem:[%s1 + $0x1168] sm:$0xf]
  %v705 = vld [vmem:[%s1 + $0x116c] sm:$0xff]
  %v706 = vld [vmem:[%s1 + $0x1174] sm:$0xff]
  %v707 = vld [vmem:[%s1 + $0x117c] sm:$0xf]
  %v708 = vld [vmem:[%s1 + $0x1180] sm:$0xff]
  %v709 = vld [vmem:[%s1 + $0x1188] sm:$0xff]
  %v710 = vld [vmem:[%s1 + $0x1190] sm:$0xf]
  %v711 = vld [vmem:[%s1 + $0x1194] sm:$0xff]
  %v712 = vld [vmem:[%s1 + $0x119c] sm:$0xff]
  %v713 = vld [vmem:[%s1 + $0x11a4] sm:$0xf]
  %v714 = vld [vmem:[%s1 + $0x11a8] sm:$0xff]
  %v715 = vld [vmem:[%s1 + $0x11b0] sm:$0xff]
  %v716 = vld [vmem:[%s1 + $0x11b8] sm:$0xf]
  %v717 = vld [vmem:[%s1 + $0x11bc] sm:$0xff]
  %v718 = vld [vmem:[%s1 + $0x11c4] sm:$0xff]
  %v719 = vld [vmem:[%s1 + $0x11cc] sm:$0xf]
  %v720 = vld [vmem:[%s1 + $0x11d0] sm:$0xff]
  %v721 = vld [vmem:[%s1 + $0x11d8] sm:$0xff]
  %v722 = vld [vmem:[%s1 + $0x11e0] sm:$0xf]
  %v723 = vld [vmem:[%s1 + $0x11e4] sm:$0xff]
  %v724 = vld [vmem:[%s1 + $0x11ec] sm:$0xff]
  %v725 = vld [vmem:[%s1 + $0x11f4] sm:$0xf]
  %v726 = vld [vmem:[%s1 + $0x11f8] sm:$0xff]
  %v727 = vld [vmem:[%s1 + $0x1200] sm:$0xff]
  %v728 = vld [vmem:[%s1 + $0x1208] sm:$0xf]
  %v729 = vld [vmem:[%s1 + $0x120c] sm:$0xff]
  %v730 = vld [vmem:[%s1 + $0x1214] sm:$0xff]
  %v731 = vld [vmem:[%s1 + $0x121c] sm:$0xf]
  %v732 = vld [vmem:[%s1 + $0x1220] sm:$0xff]
  %v733 = vld [vmem:[%s1 + $0x1228] sm:$0xff]
  %v734 = vld [vmem:[%s1 + $0x1230] sm:$0xf]
  %v735 = vld [vmem:[%s1 + $0x1234] sm:$0xff]
  %v736 = vld [vmem:[%s1 + $0x123c] sm:$0xff]
  %v737 = vld [vmem:[%s1 + $0x1244] sm:$0xf]
  %v738 = vld [vmem:[%s1 + $0x1248] sm:$0xff]
  %v739 = vld [vmem:[%s1 + $0x1250] sm:$0xff]
  %v740 = vld [vmem:[%s1 + $0x1258] sm:$0xf]
  %v741 = vld [vmem:[%s1 + $0x125c] sm:$0xff]
  %v742 = vld [vmem:[%s1 + $0x1264] sm:$0xff]
  %v743 = vld [vmem:[%s1 + $0x126c] sm:$0xf]
  %v744 = vld [vmem:[%s1 + $0x1270] sm:$0xff]
  %v745 = vld [vmem:[%s1 + $0x1278] sm:$0xff]
  %v746 = vld [vmem:[%s1 + $0x1280] sm:$0xf]
  %v747 = vld [vmem:[%s1 + $0x1284] sm:$0xff]
  %v748 = vld [vmem:[%s1 + $0x128c] sm:$0xff]
  %v749 = vld [vmem:[%s1 + $0x1294] sm:$0xf]
  %v750 = vld [vmem:[%s1 + $0x1298] sm:$0xff]
  %v751 = vld [vmem:[%s1 + $0x12a0] sm:$0xff]
  %v752 = vld [vmem:[%s1 + $0x12a8] sm:$0xf]
  %v753 = vld [vmem:[%s1 + $0x12ac] sm:$0xff]
  %v754 = vld [vmem:[%s1 + $0x12b4] sm:$0xff]
  %v755 = vld [vmem:[%s1 + $0x12bc] sm:$0xf]
  %v756 = vld [vmem:[%s1 + $0x12c0] sm:$0xff]
  %v757 = vld [vmem:[%s1 + $0x12c8] sm:$0xff]
  %v758 = vld [vmem:[%s1 + $0x12d0] sm:$0xf]
  %v759 = vld [vmem:[%s1 + $0x12d4] sm:$0xff]
  %v760 = vld [vmem:[%s1 + $0x12dc] sm:$0xff]
  %v761 = vld [vmem:[%s1 + $0x12e4] sm:$0xf]
  %v762 = vld [vmem:[%s1 + $0x12e8] sm:$0xff]
  %v763 = vld [vmem:[%s1 + $0x12f0] sm:$0xff]
  %v764 = vld [vmem:[%s1 + $0x12f8] sm:$0xf]
  %v765 = vld [vmem:[%s1 + $0x12fc] sm:$0xff]
  %v766 = vld [vmem:[%s1 + $0x1304] sm:$0xff]
  %v767 = vld [vmem:[%s1 + $0x130c] sm:$0xf]
  %v768 = vld [vmem:[%s1 + $0x1310] sm:$0xff]
  %v769 = vld [vmem:[%s1 + $0x1318] sm:$0xff]
  %v770 = vld [vmem:[%s1 + $0x1320] sm:$0xf]
  %v771 = vld [vmem:[%s1 + $0x1324] sm:$0xff]
  %v772 = vld [vmem:[%s1 + $0x132c] sm:$0xff]
  %v773 = vld [vmem:[%s1 + $0x1334] sm:$0xf]
  %v774 = vld [vmem:[%s1 + $0x1338] sm:$0xff]
  %v775 = vld [vmem:[%s1 + $0x1340] sm:$0xff]
  %v776 = vld [vmem:[%s1 + $0x1348] sm:$0xf]
  %v777 = vld [vmem:[%s1 + $0x134c] sm:$0xff]
  %v778 = vld [vmem:[%s1 + $0x1354] sm:$0xff]
  %v779 = vld [vmem:[%s1 + $0x135c] sm:$0xf]
  %v780 = vld [vmem:[%s1 + $0x1360] sm:$0xff]
  %v781 = vld [vmem:[%s1 + $0x1368] sm:$0xff]
  %v782 = vld [vmem:[%s1 + $0x1370] sm:$0xf]
  %v783 = vld [vmem:[%s1 + $0x1374] sm:$0xff]
  %v784 = vld [vmem:[%s1 + $0x137c] sm:$0xff]
  %v785 = vld [vmem:[%s1 + $0x1384] sm:$0xf]
  %v786 = vld [vmem:[%s1 + $0x1388] sm:$0xff]
  %v787 = vld [vmem:[%s1 + $0x1390] sm:$0xff]
  %v788 = vld [vmem:[%s1 + $0x1398] sm:$0xf]
  %v789 = vld [vmem:[%s1 + $0x139c] sm:$0xff]
  %v790 = vld [vmem:[%s1 + $0x13a4] sm:$0xff]
  %v791 = vld [vmem:[%s1 + $0x13ac] sm:$0xf]
  %v792 = vld [vmem:[%s1 + $0x13b0] sm:$0xff]
  %v793 = vld [vmem:[%s1 + $0x13b8] sm:$0xff]
  %v794 = vld [vmem:[%s1 + $0x13c0] sm:$0xf]
  %v795 = vld [vmem:[%s1 + $0x13c4] sm:$0xff]
  %v796 = vld [vmem:[%s1 + $0x13cc] sm:$0xff]
  %v797 = vld [vmem:[%s1 + $0x13d4] sm:$0xf]
  %v798 = vld [vmem:[%s1 + $0x13d8] sm:$0xff]
  %v799 = vld [vmem:[%s1 + $0x13e0] sm:$0xff]
  %v800 = vld [vmem:[%s1 + $0x13e8] sm:$0xf]
  %v801 = vld [vmem:[%s1 + $0x13ec] sm:$0xff]
  %v802 = vld [vmem:[%s1 + $0x13f4] sm:$0xff]
  %v803 = vld [vmem:[%s1 + $0x13fc] sm:$0xf]
  %v804 = vld [vmem:[%s1 + $0x1400] sm:$0xff]
  %v805 = vld [vmem:[%s1 + $0x1408] sm:$0xff]
  %v806 = vld [vmem:[%s1 + $0x1410] sm:$0xf]
  %v807 = vld [vmem:[%s1 + $0x1414] sm:$0xff]
  %v808 = vld [vmem:[%s1 + $0x141c] sm:$0xff]
  %v809 = vld [vmem:[%s1 + $0x1424] sm:$0xf]
  %v810 = vld [vmem:[%s1 + $0x1428] sm:$0xff]
  %v811 = vld [vmem:[%s1 + $0x1430] sm:$0xff]
  %v812 = vld [vmem:[%s1 + $0x1438] sm:$0xf]
  %v813 = vld [vmem:[%s1 + $0x143c] sm:$0xff]
  %v814 = vld [vmem:[%s1 + $0x1444] sm:$0xff]
  %v815 = vld [vmem:[%s1 + $0x144c] sm:$0xf]
  %v816 = vld [vmem:[%s1 + $0x1450] sm:$0xff]
  %v817 = vld [vmem:[%s1 + $0x1458] sm:$0xff]
  %v818 = vld [vmem:[%s1 + $0x1460] sm:$0xf]
  %v819 = vld [vmem:[%s1 + $0x1464] sm:$0xff]
  %v820 = vld [vmem:[%s1 + $0x146c] sm:$0xff]
  %v821 = vld [vmem:[%s1 + $0x1474] sm:$0xf]
  %v822 = vld [vmem:[%s1 + $0x1478] sm:$0xff]
  %v823 = vld [vmem:[%s1 + $0x1480] sm:$0xff]
  %v824 = vld [vmem:[%s1 + $0x1488] sm:$0xf]
  %v825 = vld [vmem:[%s1 + $0x148c] sm:$0xff]
  %v826 = vld [vmem:[%s1 + $0x1494] sm:$0xff]
  %v827 = vld [vmem:[%s1 + $0x149c] sm:$0xf]
  %v828 = vld [vmem:[%s1 + $0x14a0] sm:$0xff]
  %v829 = vld [vmem:[%s1 + $0x14a8] sm:$0xff]
  %v830 = vld [vmem:[%s1 + $0x14b0] sm:$0xf]
  %v831 = vld [vmem:[%s1 + $0x14b4] sm:$0xff]
  %v832 = vld [vmem:[%s1 + $0x14bc] sm:$0xff]
  %v833 = vld [vmem:[%s1 + $0x14c4] sm:$0xf]
  %v834 = vld [vmem:[%s1 + $0x14c8] sm:$0xff]
  %v835 = vld [vmem:[%s1 + $0x14d0] sm:$0xff]
  %v836 = vld [vmem:[%s1 + $0x14d8] sm:$0xf]
  %v837 = vld [vmem:[%s1 + $0x14dc] sm:$0xff]
  %v838 = vld [vmem:[%s1 + $0x14e4] sm:$0xff]
  %v839 = vld [vmem:[%s1 + $0x14ec] sm:$0xf]
  %v840 = vld [vmem:[%s1 + $0x14f0] sm:$0xff]
  %v841 = vld [vmem:[%s1 + $0x14f8] sm:$0xff]
  %v842 = vld [vmem:[%s1 + $0x1500] sm:$0xf]
  %v843 = vld [vmem:[%s1 + $0x1504] sm:$0xff]
  %v844 = vld [vmem:[%s1 + $0x150c] sm:$0xff]
  %v845 = vld [vmem:[%s1 + $0x1514] sm:$0xf]
  %v846 = vld [vmem:[%s1 + $0x1518] sm:$0xff]
  %v847 = vld [vmem:[%s1 + $0x1520] sm:$0xff]
  %v848 = vld [vmem:[%s1 + $0x1528] sm:$0xf]
  %v849 = vld [vmem:[%s1 + $0x152c] sm:$0xff]
  %v850 = vld [vmem:[%s1 + $0x1534] sm:$0xff]
  %v851 = vld [vmem:[%s1 + $0x153c] sm:$0xf]
  %v852 = vld [vmem:[%s1 + $0x1540] sm:$0xff]
  %v853 = vld [vmem:[%s1 + $0x1548] sm:$0xff]
  %v854 = vld [vmem:[%s1 + $0x1550] sm:$0xf]
  %v855 = vld [vmem:[%s1 + $0x1554] sm:$0xff]
  %v856 = vld [vmem:[%s1 + $0x155c] sm:$0xff]
  %v857 = vld [vmem:[%s1 + $0x1564] sm:$0xf]
  %v858 = vld [vmem:[%s1 + $0x1568] sm:$0xff]
  %v859 = vld [vmem:[%s1 + $0x1570] sm:$0xff]
  %v860 = vld [vmem:[%s1 + $0x1578] sm:$0xf]
  %v861 = vld [vmem:[%s1 + $0x157c] sm:$0xff]
  %v862 = vld [vmem:[%s1 + $0x1584] sm:$0xff]
  %v863 = vld [vmem:[%s1 + $0x158c] sm:$0xf]
  %v864 = vld [vmem:[%s1 + $0x1590] sm:$0xff]
  %v865 = vld [vmem:[%s1 + $0x1598] sm:$0xff]
  %v866 = vld [vmem:[%s1 + $0x15a0] sm:$0xf]
  %v867 = vld [vmem:[%s1 + $0x15a4] sm:$0xff]
  %v868 = vld [vmem:[%s1 + $0x15ac] sm:$0xff]
  %v869 = vld [vmem:[%s1 + $0x15b4] sm:$0xf]
  %v870 = vld [vmem:[%s1 + $0x15b8] sm:$0xff]
  %v871 = vld [vmem:[%s1 + $0x15c0] sm:$0xff]
  %v872 = vld [vmem:[%s1 + $0x15c8] sm:$0xf]
  %v873 = vld [vmem:[%s1 + $0x15cc] sm:$0xff]
  %v874 = vld [vmem:[%s1 + $0x15d4] sm:$0xff]
  %v875 = vld [vmem:[%s1 + $0x15dc] sm:$0xf]
  %v876 = vld [vmem:[%s1 + $0x15e0] sm:$0xff]
  %v877 = vld [vmem:[%s1 + $0x15e8] sm:$0xff]
  %v878 = vld [vmem:[%s1 + $0x15f0] sm:$0xf]
  %v879 = vld [vmem:[%s1 + $0x15f4] sm:$0xff]
  %v880 = vld [vmem:[%s1 + $0x15fc] sm:$0xff]
  %v881 = vld [vmem:[%s1 + $0x1604] sm:$0xf]
  %v882 = vld [vmem:[%s1 + $0x1608] sm:$0xff]
  %v883 = vld [vmem:[%s1 + $0x1610] sm:$0xff]
  %v884 = vld [vmem:[%s1 + $0x1618] sm:$0xf]
  %v885 = vld [vmem:[%s1 + $0x161c] sm:$0xff]
  %v886 = vld [vmem:[%s1 + $0x1624] sm:$0xff]
  %v887 = vld [vmem:[%s1 + $0x162c] sm:$0xf]
  %v888 = vld [vmem:[%s1 + $0x1630] sm:$0xff]
  %v889 = vld [vmem:[%s1 + $0x1638] sm:$0xff]
  %v890 = vld [vmem:[%s1 + $0x1640] sm:$0xf]
  %v891 = vld [vmem:[%s1 + $0x1644] sm:$0xff]
  %v892 = vld [vmem:[%s1 + $0x164c] sm:$0xff]
  %v893 = vld [vmem:[%s1 + $0x1654] sm:$0xf]
  %v894 = vld [vmem:[%s1 + $0x1658] sm:$0xff]
  %v895 = vld [vmem:[%s1 + $0x1660] sm:$0xff]
  %v896 = vld [vmem:[%s1 + $0x1668] sm:$0xf]
  %v897 = vld [vmem:[%s1 + $0x166c] sm:$0xff]
  %v898 = vld [vmem:[%s1 + $0x1674] sm:$0xff]
  %v899 = vld [vmem:[%s1 + $0x167c] sm:$0xf]
  %v900 = vld [vmem:[%s2] sm:$0x1f]
  %v902 = vlaneseq
  %v903 = vshrl.u32 %v902, 7
  %v904 = vsub.s32 0, %v903
  %v905 = vrot.slane %v900, %v904
  %v906 = vlaneseq
  %v907 = vshrl.u32 %v906, 7
  %v908 = vsub.s32 1, %v907
  %v909 = vrot.slane %v900, %v908
  %v910 = vlaneseq
  %v911 = vshrl.u32 %v910, 7
  %v912 = vsub.s32 2, %v911
  %v913 = vrot.slane %v900, %v912
  %v914 = vlaneseq
  %v915 = vshrl.u32 %v914, 7
  %v916 = vsub.s32 3, %v915
  %v917 = vrot.slane %v900, %v916
  %v918 = vlaneseq
  %v919 = vshrl.u32 %v918, 7
  %v920 = vsub.s32 4, %v919
  %v921 = vrot.slane %v900, %v920
  %v936 = vunpack.c.l.b16 %v27
  %v937 = vunpack.c.h.b16 %v27
  %v938 = vunpack.c.l.b16 %v28
  %v939 = vunpack.c.h.b16 %v28
  %v940 = vunpack.c.l.b16 %v29
  %v941 = vunpack.c.h.b16 %v29
  %v942 = vunpack.c.l.b16 %v30
  %v943 = vunpack.c.h.b16 %v30
  %v944 = vunpack.c.l.b16 %v31
  %v945 = vunpack.c.h.b16 %v31
  %v946 = vunpack.c.l.b16 %v32
  %v947 = vunpack.c.h.b16 %v32
  %v948 = vunpack.c.l.b16 %v33
  %v949 = vunpack.c.h.b16 %v33
  %v950 = vunpack.c.l.b16 %v34
  %v951 = vunpack.c.h.b16 %v34
  %v952 = vunpack.c.l.b16 %v35
  %v953 = vunpack.c.h.b16 %v35
  %v954 = vpack.c.b16 %v936, %v936
  %v955 = vpack.c.b16 %v937, %v937
  %v956 = vpack.c.b16 %v938, %v938
  %v957 = vpack.c.b16 %v939, %v939
  %v958 = vpack.c.b16 %v940, %v940
  %v959 = vpack.c.b16 %v941, %v941
  %v960 = vpack.c.b16 %v942, %v942
  %v961 = vpack.c.b16 %v943, %v943
  %v962 = vpack.c.b16 %v944, %v944
  %v963 = vpack.c.b16 %v945, %v945
  %v964 = vpack.c.b16 %v946, %v946
  %v965 = vpack.c.b16 %v947, %v947
  %v966 = vpack.c.b16 %v948, %v948
  %v967 = vpack.c.b16 %v949, %v949
  %v968 = vpack.c.b16 %v950, %v950
  %v969 = vpack.c.b16 %v951, %v951
  %v970 = vpack.c.b16 %v952, %v952
  %v971 = vpack.c.b16 %v953, %v953
  %v1854 = vunpack.c.l.b16 %v36
  %v1855 = vunpack.c.h.b16 %v36
  %v1856 = vunpack.c.l.b16 %v37
  %v1857 = vunpack.c.h.b16 %v37
  %v1858 = vunpack.c.l.b16 %v38
  %v1859 = vunpack.c.l.b16 %v39
  %v1860 = vunpack.c.h.b16 %v39
  %v1861 = vunpack.c.l.b16 %v40
  %v1862 = vunpack.c.h.b16 %v40
  %v1863 = vunpack.c.l.b16 %v41
  %v1864 = vunpack.c.l.b16 %v42
  %v1865 = vunpack.c.h.b16 %v42
  %v1866 = vunpack.c.l.b16 %v43
  %v1867 = vunpack.c.h.b16 %v43
  %v1868 = vunpack.c.l.b16 %v44
  %v1869 = vunpack.c.l.b16 %v45
  %v1870 = vunpack.c.h.b16 %v45
  %v1871 = vunpack.c.l.b16 %v46
  %v1872 = vunpack.c.h.b16 %v46
  %v1873 = vunpack.c.l.b16 %v47
  %v1874 = vunpack.c.l.b16 %v48
  %v1875 = vunpack.c.h.b16 %v48
  %v1876 = vunpack.c.l.b16 %v49
  %v1877 = vunpack.c.h.b16 %v49
  %v1878 = vunpack.c.l.b16 %v50
  %v1879 = vunpack.c.l.b16 %v51
  %v1880 = vunpack.c.h.b16 %v51
  %v1881 = vunpack.c.l.b16 %v52
  %v1882 = vunpack.c.h.b16 %v52
  %v1883 = vunpack.c.l.b16 %v53
  %v1884 = vunpack.c.l.b16 %v54
  %v1885 = vunpack.c.h.b16 %v54
  %v1886 = vunpack.c.l.b16 %v55
  %v1887 = vunpack.c.h.b16 %v55
  %v1888 = vunpack.c.l.b16 %v56
  %v1889 = vunpack.c.l.b16 %v57
  %v1890 = vunpack.c.h.b16 %v57
  %v1891 = vunpack.c.l.b16 %v58
  %v1892 = vunpack.c.h.b16 %v58
  %v1893 = vunpack.c.l.b16 %v59
  %v1894 = vunpack.c.l.b16 %v60
  %v1895 = vunpack.c.h.b16 %v60
  %v1896 = vunpack.c.l.b16 %v61
  %v1897 = vunpack.c.h.b16 %v61
  %v1898 = vunpack.c.l.b16 %v62
  %v1899 = vunpack.c.l.b16 %v63
  %v1900 = vunpack.c.h.b16 %v63
  %v1901 = vunpack.c.l.b16 %v64
  %v1902 = vunpack.c.h.b16 %v64
  %v1903 = vunpack.c.l.b16 %v65
  %v1904 = vunpack.c.l.b16 %v66
  %v1905 = vunpack.c.h.b16 %v66
  %v1906 = vunpack.c.l.b16 %v67
  %v1907 = vunpack.c.h.b16 %v67
  %v1908 = vunpack.c.l.b16 %v68
  %v1909 = vunpack.c.l.b16 %v69
  %v1910 = vunpack.c.h.b16 %v69
  %v1911 = vunpack.c.l.b16 %v70
  %v1912 = vunpack.c.h.b16 %v70
  %v1913 = vunpack.c.l.b16 %v71
  %v1914 = vunpack.c.l.b16 %v72
  %v1915 = vunpack.c.h.b16 %v72
  %v1916 = vunpack.c.l.b16 %v73
  %v1917 = vunpack.c.h.b16 %v73
  %v1918 = vunpack.c.l.b16 %v74
  %v1919 = vunpack.c.l.b16 %v75
  %v1920 = vunpack.c.h.b16 %v75
  %v1921 = vunpack.c.l.b16 %v76
  %v1922 = vunpack.c.h.b16 %v76
  %v1923 = vunpack.c.l.b16 %v77
  %v1924 = vunpack.c.l.b16 %v78
  %v1925 = vunpack.c.h.b16 %v78
  %v1926 = vunpack.c.l.b16 %v79
  %v1927 = vunpack.c.h.b16 %v79
  %v1928 = vunpack.c.l.b16 %v80
  %v1929 = vunpack.c.l.b16 %v81
  %v1930 = vunpack.c.h.b16 %v81
  %v1931 = vunpack.c.l.b16 %v82
  %v1932 = vunpack.c.h.b16 %v82
  %v1933 = vunpack.c.l.b16 %v83
  %v1934 = vunpack.c.l.b16 %v84
  %v1935 = vunpack.c.h.b16 %v84
  %v1936 = vunpack.c.l.b16 %v85
  %v1937 = vunpack.c.h.b16 %v85
  %v1938 = vunpack.c.l.b16 %v86
  %v1939 = vunpack.c.l.b16 %v87
  %v1940 = vunpack.c.h.b16 %v87
  %v1941 = vunpack.c.l.b16 %v88
  %v1942 = vunpack.c.h.b16 %v88
  %v1943 = vunpack.c.l.b16 %v89
  %v1944 = vunpack.c.l.b16 %v90
  %v1945 = vunpack.c.h.b16 %v90
  %v1946 = vunpack.c.l.b16 %v91
  %v1947 = vunpack.c.h.b16 %v91
  %v1948 = vunpack.c.l.b16 %v92
  %v1949 = vunpack.c.l.b16 %v93
  %v1950 = vunpack.c.h.b16 %v93
  %v1951 = vunpack.c.l.b16 %v94
  %v1952 = vunpack.c.h.b16 %v94
  %v1953 = vunpack.c.l.b16 %v95
  %v1954 = vunpack.c.l.b16 %v96
  %v1955 = vunpack.c.h.b16 %v96
  %v1956 = vunpack.c.l.b16 %v97
  %v1957 = vunpack.c.h.b16 %v97
  %v1958 = vunpack.c.l.b16 %v98
  %v1959 = vunpack.c.l.b16 %v99
  %v1960 = vunpack.c.h.b16 %v99
  %v1961 = vunpack.c.l.b16 %v100
  %v1962 = vunpack.c.h.b16 %v100
  %v1963 = vunpack.c.l.b16 %v101
  %v1964 = vunpack.c.l.b16 %v102
  %v1965 = vunpack.c.h.b16 %v102
  %v1966 = vunpack.c.l.b16 %v103
  %v1967 = vunpack.c.h.b16 %v103
  %v1968 = vunpack.c.l.b16 %v104
  %v1969 = vunpack.c.l.b16 %v105
  %v1970 = vunpack.c.h.b16 %v105
  %v1971 = vunpack.c.l.b16 %v106
  %v1972 = vunpack.c.h.b16 %v106
  %v1973 = vunpack.c.l.b16 %v107
  %v1974 = vunpack.c.l.b16 %v108
  %v1975 = vunpack.c.h.b16 %v108
  %v1976 = vunpack.c.l.b16 %v109
  %v1977 = vunpack.c.h.b16 %v109
  %v1978 = vunpack.c.l.b16 %v110
  %v1979 = vunpack.c.l.b16 %v111
  %v1980 = vunpack.c.h.b16 %v111
  %v1981 = vunpack.c.l.b16 %v112
  %v1982 = vunpack.c.h.b16 %v112
  %v1983 = vunpack.c.l.b16 %v113
  %v1984 = vunpack.c.l.b16 %v114
  %v1985 = vunpack.c.h.b16 %v114
  %v1986 = vunpack.c.l.b16 %v115
  %v1987 = vunpack.c.h.b16 %v115
  %v1988 = vunpack.c.l.b16 %v116
  %v1989 = vunpack.c.l.b16 %v117
  %v1990 = vunpack.c.h.b16 %v117
  %v1991 = vunpack.c.l.b16 %v118
  %v1992 = vunpack.c.h.b16 %v118
  %v1993 = vunpack.c.l.b16 %v119
  %v1994 = vunpack.c.l.b16 %v120
  %v1995 = vunpack.c.h.b16 %v120
  %v1996 = vunpack.c.l.b16 %v121
  %v1997 = vunpack.c.h.b16 %v121
  %v1998 = vunpack.c.l.b16 %v122
  %v1999 = vunpack.c.l.b16 %v123
  %v2000 = vunpack.c.h.b16 %v123
  %v2001 = vunpack.c.l.b16 %v124
  %v2002 = vunpack.c.h.b16 %v124
  %v2003 = vunpack.c.l.b16 %v125
  %v2004 = vunpack.c.l.b16 %v126
  %v2005 = vunpack.c.h.b16 %v126
  %v2006 = vunpack.c.l.b16 %v127
  %v2007 = vunpack.c.h.b16 %v127
  %v2008 = vunpack.c.l.b16 %v128
  %v2009 = vunpack.c.l.b16 %v129
  %v2010 = vunpack.c.h.b16 %v129
  %v2011 = vunpack.c.l.b16 %v130
  %v2012 = vunpack.c.h.b16 %v130
  %v2013 = vunpack.c.l.b16 %v131
  %v2014 = vunpack.c.l.b16 %v132
  %v2015 = vunpack.c.h.b16 %v132
  %v2016 = vunpack.c.l.b16 %v133
  %v2017 = vunpack.c.h.b16 %v133
  %v2018 = vunpack.c.l.b16 %v134
  %v2019 = vunpack.c.l.b16 %v135
  %v2020 = vunpack.c.h.b16 %v135
  %v2021 = vunpack.c.l.b16 %v136
  %v2022 = vunpack.c.h.b16 %v136
  %v2023 = vunpack.c.l.b16 %v137
  %v2024 = vunpack.c.l.b16 %v138
  %v2025 = vunpack.c.h.b16 %v138
  %v2026 = vunpack.c.l.b16 %v139
  %v2027 = vunpack.c.h.b16 %v139
  %v2028 = vunpack.c.l.b16 %v140
  %v2029 = vunpack.c.l.b16 %v141
  %v2030 = vunpack.c.h.b16 %v141
  %v2031 = vunpack.c.l.b16 %v142
  %v2032 = vunpack.c.h.b16 %v142
  %v2033 = vunpack.c.l.b16 %v143
  %v2034 = vunpack.c.l.b16 %v144
  %v2035 = vunpack.c.h.b16 %v144
  %v2036 = vunpack.c.l.b16 %v145
  %v2037 = vunpack.c.h.b16 %v145
  %v2038 = vunpack.c.l.b16 %v146
  %v2039 = vunpack.c.l.b16 %v147
  %v2040 = vunpack.c.h.b16 %v147
  %v2041 = vunpack.c.l.b16 %v148
  %v2042 = vunpack.c.h.b16 %v148
  %v2043 = vunpack.c.l.b16 %v149
  %v2044 = vunpack.c.l.b16 %v150
  %v2045 = vunpack.c.h.b16 %v150
  %v2046 = vunpack.c.l.b16 %v151
  %v2047 = vunpack.c.h.b16 %v151
  %v2048 = vunpack.c.l.b16 %v152
  %v2049 = vunpack.c.l.b16 %v153
  %v2050 = vunpack.c.h.b16 %v153
  %v2051 = vunpack.c.l.b16 %v154
  %v2052 = vunpack.c.h.b16 %v154
  %v2053 = vunpack.c.l.b16 %v155
  %v2054 = vunpack.c.l.b16 %v156
  %v2055 = vunpack.c.h.b16 %v156
  %v2056 = vunpack.c.l.b16 %v157
  %v2057 = vunpack.c.h.b16 %v157
  %v2058 = vunpack.c.l.b16 %v158
  %v2059 = vunpack.c.l.b16 %v159
  %v2060 = vunpack.c.h.b16 %v159
  %v2061 = vunpack.c.l.b16 %v160
  %v2062 = vunpack.c.h.b16 %v160
  %v2063 = vunpack.c.l.b16 %v161
  %v2064 = vunpack.c.l.b16 %v162
  %v2065 = vunpack.c.h.b16 %v162
  %v2066 = vunpack.c.l.b16 %v163
  %v2067 = vunpack.c.h.b16 %v163
  %v2068 = vunpack.c.l.b16 %v164
  %v2069 = vunpack.c.l.b16 %v165
  %v2070 = vunpack.c.h.b16 %v165
  %v2071 = vunpack.c.l.b16 %v166
  %v2072 = vunpack.c.h.b16 %v166
  %v2073 = vunpack.c.l.b16 %v167
  %v2074 = vunpack.c.l.b16 %v168
  %v2075 = vunpack.c.h.b16 %v168
  %v2076 = vunpack.c.l.b16 %v169
  %v2077 = vunpack.c.h.b16 %v169
  %v2078 = vunpack.c.l.b16 %v170
  %v2079 = vunpack.c.l.b16 %v171
  %v2080 = vunpack.c.h.b16 %v171
  %v2081 = vunpack.c.l.b16 %v172
  %v2082 = vunpack.c.h.b16 %v172
  %v2083 = vunpack.c.l.b16 %v173
  %v2084 = vunpack.c.l.b16 %v174
  %v2085 = vunpack.c.h.b16 %v174
  %v2086 = vunpack.c.l.b16 %v175
  %v2087 = vunpack.c.h.b16 %v175
  %v2088 = vunpack.c.l.b16 %v176
  %v2089 = vunpack.c.l.b16 %v177
  %v2090 = vunpack.c.h.b16 %v177
  %v2091 = vunpack.c.l.b16 %v178
  %v2092 = vunpack.c.h.b16 %v178
  %v2093 = vunpack.c.l.b16 %v179
  %v2094 = vunpack.c.l.b16 %v180
  %v2095 = vunpack.c.h.b16 %v180
  %v2096 = vunpack.c.l.b16 %v181
  %v2097 = vunpack.c.h.b16 %v181
  %v2098 = vunpack.c.l.b16 %v182
  %v2099 = vunpack.c.l.b16 %v183
  %v2100 = vunpack.c.h.b16 %v183
  %v2101 = vunpack.c.l.b16 %v184
  %v2102 = vunpack.c.h.b16 %v184
  %v2103 = vunpack.c.l.b16 %v185
  %v2104 = vunpack.c.l.b16 %v186
  %v2105 = vunpack.c.h.b16 %v186
  %v2106 = vunpack.c.l.b16 %v187
  %v2107 = vunpack.c.h.b16 %v187
  %v2108 = vunpack.c.l.b16 %v188
  %v2109 = vunpack.c.l.b16 %v189
  %v2110 = vunpack.c.h.b16 %v189
  %v2111 = vunpack.c.l.b16 %v190
  %v2112 = vunpack.c.h.b16 %v190
  %v2113 = vunpack.c.l.b16 %v191
  %v2114 = vunpack.c.l.b16 %v192
  %v2115 = vunpack.c.h.b16 %v192
  %v2116 = vunpack.c.l.b16 %v193
  %v2117 = vunpack.c.h.b16 %v193
  %v2118 = vunpack.c.l.b16 %v194
  %v2119 = vunpack.c.l.b16 %v195
  %v2120 = vunpack.c.h.b16 %v195
  %v2121 = vunpack.c.l.b16 %v196
  %v2122 = vunpack.c.h.b16 %v196
  %v2123 = vunpack.c.l.b16 %v197
  %v2124 = vunpack.c.l.b16 %v198
  %v2125 = vunpack.c.h.b16 %v198
  %v2126 = vunpack.c.l.b16 %v199
  %v2127 = vunpack.c.h.b16 %v199
  %v2128 = vunpack.c.l.b16 %v200
  %v2129 = vunpack.c.l.b16 %v201
  %v2130 = vunpack.c.h.b16 %v201
  %v2131 = vunpack.c.l.b16 %v202
  %v2132 = vunpack.c.h.b16 %v202
  %v2133 = vunpack.c.l.b16 %v203
  %v2134 = vunpack.c.l.b16 %v204
  %v2135 = vunpack.c.h.b16 %v204
  %v2136 = vunpack.c.l.b16 %v205
  %v2137 = vunpack.c.h.b16 %v205
  %v2138 = vunpack.c.l.b16 %v206
  %v2139 = vunpack.c.l.b16 %v207
  %v2140 = vunpack.c.h.b16 %v207
  %v2141 = vunpack.c.l.b16 %v208
  %v2142 = vunpack.c.h.b16 %v208
  %v2143 = vunpack.c.l.b16 %v209
  %v2144 = vunpack.c.l.b16 %v210
  %v2145 = vunpack.c.h.b16 %v210
  %v2146 = vunpack.c.l.b16 %v211
  %v2147 = vunpack.c.h.b16 %v211
  %v2148 = vunpack.c.l.b16 %v212
  %v2149 = vunpack.c.l.b16 %v213
  %v2150 = vunpack.c.h.b16 %v213
  %v2151 = vunpack.c.l.b16 %v214
  %v2152 = vunpack.c.h.b16 %v214
  %v2153 = vunpack.c.l.b16 %v215
  %v2154 = vunpack.c.l.b16 %v216
  %v2155 = vunpack.c.h.b16 %v216
  %v2156 = vunpack.c.l.b16 %v217
  %v2157 = vunpack.c.h.b16 %v217
  %v2158 = vunpack.c.l.b16 %v218
  %v2159 = vunpack.c.l.b16 %v219
  %v2160 = vunpack.c.h.b16 %v219
  %v2161 = vunpack.c.l.b16 %v220
  %v2162 = vunpack.c.h.b16 %v220
  %v2163 = vunpack.c.l.b16 %v221
  %v2164 = vunpack.c.l.b16 %v222
  %v2165 = vunpack.c.h.b16 %v222
  %v2166 = vunpack.c.l.b16 %v223
  %v2167 = vunpack.c.h.b16 %v223
  %v2168 = vunpack.c.l.b16 %v224
  %v2169 = vunpack.c.l.b16 %v225
  %v2170 = vunpack.c.h.b16 %v225
  %v2171 = vunpack.c.l.b16 %v226
  %v2172 = vunpack.c.h.b16 %v226
  %v2173 = vunpack.c.l.b16 %v227
  %v2174 = vunpack.c.l.b16 %v228
  %v2175 = vunpack.c.h.b16 %v228
  %v2176 = vunpack.c.l.b16 %v229
  %v2177 = vunpack.c.h.b16 %v229
  %v2178 = vunpack.c.l.b16 %v230
  %v2179 = vunpack.c.l.b16 %v231
  %v2180 = vunpack.c.h.b16 %v231
  %v2181 = vunpack.c.l.b16 %v232
  %v2182 = vunpack.c.h.b16 %v232
  %v2183 = vunpack.c.l.b16 %v233
  %v2184 = vunpack.c.l.b16 %v234
  %v2185 = vunpack.c.h.b16 %v234
  %v2186 = vunpack.c.l.b16 %v235
  %v2187 = vunpack.c.h.b16 %v235
  %v2188 = vunpack.c.l.b16 %v236
  %v2189 = vunpack.c.l.b16 %v237
  %v2190 = vunpack.c.h.b16 %v237
  %v2191 = vunpack.c.l.b16 %v238
  %v2192 = vunpack.c.h.b16 %v238
  %v2193 = vunpack.c.l.b16 %v239
  %v2194 = vunpack.c.l.b16 %v240
  %v2195 = vunpack.c.h.b16 %v240
  %v2196 = vunpack.c.l.b16 %v241
  %v2197 = vunpack.c.h.b16 %v241
  %v2198 = vunpack.c.l.b16 %v242
  %v2199 = vunpack.c.l.b16 %v243
  %v2200 = vunpack.c.h.b16 %v243
  %v2201 = vunpack.c.l.b16 %v244
  %v2202 = vunpack.c.h.b16 %v244
  %v2203 = vunpack.c.l.b16 %v245
  %v2204 = vunpack.c.l.b16 %v246
  %v2205 = vunpack.c.h.b16 %v246
  %v2206 = vunpack.c.l.b16 %v247
  %v2207 = vunpack.c.h.b16 %v247
  %v2208 = vunpack.c.l.b16 %v248
  %v2209 = vunpack.c.l.b16 %v249
  %v2210 = vunpack.c.h.b16 %v249
  %v2211 = vunpack.c.l.b16 %v250
  %v2212 = vunpack.c.h.b16 %v250
  %v2213 = vunpack.c.l.b16 %v251
  %v2214 = vunpack.c.l.b16 %v252
  %v2215 = vunpack.c.h.b16 %v252
  %v2216 = vunpack.c.l.b16 %v253
  %v2217 = vunpack.c.h.b16 %v253
  %v2218 = vunpack.c.l.b16 %v254
  %v2219 = vunpack.c.l.b16 %v255
  %v2220 = vunpack.c.h.b16 %v255
  %v2221 = vunpack.c.l.b16 %v256
  %v2222 = vunpack.c.h.b16 %v256
  %v2223 = vunpack.c.l.b16 %v257
  %v2224 = vunpack.c.l.b16 %v258
  %v2225 = vunpack.c.h.b16 %v258
  %v2226 = vunpack.c.l.b16 %v259
  %v2227 = vunpack.c.h.b16 %v259
  %v2228 = vunpack.c.l.b16 %v260
  %v2229 = vunpack.c.l.b16 %v261
  %v2230 = vunpack.c.h.b16 %v261
  %v2231 = vunpack.c.l.b16 %v262
  %v2232 = vunpack.c.h.b16 %v262
  %v2233 = vunpack.c.l.b16 %v263
  %v2234 = vunpack.c.l.b16 %v264
  %v2235 = vunpack.c.h.b16 %v264
  %v2236 = vunpack.c.l.b16 %v265
  %v2237 = vunpack.c.h.b16 %v265
  %v2238 = vunpack.c.l.b16 %v266
  %v2239 = vunpack.c.l.b16 %v267
  %v2240 = vunpack.c.h.b16 %v267
  %v2241 = vunpack.c.l.b16 %v268
  %v2242 = vunpack.c.h.b16 %v268
  %v2243 = vunpack.c.l.b16 %v269
  %v2244 = vunpack.c.l.b16 %v270
  %v2245 = vunpack.c.h.b16 %v270
  %v2246 = vunpack.c.l.b16 %v271
  %v2247 = vunpack.c.h.b16 %v271
  %v2248 = vunpack.c.l.b16 %v272
  %v2249 = vunpack.c.l.b16 %v273
  %v2250 = vunpack.c.h.b16 %v273
  %v2251 = vunpack.c.l.b16 %v274
  %v2252 = vunpack.c.h.b16 %v274
  %v2253 = vunpack.c.l.b16 %v275
  %v2254 = vunpack.c.l.b16 %v276
  %v2255 = vunpack.c.h.b16 %v276
  %v2256 = vunpack.c.l.b16 %v277
  %v2257 = vunpack.c.h.b16 %v277
  %v2258 = vunpack.c.l.b16 %v278
  %v2259 = vunpack.c.l.b16 %v279
  %v2260 = vunpack.c.h.b16 %v279
  %v2261 = vunpack.c.l.b16 %v280
  %v2262 = vunpack.c.h.b16 %v280
  %v2263 = vunpack.c.l.b16 %v281
  %v2264 = vunpack.c.l.b16 %v282
  %v2265 = vunpack.c.h.b16 %v282
  %v2266 = vunpack.c.l.b16 %v283
  %v2267 = vunpack.c.h.b16 %v283
  %v2268 = vunpack.c.l.b16 %v284
  %v2269 = vunpack.c.l.b16 %v285
  %v2270 = vunpack.c.h.b16 %v285
  %v2271 = vunpack.c.l.b16 %v286
  %v2272 = vunpack.c.h.b16 %v286
  %v2273 = vunpack.c.l.b16 %v287
  %v2274 = vunpack.c.l.b16 %v288
  %v2275 = vunpack.c.h.b16 %v288
  %v2276 = vunpack.c.l.b16 %v289
  %v2277 = vunpack.c.h.b16 %v289
  %v2278 = vunpack.c.l.b16 %v290
  %v2279 = vunpack.c.l.b16 %v291
  %v2280 = vunpack.c.h.b16 %v291
  %v2281 = vunpack.c.l.b16 %v292
  %v2282 = vunpack.c.h.b16 %v292
  %v2283 = vunpack.c.l.b16 %v293
  %v2284 = vunpack.c.l.b16 %v294
  %v2285 = vunpack.c.h.b16 %v294
  %v2286 = vunpack.c.l.b16 %v295
  %v2287 = vunpack.c.h.b16 %v295
  %v2288 = vunpack.c.l.b16 %v296
  %v2289 = vunpack.c.l.b16 %v297
  %v2290 = vunpack.c.h.b16 %v297
  %v2291 = vunpack.c.l.b16 %v298
  %v2292 = vunpack.c.h.b16 %v298
  %v2293 = vunpack.c.l.b16 %v299
  %v2294 = vunpack.c.l.b16 %v300
  %v2295 = vunpack.c.h.b16 %v300
  %v2296 = vunpack.c.l.b16 %v301
  %v2297 = vunpack.c.h.b16 %v301
  %v2298 = vunpack.c.l.b16 %v302
  %v2299 = vunpack.c.l.b16 %v303
  %v2300 = vunpack.c.h.b16 %v303
  %v2301 = vunpack.c.l.b16 %v304
  %v2302 = vunpack.c.h.b16 %v304
  %v2303 = vunpack.c.l.b16 %v305
  %v2304 = vunpack.c.l.b16 %v306
  %v2305 = vunpack.c.h.b16 %v306
  %v2306 = vunpack.c.l.b16 %v307
  %v2307 = vunpack.c.h.b16 %v307
  %v2308 = vunpack.c.l.b16 %v308
  %v2309 = vunpack.c.l.b16 %v309
  %v2310 = vunpack.c.h.b16 %v309
  %v2311 = vunpack.c.l.b16 %v310
  %v2312 = vunpack.c.h.b16 %v310
  %v2313 = vunpack.c.l.b16 %v311
  %v2314 = vunpack.c.l.b16 %v312
  %v2315 = vunpack.c.h.b16 %v312
  %v2316 = vunpack.c.l.b16 %v313
  %v2317 = vunpack.c.h.b16 %v313
  %v2318 = vunpack.c.l.b16 %v314
  %v2319 = vunpack.c.l.b16 %v315
  %v2320 = vunpack.c.h.b16 %v315
  %v2321 = vunpack.c.l.b16 %v316
  %v2322 = vunpack.c.h.b16 %v316
  %v2323 = vunpack.c.l.b16 %v317
  %v2324 = vunpack.c.l.b16 %v318
  %v2325 = vunpack.c.h.b16 %v318
  %v2326 = vunpack.c.l.b16 %v319
  %v2327 = vunpack.c.h.b16 %v319
  %v2328 = vunpack.c.l.b16 %v320
  %v2329 = vunpack.c.l.b16 %v321
  %v2330 = vunpack.c.h.b16 %v321
  %v2331 = vunpack.c.l.b16 %v322
  %v2332 = vunpack.c.h.b16 %v322
  %v2333 = vunpack.c.l.b16 %v323
  %v2334 = vunpack.c.l.b16 %v324
  %v2335 = vunpack.c.h.b16 %v324
  %v2336 = vunpack.c.l.b16 %v325
  %v2337 = vunpack.c.h.b16 %v325
  %v2338 = vunpack.c.l.b16 %v326
  %v2339 = vunpack.c.l.b16 %v327
  %v2340 = vunpack.c.h.b16 %v327
  %v2341 = vunpack.c.l.b16 %v328
  %v2342 = vunpack.c.h.b16 %v328
  %v2343 = vunpack.c.l.b16 %v329
  %v2344 = vunpack.c.l.b16 %v330
  %v2345 = vunpack.c.h.b16 %v330
  %v2346 = vunpack.c.l.b16 %v331
  %v2347 = vunpack.c.h.b16 %v331
  %v2348 = vunpack.c.l.b16 %v332
  %v2349 = vunpack.c.l.b16 %v333
  %v2350 = vunpack.c.h.b16 %v333
  %v2351 = vunpack.c.l.b16 %v334
  %v2352 = vunpack.c.h.b16 %v334
  %v2353 = vunpack.c.l.b16 %v335
  %v2354 = vunpack.c.l.b16 %v336
  %v2355 = vunpack.c.h.b16 %v336
  %v2356 = vunpack.c.l.b16 %v337
  %v2357 = vunpack.c.h.b16 %v337
  %v2358 = vunpack.c.l.b16 %v338
  %v2359 = vunpack.c.l.b16 %v339
  %v2360 = vunpack.c.h.b16 %v339
  %v2361 = vunpack.c.l.b16 %v340
  %v2362 = vunpack.c.h.b16 %v340
  %v2363 = vunpack.c.l.b16 %v341
  %v2364 = vunpack.c.l.b16 %v342
  %v2365 = vunpack.c.h.b16 %v342
  %v2366 = vunpack.c.l.b16 %v343
  %v2367 = vunpack.c.h.b16 %v343
  %v2368 = vunpack.c.l.b16 %v344
  %v2369 = vunpack.c.l.b16 %v345
  %v2370 = vunpack.c.h.b16 %v345
  %v2371 = vunpack.c.l.b16 %v346
  %v2372 = vunpack.c.h.b16 %v346
  %v2373 = vunpack.c.l.b16 %v347
  %v2374 = vunpack.c.l.b16 %v348
  %v2375 = vunpack.c.h.b16 %v348
  %v2376 = vunpack.c.l.b16 %v349
  %v2377 = vunpack.c.h.b16 %v349
  %v2378 = vunpack.c.l.b16 %v350
  %v2379 = vunpack.c.l.b16 %v351
  %v2380 = vunpack.c.h.b16 %v351
  %v2381 = vunpack.c.l.b16 %v352
  %v2382 = vunpack.c.h.b16 %v352
  %v2383 = vunpack.c.l.b16 %v353
  %v2384 = vunpack.c.l.b16 %v354
  %v2385 = vunpack.c.h.b16 %v354
  %v2386 = vunpack.c.l.b16 %v355
  %v2387 = vunpack.c.h.b16 %v355
  %v2388 = vunpack.c.l.b16 %v356
  %v2389 = vunpack.c.l.b16 %v357
  %v2390 = vunpack.c.h.b16 %v357
  %v2391 = vunpack.c.l.b16 %v358
  %v2392 = vunpack.c.h.b16 %v358
  %v2393 = vunpack.c.l.b16 %v359
  %v2394 = vunpack.c.l.b16 %v360
  %v2395 = vunpack.c.h.b16 %v360
  %v2396 = vunpack.c.l.b16 %v361
  %v2397 = vunpack.c.h.b16 %v361
  %v2398 = vunpack.c.l.b16 %v362
  %v2399 = vunpack.c.l.b16 %v363
  %v2400 = vunpack.c.h.b16 %v363
  %v2401 = vunpack.c.l.b16 %v364
  %v2402 = vunpack.c.h.b16 %v364
  %v2403 = vunpack.c.l.b16 %v365
  %v2404 = vunpack.c.l.b16 %v366
  %v2405 = vunpack.c.h.b16 %v366
  %v2406 = vunpack.c.l.b16 %v367
  %v2407 = vunpack.c.h.b16 %v367
  %v2408 = vunpack.c.l.b16 %v368
  %v2409 = vunpack.c.l.b16 %v369
  %v2410 = vunpack.c.h.b16 %v369
  %v2411 = vunpack.c.l.b16 %v370
  %v2412 = vunpack.c.h.b16 %v370
  %v2413 = vunpack.c.l.b16 %v371
  %v2414 = vunpack.c.l.b16 %v372
  %v2415 = vunpack.c.h.b16 %v372
  %v2416 = vunpack.c.l.b16 %v373
  %v2417 = vunpack.c.h.b16 %v373
  %v2418 = vunpack.c.l.b16 %v374
  %v2419 = vunpack.c.l.b16 %v375
  %v2420 = vunpack.c.h.b16 %v375
  %v2421 = vunpack.c.l.b16 %v376
  %v2422 = vunpack.c.h.b16 %v376
  %v2423 = vunpack.c.l.b16 %v377
  %v2424 = vunpack.c.l.b16 %v378
  %v2425 = vunpack.c.h.b16 %v378
  %v2426 = vunpack.c.l.b16 %v379
  %v2427 = vunpack.c.h.b16 %v379
  %v2428 = vunpack.c.l.b16 %v380
  %v2429 = vunpack.c.l.b16 %v381
  %v2430 = vunpack.c.h.b16 %v381
  %v2431 = vunpack.c.l.b16 %v382
  %v2432 = vunpack.c.h.b16 %v382
  %v2433 = vunpack.c.l.b16 %v383
  %v2434 = vunpack.c.l.b16 %v384
  %v2435 = vunpack.c.h.b16 %v384
  %v2436 = vunpack.c.l.b16 %v385
  %v2437 = vunpack.c.h.b16 %v385
  %v2438 = vunpack.c.l.b16 %v386
  %v2439 = vunpack.c.l.b16 %v387
  %v2440 = vunpack.c.h.b16 %v387
  %v2441 = vunpack.c.l.b16 %v388
  %v2442 = vunpack.c.h.b16 %v388
  %v2443 = vunpack.c.l.b16 %v389
  %v2444 = vunpack.c.l.b16 %v390
  %v2445 = vunpack.c.h.b16 %v390
  %v2446 = vunpack.c.l.b16 %v391
  %v2447 = vunpack.c.h.b16 %v391
  %v2448 = vunpack.c.l.b16 %v392
  %v2449 = vunpack.c.l.b16 %v393
  %v2450 = vunpack.c.h.b16 %v393
  %v2451 = vunpack.c.l.b16 %v394
  %v2452 = vunpack.c.h.b16 %v394
  %v2453 = vunpack.c.l.b16 %v395
  %v2454 = vunpack.c.l.b16 %v396
  %v2455 = vunpack.c.h.b16 %v396
  %v2456 = vunpack.c.l.b16 %v397
  %v2457 = vunpack.c.h.b16 %v397
  %v2458 = vunpack.c.l.b16 %v398
  %v2459 = vunpack.c.l.b16 %v399
  %v2460 = vunpack.c.h.b16 %v399
  %v2461 = vunpack.c.l.b16 %v400
  %v2462 = vunpack.c.h.b16 %v400
  %v2463 = vunpack.c.l.b16 %v401
  %v2464 = vunpack.c.l.b16 %v402
  %v2465 = vunpack.c.h.b16 %v402
  %v2466 = vunpack.c.l.b16 %v403
  %v2467 = vunpack.c.h.b16 %v403
  %v2468 = vunpack.c.l.b16 %v404
  %v2469 = vunpack.c.l.b16 %v405
  %v2470 = vunpack.c.h.b16 %v405
  %v2471 = vunpack.c.l.b16 %v406
  %v2472 = vunpack.c.h.b16 %v406
  %v2473 = vunpack.c.l.b16 %v407
  %v2474 = vunpack.c.l.b16 %v408
  %v2475 = vunpack.c.h.b16 %v408
  %v2476 = vunpack.c.l.b16 %v409
  %v2477 = vunpack.c.h.b16 %v409
  %v2478 = vunpack.c.l.b16 %v410
  %v2479 = vunpack.c.l.b16 %v411
  %v2480 = vunpack.c.h.b16 %v411
  %v2481 = vunpack.c.l.b16 %v412
  %v2482 = vunpack.c.h.b16 %v412
  %v2483 = vunpack.c.l.b16 %v413
  %v2484 = vunpack.c.l.b16 %v414
  %v2485 = vunpack.c.h.b16 %v414
  %v2486 = vunpack.c.l.b16 %v415
  %v2487 = vunpack.c.h.b16 %v415
  %v2488 = vunpack.c.l.b16 %v416
  %v2489 = vunpack.c.l.b16 %v417
  %v2490 = vunpack.c.h.b16 %v417
  %v2491 = vunpack.c.l.b16 %v418
  %v2492 = vunpack.c.h.b16 %v418
  %v2493 = vunpack.c.l.b16 %v419
  %v2494 = vunpack.c.l.b16 %v420
  %v2495 = vunpack.c.h.b16 %v420
  %v2496 = vunpack.c.l.b16 %v421
  %v2497 = vunpack.c.h.b16 %v421
  %v2498 = vunpack.c.l.b16 %v422
  %v2499 = vunpack.c.l.b16 %v423
  %v2500 = vunpack.c.h.b16 %v423
  %v2501 = vunpack.c.l.b16 %v424
  %v2502 = vunpack.c.h.b16 %v424
  %v2503 = vunpack.c.l.b16 %v425
  %v2504 = vunpack.c.l.b16 %v426
  %v2505 = vunpack.c.h.b16 %v426
  %v2506 = vunpack.c.l.b16 %v427
  %v2507 = vunpack.c.h.b16 %v427
  %v2508 = vunpack.c.l.b16 %v428
  %v2509 = vunpack.c.l.b16 %v429
  %v2510 = vunpack.c.h.b16 %v429
  %v2511 = vunpack.c.l.b16 %v430
  %v2512 = vunpack.c.h.b16 %v430
  %v2513 = vunpack.c.l.b16 %v431
  %v2514 = vunpack.c.l.b16 %v432
  %v2515 = vunpack.c.h.b16 %v432
  %v2516 = vunpack.c.l.b16 %v433
  %v2517 = vunpack.c.h.b16 %v433
  %v2518 = vunpack.c.l.b16 %v434
  %v2519 = vunpack.c.l.b16 %v435
  %v2520 = vunpack.c.h.b16 %v435
  %v2521 = vunpack.c.l.b16 %v436
  %v2522 = vunpack.c.h.b16 %v436
  %v2523 = vunpack.c.l.b16 %v437
  %v2524 = vunpack.c.l.b16 %v438
  %v2525 = vunpack.c.h.b16 %v438
  %v2526 = vunpack.c.l.b16 %v439
  %v2527 = vunpack.c.h.b16 %v439
  %v2528 = vunpack.c.l.b16 %v440
  %v2529 = vunpack.c.l.b16 %v441
  %v2530 = vunpack.c.h.b16 %v441
  %v2531 = vunpack.c.l.b16 %v442
  %v2532 = vunpack.c.h.b16 %v442
  %v2533 = vunpack.c.l.b16 %v443
  %v2534 = vunpack.c.l.b16 %v444
  %v2535 = vunpack.c.h.b16 %v444
  %v2536 = vunpack.c.l.b16 %v445
  %v2537 = vunpack.c.h.b16 %v445
  %v2538 = vunpack.c.l.b16 %v446
  %v2539 = vunpack.c.l.b16 %v447
  %v2540 = vunpack.c.h.b16 %v447
  %v2541 = vunpack.c.l.b16 %v448
  %v2542 = vunpack.c.h.b16 %v448
  %v2543 = vunpack.c.l.b16 %v449
  %v2544 = vunpack.c.l.b16 %v450
  %v2545 = vunpack.c.h.b16 %v450
  %v2546 = vunpack.c.l.b16 %v451
  %v2547 = vunpack.c.h.b16 %v451
  %v2548 = vunpack.c.l.b16 %v452
  %v2549 = vunpack.c.l.b16 %v453
  %v2550 = vunpack.c.h.b16 %v453
  %v2551 = vunpack.c.l.b16 %v454
  %v2552 = vunpack.c.h.b16 %v454
  %v2553 = vunpack.c.l.b16 %v455
  %v2554 = vunpack.c.l.b16 %v456
  %v2555 = vunpack.c.h.b16 %v456
  %v2556 = vunpack.c.l.b16 %v457
  %v2557 = vunpack.c.h.b16 %v457
  %v2558 = vunpack.c.l.b16 %v458
  %v2559 = vunpack.c.l.b16 %v459
  %v2560 = vunpack.c.h.b16 %v459
  %v2561 = vunpack.c.l.b16 %v460
  %v2562 = vunpack.c.h.b16 %v460
  %v2563 = vunpack.c.l.b16 %v461
  %v2564 = vunpack.c.l.b16 %v462
  %v2565 = vunpack.c.h.b16 %v462
  %v2566 = vunpack.c.l.b16 %v463
  %v2567 = vunpack.c.h.b16 %v463
  %v2568 = vunpack.c.l.b16 %v464
  %v2569 = vunpack.c.l.b16 %v465
  %v2570 = vunpack.c.h.b16 %v465
  %v2571 = vunpack.c.l.b16 %v466
  %v2572 = vunpack.c.h.b16 %v466
  %v2573 = vunpack.c.l.b16 %v467
  %v2574 = vunpack.c.l.b16 %v468
  %v2575 = vunpack.c.h.b16 %v468
  %v2576 = vunpack.c.l.b16 %v469
  %v2577 = vunpack.c.h.b16 %v469
  %v2578 = vunpack.c.l.b16 %v470
  %v2579 = vunpack.c.l.b16 %v471
  %v2580 = vunpack.c.h.b16 %v471
  %v2581 = vunpack.c.l.b16 %v472
  %v2582 = vunpack.c.h.b16 %v472
  %v2583 = vunpack.c.l.b16 %v473
  %v2584 = vunpack.c.l.b16 %v474
  %v2585 = vunpack.c.h.b16 %v474
  %v2586 = vunpack.c.l.b16 %v475
  %v2587 = vunpack.c.h.b16 %v475
  %v2588 = vunpack.c.l.b16 %v476
  %v2589 = vunpack.c.l.b16 %v477
  %v2590 = vunpack.c.h.b16 %v477
  %v2591 = vunpack.c.l.b16 %v478
  %v2592 = vunpack.c.h.b16 %v478
  %v2593 = vunpack.c.l.b16 %v479
  %v2594 = vunpack.c.l.b16 %v480
  %v2595 = vunpack.c.h.b16 %v480
  %v2596 = vunpack.c.l.b16 %v481
  %v2597 = vunpack.c.h.b16 %v481
  %v2598 = vunpack.c.l.b16 %v482
  %v2599 = vunpack.c.l.b16 %v483
  %v2600 = vunpack.c.h.b16 %v483
  %v2601 = vunpack.c.l.b16 %v484
  %v2602 = vunpack.c.h.b16 %v484
  %v2603 = vunpack.c.l.b16 %v485
  %v2604 = vunpack.c.l.b16 %v486
  %v2605 = vunpack.c.h.b16 %v486
  %v2606 = vunpack.c.l.b16 %v487
  %v2607 = vunpack.c.h.b16 %v487
  %v2608 = vunpack.c.l.b16 %v488
  %v2609 = vunpack.c.l.b16 %v489
  %v2610 = vunpack.c.h.b16 %v489
  %v2611 = vunpack.c.l.b16 %v490
  %v2612 = vunpack.c.h.b16 %v490
  %v2613 = vunpack.c.l.b16 %v491
  %v2614 = vunpack.c.l.b16 %v492
  %v2615 = vunpack.c.h.b16 %v492
  %v2616 = vunpack.c.l.b16 %v493
  %v2617 = vunpack.c.h.b16 %v493
  %v2618 = vunpack.c.l.b16 %v494
  %v2619 = vunpack.c.l.b16 %v495
  %v2620 = vunpack.c.h.b16 %v495
  %v2621 = vunpack.c.l.b16 %v496
  %v2622 = vunpack.c.h.b16 %v496
  %v2623 = vunpack.c.l.b16 %v497
  %v2624 = vunpack.c.l.b16 %v498
  %v2625 = vunpack.c.h.b16 %v498
  %v2626 = vunpack.c.l.b16 %v499
  %v2627 = vunpack.c.h.b16 %v499
  %v2628 = vunpack.c.l.b16 %v500
  %v2629 = vunpack.c.l.b16 %v501
  %v2630 = vunpack.c.h.b16 %v501
  %v2631 = vunpack.c.l.b16 %v502
  %v2632 = vunpack.c.h.b16 %v502
  %v2633 = vunpack.c.l.b16 %v503
  %v2634 = vunpack.c.l.b16 %v504
  %v2635 = vunpack.c.h.b16 %v504
  %v2636 = vunpack.c.l.b16 %v505
  %v2637 = vunpack.c.h.b16 %v505
  %v2638 = vunpack.c.l.b16 %v506
  %v2639 = vunpack.c.l.b16 %v507
  %v2640 = vunpack.c.h.b16 %v507
  %v2641 = vunpack.c.l.b16 %v508
  %v2642 = vunpack.c.h.b16 %v508
  %v2643 = vunpack.c.l.b16 %v509
  %v2644 = vunpack.c.l.b16 %v510
  %v2645 = vunpack.c.h.b16 %v510
  %v2646 = vunpack.c.l.b16 %v511
  %v2647 = vunpack.c.h.b16 %v511
  %v2648 = vunpack.c.l.b16 %v512
  %v2649 = vunpack.c.l.b16 %v513
  %v2650 = vunpack.c.h.b16 %v513
  %v2651 = vunpack.c.l.b16 %v514
  %v2652 = vunpack.c.h.b16 %v514
  %v2653 = vunpack.c.l.b16 %v515
  %v2654 = vunpack.c.l.b16 %v516
  %v2655 = vunpack.c.h.b16 %v516
  %v2656 = vunpack.c.l.b16 %v517
  %v2657 = vunpack.c.h.b16 %v517
  %v2658 = vunpack.c.l.b16 %v518
  %v2659 = vunpack.c.l.b16 %v519
  %v2660 = vunpack.c.h.b16 %v519
  %v2661 = vunpack.c.l.b16 %v520
  %v2662 = vunpack.c.h.b16 %v520
  %v2663 = vunpack.c.l.b16 %v521
  %v2664 = vunpack.c.l.b16 %v522
  %v2665 = vunpack.c.h.b16 %v522
  %v2666 = vunpack.c.l.b16 %v523
  %v2667 = vunpack.c.h.b16 %v523
  %v2668 = vunpack.c.l.b16 %v524
  %v2669 = vunpack.c.l.b16 %v525
  %v2670 = vunpack.c.h.b16 %v525
  %v2671 = vunpack.c.l.b16 %v526
  %v2672 = vunpack.c.h.b16 %v526
  %v2673 = vunpack.c.l.b16 %v527
  %v2674 = vunpack.c.l.b16 %v528
  %v2675 = vunpack.c.h.b16 %v528
  %v2676 = vunpack.c.l.b16 %v529
  %v2677 = vunpack.c.h.b16 %v529
  %v2678 = vunpack.c.l.b16 %v530
  %v2679 = vunpack.c.l.b16 %v531
  %v2680 = vunpack.c.h.b16 %v531
  %v2681 = vunpack.c.l.b16 %v532
  %v2682 = vunpack.c.h.b16 %v532
  %v2683 = vunpack.c.l.b16 %v533
  %v2684 = vunpack.c.l.b16 %v534
  %v2685 = vunpack.c.h.b16 %v534
  %v2686 = vunpack.c.l.b16 %v535
  %v2687 = vunpack.c.h.b16 %v535
  %v2688 = vunpack.c.l.b16 %v536
  %v2689 = vunpack.c.l.b16 %v537
  %v2690 = vunpack.c.h.b16 %v537
  %v2691 = vunpack.c.l.b16 %v538
  %v2692 = vunpack.c.h.b16 %v538
  %v2693 = vunpack.c.l.b16 %v539
  %v2694 = vunpack.c.l.b16 %v540
  %v2695 = vunpack.c.h.b16 %v540
  %v2696 = vunpack.c.l.b16 %v541
  %v2697 = vunpack.c.h.b16 %v541
  %v2698 = vunpack.c.l.b16 %v542
  %v2699 = vunpack.c.l.b16 %v543
  %v2700 = vunpack.c.h.b16 %v543
  %v2701 = vunpack.c.l.b16 %v544
  %v2702 = vunpack.c.h.b16 %v544
  %v2703 = vunpack.c.l.b16 %v545
  %v2704 = vunpack.c.l.b16 %v546
  %v2705 = vunpack.c.h.b16 %v546
  %v2706 = vunpack.c.l.b16 %v547
  %v2707 = vunpack.c.h.b16 %v547
  %v2708 = vunpack.c.l.b16 %v548
  %v2709 = vunpack.c.l.b16 %v549
  %v2710 = vunpack.c.h.b16 %v549
  %v2711 = vunpack.c.l.b16 %v550
  %v2712 = vunpack.c.h.b16 %v550
  %v2713 = vunpack.c.l.b16 %v551
  %v2714 = vunpack.c.l.b16 %v552
  %v2715 = vunpack.c.h.b16 %v552
  %v2716 = vunpack.c.l.b16 %v553
  %v2717 = vunpack.c.h.b16 %v553
  %v2718 = vunpack.c.l.b16 %v554
  %v2719 = vunpack.c.l.b16 %v555
  %v2720 = vunpack.c.h.b16 %v555
  %v2721 = vunpack.c.l.b16 %v556
  %v2722 = vunpack.c.h.b16 %v556
  %v2723 = vunpack.c.l.b16 %v557
  %v2724 = vunpack.c.l.b16 %v558
  %v2725 = vunpack.c.h.b16 %v558
  %v2726 = vunpack.c.l.b16 %v559
  %v2727 = vunpack.c.h.b16 %v559
  %v2728 = vunpack.c.l.b16 %v560
  %v2729 = vunpack.c.l.b16 %v561
  %v2730 = vunpack.c.h.b16 %v561
  %v2731 = vunpack.c.l.b16 %v562
  %v2732 = vunpack.c.h.b16 %v562
  %v2733 = vunpack.c.l.b16 %v563
  %v2734 = vunpack.c.l.b16 %v564
  %v2735 = vunpack.c.h.b16 %v564
  %v2736 = vunpack.c.l.b16 %v565
  %v2737 = vunpack.c.h.b16 %v565
  %v2738 = vunpack.c.l.b16 %v566
  %v2739 = vunpack.c.l.b16 %v567
  %v2740 = vunpack.c.h.b16 %v567
  %v2741 = vunpack.c.l.b16 %v568
  %v2742 = vunpack.c.h.b16 %v568
  %v2743 = vunpack.c.l.b16 %v569
  %v2744 = vunpack.c.l.b16 %v570
  %v2745 = vunpack.c.h.b16 %v570
  %v2746 = vunpack.c.l.b16 %v571
  %v2747 = vunpack.c.h.b16 %v571
  %v2748 = vunpack.c.l.b16 %v572
  %v2749 = vunpack.c.l.b16 %v573
  %v2750 = vunpack.c.h.b16 %v573
  %v2751 = vunpack.c.l.b16 %v574
  %v2752 = vunpack.c.h.b16 %v574
  %v2753 = vunpack.c.l.b16 %v575
  %v2754 = vunpack.c.l.b16 %v576
  %v2755 = vunpack.c.h.b16 %v576
  %v2756 = vunpack.c.l.b16 %v577
  %v2757 = vunpack.c.h.b16 %v577
  %v2758 = vunpack.c.l.b16 %v578
  %v2759 = vunpack.c.l.b16 %v579
  %v2760 = vunpack.c.h.b16 %v579
  %v2761 = vunpack.c.l.b16 %v580
  %v2762 = vunpack.c.h.b16 %v580
  %v2763 = vunpack.c.l.b16 %v581
  %v2764 = vunpack.c.l.b16 %v582
  %v2765 = vunpack.c.h.b16 %v582
  %v2766 = vunpack.c.l.b16 %v583
  %v2767 = vunpack.c.h.b16 %v583
  %v2768 = vunpack.c.l.b16 %v584
  %v2769 = vunpack.c.l.b16 %v585
  %v2770 = vunpack.c.h.b16 %v585
  %v2771 = vunpack.c.l.b16 %v586
  %v2772 = vunpack.c.h.b16 %v586
  %v2773 = vunpack.c.l.b16 %v587
  %v2774 = vunpack.c.l.b16 %v588
  %v2775 = vunpack.c.h.b16 %v588
  %v2776 = vunpack.c.l.b16 %v589
  %v2777 = vunpack.c.h.b16 %v589
  %v2778 = vunpack.c.l.b16 %v590
  %v2779 = vunpack.c.l.b16 %v591
  %v2780 = vunpack.c.h.b16 %v591
  %v2781 = vunpack.c.l.b16 %v592
  %v2782 = vunpack.c.h.b16 %v592
  %v2783 = vunpack.c.l.b16 %v593
  %v2784 = vunpack.c.l.b16 %v594
  %v2785 = vunpack.c.h.b16 %v594
  %v2786 = vunpack.c.l.b16 %v595
  %v2787 = vunpack.c.h.b16 %v595
  %v2788 = vunpack.c.l.b16 %v596
  %v2789 = vunpack.c.l.b16 %v597
  %v2790 = vunpack.c.h.b16 %v597
  %v2791 = vunpack.c.l.b16 %v598
  %v2792 = vunpack.c.h.b16 %v598
  %v2793 = vunpack.c.l.b16 %v599
  %v2794 = vunpack.c.l.b16 %v600
  %v2795 = vunpack.c.h.b16 %v600
  %v2796 = vunpack.c.l.b16 %v601
  %v2797 = vunpack.c.h.b16 %v601
  %v2798 = vunpack.c.l.b16 %v602
  %v2799 = vunpack.c.l.b16 %v603
  %v2800 = vunpack.c.h.b16 %v603
  %v2801 = vunpack.c.l.b16 %v604
  %v2802 = vunpack.c.h.b16 %v604
  %v2803 = vunpack.c.l.b16 %v605
  %v2804 = vunpack.c.l.b16 %v606
  %v2805 = vunpack.c.h.b16 %v606
  %v2806 = vunpack.c.l.b16 %v607
  %v2807 = vunpack.c.h.b16 %v607
  %v2808 = vunpack.c.l.b16 %v608
  %v2809 = vunpack.c.l.b16 %v609
  %v2810 = vunpack.c.h.b16 %v609
  %v2811 = vunpack.c.l.b16 %v610
  %v2812 = vunpack.c.h.b16 %v610
  %v2813 = vunpack.c.l.b16 %v611
  %v2814 = vunpack.c.l.b16 %v612
  %v2815 = vunpack.c.h.b16 %v612
  %v2816 = vunpack.c.l.b16 %v613
  %v2817 = vunpack.c.h.b16 %v613
  %v2818 = vunpack.c.l.b16 %v614
  %v2819 = vunpack.c.l.b16 %v615
  %v2820 = vunpack.c.h.b16 %v615
  %v2821 = vunpack.c.l.b16 %v616
  %v2822 = vunpack.c.h.b16 %v616
  %v2823 = vunpack.c.l.b16 %v617
  %v2824 = vunpack.c.l.b16 %v618
  %v2825 = vunpack.c.h.b16 %v618
  %v2826 = vunpack.c.l.b16 %v619
  %v2827 = vunpack.c.h.b16 %v619
  %v2828 = vunpack.c.l.b16 %v620
  %v2829 = vunpack.c.l.b16 %v621
  %v2830 = vunpack.c.h.b16 %v621
  %v2831 = vunpack.c.l.b16 %v622
  %v2832 = vunpack.c.h.b16 %v622
  %v2833 = vunpack.c.l.b16 %v623
  %v2834 = vunpack.c.l.b16 %v624
  %v2835 = vunpack.c.h.b16 %v624
  %v2836 = vunpack.c.l.b16 %v625
  %v2837 = vunpack.c.h.b16 %v625
  %v2838 = vunpack.c.l.b16 %v626
  %v2839 = vunpack.c.l.b16 %v627
  %v2840 = vunpack.c.h.b16 %v627
  %v2841 = vunpack.c.l.b16 %v628
  %v2842 = vunpack.c.h.b16 %v628
  %v2843 = vunpack.c.l.b16 %v629
  %v2844 = vunpack.c.l.b16 %v630
  %v2845 = vunpack.c.h.b16 %v630
  %v2846 = vunpack.c.l.b16 %v631
  %v2847 = vunpack.c.h.b16 %v631
  %v2848 = vunpack.c.l.b16 %v632
  %v2849 = vunpack.c.l.b16 %v633
  %v2850 = vunpack.c.h.b16 %v633
  %v2851 = vunpack.c.l.b16 %v634
  %v2852 = vunpack.c.h.b16 %v634
  %v2853 = vunpack.c.l.b16 %v635
  %v2854 = vunpack.c.l.b16 %v636
  %v2855 = vunpack.c.h.b16 %v636
  %v2856 = vunpack.c.l.b16 %v637
  %v2857 = vunpack.c.h.b16 %v637
  %v2858 = vunpack.c.l.b16 %v638
  %v2859 = vunpack.c.l.b16 %v639
  %v2860 = vunpack.c.h.b16 %v639
  %v2861 = vunpack.c.l.b16 %v640
  %v2862 = vunpack.c.h.b16 %v640
  %v2863 = vunpack.c.l.b16 %v641
  %v2864 = vunpack.c.l.b16 %v642
  %v2865 = vunpack.c.h.b16 %v642
  %v2866 = vunpack.c.l.b16 %v643
  %v2867 = vunpack.c.h.b16 %v643
  %v2868 = vunpack.c.l.b16 %v644
  %v2869 = vunpack.c.l.b16 %v645
  %v2870 = vunpack.c.h.b16 %v645
  %v2871 = vunpack.c.l.b16 %v646
  %v2872 = vunpack.c.h.b16 %v646
  %v2873 = vunpack.c.l.b16 %v647
  %v2874 = vunpack.c.l.b16 %v648
  %v2875 = vunpack.c.h.b16 %v648
  %v2876 = vunpack.c.l.b16 %v649
  %v2877 = vunpack.c.h.b16 %v649
  %v2878 = vunpack.c.l.b16 %v650
  %v2879 = vunpack.c.l.b16 %v651
  %v2880 = vunpack.c.h.b16 %v651
  %v2881 = vunpack.c.l.b16 %v652
  %v2882 = vunpack.c.h.b16 %v652
  %v2883 = vunpack.c.l.b16 %v653
  %v2884 = vunpack.c.l.b16 %v654
  %v2885 = vunpack.c.h.b16 %v654
  %v2886 = vunpack.c.l.b16 %v655
  %v2887 = vunpack.c.h.b16 %v655
  %v2888 = vunpack.c.l.b16 %v656
  %v2889 = vunpack.c.l.b16 %v657
  %v2890 = vunpack.c.h.b16 %v657
  %v2891 = vunpack.c.l.b16 %v658
  %v2892 = vunpack.c.h.b16 %v658
  %v2893 = vunpack.c.l.b16 %v659
  %v2894 = vunpack.c.l.b16 %v660
  %v2895 = vunpack.c.h.b16 %v660
  %v2896 = vunpack.c.l.b16 %v661
  %v2897 = vunpack.c.h.b16 %v661
  %v2898 = vunpack.c.l.b16 %v662
  %v2899 = vunpack.c.l.b16 %v663
  %v2900 = vunpack.c.h.b16 %v663
  %v2901 = vunpack.c.l.b16 %v664
  %v2902 = vunpack.c.h.b16 %v664
  %v2903 = vunpack.c.l.b16 %v665
  %v2904 = vunpack.c.l.b16 %v666
  %v2905 = vunpack.c.h.b16 %v666
  %v2906 = vunpack.c.l.b16 %v667
  %v2907 = vunpack.c.h.b16 %v667
  %v2908 = vunpack.c.l.b16 %v668
  %v2909 = vunpack.c.l.b16 %v669
  %v2910 = vunpack.c.h.b16 %v669
  %v2911 = vunpack.c.l.b16 %v670
  %v2912 = vunpack.c.h.b16 %v670
  %v2913 = vunpack.c.l.b16 %v671
  %v2914 = vunpack.c.l.b16 %v672
  %v2915 = vunpack.c.h.b16 %v672
  %v2916 = vunpack.c.l.b16 %v673
  %v2917 = vunpack.c.h.b16 %v673
  %v2918 = vunpack.c.l.b16 %v674
  %v2919 = vunpack.c.l.b16 %v675
  %v2920 = vunpack.c.h.b16 %v675
  %v2921 = vunpack.c.l.b16 %v676
  %v2922 = vunpack.c.h.b16 %v676
  %v2923 = vunpack.c.l.b16 %v677
  %v2924 = vunpack.c.l.b16 %v678
  %v2925 = vunpack.c.h.b16 %v678
  %v2926 = vunpack.c.l.b16 %v679
  %v2927 = vunpack.c.h.b16 %v679
  %v2928 = vunpack.c.l.b16 %v680
  %v2929 = vunpack.c.l.b16 %v681
  %v2930 = vunpack.c.h.b16 %v681
  %v2931 = vunpack.c.l.b16 %v682
  %v2932 = vunpack.c.h.b16 %v682
  %v2933 = vunpack.c.l.b16 %v683
  %v2934 = vunpack.c.l.b16 %v684
  %v2935 = vunpack.c.h.b16 %v684
  %v2936 = vunpack.c.l.b16 %v685
  %v2937 = vunpack.c.h.b16 %v685
  %v2938 = vunpack.c.l.b16 %v686
  %v2939 = vunpack.c.l.b16 %v687
  %v2940 = vunpack.c.h.b16 %v687
  %v2941 = vunpack.c.l.b16 %v688
  %v2942 = vunpack.c.h.b16 %v688
  %v2943 = vunpack.c.l.b16 %v689
  %v2944 = vunpack.c.l.b16 %v690
  %v2945 = vunpack.c.h.b16 %v690
  %v2946 = vunpack.c.l.b16 %v691
  %v2947 = vunpack.c.h.b16 %v691
  %v2948 = vunpack.c.l.b16 %v692
  %v2949 = vunpack.c.l.b16 %v693
  %v2950 = vunpack.c.h.b16 %v693
  %v2951 = vunpack.c.l.b16 %v694
  %v2952 = vunpack.c.h.b16 %v694
  %v2953 = vunpack.c.l.b16 %v695
  %v2954 = vunpack.c.l.b16 %v696
  %v2955 = vunpack.c.h.b16 %v696
  %v2956 = vunpack.c.l.b16 %v697
  %v2957 = vunpack.c.h.b16 %v697
  %v2958 = vunpack.c.l.b16 %v698
  %v2959 = vunpack.c.l.b16 %v699
  %v2960 = vunpack.c.h.b16 %v699
  %v2961 = vunpack.c.l.b16 %v700
  %v2962 = vunpack.c.h.b16 %v700
  %v2963 = vunpack.c.l.b16 %v701
  %v2964 = vunpack.c.l.b16 %v702
  %v2965 = vunpack.c.h.b16 %v702
  %v2966 = vunpack.c.l.b16 %v703
  %v2967 = vunpack.c.h.b16 %v703
  %v2968 = vunpack.c.l.b16 %v704
  %v2969 = vunpack.c.l.b16 %v705
  %v2970 = vunpack.c.h.b16 %v705
  %v2971 = vunpack.c.l.b16 %v706
  %v2972 = vunpack.c.h.b16 %v706
  %v2973 = vunpack.c.l.b16 %v707
  %v2974 = vunpack.c.l.b16 %v708
  %v2975 = vunpack.c.h.b16 %v708
  %v2976 = vunpack.c.l.b16 %v709
  %v2977 = vunpack.c.h.b16 %v709
  %v2978 = vunpack.c.l.b16 %v710
  %v2979 = vunpack.c.l.b16 %v711
  %v2980 = vunpack.c.h.b16 %v711
  %v2981 = vunpack.c.l.b16 %v712
  %v2982 = vunpack.c.h.b16 %v712
  %v2983 = vunpack.c.l.b16 %v713
  %v2984 = vunpack.c.l.b16 %v714
  %v2985 = vunpack.c.h.b16 %v714
  %v2986 = vunpack.c.l.b16 %v715
  %v2987 = vunpack.c.h.b16 %v715
  %v2988 = vunpack.c.l.b16 %v716
  %v2989 = vunpack.c.l.b16 %v717
  %v2990 = vunpack.c.h.b16 %v717
  %v2991 = vunpack.c.l.b16 %v718
  %v2992 = vunpack.c.h.b16 %v718
  %v2993 = vunpack.c.l.b16 %v719
  %v2994 = vunpack.c.l.b16 %v720
  %v2995 = vunpack.c.h.b16 %v720
  %v2996 = vunpack.c.l.b16 %v721
  %v2997 = vunpack.c.h.b16 %v721
  %v2998 = vunpack.c.l.b16 %v722
  %v2999 = vunpack.c.l.b16 %v723
  %v3000 = vunpack.c.h.b16 %v723
  %v3001 = vunpack.c.l.b16 %v724
  %v3002 = vunpack.c.h.b16 %v724
  %v3003 = vunpack.c.l.b16 %v725
  %v3004 = vunpack.c.l.b16 %v726
  %v3005 = vunpack.c.h.b16 %v726
  %v3006 = vunpack.c.l.b16 %v727
  %v3007 = vunpack.c.h.b16 %v727
  %v3008 = vunpack.c.l.b16 %v728
  %v3009 = vunpack.c.l.b16 %v729
  %v3010 = vunpack.c.h.b16 %v729
  %v3011 = vunpack.c.l.b16 %v730
  %v3012 = vunpack.c.h.b16 %v730
  %v3013 = vunpack.c.l.b16 %v731
  %v3014 = vunpack.c.l.b16 %v732
  %v3015 = vunpack.c.h.b16 %v732
  %v3016 = vunpack.c.l.b16 %v733
  %v3017 = vunpack.c.h.b16 %v733
  %v3018 = vunpack.c.l.b16 %v734
  %v3019 = vunpack.c.l.b16 %v735
  %v3020 = vunpack.c.h.b16 %v735
  %v3021 = vunpack.c.l.b16 %v736
  %v3022 = vunpack.c.h.b16 %v736
  %v3023 = vunpack.c.l.b16 %v737
  %v3024 = vunpack.c.l.b16 %v738
  %v3025 = vunpack.c.h.b16 %v738
  %v3026 = vunpack.c.l.b16 %v739
  %v3027 = vunpack.c.h.b16 %v739
  %v3028 = vunpack.c.l.b16 %v740
  %v3029 = vunpack.c.l.b16 %v741
  %v3030 = vunpack.c.h.b16 %v741
  %v3031 = vunpack.c.l.b16 %v742
  %v3032 = vunpack.c.h.b16 %v742
  %v3033 = vunpack.c.l.b16 %v743
  %v3034 = vunpack.c.l.b16 %v744
  %v3035 = vunpack.c.h.b16 %v744
  %v3036 = vunpack.c.l.b16 %v745
  %v3037 = vunpack.c.h.b16 %v745
  %v3038 = vunpack.c.l.b16 %v746
  %v3039 = vunpack.c.l.b16 %v747
  %v3040 = vunpack.c.h.b16 %v747
  %v3041 = vunpack.c.l.b16 %v748
  %v3042 = vunpack.c.h.b16 %v748
  %v3043 = vunpack.c.l.b16 %v749
  %v3044 = vunpack.c.l.b16 %v750
  %v3045 = vunpack.c.h.b16 %v750
  %v3046 = vunpack.c.l.b16 %v751
  %v3047 = vunpack.c.h.b16 %v751
  %v3048 = vunpack.c.l.b16 %v752
  %v3049 = vunpack.c.l.b16 %v753
  %v3050 = vunpack.c.h.b16 %v753
  %v3051 = vunpack.c.l.b16 %v754
  %v3052 = vunpack.c.h.b16 %v754
  %v3053 = vunpack.c.l.b16 %v755
  %v3054 = vunpack.c.l.b16 %v756
  %v3055 = vunpack.c.h.b16 %v756
  %v3056 = vunpack.c.l.b16 %v757
  %v3057 = vunpack.c.h.b16 %v757
  %v3058 = vunpack.c.l.b16 %v758
  %v3059 = vunpack.c.l.b16 %v759
  %v3060 = vunpack.c.h.b16 %v759
  %v3061 = vunpack.c.l.b16 %v760
  %v3062 = vunpack.c.h.b16 %v760
  %v3063 = vunpack.c.l.b16 %v761
  %v3064 = vunpack.c.l.b16 %v762
  %v3065 = vunpack.c.h.b16 %v762
  %v3066 = vunpack.c.l.b16 %v763
  %v3067 = vunpack.c.h.b16 %v763
  %v3068 = vunpack.c.l.b16 %v764
  %v3069 = vunpack.c.l.b16 %v765
  %v3070 = vunpack.c.h.b16 %v765
  %v3071 = vunpack.c.l.b16 %v766
  %v3072 = vunpack.c.h.b16 %v766
  %v3073 = vunpack.c.l.b16 %v767
  %v3074 = vunpack.c.l.b16 %v768
  %v3075 = vunpack.c.h.b16 %v768
  %v3076 = vunpack.c.l.b16 %v769
  %v3077 = vunpack.c.h.b16 %v769
  %v3078 = vunpack.c.l.b16 %v770
  %v3079 = vunpack.c.l.b16 %v771
  %v3080 = vunpack.c.h.b16 %v771
  %v3081 = vunpack.c.l.b16 %v772
  %v3082 = vunpack.c.h.b16 %v772
  %v3083 = vunpack.c.l.b16 %v773
  %v3084 = vunpack.c.l.b16 %v774
  %v3085 = vunpack.c.h.b16 %v774
  %v3086 = vunpack.c.l.b16 %v775
  %v3087 = vunpack.c.h.b16 %v775
  %v3088 = vunpack.c.l.b16 %v776
  %v3089 = vunpack.c.l.b16 %v777
  %v3090 = vunpack.c.h.b16 %v777
  %v3091 = vunpack.c.l.b16 %v778
  %v3092 = vunpack.c.h.b16 %v778
  %v3093 = vunpack.c.l.b16 %v779
  %v3094 = vunpack.c.l.b16 %v780
  %v3095 = vunpack.c.h.b16 %v780
  %v3096 = vunpack.c.l.b16 %v781
  %v3097 = vunpack.c.h.b16 %v781
  %v3098 = vunpack.c.l.b16 %v782
  %v3099 = vunpack.c.l.b16 %v783
  %v3100 = vunpack.c.h.b16 %v783
  %v3101 = vunpack.c.l.b16 %v784
  %v3102 = vunpack.c.h.b16 %v784
  %v3103 = vunpack.c.l.b16 %v785
  %v3104 = vunpack.c.l.b16 %v786
  %v3105 = vunpack.c.h.b16 %v786
  %v3106 = vunpack.c.l.b16 %v787
  %v3107 = vunpack.c.h.b16 %v787
  %v3108 = vunpack.c.l.b16 %v788
  %v3109 = vunpack.c.l.b16 %v789
  %v3110 = vunpack.c.h.b16 %v789
  %v3111 = vunpack.c.l.b16 %v790
  %v3112 = vunpack.c.h.b16 %v790
  %v3113 = vunpack.c.l.b16 %v791
  %v3114 = vunpack.c.l.b16 %v792
  %v3115 = vunpack.c.h.b16 %v792
  %v3116 = vunpack.c.l.b16 %v793
  %v3117 = vunpack.c.h.b16 %v793
  %v3118 = vunpack.c.l.b16 %v794
  %v3119 = vunpack.c.l.b16 %v795
  %v3120 = vunpack.c.h.b16 %v795
  %v3121 = vunpack.c.l.b16 %v796
  %v3122 = vunpack.c.h.b16 %v796
  %v3123 = vunpack.c.l.b16 %v797
  %v3124 = vunpack.c.l.b16 %v798
  %v3125 = vunpack.c.h.b16 %v798
  %v3126 = vunpack.c.l.b16 %v799
  %v3127 = vunpack.c.h.b16 %v799
  %v3128 = vunpack.c.l.b16 %v800
  %v3129 = vunpack.c.l.b16 %v801
  %v3130 = vunpack.c.h.b16 %v801
  %v3131 = vunpack.c.l.b16 %v802
  %v3132 = vunpack.c.h.b16 %v802
  %v3133 = vunpack.c.l.b16 %v803
  %v3134 = vunpack.c.l.b16 %v804
  %v3135 = vunpack.c.h.b16 %v804
  %v3136 = vunpack.c.l.b16 %v805
  %v3137 = vunpack.c.h.b16 %v805
  %v3138 = vunpack.c.l.b16 %v806
  %v3139 = vunpack.c.l.b16 %v807
  %v3140 = vunpack.c.h.b16 %v807
  %v3141 = vunpack.c.l.b16 %v808
  %v3142 = vunpack.c.h.b16 %v808
  %v3143 = vunpack.c.l.b16 %v809
  %v3144 = vunpack.c.l.b16 %v810
  %v3145 = vunpack.c.h.b16 %v810
  %v3146 = vunpack.c.l.b16 %v811
  %v3147 = vunpack.c.h.b16 %v811
  %v3148 = vunpack.c.l.b16 %v812
  %v3149 = vunpack.c.l.b16 %v813
  %v3150 = vunpack.c.h.b16 %v813
  %v3151 = vunpack.c.l.b16 %v814
  %v3152 = vunpack.c.h.b16 %v814
  %v3153 = vunpack.c.l.b16 %v815
  %v3154 = vunpack.c.l.b16 %v816
  %v3155 = vunpack.c.h.b16 %v816
  %v3156 = vunpack.c.l.b16 %v817
  %v3157 = vunpack.c.h.b16 %v817
  %v3158 = vunpack.c.l.b16 %v818
  %v3159 = vunpack.c.l.b16 %v819
  %v3160 = vunpack.c.h.b16 %v819
  %v3161 = vunpack.c.l.b16 %v820
  %v3162 = vunpack.c.h.b16 %v820
  %v3163 = vunpack.c.l.b16 %v821
  %v3164 = vunpack.c.l.b16 %v822
  %v3165 = vunpack.c.h.b16 %v822
  %v3166 = vunpack.c.l.b16 %v823
  %v3167 = vunpack.c.h.b16 %v823
  %v3168 = vunpack.c.l.b16 %v824
  %v3169 = vunpack.c.l.b16 %v825
  %v3170 = vunpack.c.h.b16 %v825
  %v3171 = vunpack.c.l.b16 %v826
  %v3172 = vunpack.c.h.b16 %v826
  %v3173 = vunpack.c.l.b16 %v827
  %v3174 = vunpack.c.l.b16 %v828
  %v3175 = vunpack.c.h.b16 %v828
  %v3176 = vunpack.c.l.b16 %v829
  %v3177 = vunpack.c.h.b16 %v829
  %v3178 = vunpack.c.l.b16 %v830
  %v3179 = vunpack.c.l.b16 %v831
  %v3180 = vunpack.c.h.b16 %v831
  %v3181 = vunpack.c.l.b16 %v832
  %v3182 = vunpack.c.h.b16 %v832
  %v3183 = vunpack.c.l.b16 %v833
  %v3184 = vunpack.c.l.b16 %v834
  %v3185 = vunpack.c.h.b16 %v834
  %v3186 = vunpack.c.l.b16 %v835
  %v3187 = vunpack.c.h.b16 %v835
  %v3188 = vunpack.c.l.b16 %v836
  %v3189 = vunpack.c.l.b16 %v837
  %v3190 = vunpack.c.h.b16 %v837
  %v3191 = vunpack.c.l.b16 %v838
  %v3192 = vunpack.c.h.b16 %v838
  %v3193 = vunpack.c.l.b16 %v839
  %v3194 = vunpack.c.l.b16 %v840
  %v3195 = vunpack.c.h.b16 %v840
  %v3196 = vunpack.c.l.b16 %v841
  %v3197 = vunpack.c.h.b16 %v841
  %v3198 = vunpack.c.l.b16 %v842
  %v3199 = vunpack.c.l.b16 %v843
  %v3200 = vunpack.c.h.b16 %v843
  %v3201 = vunpack.c.l.b16 %v844
  %v3202 = vunpack.c.h.b16 %v844
  %v3203 = vunpack.c.l.b16 %v845
  %v3204 = vunpack.c.l.b16 %v846
  %v3205 = vunpack.c.h.b16 %v846
  %v3206 = vunpack.c.l.b16 %v847
  %v3207 = vunpack.c.h.b16 %v847
  %v3208 = vunpack.c.l.b16 %v848
  %v3209 = vunpack.c.l.b16 %v849
  %v3210 = vunpack.c.h.b16 %v849
  %v3211 = vunpack.c.l.b16 %v850
  %v3212 = vunpack.c.h.b16 %v850
  %v3213 = vunpack.c.l.b16 %v851
  %v3214 = vunpack.c.l.b16 %v852
  %v3215 = vunpack.c.h.b16 %v852
  %v3216 = vunpack.c.l.b16 %v853
  %v3217 = vunpack.c.h.b16 %v853
  %v3218 = vunpack.c.l.b16 %v854
  %v3219 = vunpack.c.l.b16 %v855
  %v3220 = vunpack.c.h.b16 %v855
  %v3221 = vunpack.c.l.b16 %v856
  %v3222 = vunpack.c.h.b16 %v856
  %v3223 = vunpack.c.l.b16 %v857
  %v3224 = vunpack.c.l.b16 %v858
  %v3225 = vunpack.c.h.b16 %v858
  %v3226 = vunpack.c.l.b16 %v859
  %v3227 = vunpack.c.h.b16 %v859
  %v3228 = vunpack.c.l.b16 %v860
  %v3229 = vunpack.c.l.b16 %v861
  %v3230 = vunpack.c.h.b16 %v861
  %v3231 = vunpack.c.l.b16 %v862
  %v3232 = vunpack.c.h.b16 %v862
  %v3233 = vunpack.c.l.b16 %v863
  %v3234 = vunpack.c.l.b16 %v864
  %v3235 = vunpack.c.h.b16 %v864
  %v3236 = vunpack.c.l.b16 %v865
  %v3237 = vunpack.c.h.b16 %v865
  %v3238 = vunpack.c.l.b16 %v866
  %v3239 = vunpack.c.l.b16 %v867
  %v3240 = vunpack.c.h.b16 %v867
  %v3241 = vunpack.c.l.b16 %v868
  %v3242 = vunpack.c.h.b16 %v868
  %v3243 = vunpack.c.l.b16 %v869
  %v3244 = vunpack.c.l.b16 %v870
  %v3245 = vunpack.c.h.b16 %v870
  %v3246 = vunpack.c.l.b16 %v871
  %v3247 = vunpack.c.h.b16 %v871
  %v3248 = vunpack.c.l.b16 %v872
  %v3249 = vunpack.c.l.b16 %v873
  %v3250 = vunpack.c.h.b16 %v873
  %v3251 = vunpack.c.l.b16 %v874
  %v3252 = vunpack.c.h.b16 %v874
  %v3253 = vunpack.c.l.b16 %v875
  %v3254 = vunpack.c.l.b16 %v876
  %v3255 = vunpack.c.h.b16 %v876
  %v3256 = vunpack.c.l.b16 %v877
  %v3257 = vunpack.c.h.b16 %v877
  %v3258 = vunpack.c.l.b16 %v878
  %v3259 = vunpack.c.l.b16 %v879
  %v3260 = vunpack.c.h.b16 %v879
  %v3261 = vunpack.c.l.b16 %v880
  %v3262 = vunpack.c.h.b16 %v880
  %v3263 = vunpack.c.l.b16 %v881
  %v3264 = vunpack.c.l.b16 %v882
  %v3265 = vunpack.c.h.b16 %v882
  %v3266 = vunpack.c.l.b16 %v883
  %v3267 = vunpack.c.h.b16 %v883
  %v3268 = vunpack.c.l.b16 %v884
  %v3269 = vunpack.c.l.b16 %v885
  %v3270 = vunpack.c.h.b16 %v885
  %v3271 = vunpack.c.l.b16 %v886
  %v3272 = vunpack.c.h.b16 %v886
  %v3273 = vunpack.c.l.b16 %v887
  %v3274 = vunpack.c.l.b16 %v888
  %v3275 = vunpack.c.h.b16 %v888
  %v3276 = vunpack.c.l.b16 %v889
  %v3277 = vunpack.c.h.b16 %v889
  %v3278 = vunpack.c.l.b16 %v890
  %v3279 = vunpack.c.l.b16 %v891
  %v3280 = vunpack.c.h.b16 %v891
  %v3281 = vunpack.c.l.b16 %v892
  %v3282 = vunpack.c.h.b16 %v892
  %v3283 = vunpack.c.l.b16 %v893
  %v3284 = vunpack.c.l.b16 %v894
  %v3285 = vunpack.c.h.b16 %v894
  %v3286 = vunpack.c.l.b16 %v895
  %v3287 = vunpack.c.h.b16 %v895
  %v3288 = vunpack.c.l.b16 %v896
  %v3289 = vunpack.c.l.b16 %v897
  %v3290 = vunpack.c.h.b16 %v897
  %v3291 = vunpack.c.l.b16 %v898
  %v3292 = vunpack.c.h.b16 %v898
  %v3293 = vunpack.c.l.b16 %v899
  %v3294 = vpack.c.b16 %v1859, %v1854
  %v3295 = vpack.c.b16 %v1860, %v1855
  %v3296 = vpack.c.b16 %v1861, %v1856
  %v3297 = vpack.c.b16 %v1862, %v1857
  %v3298 = vpack.c.b16 %v1863, %v1858
  %v3299 = vpack.c.b16 %v1869, %v1864
  %v3300 = vpack.c.b16 %v1870, %v1865
  %v3301 = vpack.c.b16 %v1871, %v1866
  %v3302 = vpack.c.b16 %v1872, %v1867
  %v3303 = vpack.c.b16 %v1873, %v1868
  %v3304 = vpack.c.b16 %v1879, %v1874
  %v3305 = vpack.c.b16 %v1880, %v1875
  %v3306 = vpack.c.b16 %v1881, %v1876
  %v3307 = vpack.c.b16 %v1882, %v1877
  %v3308 = vpack.c.b16 %v1883, %v1878
  %v3309 = vpack.c.b16 %v1889, %v1884
  %v3310 = vpack.c.b16 %v1890, %v1885
  %v3311 = vpack.c.b16 %v1891, %v1886
  %v3312 = vpack.c.b16 %v1892, %v1887
  %v3313 = vpack.c.b16 %v1893, %v1888
  %v3314 = vpack.c.b16 %v1899, %v1894
  %v3315 = vpack.c.b16 %v1900, %v1895
  %v3316 = vpack.c.b16 %v1901, %v1896
  %v3317 = vpack.c.b16 %v1902, %v1897
  %v3318 = vpack.c.b16 %v1903, %v1898
  %v3319 = vpack.c.b16 %v1909, %v1904
  %v3320 = vpack.c.b16 %v1910, %v1905
  %v3321 = vpack.c.b16 %v1911, %v1906
  %v3322 = vpack.c.b16 %v1912, %v1907
  %v3323 = vpack.c.b16 %v1913, %v1908
  %v3324 = vpack.c.b16 %v1919, %v1914
  %v3325 = vpack.c.b16 %v1920, %v1915
  %v3326 = vpack.c.b16 %v1921, %v1916
  %v3327 = vpack.c.b16 %v1922, %v1917
  %v3328 = vpack.c.b16 %v1923, %v1918
  %v3329 = vpack.c.b16 %v1929, %v1924
  %v3330 = vpack.c.b16 %v1930, %v1925
  %v3331 = vpack.c.b16 %v1931, %v1926
  %v3332 = vpack.c.b16 %v1932, %v1927
  %v3333 = vpack.c.b16 %v1933, %v1928
  %v3334 = vpack.c.b16 %v1939, %v1934
  %v3335 = vpack.c.b16 %v1940, %v1935
  %v3336 = vpack.c.b16 %v1941, %v1936
  %v3337 = vpack.c.b16 %v1942, %v1937
  %v3338 = vpack.c.b16 %v1943, %v1938
  %v3339 = vpack.c.b16 %v1949, %v1944
  %v3340 = vpack.c.b16 %v1950, %v1945
  %v3341 = vpack.c.b16 %v1951, %v1946
  %v3342 = vpack.c.b16 %v1952, %v1947
  %v3343 = vpack.c.b16 %v1953, %v1948
  %v3344 = vpack.c.b16 %v1959, %v1954
  %v3345 = vpack.c.b16 %v1960, %v1955
  %v3346 = vpack.c.b16 %v1961, %v1956
  %v3347 = vpack.c.b16 %v1962, %v1957
  %v3348 = vpack.c.b16 %v1963, %v1958
  %v3349 = vpack.c.b16 %v1969, %v1964
  %v3350 = vpack.c.b16 %v1970, %v1965
  %v3351 = vpack.c.b16 %v1971, %v1966
  %v3352 = vpack.c.b16 %v1972, %v1967
  %v3353 = vpack.c.b16 %v1973, %v1968
  %v3354 = vpack.c.b16 %v1979, %v1974
  %v3355 = vpack.c.b16 %v1980, %v1975
  %v3356 = vpack.c.b16 %v1981, %v1976
  %v3357 = vpack.c.b16 %v1982, %v1977
  %v3358 = vpack.c.b16 %v1983, %v1978
  %v3359 = vpack.c.b16 %v1989, %v1984
  %v3360 = vpack.c.b16 %v1990, %v1985
  %v3361 = vpack.c.b16 %v1991, %v1986
  %v3362 = vpack.c.b16 %v1992, %v1987
  %v3363 = vpack.c.b16 %v1993, %v1988
  %v3364 = vpack.c.b16 %v1999, %v1994
  %v3365 = vpack.c.b16 %v2000, %v1995
  %v3366 = vpack.c.b16 %v2001, %v1996
  %v3367 = vpack.c.b16 %v2002, %v1997
  %v3368 = vpack.c.b16 %v2003, %v1998
  %v3369 = vpack.c.b16 %v2009, %v2004
  %v3370 = vpack.c.b16 %v2010, %v2005
  %v3371 = vpack.c.b16 %v2011, %v2006
  %v3372 = vpack.c.b16 %v2012, %v2007
  %v3373 = vpack.c.b16 %v2013, %v2008
  %v3374 = vpack.c.b16 %v2019, %v2014
  %v3375 = vpack.c.b16 %v2020, %v2015
  %v3376 = vpack.c.b16 %v2021, %v2016
  %v3377 = vpack.c.b16 %v2022, %v2017
  %v3378 = vpack.c.b16 %v2023, %v2018
  %v3379 = vpack.c.b16 %v2029, %v2024
  %v3380 = vpack.c.b16 %v2030, %v2025
  %v3381 = vpack.c.b16 %v2031, %v2026
  %v3382 = vpack.c.b16 %v2032, %v2027
  %v3383 = vpack.c.b16 %v2033, %v2028
  %v3384 = vpack.c.b16 %v2039, %v2034
  %v3385 = vpack.c.b16 %v2040, %v2035
  %v3386 = vpack.c.b16 %v2041, %v2036
  %v3387 = vpack.c.b16 %v2042, %v2037
  %v3388 = vpack.c.b16 %v2043, %v2038
  %v3389 = vpack.c.b16 %v2049, %v2044
  %v3390 = vpack.c.b16 %v2050, %v2045
  %v3391 = vpack.c.b16 %v2051, %v2046
  %v3392 = vpack.c.b16 %v2052, %v2047
  %v3393 = vpack.c.b16 %v2053, %v2048
  %v3394 = vpack.c.b16 %v2059, %v2054
  %v3395 = vpack.c.b16 %v2060, %v2055
  %v3396 = vpack.c.b16 %v2061, %v2056
  %v3397 = vpack.c.b16 %v2062, %v2057
  %v3398 = vpack.c.b16 %v2063, %v2058
  %v3399 = vpack.c.b16 %v2069, %v2064
  %v3400 = vpack.c.b16 %v2070, %v2065
  %v3401 = vpack.c.b16 %v2071, %v2066
  %v3402 = vpack.c.b16 %v2072, %v2067
  %v3403 = vpack.c.b16 %v2073, %v2068
  %v3404 = vpack.c.b16 %v2079, %v2074
  %v3405 = vpack.c.b16 %v2080, %v2075
  %v3406 = vpack.c.b16 %v2081, %v2076
  %v3407 = vpack.c.b16 %v2082, %v2077
  %v3408 = vpack.c.b16 %v2083, %v2078
  %v3409 = vpack.c.b16 %v2089, %v2084
  %v3410 = vpack.c.b16 %v2090, %v2085
  %v3411 = vpack.c.b16 %v2091, %v2086
  %v3412 = vpack.c.b16 %v2092, %v2087
  %v3413 = vpack.c.b16 %v2093, %v2088
  %v3414 = vpack.c.b16 %v2099, %v2094
  %v3415 = vpack.c.b16 %v2100, %v2095
  %v3416 = vpack.c.b16 %v2101, %v2096
  %v3417 = vpack.c.b16 %v2102, %v2097
  %v3418 = vpack.c.b16 %v2103, %v2098
  %v3419 = vpack.c.b16 %v2109, %v2104
  %v3420 = vpack.c.b16 %v2110, %v2105
  %v3421 = vpack.c.b16 %v2111, %v2106
  %v3422 = vpack.c.b16 %v2112, %v2107
  %v3423 = vpack.c.b16 %v2113, %v2108
  %v3424 = vpack.c.b16 %v2119, %v2114
  %v3425 = vpack.c.b16 %v2120, %v2115
  %v3426 = vpack.c.b16 %v2121, %v2116
  %v3427 = vpack.c.b16 %v2122, %v2117
  %v3428 = vpack.c.b16 %v2123, %v2118
  %v3429 = vpack.c.b16 %v2129, %v2124
  %v3430 = vpack.c.b16 %v2130, %v2125
  %v3431 = vpack.c.b16 %v2131, %v2126
  %v3432 = vpack.c.b16 %v2132, %v2127
  %v3433 = vpack.c.b16 %v2133, %v2128
  %v3434 = vpack.c.b16 %v2139, %v2134
  %v3435 = vpack.c.b16 %v2140, %v2135
  %v3436 = vpack.c.b16 %v2141, %v2136
  %v3437 = vpack.c.b16 %v2142, %v2137
  %v3438 = vpack.c.b16 %v2143, %v2138
  %v3439 = vpack.c.b16 %v2149, %v2144
  %v3440 = vpack.c.b16 %v2150, %v2145
  %v3441 = vpack.c.b16 %v2151, %v2146
  %v3442 = vpack.c.b16 %v2152, %v2147
  %v3443 = vpack.c.b16 %v2153, %v2148
  %v3444 = vpack.c.b16 %v2159, %v2154
  %v3445 = vpack.c.b16 %v2160, %v2155
  %v3446 = vpack.c.b16 %v2161, %v2156
  %v3447 = vpack.c.b16 %v2162, %v2157
  %v3448 = vpack.c.b16 %v2163, %v2158
  %v3449 = vpack.c.b16 %v2169, %v2164
  %v3450 = vpack.c.b16 %v2170, %v2165
  %v3451 = vpack.c.b16 %v2171, %v2166
  %v3452 = vpack.c.b16 %v2172, %v2167
  %v3453 = vpack.c.b16 %v2173, %v2168
  %v3454 = vpack.c.b16 %v2179, %v2174
  %v3455 = vpack.c.b16 %v2180, %v2175
  %v3456 = vpack.c.b16 %v2181, %v2176
  %v3457 = vpack.c.b16 %v2182, %v2177
  %v3458 = vpack.c.b16 %v2183, %v2178
  %v3459 = vpack.c.b16 %v2189, %v2184
  %v3460 = vpack.c.b16 %v2190, %v2185
  %v3461 = vpack.c.b16 %v2191, %v2186
  %v3462 = vpack.c.b16 %v2192, %v2187
  %v3463 = vpack.c.b16 %v2193, %v2188
  %v3464 = vpack.c.b16 %v2199, %v2194
  %v3465 = vpack.c.b16 %v2200, %v2195
  %v3466 = vpack.c.b16 %v2201, %v2196
  %v3467 = vpack.c.b16 %v2202, %v2197
  %v3468 = vpack.c.b16 %v2203, %v2198
  %v3469 = vpack.c.b16 %v2209, %v2204
  %v3470 = vpack.c.b16 %v2210, %v2205
  %v3471 = vpack.c.b16 %v2211, %v2206
  %v3472 = vpack.c.b16 %v2212, %v2207
  %v3473 = vpack.c.b16 %v2213, %v2208
  %v3474 = vpack.c.b16 %v2219, %v2214
  %v3475 = vpack.c.b16 %v2220, %v2215
  %v3476 = vpack.c.b16 %v2221, %v2216
  %v3477 = vpack.c.b16 %v2222, %v2217
  %v3478 = vpack.c.b16 %v2223, %v2218
  %v3479 = vpack.c.b16 %v2229, %v2224
  %v3480 = vpack.c.b16 %v2230, %v2225
  %v3481 = vpack.c.b16 %v2231, %v2226
  %v3482 = vpack.c.b16 %v2232, %v2227
  %v3483 = vpack.c.b16 %v2233, %v2228
  %v3484 = vpack.c.b16 %v2239, %v2234
  %v3485 = vpack.c.b16 %v2240, %v2235
  %v3486 = vpack.c.b16 %v2241, %v2236
  %v3487 = vpack.c.b16 %v2242, %v2237
  %v3488 = vpack.c.b16 %v2243, %v2238
  %v3489 = vpack.c.b16 %v2249, %v2244
  %v3490 = vpack.c.b16 %v2250, %v2245
  %v3491 = vpack.c.b16 %v2251, %v2246
  %v3492 = vpack.c.b16 %v2252, %v2247
  %v3493 = vpack.c.b16 %v2253, %v2248
  %v3494 = vpack.c.b16 %v2259, %v2254
  %v3495 = vpack.c.b16 %v2260, %v2255
  %v3496 = vpack.c.b16 %v2261, %v2256
  %v3497 = vpack.c.b16 %v2262, %v2257
  %v3498 = vpack.c.b16 %v2263, %v2258
  %v3499 = vpack.c.b16 %v2269, %v2264
  %v3500 = vpack.c.b16 %v2270, %v2265
  %v3501 = vpack.c.b16 %v2271, %v2266
  %v3502 = vpack.c.b16 %v2272, %v2267
  %v3503 = vpack.c.b16 %v2273, %v2268
  %v3504 = vpack.c.b16 %v2279, %v2274
  %v3505 = vpack.c.b16 %v2280, %v2275
  %v3506 = vpack.c.b16 %v2281, %v2276
  %v3507 = vpack.c.b16 %v2282, %v2277
  %v3508 = vpack.c.b16 %v2283, %v2278
  %v3509 = vpack.c.b16 %v2289, %v2284
  %v3510 = vpack.c.b16 %v2290, %v2285
  %v3511 = vpack.c.b16 %v2291, %v2286
  %v3512 = vpack.c.b16 %v2292, %v2287
  %v3513 = vpack.c.b16 %v2293, %v2288
  %v3514 = vpack.c.b16 %v2299, %v2294
  %v3515 = vpack.c.b16 %v2300, %v2295
  %v3516 = vpack.c.b16 %v2301, %v2296
  %v3517 = vpack.c.b16 %v2302, %v2297
  %v3518 = vpack.c.b16 %v2303, %v2298
  %v3519 = vpack.c.b16 %v2309, %v2304
  %v3520 = vpack.c.b16 %v2310, %v2305
  %v3521 = vpack.c.b16 %v2311, %v2306
  %v3522 = vpack.c.b16 %v2312, %v2307
  %v3523 = vpack.c.b16 %v2313, %v2308
  %v3524 = vpack.c.b16 %v2319, %v2314
  %v3525 = vpack.c.b16 %v2320, %v2315
  %v3526 = vpack.c.b16 %v2321, %v2316
  %v3527 = vpack.c.b16 %v2322, %v2317
  %v3528 = vpack.c.b16 %v2323, %v2318
  %v3529 = vpack.c.b16 %v2329, %v2324
  %v3530 = vpack.c.b16 %v2330, %v2325
  %v3531 = vpack.c.b16 %v2331, %v2326
  %v3532 = vpack.c.b16 %v2332, %v2327
  %v3533 = vpack.c.b16 %v2333, %v2328
  %v3534 = vpack.c.b16 %v2339, %v2334
  %v3535 = vpack.c.b16 %v2340, %v2335
  %v3536 = vpack.c.b16 %v2341, %v2336
  %v3537 = vpack.c.b16 %v2342, %v2337
  %v3538 = vpack.c.b16 %v2343, %v2338
  %v3539 = vpack.c.b16 %v2349, %v2344
  %v3540 = vpack.c.b16 %v2350, %v2345
  %v3541 = vpack.c.b16 %v2351, %v2346
  %v3542 = vpack.c.b16 %v2352, %v2347
  %v3543 = vpack.c.b16 %v2353, %v2348
  %v3544 = vpack.c.b16 %v2359, %v2354
  %v3545 = vpack.c.b16 %v2360, %v2355
  %v3546 = vpack.c.b16 %v2361, %v2356
  %v3547 = vpack.c.b16 %v2362, %v2357
  %v3548 = vpack.c.b16 %v2363, %v2358
  %v3549 = vpack.c.b16 %v2369, %v2364
  %v3550 = vpack.c.b16 %v2370, %v2365
  %v3551 = vpack.c.b16 %v2371, %v2366
  %v3552 = vpack.c.b16 %v2372, %v2367
  %v3553 = vpack.c.b16 %v2373, %v2368
  %v3554 = vpack.c.b16 %v2379, %v2374
  %v3555 = vpack.c.b16 %v2380, %v2375
  %v3556 = vpack.c.b16 %v2381, %v2376
  %v3557 = vpack.c.b16 %v2382, %v2377
  %v3558 = vpack.c.b16 %v2383, %v2378
  %v3559 = vpack.c.b16 %v2389, %v2384
  %v3560 = vpack.c.b16 %v2390, %v2385
  %v3561 = vpack.c.b16 %v2391, %v2386
  %v3562 = vpack.c.b16 %v2392, %v2387
  %v3563 = vpack.c.b16 %v2393, %v2388
  %v3564 = vpack.c.b16 %v2399, %v2394
  %v3565 = vpack.c.b16 %v2400, %v2395
  %v3566 = vpack.c.b16 %v2401, %v2396
  %v3567 = vpack.c.b16 %v2402, %v2397
  %v3568 = vpack.c.b16 %v2403, %v2398
  %v3569 = vpack.c.b16 %v2409, %v2404
  %v3570 = vpack.c.b16 %v2410, %v2405
  %v3571 = vpack.c.b16 %v2411, %v2406
  %v3572 = vpack.c.b16 %v2412, %v2407
  %v3573 = vpack.c.b16 %v2413, %v2408
  %v3574 = vpack.c.b16 %v2419, %v2414
  %v3575 = vpack.c.b16 %v2420, %v2415
  %v3576 = vpack.c.b16 %v2421, %v2416
  %v3577 = vpack.c.b16 %v2422, %v2417
  %v3578 = vpack.c.b16 %v2423, %v2418
  %v3579 = vpack.c.b16 %v2429, %v2424
  %v3580 = vpack.c.b16 %v2430, %v2425
  %v3581 = vpack.c.b16 %v2431, %v2426
  %v3582 = vpack.c.b16 %v2432, %v2427
  %v3583 = vpack.c.b16 %v2433, %v2428
  %v3584 = vpack.c.b16 %v2439, %v2434
  %v3585 = vpack.c.b16 %v2440, %v2435
  %v3586 = vpack.c.b16 %v2441, %v2436
  %v3587 = vpack.c.b16 %v2442, %v2437
  %v3588 = vpack.c.b16 %v2443, %v2438
  %v3589 = vpack.c.b16 %v2449, %v2444
  %v3590 = vpack.c.b16 %v2450, %v2445
  %v3591 = vpack.c.b16 %v2451, %v2446
  %v3592 = vpack.c.b16 %v2452, %v2447
  %v3593 = vpack.c.b16 %v2453, %v2448
  %v3594 = vpack.c.b16 %v2459, %v2454
  %v3595 = vpack.c.b16 %v2460, %v2455
  %v3596 = vpack.c.b16 %v2461, %v2456
  %v3597 = vpack.c.b16 %v2462, %v2457
  %v3598 = vpack.c.b16 %v2463, %v2458
  %v3599 = vpack.c.b16 %v2469, %v2464
  %v3600 = vpack.c.b16 %v2470, %v2465
  %v3601 = vpack.c.b16 %v2471, %v2466
  %v3602 = vpack.c.b16 %v2472, %v2467
  %v3603 = vpack.c.b16 %v2473, %v2468
  %v3604 = vpack.c.b16 %v2479, %v2474
  %v3605 = vpack.c.b16 %v2480, %v2475
  %v3606 = vpack.c.b16 %v2481, %v2476
  %v3607 = vpack.c.b16 %v2482, %v2477
  %v3608 = vpack.c.b16 %v2483, %v2478
  %v3609 = vpack.c.b16 %v2489, %v2484
  %v3610 = vpack.c.b16 %v2490, %v2485
  %v3611 = vpack.c.b16 %v2491, %v2486
  %v3612 = vpack.c.b16 %v2492, %v2487
  %v3613 = vpack.c.b16 %v2493, %v2488
  %v3614 = vpack.c.b16 %v2499, %v2494
  %v3615 = vpack.c.b16 %v2500, %v2495
  %v3616 = vpack.c.b16 %v2501, %v2496
  %v3617 = vpack.c.b16 %v2502, %v2497
  %v3618 = vpack.c.b16 %v2503, %v2498
  %v3619 = vpack.c.b16 %v2509, %v2504
  %v3620 = vpack.c.b16 %v2510, %v2505
  %v3621 = vpack.c.b16 %v2511, %v2506
  %v3622 = vpack.c.b16 %v2512, %v2507
  %v3623 = vpack.c.b16 %v2513, %v2508
  %v3624 = vpack.c.b16 %v2519, %v2514
  %v3625 = vpack.c.b16 %v2520, %v2515
  %v3626 = vpack.c.b16 %v2521, %v2516
  %v3627 = vpack.c.b16 %v2522, %v2517
  %v3628 = vpack.c.b16 %v2523, %v2518
  %v3629 = vpack.c.b16 %v2529, %v2524
  %v3630 = vpack.c.b16 %v2530, %v2525
  %v3631 = vpack.c.b16 %v2531, %v2526
  %v3632 = vpack.c.b16 %v2532, %v2527
  %v3633 = vpack.c.b16 %v2533, %v2528
  %v3634 = vpack.c.b16 %v2539, %v2534
  %v3635 = vpack.c.b16 %v2540, %v2535
  %v3636 = vpack.c.b16 %v2541, %v2536
  %v3637 = vpack.c.b16 %v2542, %v2537
  %v3638 = vpack.c.b16 %v2543, %v2538
  %v3639 = vpack.c.b16 %v2549, %v2544
  %v3640 = vpack.c.b16 %v2550, %v2545
  %v3641 = vpack.c.b16 %v2551, %v2546
  %v3642 = vpack.c.b16 %v2552, %v2547
  %v3643 = vpack.c.b16 %v2553, %v2548
  %v3644 = vpack.c.b16 %v2559, %v2554
  %v3645 = vpack.c.b16 %v2560, %v2555
  %v3646 = vpack.c.b16 %v2561, %v2556
  %v3647 = vpack.c.b16 %v2562, %v2557
  %v3648 = vpack.c.b16 %v2563, %v2558
  %v3649 = vpack.c.b16 %v2569, %v2564
  %v3650 = vpack.c.b16 %v2570, %v2565
  %v3651 = vpack.c.b16 %v2571, %v2566
  %v3652 = vpack.c.b16 %v2572, %v2567
  %v3653 = vpack.c.b16 %v2573, %v2568
  %v3654 = vpack.c.b16 %v2579, %v2574
  %v3655 = vpack.c.b16 %v2580, %v2575
  %v3656 = vpack.c.b16 %v2581, %v2576
  %v3657 = vpack.c.b16 %v2582, %v2577
  %v3658 = vpack.c.b16 %v2583, %v2578
  %v3659 = vpack.c.b16 %v2589, %v2584
  %v3660 = vpack.c.b16 %v2590, %v2585
  %v3661 = vpack.c.b16 %v2591, %v2586
  %v3662 = vpack.c.b16 %v2592, %v2587
  %v3663 = vpack.c.b16 %v2593, %v2588
  %v3664 = vpack.c.b16 %v2599, %v2594
  %v3665 = vpack.c.b16 %v2600, %v2595
  %v3666 = vpack.c.b16 %v2601, %v2596
  %v3667 = vpack.c.b16 %v2602, %v2597
  %v3668 = vpack.c.b16 %v2603, %v2598
  %v3669 = vpack.c.b16 %v2609, %v2604
  %v3670 = vpack.c.b16 %v2610, %v2605
  %v3671 = vpack.c.b16 %v2611, %v2606
  %v3672 = vpack.c.b16 %v2612, %v2607
  %v3673 = vpack.c.b16 %v2613, %v2608
  %v3674 = vpack.c.b16 %v2619, %v2614
  %v3675 = vpack.c.b16 %v2620, %v2615
  %v3676 = vpack.c.b16 %v2621, %v2616
  %v3677 = vpack.c.b16 %v2622, %v2617
  %v3678 = vpack.c.b16 %v2623, %v2618
  %v3679 = vpack.c.b16 %v2629, %v2624
  %v3680 = vpack.c.b16 %v2630, %v2625
  %v3681 = vpack.c.b16 %v2631, %v2626
  %v3682 = vpack.c.b16 %v2632, %v2627
  %v3683 = vpack.c.b16 %v2633, %v2628
  %v3684 = vpack.c.b16 %v2639, %v2634
  %v3685 = vpack.c.b16 %v2640, %v2635
  %v3686 = vpack.c.b16 %v2641, %v2636
  %v3687 = vpack.c.b16 %v2642, %v2637
  %v3688 = vpack.c.b16 %v2643, %v2638
  %v3689 = vpack.c.b16 %v2649, %v2644
  %v3690 = vpack.c.b16 %v2650, %v2645
  %v3691 = vpack.c.b16 %v2651, %v2646
  %v3692 = vpack.c.b16 %v2652, %v2647
  %v3693 = vpack.c.b16 %v2653, %v2648
  %v3694 = vpack.c.b16 %v2659, %v2654
  %v3695 = vpack.c.b16 %v2660, %v2655
  %v3696 = vpack.c.b16 %v2661, %v2656
  %v3697 = vpack.c.b16 %v2662, %v2657
  %v3698 = vpack.c.b16 %v2663, %v2658
  %v3699 = vpack.c.b16 %v2669, %v2664
  %v3700 = vpack.c.b16 %v2670, %v2665
  %v3701 = vpack.c.b16 %v2671, %v2666
  %v3702 = vpack.c.b16 %v2672, %v2667
  %v3703 = vpack.c.b16 %v2673, %v2668
  %v3704 = vpack.c.b16 %v2679, %v2674
  %v3705 = vpack.c.b16 %v2680, %v2675
  %v3706 = vpack.c.b16 %v2681, %v2676
  %v3707 = vpack.c.b16 %v2682, %v2677
  %v3708 = vpack.c.b16 %v2683, %v2678
  %v3709 = vpack.c.b16 %v2689, %v2684
  %v3710 = vpack.c.b16 %v2690, %v2685
  %v3711 = vpack.c.b16 %v2691, %v2686
  %v3712 = vpack.c.b16 %v2692, %v2687
  %v3713 = vpack.c.b16 %v2693, %v2688
  %v3714 = vpack.c.b16 %v2699, %v2694
  %v3715 = vpack.c.b16 %v2700, %v2695
  %v3716 = vpack.c.b16 %v2701, %v2696
  %v3717 = vpack.c.b16 %v2702, %v2697
  %v3718 = vpack.c.b16 %v2703, %v2698
  %v3719 = vpack.c.b16 %v2709, %v2704
  %v3720 = vpack.c.b16 %v2710, %v2705
  %v3721 = vpack.c.b16 %v2711, %v2706
  %v3722 = vpack.c.b16 %v2712, %v2707
  %v3723 = vpack.c.b16 %v2713, %v2708
  %v3724 = vpack.c.b16 %v2719, %v2714
  %v3725 = vpack.c.b16 %v2720, %v2715
  %v3726 = vpack.c.b16 %v2721, %v2716
  %v3727 = vpack.c.b16 %v2722, %v2717
  %v3728 = vpack.c.b16 %v2723, %v2718
  %v3729 = vpack.c.b16 %v2729, %v2724
  %v3730 = vpack.c.b16 %v2730, %v2725
  %v3731 = vpack.c.b16 %v2731, %v2726
  %v3732 = vpack.c.b16 %v2732, %v2727
  %v3733 = vpack.c.b16 %v2733, %v2728
  %v3734 = vpack.c.b16 %v2739, %v2734
  %v3735 = vpack.c.b16 %v2740, %v2735
  %v3736 = vpack.c.b16 %v2741, %v2736
  %v3737 = vpack.c.b16 %v2742, %v2737
  %v3738 = vpack.c.b16 %v2743, %v2738
  %v3739 = vpack.c.b16 %v2749, %v2744
  %v3740 = vpack.c.b16 %v2750, %v2745
  %v3741 = vpack.c.b16 %v2751, %v2746
  %v3742 = vpack.c.b16 %v2752, %v2747
  %v3743 = vpack.c.b16 %v2753, %v2748
  %v3744 = vpack.c.b16 %v2759, %v2754
  %v3745 = vpack.c.b16 %v2760, %v2755
  %v3746 = vpack.c.b16 %v2761, %v2756
  %v3747 = vpack.c.b16 %v2762, %v2757
  %v3748 = vpack.c.b16 %v2763, %v2758
  %v3749 = vpack.c.b16 %v2769, %v2764
  %v3750 = vpack.c.b16 %v2770, %v2765
  %v3751 = vpack.c.b16 %v2771, %v2766
  %v3752 = vpack.c.b16 %v2772, %v2767
  %v3753 = vpack.c.b16 %v2773, %v2768
  %v3754 = vpack.c.b16 %v2779, %v2774
  %v3755 = vpack.c.b16 %v2780, %v2775
  %v3756 = vpack.c.b16 %v2781, %v2776
  %v3757 = vpack.c.b16 %v2782, %v2777
  %v3758 = vpack.c.b16 %v2783, %v2778
  %v3759 = vpack.c.b16 %v2789, %v2784
  %v3760 = vpack.c.b16 %v2790, %v2785
  %v3761 = vpack.c.b16 %v2791, %v2786
  %v3762 = vpack.c.b16 %v2792, %v2787
  %v3763 = vpack.c.b16 %v2793, %v2788
  %v3764 = vpack.c.b16 %v2799, %v2794
  %v3765 = vpack.c.b16 %v2800, %v2795
  %v3766 = vpack.c.b16 %v2801, %v2796
  %v3767 = vpack.c.b16 %v2802, %v2797
  %v3768 = vpack.c.b16 %v2803, %v2798
  %v3769 = vpack.c.b16 %v2809, %v2804
  %v3770 = vpack.c.b16 %v2810, %v2805
  %v3771 = vpack.c.b16 %v2811, %v2806
  %v3772 = vpack.c.b16 %v2812, %v2807
  %v3773 = vpack.c.b16 %v2813, %v2808
  %v3774 = vpack.c.b16 %v2819, %v2814
  %v3775 = vpack.c.b16 %v2820, %v2815
  %v3776 = vpack.c.b16 %v2821, %v2816
  %v3777 = vpack.c.b16 %v2822, %v2817
  %v3778 = vpack.c.b16 %v2823, %v2818
  %v3779 = vpack.c.b16 %v2829, %v2824
  %v3780 = vpack.c.b16 %v2830, %v2825
  %v3781 = vpack.c.b16 %v2831, %v2826
  %v3782 = vpack.c.b16 %v2832, %v2827
  %v3783 = vpack.c.b16 %v2833, %v2828
  %v3784 = vpack.c.b16 %v2839, %v2834
  %v3785 = vpack.c.b16 %v2840, %v2835
  %v3786 = vpack.c.b16 %v2841, %v2836
  %v3787 = vpack.c.b16 %v2842, %v2837
  %v3788 = vpack.c.b16 %v2843, %v2838
  %v3789 = vpack.c.b16 %v2849, %v2844
  %v3790 = vpack.c.b16 %v2850, %v2845
  %v3791 = vpack.c.b16 %v2851, %v2846
  %v3792 = vpack.c.b16 %v2852, %v2847
  %v3793 = vpack.c.b16 %v2853, %v2848
  %v3794 = vpack.c.b16 %v2859, %v2854
  %v3795 = vpack.c.b16 %v2860, %v2855
  %v3796 = vpack.c.b16 %v2861, %v2856
  %v3797 = vpack.c.b16 %v2862, %v2857
  %v3798 = vpack.c.b16 %v2863, %v2858
  %v3799 = vpack.c.b16 %v2869, %v2864
  %v3800 = vpack.c.b16 %v2870, %v2865
  %v3801 = vpack.c.b16 %v2871, %v2866
  %v3802 = vpack.c.b16 %v2872, %v2867
  %v3803 = vpack.c.b16 %v2873, %v2868
  %v3804 = vpack.c.b16 %v2879, %v2874
  %v3805 = vpack.c.b16 %v2880, %v2875
  %v3806 = vpack.c.b16 %v2881, %v2876
  %v3807 = vpack.c.b16 %v2882, %v2877
  %v3808 = vpack.c.b16 %v2883, %v2878
  %v3809 = vpack.c.b16 %v2889, %v2884
  %v3810 = vpack.c.b16 %v2890, %v2885
  %v3811 = vpack.c.b16 %v2891, %v2886
  %v3812 = vpack.c.b16 %v2892, %v2887
  %v3813 = vpack.c.b16 %v2893, %v2888
  %v3814 = vpack.c.b16 %v2899, %v2894
  %v3815 = vpack.c.b16 %v2900, %v2895
  %v3816 = vpack.c.b16 %v2901, %v2896
  %v3817 = vpack.c.b16 %v2902, %v2897
  %v3818 = vpack.c.b16 %v2903, %v2898
  %v3819 = vpack.c.b16 %v2909, %v2904
  %v3820 = vpack.c.b16 %v2910, %v2905
  %v3821 = vpack.c.b16 %v2911, %v2906
  %v3822 = vpack.c.b16 %v2912, %v2907
  %v3823 = vpack.c.b16 %v2913, %v2908
  %v3824 = vpack.c.b16 %v2919, %v2914
  %v3825 = vpack.c.b16 %v2920, %v2915
  %v3826 = vpack.c.b16 %v2921, %v2916
  %v3827 = vpack.c.b16 %v2922, %v2917
  %v3828 = vpack.c.b16 %v2923, %v2918
  %v3829 = vpack.c.b16 %v2929, %v2924
  %v3830 = vpack.c.b16 %v2930, %v2925
  %v3831 = vpack.c.b16 %v2931, %v2926
  %v3832 = vpack.c.b16 %v2932, %v2927
  %v3833 = vpack.c.b16 %v2933, %v2928
  %v3834 = vpack.c.b16 %v2939, %v2934
  %v3835 = vpack.c.b16 %v2940, %v2935
  %v3836 = vpack.c.b16 %v2941, %v2936
  %v3837 = vpack.c.b16 %v2942, %v2937
  %v3838 = vpack.c.b16 %v2943, %v2938
  %v3839 = vpack.c.b16 %v2949, %v2944
  %v3840 = vpack.c.b16 %v2950, %v2945
  %v3841 = vpack.c.b16 %v2951, %v2946
  %v3842 = vpack.c.b16 %v2952, %v2947
  %v3843 = vpack.c.b16 %v2953, %v2948
  %v3844 = vpack.c.b16 %v2959, %v2954
  %v3845 = vpack.c.b16 %v2960, %v2955
  %v3846 = vpack.c.b16 %v2961, %v2956
  %v3847 = vpack.c.b16 %v2962, %v2957
  %v3848 = vpack.c.b16 %v2963, %v2958
  %v3849 = vpack.c.b16 %v2969, %v2964
  %v3850 = vpack.c.b16 %v2970, %v2965
  %v3851 = vpack.c.b16 %v2971, %v2966
  %v3852 = vpack.c.b16 %v2972, %v2967
  %v3853 = vpack.c.b16 %v2973, %v2968
  %v3854 = vpack.c.b16 %v2979, %v2974
  %v3855 = vpack.c.b16 %v2980, %v2975
  %v3856 = vpack.c.b16 %v2981, %v2976
  %v3857 = vpack.c.b16 %v2982, %v2977
  %v3858 = vpack.c.b16 %v2983, %v2978
  %v3859 = vpack.c.b16 %v2989, %v2984
  %v3860 = vpack.c.b16 %v2990, %v2985
  %v3861 = vpack.c.b16 %v2991, %v2986
  %v3862 = vpack.c.b16 %v2992, %v2987
  %v3863 = vpack.c.b16 %v2993, %v2988
  %v3864 = vpack.c.b16 %v2999, %v2994
  %v3865 = vpack.c.b16 %v3000, %v2995
  %v3866 = vpack.c.b16 %v3001, %v2996
  %v3867 = vpack.c.b16 %v3002, %v2997
  %v3868 = vpack.c.b16 %v3003, %v2998
  %v3869 = vpack.c.b16 %v3009, %v3004
  %v3870 = vpack.c.b16 %v3010, %v3005
  %v3871 = vpack.c.b16 %v3011, %v3006
  %v3872 = vpack.c.b16 %v3012, %v3007
  %v3873 = vpack.c.b16 %v3013, %v3008
  %v3874 = vpack.c.b16 %v3019, %v3014
  %v3875 = vpack.c.b16 %v3020, %v3015
  %v3876 = vpack.c.b16 %v3021, %v3016
  %v3877 = vpack.c.b16 %v3022, %v3017
  %v3878 = vpack.c.b16 %v3023, %v3018
  %v3879 = vpack.c.b16 %v3029, %v3024
  %v3880 = vpack.c.b16 %v3030, %v3025
  %v3881 = vpack.c.b16 %v3031, %v3026
  %v3882 = vpack.c.b16 %v3032, %v3027
  %v3883 = vpack.c.b16 %v3033, %v3028
  %v3884 = vpack.c.b16 %v3039, %v3034
  %v3885 = vpack.c.b16 %v3040, %v3035
  %v3886 = vpack.c.b16 %v3041, %v3036
  %v3887 = vpack.c.b16 %v3042, %v3037
  %v3888 = vpack.c.b16 %v3043, %v3038
  %v3889 = vpack.c.b16 %v3049, %v3044
  %v3890 = vpack.c.b16 %v3050, %v3045
  %v3891 = vpack.c.b16 %v3051, %v3046
  %v3892 = vpack.c.b16 %v3052, %v3047
  %v3893 = vpack.c.b16 %v3053, %v3048
  %v3894 = vpack.c.b16 %v3059, %v3054
  %v3895 = vpack.c.b16 %v3060, %v3055
  %v3896 = vpack.c.b16 %v3061, %v3056
  %v3897 = vpack.c.b16 %v3062, %v3057
  %v3898 = vpack.c.b16 %v3063, %v3058
  %v3899 = vpack.c.b16 %v3069, %v3064
  %v3900 = vpack.c.b16 %v3070, %v3065
  %v3901 = vpack.c.b16 %v3071, %v3066
  %v3902 = vpack.c.b16 %v3072, %v3067
  %v3903 = vpack.c.b16 %v3073, %v3068
  %v3904 = vpack.c.b16 %v3079, %v3074
  %v3905 = vpack.c.b16 %v3080, %v3075
  %v3906 = vpack.c.b16 %v3081, %v3076
  %v3907 = vpack.c.b16 %v3082, %v3077
  %v3908 = vpack.c.b16 %v3083, %v3078
  %v3909 = vpack.c.b16 %v3089, %v3084
  %v3910 = vpack.c.b16 %v3090, %v3085
  %v3911 = vpack.c.b16 %v3091, %v3086
  %v3912 = vpack.c.b16 %v3092, %v3087
  %v3913 = vpack.c.b16 %v3093, %v3088
  %v3914 = vpack.c.b16 %v3099, %v3094
  %v3915 = vpack.c.b16 %v3100, %v3095
  %v3916 = vpack.c.b16 %v3101, %v3096
  %v3917 = vpack.c.b16 %v3102, %v3097
  %v3918 = vpack.c.b16 %v3103, %v3098
  %v3919 = vpack.c.b16 %v3109, %v3104
  %v3920 = vpack.c.b16 %v3110, %v3105
  %v3921 = vpack.c.b16 %v3111, %v3106
  %v3922 = vpack.c.b16 %v3112, %v3107
  %v3923 = vpack.c.b16 %v3113, %v3108
  %v3924 = vpack.c.b16 %v3119, %v3114
  %v3925 = vpack.c.b16 %v3120, %v3115
  %v3926 = vpack.c.b16 %v3121, %v3116
  %v3927 = vpack.c.b16 %v3122, %v3117
  %v3928 = vpack.c.b16 %v3123, %v3118
  %v3929 = vpack.c.b16 %v3129, %v3124
  %v3930 = vpack.c.b16 %v3130, %v3125
  %v3931 = vpack.c.b16 %v3131, %v3126
  %v3932 = vpack.c.b16 %v3132, %v3127
  %v3933 = vpack.c.b16 %v3133, %v3128
  %v3934 = vpack.c.b16 %v3139, %v3134
  %v3935 = vpack.c.b16 %v3140, %v3135
  %v3936 = vpack.c.b16 %v3141, %v3136
  %v3937 = vpack.c.b16 %v3142, %v3137
  %v3938 = vpack.c.b16 %v3143, %v3138
  %v3939 = vpack.c.b16 %v3149, %v3144
  %v3940 = vpack.c.b16 %v3150, %v3145
  %v3941 = vpack.c.b16 %v3151, %v3146
  %v3942 = vpack.c.b16 %v3152, %v3147
  %v3943 = vpack.c.b16 %v3153, %v3148
  %v3944 = vpack.c.b16 %v3159, %v3154
  %v3945 = vpack.c.b16 %v3160, %v3155
  %v3946 = vpack.c.b16 %v3161, %v3156
  %v3947 = vpack.c.b16 %v3162, %v3157
  %v3948 = vpack.c.b16 %v3163, %v3158
  %v3949 = vpack.c.b16 %v3169, %v3164
  %v3950 = vpack.c.b16 %v3170, %v3165
  %v3951 = vpack.c.b16 %v3171, %v3166
  %v3952 = vpack.c.b16 %v3172, %v3167
  %v3953 = vpack.c.b16 %v3173, %v3168
  %v3954 = vpack.c.b16 %v3179, %v3174
  %v3955 = vpack.c.b16 %v3180, %v3175
  %v3956 = vpack.c.b16 %v3181, %v3176
  %v3957 = vpack.c.b16 %v3182, %v3177
  %v3958 = vpack.c.b16 %v3183, %v3178
  %v3959 = vpack.c.b16 %v3189, %v3184
  %v3960 = vpack.c.b16 %v3190, %v3185
  %v3961 = vpack.c.b16 %v3191, %v3186
  %v3962 = vpack.c.b16 %v3192, %v3187
  %v3963 = vpack.c.b16 %v3193, %v3188
  %v3964 = vpack.c.b16 %v3199, %v3194
  %v3965 = vpack.c.b16 %v3200, %v3195
  %v3966 = vpack.c.b16 %v3201, %v3196
  %v3967 = vpack.c.b16 %v3202, %v3197
  %v3968 = vpack.c.b16 %v3203, %v3198
  %v3969 = vpack.c.b16 %v3209, %v3204
  %v3970 = vpack.c.b16 %v3210, %v3205
  %v3971 = vpack.c.b16 %v3211, %v3206
  %v3972 = vpack.c.b16 %v3212, %v3207
  %v3973 = vpack.c.b16 %v3213, %v3208
  %v3974 = vpack.c.b16 %v3219, %v3214
  %v3975 = vpack.c.b16 %v3220, %v3215
  %v3976 = vpack.c.b16 %v3221, %v3216
  %v3977 = vpack.c.b16 %v3222, %v3217
  %v3978 = vpack.c.b16 %v3223, %v3218
  %v3979 = vpack.c.b16 %v3229, %v3224
  %v3980 = vpack.c.b16 %v3230, %v3225
  %v3981 = vpack.c.b16 %v3231, %v3226
  %v3982 = vpack.c.b16 %v3232, %v3227
  %v3983 = vpack.c.b16 %v3233, %v3228
  %v3984 = vpack.c.b16 %v3239, %v3234
  %v3985 = vpack.c.b16 %v3240, %v3235
  %v3986 = vpack.c.b16 %v3241, %v3236
  %v3987 = vpack.c.b16 %v3242, %v3237
  %v3988 = vpack.c.b16 %v3243, %v3238
  %v3989 = vpack.c.b16 %v3249, %v3244
  %v3990 = vpack.c.b16 %v3250, %v3245
  %v3991 = vpack.c.b16 %v3251, %v3246
  %v3992 = vpack.c.b16 %v3252, %v3247
  %v3993 = vpack.c.b16 %v3253, %v3248
  %v3994 = vpack.c.b16 %v3259, %v3254
  %v3995 = vpack.c.b16 %v3260, %v3255
  %v3996 = vpack.c.b16 %v3261, %v3256
  %v3997 = vpack.c.b16 %v3262, %v3257
  %v3998 = vpack.c.b16 %v3263, %v3258
  %v3999 = vpack.c.b16 %v3269, %v3264
  %v4000 = vpack.c.b16 %v3270, %v3265
  %v4001 = vpack.c.b16 %v3271, %v3266
  %v4002 = vpack.c.b16 %v3272, %v3267
  %v4003 = vpack.c.b16 %v3273, %v3268
  %v4004 = vpack.c.b16 %v3279, %v3274
  %v4005 = vpack.c.b16 %v3280, %v3275
  %v4006 = vpack.c.b16 %v3281, %v3276
  %v4007 = vpack.c.b16 %v3282, %v3277
  %v4008 = vpack.c.b16 %v3283, %v3278
  %v4009 = vpack.c.b16 %v3289, %v3284
  %v4010 = vpack.c.b16 %v3290, %v3285
  %v4011 = vpack.c.b16 %v3291, %v3286
  %v4012 = vpack.c.b16 %v3292, %v3287
  %v4013 = vpack.c.b16 %v3293, %v3288
  %4734 = vmatprep.subr.bf16.mxu0 %v3295
  %4735 = vmatpush1.bf16.msra.mxu0 %v3294
  %4736 = vmatprep.subr.bf16.mxu0 %v3300
  %4737 = vmatpush1.bf16.msra.mxu0 %v3299
  %4738 = vmatprep.subr.bf16.mxu0 %v3305
  %4739 = vmatpush1.bf16.msra.mxu0 %v3304
  %4740 = vmatprep.subr.bf16.mxu0 %v3310
  %4741 = vmatpush1.bf16.msra.mxu0 %v3309
  %4742 = vmatprep.subr.bf16.mxu0 %v3315
  %4743 = vmatpush1.bf16.msra.mxu0 %v3314
  %4744 = vmatprep.subr.bf16.mxu0 %v3320
  %4745 = vmatpush1.bf16.msra.mxu0 %v3319
  %4746 = vmatprep.subr.bf16.mxu0 %v3325
  %4747 = vmatpush1.bf16.msra.mxu0 %v3324
  %4748 = vmatprep.subr.bf16.mxu0 %v3330
  %4749 = vmatpush1.bf16.msra.mxu0 %v3329
  %4750 = vmatprep.subr.bf16.mxu0 %v3335
  %4751 = vmatpush1.bf16.msra.mxu0 %v3334
  %4752 = vmatprep.subr.bf16.mxu0 %v3340
  %4753 = vmatpush1.bf16.msra.mxu0 %v3339
  %4754 = vmatprep.subr.bf16.mxu0 %v3345
  %4755 = vmatpush1.bf16.msra.mxu0 %v3344
  %4756 = vmatprep.subr.bf16.mxu0 %v3350
  %4757 = vmatpush1.bf16.msra.mxu0 %v3349
  %4758 = vmatprep.subr.bf16.mxu0 %v3355
  %4759 = vmatpush1.bf16.msra.mxu0 %v3354
  %4760 = vmatprep.subr.bf16.mxu0 %v3360
  %4761 = vmatpush1.bf16.msra.mxu0 %v3359
  %4762 = vmatprep.subr.bf16.mxu0 %v3365
  %4763 = vmatpush1.bf16.msra.mxu0 %v3364
  %4764 = vmatprep.subr.bf16.mxu0 %v3370
  %4765 = vmatpush1.bf16.msra.mxu0 %v3369
  %4766 = vmatprep.mubr.bf16.mxu0 %v955
  %4767 = vmatmul.mubr.bf16.gmra.mrb[0].mxu0 %v954
  %v4768 = vpop.f32.mrb[0].mxu0
  %v4769 = vadd.f32 %v905, %v4768
  %v4770 = vpop.f32.mrb[0].mxu0
  %v4771 = vadd.f32 %v909, %v4770
  %v4772 = vpop.f32.mrb[0].mxu0
  %v4773 = vpop.f32.mrb[0].mxu0
  %4774 = vdwg.mxu0
  %4775 = vmatprep.subr.bf16.mxu0 %v3375
  %4776 = vmatpush1.bf16.msra.mxu0 %v3374
  %4777 = vmatprep.subr.bf16.mxu0 %v3380
  %4778 = vmatpush1.bf16.msra.mxu0 %v3379
  %4779 = vmatprep.subr.bf16.mxu0 %v3385
  %4780 = vmatpush1.bf16.msra.mxu0 %v3384
  %4781 = vmatprep.subr.bf16.mxu0 %v3390
  %4782 = vmatpush1.bf16.msra.mxu0 %v3389
  %4783 = vmatprep.subr.bf16.mxu0 %v3395
  %4784 = vmatpush1.bf16.msra.mxu0 %v3394
  %4785 = vmatprep.subr.bf16.mxu0 %v3400
  %4786 = vmatpush1.bf16.msra.mxu0 %v3399
  %4787 = vmatprep.subr.bf16.mxu0 %v3405
  %4788 = vmatpush1.bf16.msra.mxu0 %v3404
  %4789 = vmatprep.subr.bf16.mxu0 %v3410
  %4790 = vmatpush1.bf16.msra.mxu0 %v3409
  %4791 = vmatprep.subr.bf16.mxu0 %v3415
  %4792 = vmatpush1.bf16.msra.mxu0 %v3414
  %4793 = vmatprep.subr.bf16.mxu0 %v3420
  %4794 = vmatpush1.bf16.msra.mxu0 %v3419
  %4795 = vmatprep.subr.bf16.mxu0 %v3425
  %4796 = vmatpush1.bf16.msra.mxu0 %v3424
  %4797 = vmatprep.subr.bf16.mxu0 %v3430
  %4798 = vmatpush1.bf16.msra.mxu0 %v3429
  %4799 = vmatprep.subr.bf16.mxu0 %v3435
  %4800 = vmatpush1.bf16.msra.mxu0 %v3434
  %4801 = vmatprep.subr.bf16.mxu0 %v3440
  %4802 = vmatpush1.bf16.msra.mxu0 %v3439
  %4803 = vmatprep.subr.bf16.mxu0 %v3445
  %4804 = vmatpush1.bf16.msra.mxu0 %v3444
  %4805 = vmatprep.subr.bf16.mxu0 %v3450
  %4806 = vmatpush1.bf16.msra.mxu0 %v3449
  %4807 = vmatprep.mubr.bf16.mxu0 %v957
  %4808 = vmatmul.mubr.bf16.gmra.mrb[0].mxu0 %v956
  %v4809 = vpop.f32.mrb[0].mxu0
  %v4810 = vadd.f32 %v4769, %v4809
  %v4811 = vpop.f32.mrb[0].mxu0
  %v4812 = vadd.f32 %v4771, %v4811
  %v4813 = vpop.f32.mrb[0].mxu0
  %v4814 = vpop.f32.mrb[0].mxu0
  %4815 = vdwg.mxu0
  %4816 = vmatprep.subr.bf16.mxu0 %v3455
  %4817 = vmatpush1.bf16.msra.mxu0 %v3454
  %4818 = vmatprep.subr.bf16.mxu0 %v3460
  %4819 = vmatpush1.bf16.msra.mxu0 %v3459
  %4820 = vmatprep.subr.bf16.mxu0 %v3465
  %4821 = vmatpush1.bf16.msra.mxu0 %v3464
  %4822 = vmatprep.subr.bf16.mxu0 %v3470
  %4823 = vmatpush1.bf16.msra.mxu0 %v3469
  %4824 = vmatprep.subr.bf16.mxu0 %v3475
  %4825 = vmatpush1.bf16.msra.mxu0 %v3474
  %4826 = vmatprep.subr.bf16.mxu0 %v3480
  %4827 = vmatpush1.bf16.msra.mxu0 %v3479
  %4828 = vmatprep.subr.bf16.mxu0 %v3485
  %4829 = vmatpush1.bf16.msra.mxu0 %v3484
  %4830 = vmatprep.subr.bf16.mxu0 %v3490
  %4831 = vmatpush1.bf16.msra.mxu0 %v3489
  %4832 = vmatprep.subr.bf16.mxu0 %v3495
  %4833 = vmatpush1.bf16.msra.mxu0 %v3494
  %4834 = vmatprep.subr.bf16.mxu0 %v3500
  %4835 = vmatpush1.bf16.msra.mxu0 %v3499
  %4836 = vmatprep.subr.bf16.mxu0 %v3505
  %4837 = vmatpush1.bf16.msra.mxu0 %v3504
  %4838 = vmatprep.subr.bf16.mxu0 %v3510
  %4839 = vmatpush1.bf16.msra.mxu0 %v3509
  %4840 = vmatprep.subr.bf16.mxu0 %v3515
  %4841 = vmatpush1.bf16.msra.mxu0 %v3514
  %4842 = vmatprep.subr.bf16.mxu0 %v3520
  %4843 = vmatpush1.bf16.msra.mxu0 %v3519
  %4844 = vmatprep.subr.bf16.mxu0 %v3525
  %4845 = vmatpush1.bf16.msra.mxu0 %v3524
  %4846 = vmatprep.subr.bf16.mxu0 %v3530
  %4847 = vmatpush1.bf16.msra.mxu0 %v3529
  %4848 = vmatprep.mubr.bf16.mxu0 %v959
  %4849 = vmatmul.mubr.bf16.gmra.mrb[0].mxu0 %v958
  %v4850 = vpop.f32.mrb[0].mxu0
  %v4851 = vadd.f32 %v4810, %v4850
  %v4852 = vpop.f32.mrb[0].mxu0
  %v4853 = vadd.f32 %v4812, %v4852
  %v4854 = vpop.f32.mrb[0].mxu0
  %v4855 = vpop.f32.mrb[0].mxu0
  %4856 = vdwg.mxu0
  %4857 = vmatprep.subr.bf16.mxu0 %v3535
  %4858 = vmatpush1.bf16.msra.mxu0 %v3534
  %4859 = vmatprep.subr.bf16.mxu0 %v3540
  %4860 = vmatpush1.bf16.msra.mxu0 %v3539
  %4861 = vmatprep.subr.bf16.mxu0 %v3545
  %4862 = vmatpush1.bf16.msra.mxu0 %v3544
  %4863 = vmatprep.subr.bf16.mxu0 %v3550
  %4864 = vmatpush1.bf16.msra.mxu0 %v3549
  %4865 = vmatprep.subr.bf16.mxu0 %v3555
  %4866 = vmatpush1.bf16.msra.mxu0 %v3554
  %4867 = vmatprep.subr.bf16.mxu0 %v3560
  %4868 = vmatpush1.bf16.msra.mxu0 %v3559
  %4869 = vmatprep.subr.bf16.mxu0 %v3565
  %4870 = vmatpush1.bf16.msra.mxu0 %v3564
  %4871 = vmatprep.subr.bf16.mxu0 %v3570
  %4872 = vmatpush1.bf16.msra.mxu0 %v3569
  %4873 = vmatprep.subr.bf16.mxu0 %v3575
  %4874 = vmatpush1.bf16.msra.mxu0 %v3574
  %4875 = vmatprep.subr.bf16.mxu0 %v3580
  %4876 = vmatpush1.bf16.msra.mxu0 %v3579
  %4877 = vmatprep.subr.bf16.mxu0 %v3585
  %4878 = vmatpush1.bf16.msra.mxu0 %v3584
  %4879 = vmatprep.subr.bf16.mxu0 %v3590
  %4880 = vmatpush1.bf16.msra.mxu0 %v3589
  %4881 = vmatprep.subr.bf16.mxu0 %v3595
  %4882 = vmatpush1.bf16.msra.mxu0 %v3594
  %4883 = vmatprep.subr.bf16.mxu0 %v3600
  %4884 = vmatpush1.bf16.msra.mxu0 %v3599
  %4885 = vmatprep.subr.bf16.mxu0 %v3605
  %4886 = vmatpush1.bf16.msra.mxu0 %v3604
  %4887 = vmatprep.subr.bf16.mxu0 %v3610
  %4888 = vmatpush1.bf16.msra.mxu0 %v3609
  %4889 = vmatprep.mubr.bf16.mxu0 %v961
  %4890 = vmatmul.mubr.bf16.gmra.mrb[0].mxu0 %v960
  %v4891 = vpop.f32.mrb[0].mxu0
  %v4892 = vadd.f32 %v4851, %v4891
  %v4893 = vpop.f32.mrb[0].mxu0
  %v4894 = vadd.f32 %v4853, %v4893
  %v4895 = vpop.f32.mrb[0].mxu0
  %v4896 = vpop.f32.mrb[0].mxu0
  %4897 = vdwg.mxu0
  %4898 = vmatprep.subr.bf16.mxu0 %v3615
  %4899 = vmatpush1.bf16.msra.mxu0 %v3614
  %4900 = vmatprep.subr.bf16.mxu0 %v3620
  %4901 = vmatpush1.bf16.msra.mxu0 %v3619
  %4902 = vmatprep.subr.bf16.mxu0 %v3625
  %4903 = vmatpush1.bf16.msra.mxu0 %v3624
  %4904 = vmatprep.subr.bf16.mxu0 %v3630
  %4905 = vmatpush1.bf16.msra.mxu0 %v3629
  %4906 = vmatprep.subr.bf16.mxu0 %v3635
  %4907 = vmatpush1.bf16.msra.mxu0 %v3634
  %4908 = vmatprep.subr.bf16.mxu0 %v3640
  %4909 = vmatpush1.bf16.msra.mxu0 %v3639
  %4910 = vmatprep.subr.bf16.mxu0 %v3645
  %4911 = vmatpush1.bf16.msra.mxu0 %v3644
  %4912 = vmatprep.subr.bf16.mxu0 %v3650
  %4913 = vmatpush1.bf16.msra.mxu0 %v3649
  %4914 = vmatprep.subr.bf16.mxu0 %v3655
  %4915 = vmatpush1.bf16.msra.mxu0 %v3654
  %4916 = vmatprep.subr.bf16.mxu0 %v3660
  %4917 = vmatpush1.bf16.msra.mxu0 %v3659
  %4918 = vmatprep.subr.bf16.mxu0 %v3665
  %4919 = vmatpush1.bf16.msra.mxu0 %v3664
  %4920 = vmatprep.subr.bf16.mxu0 %v3670
  %4921 = vmatpush1.bf16.msra.mxu0 %v3669
  %4922 = vmatprep.subr.bf16.mxu0 %v3675
  %4923 = vmatpush1.bf16.msra.mxu0 %v3674
  %4924 = vmatprep.subr.bf16.mxu0 %v3680
  %4925 = vmatpush1.bf16.msra.mxu0 %v3679
  %4926 = vmatprep.subr.bf16.mxu0 %v3685
  %4927 = vmatpush1.bf16.msra.mxu0 %v3684
  %4928 = vmatprep.subr.bf16.mxu0 %v3690
  %4929 = vmatpush1.bf16.msra.mxu0 %v3689
  %4930 = vmatprep.mubr.bf16.mxu0 %v963
  %4931 = vmatmul.mubr.bf16.gmra.mrb[0].mxu0 %v962
  %v4932 = vpop.f32.mrb[0].mxu0
  %v4933 = vadd.f32 %v4892, %v4932
  %v4934 = vpop.f32.mrb[0].mxu0
  %v4935 = vadd.f32 %v4894, %v4934
  %v4936 = vpop.f32.mrb[0].mxu0
  %v4937 = vpop.f32.mrb[0].mxu0
  %4938 = vdwg.mxu0
  %4939 = vmatprep.subr.bf16.mxu0 %v3695
  %4940 = vmatpush1.bf16.msra.mxu0 %v3694
  %4941 = vmatprep.subr.bf16.mxu0 %v3700
  %4942 = vmatpush1.bf16.msra.mxu0 %v3699
  %4943 = vmatprep.subr.bf16.mxu0 %v3705
  %4944 = vmatpush1.bf16.msra.mxu0 %v3704
  %4945 = vmatprep.subr.bf16.mxu0 %v3710
  %4946 = vmatpush1.bf16.msra.mxu0 %v3709
  %4947 = vmatprep.subr.bf16.mxu0 %v3715
  %4948 = vmatpush1.bf16.msra.mxu0 %v3714
  %4949 = vmatprep.subr.bf16.mxu0 %v3720
  %4950 = vmatpush1.bf16.msra.mxu0 %v3719
  %4951 = vmatprep.subr.bf16.mxu0 %v3725
  %4952 = vmatpush1.bf16.msra.mxu0 %v3724
  %4953 = vmatprep.subr.bf16.mxu0 %v3730
  %4954 = vmatpush1.bf16.msra.mxu0 %v3729
  %4955 = vmatprep.subr.bf16.mxu0 %v3735
  %4956 = vmatpush1.bf16.msra.mxu0 %v3734
  %4957 = vmatprep.subr.bf16.mxu0 %v3740
  %4958 = vmatpush1.bf16.msra.mxu0 %v3739
  %4959 = vmatprep.subr.bf16.mxu0 %v3745
  %4960 = vmatpush1.bf16.msra.mxu0 %v3744
  %4961 = vmatprep.subr.bf16.mxu0 %v3750
  %4962 = vmatpush1.bf16.msra.mxu0 %v3749
  %4963 = vmatprep.subr.bf16.mxu0 %v3755
  %4964 = vmatpush1.bf16.msra.mxu0 %v3754
  %4965 = vmatprep.subr.bf16.mxu0 %v3760
  %4966 = vmatpush1.bf16.msra.mxu0 %v3759
  %4967 = vmatprep.subr.bf16.mxu0 %v3765
  %4968 = vmatpush1.bf16.msra.mxu0 %v3764
  %4969 = vmatprep.subr.bf16.mxu0 %v3770
  %4970 = vmatpush1.bf16.msra.mxu0 %v3769
  %4971 = vmatprep.mubr.bf16.mxu0 %v965
  %4972 = vmatmul.mubr.bf16.gmra.mrb[0].mxu0 %v964
  %v4973 = vpop.f32.mrb[0].mxu0
  %v4974 = vadd.f32 %v4933, %v4973
  %v4975 = vpop.f32.mrb[0].mxu0
  %v4976 = vadd.f32 %v4935, %v4975
  %v4977 = vpop.f32.mrb[0].mxu0
  %v4978 = vpop.f32.mrb[0].mxu0
  %4979 = vdwg.mxu0
  %4980 = vmatprep.subr.bf16.mxu0 %v3775
  %4981 = vmatpush1.bf16.msra.mxu0 %v3774
  %4982 = vmatprep.subr.bf16.mxu0 %v3780
  %4983 = vmatpush1.bf16.msra.mxu0 %v3779
  %4984 = vmatprep.subr.bf16.mxu0 %v3785
  %4985 = vmatpush1.bf16.msra.mxu0 %v3784
  %4986 = vmatprep.subr.bf16.mxu0 %v3790
  %4987 = vmatpush1.bf16.msra.mxu0 %v3789
  %4988 = vmatprep.subr.bf16.mxu0 %v3795
  %4989 = vmatpush1.bf16.msra.mxu0 %v3794
  %4990 = vmatprep.subr.bf16.mxu0 %v3800
  %4991 = vmatpush1.bf16.msra.mxu0 %v3799
  %4992 = vmatprep.subr.bf16.mxu0 %v3805
  %4993 = vmatpush1.bf16.msra.mxu0 %v3804
  %4994 = vmatprep.subr.bf16.mxu0 %v3810
  %4995 = vmatpush1.bf16.msra.mxu0 %v3809
  %4996 = vmatprep.subr.bf16.mxu0 %v3815
  %4997 = vmatpush1.bf16.msra.mxu0 %v3814
  %4998 = vmatprep.subr.bf16.mxu0 %v3820
  %4999 = vmatpush1.bf16.msra.mxu0 %v3819
  %5000 = vmatprep.subr.bf16.mxu0 %v3825
  %5001 = vmatpush1.bf16.msra.mxu0 %v3824
  %5002 = vmatprep.subr.bf16.mxu0 %v3830
  %5003 = vmatpush1.bf16.msra.mxu0 %v3829
  %5004 = vmatprep.subr.bf16.mxu0 %v3835
  %5005 = vmatpush1.bf16.msra.mxu0 %v3834
  %5006 = vmatprep.subr.bf16.mxu0 %v3840
  %5007 = vmatpush1.bf16.msra.mxu0 %v3839
  %5008 = vmatprep.subr.bf16.mxu0 %v3845
  %5009 = vmatpush1.bf16.msra.mxu0 %v3844
  %5010 = vmatprep.subr.bf16.mxu0 %v3850
  %5011 = vmatpush1.bf16.msra.mxu0 %v3849
  %5012 = vmatprep.mubr.bf16.mxu0 %v967
  %5013 = vmatmul.mubr.bf16.gmra.mrb[0].mxu0 %v966
  %v5014 = vpop.f32.mrb[0].mxu0
  %v5015 = vadd.f32 %v4974, %v5014
  %v5016 = vpop.f32.mrb[0].mxu0
  %v5017 = vadd.f32 %v4976, %v5016
  %v5018 = vpop.f32.mrb[0].mxu0
  %v5019 = vpop.f32.mrb[0].mxu0
  %5020 = vdwg.mxu0
  %5021 = vmatprep.subr.bf16.mxu0 %v3855
  %5022 = vmatpush1.bf16.msra.mxu0 %v3854
  %5023 = vmatprep.subr.bf16.mxu0 %v3860
  %5024 = vmatpush1.bf16.msra.mxu0 %v3859
  %5025 = vmatprep.subr.bf16.mxu0 %v3865
  %5026 = vmatpush1.bf16.msra.mxu0 %v3864
  %5027 = vmatprep.subr.bf16.mxu0 %v3870
  %5028 = vmatpush1.bf16.msra.mxu0 %v3869
  %5029 = vmatprep.subr.bf16.mxu0 %v3875
  %5030 = vmatpush1.bf16.msra.mxu0 %v3874
  %5031 = vmatprep.subr.bf16.mxu0 %v3880
  %5032 = vmatpush1.bf16.msra.mxu0 %v3879
  %5033 = vmatprep.subr.bf16.mxu0 %v3885
  %5034 = vmatpush1.bf16.msra.mxu0 %v3884
  %5035 = vmatprep.subr.bf16.mxu0 %v3890
  %5036 = vmatpush1.bf16.msra.mxu0 %v3889
  %5037 = vmatprep.subr.bf16.mxu0 %v3895
  %5038 = vmatpush1.bf16.msra.mxu0 %v3894
  %5039 = vmatprep.subr.bf16.mxu0 %v3900
  %5040 = vmatpush1.bf16.msra.mxu0 %v3899
  %5041 = vmatprep.subr.bf16.mxu0 %v3905
  %5042 = vmatpush1.bf16.msra.mxu0 %v3904
  %5043 = vmatprep.subr.bf16.mxu0 %v3910
  %5044 = vmatpush1.bf16.msra.mxu0 %v3909
  %5045 = vmatprep.subr.bf16.mxu0 %v3915
  %5046 = vmatpush1.bf16.msra.mxu0 %v3914
  %5047 = vmatprep.subr.bf16.mxu0 %v3920
  %5048 = vmatpush1.bf16.msra.mxu0 %v3919
  %5049 = vmatprep.subr.bf16.mxu0 %v3925
  %5050 = vmatpush1.bf16.msra.mxu0 %v3924
  %5051 = vmatprep.subr.bf16.mxu0 %v3930
  %5052 = vmatpush1.bf16.msra.mxu0 %v3929
  %5053 = vmatprep.mubr.bf16.mxu0 %v969
  %5054 = vmatmul.mubr.bf16.gmra.mrb[0].mxu0 %v968
  %v5055 = vpop.f32.mrb[0].mxu0
  %v5056 = vadd.f32 %v5015, %v5055
  %v5057 = vpop.f32.mrb[0].mxu0
  %v5058 = vadd.f32 %v5017, %v5057
  %v5059 = vpop.f32.mrb[0].mxu0
  %v5060 = vpop.f32.mrb[0].mxu0
  %5061 = vdwg.mxu0
  %5062 = vmatprep.subr.bf16.mxu0 %v3935
  %5063 = vmatpush1.bf16.msra.mxu0 %v3934
  %5064 = vmatprep.subr.bf16.mxu0 %v3940
  %5065 = vmatpush1.bf16.msra.mxu0 %v3939
  %5066 = vmatprep.subr.bf16.mxu0 %v3945
  %5067 = vmatpush1.bf16.msra.mxu0 %v3944
  %5068 = vmatprep.subr.bf16.mxu0 %v3950
  %5069 = vmatpush1.bf16.msra.mxu0 %v3949
  %5070 = vmatprep.subr.bf16.mxu0 %v3955
  %5071 = vmatpush1.bf16.msra.mxu0 %v3954
  %5072 = vmatprep.subr.bf16.mxu0 %v3960
  %5073 = vmatpush1.bf16.msra.mxu0 %v3959
  %5074 = vmatprep.subr.bf16.mxu0 %v3965
  %5075 = vmatpush1.bf16.msra.mxu0 %v3964
  %5076 = vmatprep.subr.bf16.mxu0 %v3970
  %5077 = vmatpush1.bf16.msra.mxu0 %v3969
  %5078 = vmatprep.subr.bf16.mxu0 %v3975
  %5079 = vmatpush1.bf16.msra.mxu0 %v3974
  %5080 = vmatprep.subr.bf16.mxu0 %v3980
  %5081 = vmatpush1.bf16.msra.mxu0 %v3979
  %5082 = vmatprep.subr.bf16.mxu0 %v3985
  %5083 = vmatpush1.bf16.msra.mxu0 %v3984
  %5084 = vmatprep.subr.bf16.mxu0 %v3990
  %5085 = vmatpush1.bf16.msra.mxu0 %v3989
  %5086 = vmatprep.subr.bf16.mxu0 %v3995
  %5087 = vmatpush1.bf16.msra.mxu0 %v3994
  %5088 = vmatprep.subr.bf16.mxu0 %v4000
  %5089 = vmatpush1.bf16.msra.mxu0 %v3999
  %5090 = vmatprep.subr.bf16.mxu0 %v4005
  %5091 = vmatpush1.bf16.msra.mxu0 %v4004
  %5092 = vmatprep.subr.bf16.mxu0 %v4010
  %5093 = vmatpush1.bf16.msra.mxu0 %v4009
  %5094 = vmatprep.mubr.bf16.mxu0 %v971
  %5095 = vmatmul.mubr.bf16.gmra.mrb[0].mxu0 %v970
  %v5096 = vpop.f32.mrb[0].mxu0
  %v5097 = vadd.f32 %v5056, %v5096
  %v5098 = vpop.f32.mrb[0].mxu0
  %v5099 = vadd.f32 %v5058, %v5098
  %v5100 = vpop.f32.mrb[0].mxu0
  %v5101 = vpop.f32.mrb[0].mxu0
  %5102 = vdwg.mxu0
  %5103 = vmatprep.subr.bf16.mxu0 %v3297
  %5104 = vmatpush1.bf16.msra.mxu0 %v3296
  %5105 = vmatprep.subr.bf16.mxu0 %v3302
  %5106 = vmatpush1.bf16.msra.mxu0 %v3301
  %5107 = vmatprep.subr.bf16.mxu0 %v3307
  %5108 = vmatpush1.bf16.msra.mxu0 %v3306
  %5109 = vmatprep.subr.bf16.mxu0 %v3312
  %5110 = vmatpush1.bf16.msra.mxu0 %v3311
  %5111 = vmatprep.subr.bf16.mxu0 %v3317
  %5112 = vmatpush1.bf16.msra.mxu0 %v3316
  %5113 = vmatprep.subr.bf16.mxu0 %v3322
  %5114 = vmatpush1.bf16.msra.mxu0 %v3321
  %5115 = vmatprep.subr.bf16.mxu0 %v3327
  %5116 = vmatpush1.bf16.msra.mxu0 %v3326
  %5117 = vmatprep.subr.bf16.mxu0 %v3332
  %5118 = vmatpush1.bf16.msra.mxu0 %v3331
  %5119 = vmatprep.subr.bf16.mxu0 %v3337
  %5120 = vmatpush1.bf16.msra.mxu0 %v3336
  %5121 = vmatprep.subr.bf16.mxu0 %v3342
  %5122 = vmatpush1.bf16.msra.mxu0 %v3341
  %5123 = vmatprep.subr.bf16.mxu0 %v3347
  %5124 = vmatpush1.bf16.msra.mxu0 %v3346
  %5125 = vmatprep.subr.bf16.mxu0 %v3352
  %5126 = vmatpush1.bf16.msra.mxu0 %v3351
  %5127 = vmatprep.subr.bf16.mxu0 %v3357
  %5128 = vmatpush1.bf16.msra.mxu0 %v3356
  %5129 = vmatprep.subr.bf16.mxu0 %v3362
  %5130 = vmatpush1.bf16.msra.mxu0 %v3361
  %5131 = vmatprep.subr.bf16.mxu0 %v3367
  %5132 = vmatpush1.bf16.msra.mxu0 %v3366
  %5133 = vmatprep.subr.bf16.mxu0 %v3372
  %5134 = vmatpush1.bf16.msra.mxu0 %v3371
  %5135 = vmatprep.mubr.bf16.mxu0 %v955
  %5136 = vmatmul.mubr.bf16.gmra.mrb[0].mxu0 %v954
  %v5137 = vpop.f32.mrb[0].mxu0
  %v5138 = vadd.f32 %v913, %v5137
  %v5139 = vpop.f32.mrb[0].mxu0
  %v5140 = vadd.f32 %v917, %v5139
  %v5141 = vpop.f32.mrb[0].mxu0
  %v5142 = vpop.f32.mrb[0].mxu0
  %5143 = vdwg.mxu0
  %5144 = vmatprep.subr.bf16.mxu0 %v3377
  %5145 = vmatpush1.bf16.msra.mxu0 %v3376
  %5146 = vmatprep.subr.bf16.mxu0 %v3382
  %5147 = vmatpush1.bf16.msra.mxu0 %v3381
  %5148 = vmatprep.subr.bf16.mxu0 %v3387
  %5149 = vmatpush1.bf16.msra.mxu0 %v3386
  %5150 = vmatprep.subr.bf16.mxu0 %v3392
  %5151 = vmatpush1.bf16.msra.mxu0 %v3391
  %5152 = vmatprep.subr.bf16.mxu0 %v3397
  %5153 = vmatpush1.bf16.msra.mxu0 %v3396
  %5154 = vmatprep.subr.bf16.mxu0 %v3402
  %5155 = vmatpush1.bf16.msra.mxu0 %v3401
  %5156 = vmatprep.subr.bf16.mxu0 %v3407
  %5157 = vmatpush1.bf16.msra.mxu0 %v3406
  %5158 = vmatprep.subr.bf16.mxu0 %v3412
  %5159 = vmatpush1.bf16.msra.mxu0 %v3411
  %5160 = vmatprep.subr.bf16.mxu0 %v3417
  %5161 = vmatpush1.bf16.msra.mxu0 %v3416
  %5162 = vmatprep.subr.bf16.mxu0 %v3422
  %5163 = vmatpush1.bf16.msra.mxu0 %v3421
  %5164 = vmatprep.subr.bf16.mxu0 %v3427
  %5165 = vmatpush1.bf16.msra.mxu0 %v3426
  %5166 = vmatprep.subr.bf16.mxu0 %v3432
  %5167 = vmatpush1.bf16.msra.mxu0 %v3431
  %5168 = vmatprep.subr.bf16.mxu0 %v3437
  %5169 = vmatpush1.bf16.msra.mxu0 %v3436
  %5170 = vmatprep.subr.bf16.mxu0 %v3442
  %5171 = vmatpush1.bf16.msra.mxu0 %v3441
  %5172 = vmatprep.subr.bf16.mxu0 %v3447
  %5173 = vmatpush1.bf16.msra.mxu0 %v3446
  %5174 = vmatprep.subr.bf16.mxu0 %v3452
  %5175 = vmatpush1.bf16.msra.mxu0 %v3451
  %5176 = vmatprep.mubr.bf16.mxu0 %v957
  %5177 = vmatmul.mubr.bf16.gmra.mrb[0].mxu0 %v956
  %v5178 = vpop.f32.mrb[0].mxu0
  %v5179 = vadd.f32 %v5138, %v5178
  %v5180 = vpop.f32.mrb[0].mxu0
  %v5181 = vadd.f32 %v5140, %v5180
  %v5182 = vpop.f32.mrb[0].mxu0
  %v5183 = vpop.f32.mrb[0].mxu0
  %5184 = vdwg.mxu0
  %5185 = vmatprep.subr.bf16.mxu0 %v3457
  %5186 = vmatpush1.bf16.msra.mxu0 %v3456
  %5187 = vmatprep.subr.bf16.mxu0 %v3462
  %5188 = vmatpush1.bf16.msra.mxu0 %v3461
  %5189 = vmatprep.subr.bf16.mxu0 %v3467
  %5190 = vmatpush1.bf16.msra.mxu0 %v3466
  %5191 = vmatprep.subr.bf16.mxu0 %v3472
  %5192 = vmatpush1.bf16.msra.mxu0 %v3471
  %5193 = vmatprep.subr.bf16.mxu0 %v3477
  %5194 = vmatpush1.bf16.msra.mxu0 %v3476
  %5195 = vmatprep.subr.bf16.mxu0 %v3482
  %5196 = vmatpush1.bf16.msra.mxu0 %v3481
  %5197 = vmatprep.subr.bf16.mxu0 %v3487
  %5198 = vmatpush1.bf16.msra.mxu0 %v3486
  %5199 = vmatprep.subr.bf16.mxu0 %v3492
  %5200 = vmatpush1.bf16.msra.mxu0 %v3491
  %5201 = vmatprep.subr.bf16.mxu0 %v3497
  %5202 = vmatpush1.bf16.msra.mxu0 %v3496
  %5203 = vmatprep.subr.bf16.mxu0 %v3502
  %5204 = vmatpush1.bf16.msra.mxu0 %v3501
  %5205 = vmatprep.subr.bf16.mxu0 %v3507
  %5206 = vmatpush1.bf16.msra.mxu0 %v3506
  %5207 = vmatprep.subr.bf16.mxu0 %v3512
  %5208 = vmatpush1.bf16.msra.mxu0 %v3511
  %5209 = vmatprep.subr.bf16.mxu0 %v3517
  %5210 = vmatpush1.bf16.msra.mxu0 %v3516
  %5211 = vmatprep.subr.bf16.mxu0 %v3522
  %5212 = vmatpush1.bf16.msra.mxu0 %v3521
  %5213 = vmatprep.subr.bf16.mxu0 %v3527
  %5214 = vmatpush1.bf16.msra.mxu0 %v3526
  %5215 = vmatprep.subr.bf16.mxu0 %v3532
  %5216 = vmatpush1.bf16.msra.mxu0 %v3531
  %5217 = vmatprep.mubr.bf16.mxu0 %v959
  %5218 = vmatmul.mubr.bf16.gmra.mrb[0].mxu0 %v958
  %v5219 = vpop.f32.mrb[0].mxu0
  %v5220 = vadd.f32 %v5179, %v5219
  %v5221 = vpop.f32.mrb[0].mxu0
  %v5222 = vadd.f32 %v5181, %v5221
  %v5223 = vpop.f32.mrb[0].mxu0
  %v5224 = vpop.f32.mrb[0].mxu0
  %5225 = vdwg.mxu0
  %5226 = vmatprep.subr.bf16.mxu0 %v3537
  %5227 = vmatpush1.bf16.msra.mxu0 %v3536
  %5228 = vmatprep.subr.bf16.mxu0 %v3542
  %5229 = vmatpush1.bf16.msra.mxu0 %v3541
  %5230 = vmatprep.subr.bf16.mxu0 %v3547
  %5231 = vmatpush1.bf16.msra.mxu0 %v3546
  %5232 = vmatprep.subr.bf16.mxu0 %v3552
  %5233 = vmatpush1.bf16.msra.mxu0 %v3551
  %5234 = vmatprep.subr.bf16.mxu0 %v3557
  %5235 = vmatpush1.bf16.msra.mxu0 %v3556
  %5236 = vmatprep.subr.bf16.mxu0 %v3562
  %5237 = vmatpush1.bf16.msra.mxu0 %v3561
  %5238 = vmatprep.subr.bf16.mxu0 %v3567
  %5239 = vmatpush1.bf16.msra.mxu0 %v3566
  %5240 = vmatprep.subr.bf16.mxu0 %v3572
  %5241 = vmatpush1.bf16.msra.mxu0 %v3571
  %5242 = vmatprep.subr.bf16.mxu0 %v3577
  %5243 = vmatpush1.bf16.msra.mxu0 %v3576
  %5244 = vmatprep.subr.bf16.mxu0 %v3582
  %5245 = vmatpush1.bf16.msra.mxu0 %v3581
  %5246 = vmatprep.subr.bf16.mxu0 %v3587
  %5247 = vmatpush1.bf16.msra.mxu0 %v3586
  %5248 = vmatprep.subr.bf16.mxu0 %v3592
  %5249 = vmatpush1.bf16.msra.mxu0 %v3591
  %5250 = vmatprep.subr.bf16.mxu0 %v3597
  %5251 = vmatpush1.bf16.msra.mxu0 %v3596
  %5252 = vmatprep.subr.bf16.mxu0 %v3602
  %5253 = vmatpush1.bf16.msra.mxu0 %v3601
  %5254 = vmatprep.subr.bf16.mxu0 %v3607
  %5255 = vmatpush1.bf16.msra.mxu0 %v3606
  %5256 = vmatprep.subr.bf16.mxu0 %v3612
  %5257 = vmatpush1.bf16.msra.mxu0 %v3611
  %5258 = vmatprep.mubr.bf16.mxu0 %v961
  %5259 = vmatmul.mubr.bf16.gmra.mrb[0].mxu0 %v960
  %v5260 = vpop.f32.mrb[0].mxu0
  %v5261 = vadd.f32 %v5220, %v5260
  %v5262 = vpop.f32.mrb[0].mxu0
  %v5263 = vadd.f32 %v5222, %v5262
  %v5264 = vpop.f32.mrb[0].mxu0
  %v5265 = vpop.f32.mrb[0].mxu0
  %5266 = vdwg.mxu0
  %5267 = vmatprep.subr.bf16.mxu0 %v3617
  %5268 = vmatpush1.bf16.msra.mxu0 %v3616
  %5269 = vmatprep.subr.bf16.mxu0 %v3622
  %5270 = vmatpush1.bf16.msra.mxu0 %v3621
  %5271 = vmatprep.subr.bf16.mxu0 %v3627
  %5272 = vmatpush1.bf16.msra.mxu0 %v3626
  %5273 = vmatprep.subr.bf16.mxu0 %v3632
  %5274 = vmatpush1.bf16.msra.mxu0 %v3631
  %5275 = vmatprep.subr.bf16.mxu0 %v3637
  %5276 = vmatpush1.bf16.msra.mxu0 %v3636
  %5277 = vmatprep.subr.bf16.mxu0 %v3642
  %5278 = vmatpush1.bf16.msra.mxu0 %v3641
  %5279 = vmatprep.subr.bf16.mxu0 %v3647
  %5280 = vmatpush1.bf16.msra.mxu0 %v3646
  %5281 = vmatprep.subr.bf16.mxu0 %v3652
  %5282 = vmatpush1.bf16.msra.mxu0 %v3651
  %5283 = vmatprep.subr.bf16.mxu0 %v3657
  %5284 = vmatpush1.bf16.msra.mxu0 %v3656
  %5285 = vmatprep.subr.bf16.mxu0 %v3662
  %5286 = vmatpush1.bf16.msra.mxu0 %v3661
  %5287 = vmatprep.subr.bf16.mxu0 %v3667
  %5288 = vmatpush1.bf16.msra.mxu0 %v3666
  %5289 = vmatprep.subr.bf16.mxu0 %v3672
  %5290 = vmatpush1.bf16.msra.mxu0 %v3671
  %5291 = vmatprep.subr.bf16.mxu0 %v3677
  %5292 = vmatpush1.bf16.msra.mxu0 %v3676
  %5293 = vmatprep.subr.bf16.mxu0 %v3682
  %5294 = vmatpush1.bf16.msra.mxu0 %v3681
  %5295 = vmatprep.subr.bf16.mxu0 %v3687
  %5296 = vmatpush1.bf16.msra.mxu0 %v3686
  %5297 = vmatprep.subr.bf16.mxu0 %v3692
  %5298 = vmatpush1.bf16.msra.mxu0 %v3691
  %5299 = vmatprep.mubr.bf16.mxu0 %v963
  %5300 = vmatmul.mubr.bf16.gmra.mrb[0].mxu0 %v962
  %v5301 = vpop.f32.mrb[0].mxu0
  %v5302 = vadd.f32 %v5261, %v5301
  %v5303 = vpop.f32.mrb[0].mxu0
  %v5304 = vadd.f32 %v5263, %v5303
  %v5305 = vpop.f32.mrb[0].mxu0
  %v5306 = vpop.f32.mrb[0].mxu0
  %5307 = vdwg.mxu0
  %5308 = vmatprep.subr.bf16.mxu0 %v3697
  %5309 = vmatpush1.bf16.msra.mxu0 %v3696
  %5310 = vmatprep.subr.bf16.mxu0 %v3702
  %5311 = vmatpush1.bf16.msra.mxu0 %v3701
  %5312 = vmatprep.subr.bf16.mxu0 %v3707
  %5313 = vmatpush1.bf16.msra.mxu0 %v3706
  %5314 = vmatprep.subr.bf16.mxu0 %v3712
  %5315 = vmatpush1.bf16.msra.mxu0 %v3711
  %5316 = vmatprep.subr.bf16.mxu0 %v3717
  %5317 = vmatpush1.bf16.msra.mxu0 %v3716
  %5318 = vmatprep.subr.bf16.mxu0 %v3722
  %5319 = vmatpush1.bf16.msra.mxu0 %v3721
  %5320 = vmatprep.subr.bf16.mxu0 %v3727
  %5321 = vmatpush1.bf16.msra.mxu0 %v3726
  %5322 = vmatprep.subr.bf16.mxu0 %v3732
  %5323 = vmatpush1.bf16.msra.mxu0 %v3731
  %5324 = vmatprep.subr.bf16.mxu0 %v3737
  %5325 = vmatpush1.bf16.msra.mxu0 %v3736
  %5326 = vmatprep.subr.bf16.mxu0 %v3742
  %5327 = vmatpush1.bf16.msra.mxu0 %v3741
  %5328 = vmatprep.subr.bf16.mxu0 %v3747
  %5329 = vmatpush1.bf16.msra.mxu0 %v3746
  %5330 = vmatprep.subr.bf16.mxu0 %v3752
  %5331 = vmatpush1.bf16.msra.mxu0 %v3751
  %5332 = vmatprep.subr.bf16.mxu0 %v3757
  %5333 = vmatpush1.bf16.msra.mxu0 %v3756
  %5334 = vmatprep.subr.bf16.mxu0 %v3762
  %5335 = vmatpush1.bf16.msra.mxu0 %v3761
  %5336 = vmatprep.subr.bf16.mxu0 %v3767
  %5337 = vmatpush1.bf16.msra.mxu0 %v3766
  %5338 = vmatprep.subr.bf16.mxu0 %v3772
  %5339 = vmatpush1.bf16.msra.mxu0 %v3771
  %5340 = vmatprep.mubr.bf16.mxu0 %v965
  %5341 = vmatmul.mubr.bf16.gmra.mrb[0].mxu0 %v964
  %v5342 = vpop.f32.mrb[0].mxu0
  %v5343 = vadd.f32 %v5302, %v5342
  %v5344 = vpop.f32.mrb[0].mxu0
  %v5345 = vadd.f32 %v5304, %v5344
  %v5346 = vpop.f32.mrb[0].mxu0
  %v5347 = vpop.f32.mrb[0].mxu0
  %5348 = vdwg.mxu0
  %5349 = vmatprep.subr.bf16.mxu0 %v3777
  %5350 = vmatpush1.bf16.msra.mxu0 %v3776
  %5351 = vmatprep.subr.bf16.mxu0 %v3782
  %5352 = vmatpush1.bf16.msra.mxu0 %v3781
  %5353 = vmatprep.subr.bf16.mxu0 %v3787
  %5354 = vmatpush1.bf16.msra.mxu0 %v3786
  %5355 = vmatprep.subr.bf16.mxu0 %v3792
  %5356 = vmatpush1.bf16.msra.mxu0 %v3791
  %5357 = vmatprep.subr.bf16.mxu0 %v3797
  %5358 = vmatpush1.bf16.msra.mxu0 %v3796
  %5359 = vmatprep.subr.bf16.mxu0 %v3802
  %5360 = vmatpush1.bf16.msra.mxu0 %v3801
  %5361 = vmatprep.subr.bf16.mxu0 %v3807
  %5362 = vmatpush1.bf16.msra.mxu0 %v3806
  %5363 = vmatprep.subr.bf16.mxu0 %v3812
  %5364 = vmatpush1.bf16.msra.mxu0 %v3811
  %5365 = vmatprep.subr.bf16.mxu0 %v3817
  %5366 = vmatpush1.bf16.msra.mxu0 %v3816
  %5367 = vmatprep.subr.bf16.mxu0 %v3822
  %5368 = vmatpush1.bf16.msra.mxu0 %v3821
  %5369 = vmatprep.subr.bf16.mxu0 %v3827
  %5370 = vmatpush1.bf16.msra.mxu0 %v3826
  %5371 = vmatprep.subr.bf16.mxu0 %v3832
  %5372 = vmatpush1.bf16.msra.mxu0 %v3831
  %5373 = vmatprep.subr.bf16.mxu0 %v3837
  %5374 = vmatpush1.bf16.msra.mxu0 %v3836
  %5375 = vmatprep.subr.bf16.mxu0 %v3842
  %5376 = vmatpush1.bf16.msra.mxu0 %v3841
  %5377 = vmatprep.subr.bf16.mxu0 %v3847
  %5378 = vmatpush1.bf16.msra.mxu0 %v3846
  %5379 = vmatprep.subr.bf16.mxu0 %v3852
  %5380 = vmatpush1.bf16.msra.mxu0 %v3851
  %5381 = vmatprep.mubr.bf16.mxu0 %v967
  %5382 = vmatmul.mubr.bf16.gmra.mrb[0].mxu0 %v966
  %v5383 = vpop.f32.mrb[0].mxu0
  %v5384 = vadd.f32 %v5343, %v5383
  %v5385 = vpop.f32.mrb[0].mxu0
  %v5386 = vadd.f32 %v5345, %v5385
  %v5387 = vpop.f32.mrb[0].mxu0
  %v5388 = vpop.f32.mrb[0].mxu0
  %5389 = vdwg.mxu0
  %5390 = vmatprep.subr.bf16.mxu0 %v3857
  %5391 = vmatpush1.bf16.msra.mxu0 %v3856
  %5392 = vmatprep.subr.bf16.mxu0 %v3862
  %5393 = vmatpush1.bf16.msra.mxu0 %v3861
  %5394 = vmatprep.subr.bf16.mxu0 %v3867
  %5395 = vmatpush1.bf16.msra.mxu0 %v3866
  %5396 = vmatprep.subr.bf16.mxu0 %v3872
  %5397 = vmatpush1.bf16.msra.mxu0 %v3871
  %5398 = vmatprep.subr.bf16.mxu0 %v3877
  %5399 = vmatpush1.bf16.msra.mxu0 %v3876
  %5400 = vmatprep.subr.bf16.mxu0 %v3882
  %5401 = vmatpush1.bf16.msra.mxu0 %v3881
  %5402 = vmatprep.subr.bf16.mxu0 %v3887
  %5403 = vmatpush1.bf16.msra.mxu0 %v3886
  %5404 = vmatprep.subr.bf16.mxu0 %v3892
  %5405 = vmatpush1.bf16.msra.mxu0 %v3891
  %5406 = vmatprep.subr.bf16.mxu0 %v3897
  %5407 = vmatpush1.bf16.msra.mxu0 %v3896
  %5408 = vmatprep.subr.bf16.mxu0 %v3902
  %5409 = vmatpush1.bf16.msra.mxu0 %v3901
  %5410 = vmatprep.subr.bf16.mxu0 %v3907
  %5411 = vmatpush1.bf16.msra.mxu0 %v3906
  %5412 = vmatprep.subr.bf16.mxu0 %v3912
  %5413 = vmatpush1.bf16.msra.mxu0 %v3911
  %5414 = vmatprep.subr.bf16.mxu0 %v3917
  %5415 = vmatpush1.bf16.msra.mxu0 %v3916
  %5416 = vmatprep.subr.bf16.mxu0 %v3922
  %5417 = vmatpush1.bf16.msra.mxu0 %v3921
  %5418 = vmatprep.subr.bf16.mxu0 %v3927
  %5419 = vmatpush1.bf16.msra.mxu0 %v3926
  %5420 = vmatprep.subr.bf16.mxu0 %v3932
  %5421 = vmatpush1.bf16.msra.mxu0 %v3931
  %5422 = vmatprep.mubr.bf16.mxu0 %v969
  %5423 = vmatmul.mubr.bf16.gmra.mrb[0].mxu0 %v968
  %v5424 = vpop.f32.mrb[0].mxu0
  %v5425 = vadd.f32 %v5384, %v5424
  %v5426 = vpop.f32.mrb[0].mxu0
  %v5427 = vadd.f32 %v5386, %v5426
  %v5428 = vpop.f32.mrb[0].mxu0
  %v5429 = vpop.f32.mrb[0].mxu0
  %5430 = vdwg.mxu0
  %5431 = vmatprep.subr.bf16.mxu0 %v3937
  %5432 = vmatpush1.bf16.msra.mxu0 %v3936
  %5433 = vmatprep.subr.bf16.mxu0 %v3942
  %5434 = vmatpush1.bf16.msra.mxu0 %v3941
  %5435 = vmatprep.subr.bf16.mxu0 %v3947
  %5436 = vmatpush1.bf16.msra.mxu0 %v3946
  %5437 = vmatprep.subr.bf16.mxu0 %v3952
  %5438 = vmatpush1.bf16.msra.mxu0 %v3951
  %5439 = vmatprep.subr.bf16.mxu0 %v3957
  %5440 = vmatpush1.bf16.msra.mxu0 %v3956
  %5441 = vmatprep.subr.bf16.mxu0 %v3962
  %5442 = vmatpush1.bf16.msra.mxu0 %v3961
  %5443 = vmatprep.subr.bf16.mxu0 %v3967
  %5444 = vmatpush1.bf16.msra.mxu0 %v3966
  %5445 = vmatprep.subr.bf16.mxu0 %v3972
  %5446 = vmatpush1.bf16.msra.mxu0 %v3971
  %5447 = vmatprep.subr.bf16.mxu0 %v3977
  %5448 = vmatpush1.bf16.msra.mxu0 %v3976
  %5449 = vmatprep.subr.bf16.mxu0 %v3982
  %5450 = vmatpush1.bf16.msra.mxu0 %v3981
  %5451 = vmatprep.subr.bf16.mxu0 %v3987
  %5452 = vmatpush1.bf16.msra.mxu0 %v3986
  %5453 = vmatprep.subr.bf16.mxu0 %v3992
  %5454 = vmatpush1.bf16.msra.mxu0 %v3991
  %5455 = vmatprep.subr.bf16.mxu0 %v3997
  %5456 = vmatpush1.bf16.msra.mxu0 %v3996
  %5457 = vmatprep.subr.bf16.mxu0 %v4002
  %5458 = vmatpush1.bf16.msra.mxu0 %v4001
  %5459 = vmatprep.subr.bf16.mxu0 %v4007
  %5460 = vmatpush1.bf16.msra.mxu0 %v4006
  %5461 = vmatprep.subr.bf16.mxu0 %v4012
  %5462 = vmatpush1.bf16.msra.mxu0 %v4011
  %5463 = vmatprep.mubr.bf16.mxu0 %v971
  %5464 = vmatmul.mubr.bf16.gmra.mrb[0].mxu0 %v970
  %v5465 = vpop.f32.mrb[0].mxu0
  %v5466 = vadd.f32 %v5425, %v5465
  %v5467 = vpop.f32.mrb[0].mxu0
  %v5468 = vadd.f32 %v5427, %v5467
  %v5469 = vpop.f32.mrb[0].mxu0
  %v5470 = vpop.f32.mrb[0].mxu0
  %5471 = vdwg.mxu0
  %5472 = vmatprep.subr.bf16.mxu0 0
  %5473 = vmatpush1.bf16.msra.mxu0 %v3298
  %5474 = vmatprep.subr.bf16.mxu0 0
  %5475 = vmatpush1.bf16.msra.mxu0 %v3303
  %5476 = vmatprep.subr.bf16.mxu0 0
  %5477 = vmatpush1.bf16.msra.mxu0 %v3308
  %5478 = vmatprep.subr.bf16.mxu0 0
  %5479 = vmatpush1.bf16.msra.mxu0 %v3313
  %5480 = vmatprep.subr.bf16.mxu0 0
  %5481 = vmatpush1.bf16.msra.mxu0 %v3318
  %5482 = vmatprep.subr.bf16.mxu0 0
  %5483 = vmatpush1.bf16.msra.mxu0 %v3323
  %5484 = vmatprep.subr.bf16.mxu0 0
  %5485 = vmatpush1.bf16.msra.mxu0 %v3328
  %5486 = vmatprep.subr.bf16.mxu0 0
  %5487 = vmatpush1.bf16.msra.mxu0 %v3333
  %5488 = vmatprep.subr.bf16.mxu0 0
  %5489 = vmatpush1.bf16.msra.mxu0 %v3338
  %5490 = vmatprep.subr.bf16.mxu0 0
  %5491 = vmatpush1.bf16.msra.mxu0 %v3343
  %5492 = vmatprep.subr.bf16.mxu0 0
  %5493 = vmatpush1.bf16.msra.mxu0 %v3348
  %5494 = vmatprep.subr.bf16.mxu0 0
  %5495 = vmatpush1.bf16.msra.mxu0 %v3353
  %5496 = vmatprep.subr.bf16.mxu0 0
  %5497 = vmatpush1.bf16.msra.mxu0 %v3358
  %5498 = vmatprep.subr.bf16.mxu0 0
  %5499 = vmatpush1.bf16.msra.mxu0 %v3363
  %5500 = vmatprep.subr.bf16.mxu0 0
  %5501 = vmatpush1.bf16.msra.mxu0 %v3368
  %5502 = vmatprep.subr.bf16.mxu0 0
  %5503 = vmatpush1.bf16.msra.mxu0 %v3373
  %5504 = vmatprep.mubr.bf16.mxu0 %v955
  %5505 = vmatmul.mubr.bf16.gmra.mrb[0].mxu0 %v954
  %v5506 = vpop.f32.mrb[0].mxu0
  %v5507 = vadd.f32 %v921, %v5506
  %v5508 = vpop.f32.mrb[0].mxu0
  %v5509 = vpop.f32.mrb[0].mxu0
  %v5510 = vpop.f32.mrb[0].mxu0
  %5511 = vdwg.mxu0
  %5512 = vmatprep.subr.bf16.mxu0 0
  %5513 = vmatpush1.bf16.msra.mxu0 %v3378
  %5514 = vmatprep.subr.bf16.mxu0 0
  %5515 = vmatpush1.bf16.msra.mxu0 %v3383
  %5516 = vmatprep.subr.bf16.mxu0 0
  %5517 = vmatpush1.bf16.msra.mxu0 %v3388
  %5518 = vmatprep.subr.bf16.mxu0 0
  %5519 = vmatpush1.bf16.msra.mxu0 %v3393
  %5520 = vmatprep.subr.bf16.mxu0 0
  %5521 = vmatpush1.bf16.msra.mxu0 %v3398
  %5522 = vmatprep.subr.bf16.mxu0 0
  %5523 = vmatpush1.bf16.msra.mxu0 %v3403
  %5524 = vmatprep.subr.bf16.mxu0 0
  %5525 = vmatpush1.bf16.msra.mxu0 %v3408
  %5526 = vmatprep.subr.bf16.mxu0 0
  %5527 = vmatpush1.bf16.msra.mxu0 %v3413
  %5528 = vmatprep.subr.bf16.mxu0 0
  %5529 = vmatpush1.bf16.msra.mxu0 %v3418
  %5530 = vmatprep.subr.bf16.mxu0 0
  %5531 = vmatpush1.bf16.msra.mxu0 %v3423
  %5532 = vmatprep.subr.bf16.mxu0 0
  %5533 = vmatpush1.bf16.msra.mxu0 %v3428
  %5534 = vmatprep.subr.bf16.mxu0 0
  %5535 = vmatpush1.bf16.msra.mxu0 %v3433
  %5536 = vmatprep.subr.bf16.mxu0 0
  %5537 = vmatpush1.bf16.msra.mxu0 %v3438
  %5538 = vmatprep.subr.bf16.mxu0 0
  %5539 = vmatpush1.bf16.msra.mxu0 %v3443
  %5540 = vmatprep.subr.bf16.mxu0 0
  %5541 = vmatpush1.bf16.msra.mxu0 %v3448
  %5542 = vmatprep.subr.bf16.mxu0 0
  %5543 = vmatpush1.bf16.msra.mxu0 %v3453
  %5544 = vmatprep.mubr.bf16.mxu0 %v957
  %5545 = vmatmul.mubr.bf16.gmra.mrb[0].mxu0 %v956
  %v5546 = vpop.f32.mrb[0].mxu0
  %v5547 = vadd.f32 %v5507, %v5546
  %v5548 = vpop.f32.mrb[0].mxu0
  %v5549 = vpop.f32.mrb[0].mxu0
  %v5550 = vpop.f32.mrb[0].mxu0
  %5551 = vdwg.mxu0
  %5552 = vmatprep.subr.bf16.mxu0 0
  %5553 = vmatpush1.bf16.msra.mxu0 %v3458
  %5554 = vmatprep.subr.bf16.mxu0 0
  %5555 = vmatpush1.bf16.msra.mxu0 %v3463
  %5556 = vmatprep.subr.bf16.mxu0 0
  %5557 = vmatpush1.bf16.msra.mxu0 %v3468
  %5558 = vmatprep.subr.bf16.mxu0 0
  %5559 = vmatpush1.bf16.msra.mxu0 %v3473
  %5560 = vmatprep.subr.bf16.mxu0 0
  %5561 = vmatpush1.bf16.msra.mxu0 %v3478
  %5562 = vmatprep.subr.bf16.mxu0 0
  %5563 = vmatpush1.bf16.msra.mxu0 %v3483
  %5564 = vmatprep.subr.bf16.mxu0 0
  %5565 = vmatpush1.bf16.msra.mxu0 %v3488
  %5566 = vmatprep.subr.bf16.mxu0 0
  %5567 = vmatpush1.bf16.msra.mxu0 %v3493
  %5568 = vmatprep.subr.bf16.mxu0 0
  %5569 = vmatpush1.bf16.msra.mxu0 %v3498
  %5570 = vmatprep.subr.bf16.mxu0 0
  %5571 = vmatpush1.bf16.msra.mxu0 %v3503
  %5572 = vmatprep.subr.bf16.mxu0 0
  %5573 = vmatpush1.bf16.msra.mxu0 %v3508
  %5574 = vmatprep.subr.bf16.mxu0 0
  %5575 = vmatpush1.bf16.msra.mxu0 %v3513
  %5576 = vmatprep.subr.bf16.mxu0 0
  %5577 = vmatpush1.bf16.msra.mxu0 %v3518
  %5578 = vmatprep.subr.bf16.mxu0 0
  %5579 = vmatpush1.bf16.msra.mxu0 %v3523
  %5580 = vmatprep.subr.bf16.mxu0 0
  %5581 = vmatpush1.bf16.msra.mxu0 %v3528
  %5582 = vmatprep.subr.bf16.mxu0 0
  %5583 = vmatpush1.bf16.msra.mxu0 %v3533
  %5584 = vmatprep.mubr.bf16.mxu0 %v959
  %5585 = vmatmul.mubr.bf16.gmra.mrb[0].mxu0 %v958
  %v5586 = vpop.f32.mrb[0].mxu0
  %v5587 = vadd.f32 %v5547, %v5586
  %v5588 = vpop.f32.mrb[0].mxu0
  %v5589 = vpop.f32.mrb[0].mxu0
  %v5590 = vpop.f32.mrb[0].mxu0
  %5591 = vdwg.mxu0
  %5592 = vmatprep.subr.bf16.mxu0 0
  %5593 = vmatpush1.bf16.msra.mxu0 %v3538
  %5594 = vmatprep.subr.bf16.mxu0 0
  %5595 = vmatpush1.bf16.msra.mxu0 %v3543
  %5596 = vmatprep.subr.bf16.mxu0 0
  %5597 = vmatpush1.bf16.msra.mxu0 %v3548
  %5598 = vmatprep.subr.bf16.mxu0 0
  %5599 = vmatpush1.bf16.msra.mxu0 %v3553
  %5600 = vmatprep.subr.bf16.mxu0 0
  %5601 = vmatpush1.bf16.msra.mxu0 %v3558
  %5602 = vmatprep.subr.bf16.mxu0 0
  %5603 = vmatpush1.bf16.msra.mxu0 %v3563
  %5604 = vmatprep.subr.bf16.mxu0 0
  %5605 = vmatpush1.bf16.msra.mxu0 %v3568
  %5606 = vmatprep.subr.bf16.mxu0 0
  %5607 = vmatpush1.bf16.msra.mxu0 %v3573
  %5608 = vmatprep.subr.bf16.mxu0 0
  %5609 = vmatpush1.bf16.msra.mxu0 %v3578
  %5610 = vmatprep.subr.bf16.mxu0 0
  %5611 = vmatpush1.bf16.msra.mxu0 %v3583
  %5612 = vmatprep.subr.bf16.mxu0 0
  %5613 = vmatpush1.bf16.msra.mxu0 %v3588
  %5614 = vmatprep.subr.bf16.mxu0 0
  %5615 = vmatpush1.bf16.msra.mxu0 %v3593
  %5616 = vmatprep.subr.bf16.mxu0 0
  %5617 = vmatpush1.bf16.msra.mxu0 %v3598
  %5618 = vmatprep.subr.bf16.mxu0 0
  %5619 = vmatpush1.bf16.msra.mxu0 %v3603
  %5620 = vmatprep.subr.bf16.mxu0 0
  %5621 = vmatpush1.bf16.msra.mxu0 %v3608
  %5622 = vmatprep.subr.bf16.mxu0 0
  %5623 = vmatpush1.bf16.msra.mxu0 %v3613
  %5624 = vmatprep.mubr.bf16.mxu0 %v961
  %5625 = vmatmul.mubr.bf16.gmra.mrb[0].mxu0 %v960
  %v5626 = vpop.f32.mrb[0].mxu0
  %v5627 = vadd.f32 %v5587, %v5626
  %v5628 = vpop.f32.mrb[0].mxu0
  %v5629 = vpop.f32.mrb[0].mxu0
  %v5630 = vpop.f32.mrb[0].mxu0
  %5631 = vdwg.mxu0
  %5632 = vmatprep.subr.bf16.mxu0 0
  %5633 = vmatpush1.bf16.msra.mxu0 %v3618
  %5634 = vmatprep.subr.bf16.mxu0 0
  %5635 = vmatpush1.bf16.msra.mxu0 %v3623
  %5636 = vmatprep.subr.bf16.mxu0 0
  %5637 = vmatpush1.bf16.msra.mxu0 %v3628
  %5638 = vmatprep.subr.bf16.mxu0 0
  %5639 = vmatpush1.bf16.msra.mxu0 %v3633
  %5640 = vmatprep.subr.bf16.mxu0 0
  %5641 = vmatpush1.bf16.msra.mxu0 %v3638
  %5642 = vmatprep.subr.bf16.mxu0 0
  %5643 = vmatpush1.bf16.msra.mxu0 %v3643
  %5644 = vmatprep.subr.bf16.mxu0 0
  %5645 = vmatpush1.bf16.msra.mxu0 %v3648
  %5646 = vmatprep.subr.bf16.mxu0 0
  %5647 = vmatpush1.bf16.msra.mxu0 %v3653
  %5648 = vmatprep.subr.bf16.mxu0 0
  %5649 = vmatpush1.bf16.msra.mxu0 %v3658
  %5650 = vmatprep.subr.bf16.mxu0 0
  %5651 = vmatpush1.bf16.msra.mxu0 %v3663
  %5652 = vmatprep.subr.bf16.mxu0 0
  %5653 = vmatpush1.bf16.msra.mxu0 %v3668
  %5654 = vmatprep.subr.bf16.mxu0 0
  %5655 = vmatpush1.bf16.msra.mxu0 %v3673
  %5656 = vmatprep.subr.bf16.mxu0 0
  %5657 = vmatpush1.bf16.msra.mxu0 %v3678
  %5658 = vmatprep.subr.bf16.mxu0 0
  %5659 = vmatpush1.bf16.msra.mxu0 %v3683
  %5660 = vmatprep.subr.bf16.mxu0 0
  %5661 = vmatpush1.bf16.msra.mxu0 %v3688
  %5662 = vmatprep.subr.bf16.mxu0 0
  %5663 = vmatpush1.bf16.msra.mxu0 %v3693
  %5664 = vmatprep.mubr.bf16.mxu0 %v963
  %5665 = vmatmul.mubr.bf16.gmra.mrb[0].mxu0 %v962
  %v5666 = vpop.f32.mrb[0].mxu0
  %v5667 = vadd.f32 %v5627, %v5666
  %v5668 = vpop.f32.mrb[0].mxu0
  %v5669 = vpop.f32.mrb[0].mxu0
  %v5670 = vpop.f32.mrb[0].mxu0
  %5671 = vdwg.mxu0
  %5672 = vmatprep.subr.bf16.mxu0 0
  %5673 = vmatpush1.bf16.msra.mxu0 %v3698
  %5674 = vmatprep.subr.bf16.mxu0 0
  %5675 = vmatpush1.bf16.msra.mxu0 %v3703
  %5676 = vmatprep.subr.bf16.mxu0 0
  %5677 = vmatpush1.bf16.msra.mxu0 %v3708
  %5678 = vmatprep.subr.bf16.mxu0 0
  %5679 = vmatpush1.bf16.msra.mxu0 %v3713
  %5680 = vmatprep.subr.bf16.mxu0 0
  %5681 = vmatpush1.bf16.msra.mxu0 %v3718
  %5682 = vmatprep.subr.bf16.mxu0 0
  %5683 = vmatpush1.bf16.msra.mxu0 %v3723
  %5684 = vmatprep.subr.bf16.mxu0 0
  %5685 = vmatpush1.bf16.msra.mxu0 %v3728
  %5686 = vmatprep.subr.bf16.mxu0 0
  %5687 = vmatpush1.bf16.msra.mxu0 %v3733
  %5688 = vmatprep.subr.bf16.mxu0 0
  %5689 = vmatpush1.bf16.msra.mxu0 %v3738
  %5690 = vmatprep.subr.bf16.mxu0 0
  %5691 = vmatpush1.bf16.msra.mxu0 %v3743
  %5692 = vmatprep.subr.bf16.mxu0 0
  %5693 = vmatpush1.bf16.msra.mxu0 %v3748
  %5694 = vmatprep.subr.bf16.mxu0 0
  %5695 = vmatpush1.bf16.msra.mxu0 %v3753
  %5696 = vmatprep.subr.bf16.mxu0 0
  %5697 = vmatpush1.bf16.msra.mxu0 %v3758
  %5698 = vmatprep.subr.bf16.mxu0 0
  %5699 = vmatpush1.bf16.msra.mxu0 %v3763
  %5700 = vmatprep.subr.bf16.mxu0 0
  %5701 = vmatpush1.bf16.msra.mxu0 %v3768
  %5702 = vmatprep.subr.bf16.mxu0 0
  %5703 = vmatpush1.bf16.msra.mxu0 %v3773
  %5704 = vmatprep.mubr.bf16.mxu0 %v965
  %5705 = vmatmul.mubr.bf16.gmra.mrb[0].mxu0 %v964
  %v5706 = vpop.f32.mrb[0].mxu0
  %v5707 = vadd.f32 %v5667, %v5706
  %v5708 = vpop.f32.mrb[0].mxu0
  %v5709 = vpop.f32.mrb[0].mxu0
  %v5710 = vpop.f32.mrb[0].mxu0
  %5711 = vdwg.mxu0
  %5712 = vmatprep.subr.bf16.mxu0 0
  %5713 = vmatpush1.bf16.msra.mxu0 %v3778
  %5714 = vmatprep.subr.bf16.mxu0 0
  %5715 = vmatpush1.bf16.msra.mxu0 %v3783
  %5716 = vmatprep.subr.bf16.mxu0 0
  %5717 = vmatpush1.bf16.msra.mxu0 %v3788
  %5718 = vmatprep.subr.bf16.mxu0 0
  %5719 = vmatpush1.bf16.msra.mxu0 %v3793
  %5720 = vmatprep.subr.bf16.mxu0 0
  %5721 = vmatpush1.bf16.msra.mxu0 %v3798
  %5722 = vmatprep.subr.bf16.mxu0 0
  %5723 = vmatpush1.bf16.msra.mxu0 %v3803
  %5724 = vmatprep.subr.bf16.mxu0 0
  %5725 = vmatpush1.bf16.msra.mxu0 %v3808
  %5726 = vmatprep.subr.bf16.mxu0 0
  %5727 = vmatpush1.bf16.msra.mxu0 %v3813
  %5728 = vmatprep.subr.bf16.mxu0 0
  %5729 = vmatpush1.bf16.msra.mxu0 %v3818
  %5730 = vmatprep.subr.bf16.mxu0 0
  %5731 = vmatpush1.bf16.msra.mxu0 %v3823
  %5732 = vmatprep.subr.bf16.mxu0 0
  %5733 = vmatpush1.bf16.msra.mxu0 %v3828
  %5734 = vmatprep.subr.bf16.mxu0 0
  %5735 = vmatpush1.bf16.msra.mxu0 %v3833
  %5736 = vmatprep.subr.bf16.mxu0 0
  %5737 = vmatpush1.bf16.msra.mxu0 %v3838
  %5738 = vmatprep.subr.bf16.mxu0 0
  %5739 = vmatpush1.bf16.msra.mxu0 %v3843
  %5740 = vmatprep.subr.bf16.mxu0 0
  %5741 = vmatpush1.bf16.msra.mxu0 %v3848
  %5742 = vmatprep.subr.bf16.mxu0 0
  %5743 = vmatpush1.bf16.msra.mxu0 %v3853
  %5744 = vmatprep.mubr.bf16.mxu0 %v967
  %5745 = vmatmul.mubr.bf16.gmra.mrb[0].mxu0 %v966
  %v5746 = vpop.f32.mrb[0].mxu0
  %v5747 = vadd.f32 %v5707, %v5746
  %v5748 = vpop.f32.mrb[0].mxu0
  %v5749 = vpop.f32.mrb[0].mxu0
  %v5750 = vpop.f32.mrb[0].mxu0
  %5751 = vdwg.mxu0
  %5752 = vmatprep.subr.bf16.mxu0 0
  %5753 = vmatpush1.bf16.msra.mxu0 %v3858
  %5754 = vmatprep.subr.bf16.mxu0 0
  %5755 = vmatpush1.bf16.msra.mxu0 %v3863
  %5756 = vmatprep.subr.bf16.mxu0 0
  %5757 = vmatpush1.bf16.msra.mxu0 %v3868
  %5758 = vmatprep.subr.bf16.mxu0 0
  %5759 = vmatpush1.bf16.msra.mxu0 %v3873
  %5760 = vmatprep.subr.bf16.mxu0 0
  %5761 = vmatpush1.bf16.msra.mxu0 %v3878
  %5762 = vmatprep.subr.bf16.mxu0 0
  %5763 = vmatpush1.bf16.msra.mxu0 %v3883
  %5764 = vmatprep.subr.bf16.mxu0 0
  %5765 = vmatpush1.bf16.msra.mxu0 %v3888
  %5766 = vmatprep.subr.bf16.mxu0 0
  %5767 = vmatpush1.bf16.msra.mxu0 %v3893
  %5768 = vmatprep.subr.bf16.mxu0 0
  %5769 = vmatpush1.bf16.msra.mxu0 %v3898
  %5770 = vmatprep.subr.bf16.mxu0 0
  %5771 = vmatpush1.bf16.msra.mxu0 %v3903
  %5772 = vmatprep.subr.bf16.mxu0 0
  %5773 = vmatpush1.bf16.msra.mxu0 %v3908
  %5774 = vmatprep.subr.bf16.mxu0 0
  %5775 = vmatpush1.bf16.msra.mxu0 %v3913
  %5776 = vmatprep.subr.bf16.mxu0 0
  %5777 = vmatpush1.bf16.msra.mxu0 %v3918
  %5778 = vmatprep.subr.bf16.mxu0 0
  %5779 = vmatpush1.bf16.msra.mxu0 %v3923
  %5780 = vmatprep.subr.bf16.mxu0 0
  %5781 = vmatpush1.bf16.msra.mxu0 %v3928
  %5782 = vmatprep.subr.bf16.mxu0 0
  %5783 = vmatpush1.bf16.msra.mxu0 %v3933
  %5784 = vmatprep.mubr.bf16.mxu0 %v969
  %5785 = vmatmul.mubr.bf16.gmra.mrb[0].mxu0 %v968
  %v5786 = vpop.f32.mrb[0].mxu0
  %v5787 = vadd.f32 %v5747, %v5786
  %v5788 = vpop.f32.mrb[0].mxu0
  %v5789 = vpop.f32.mrb[0].mxu0
  %v5790 = vpop.f32.mrb[0].mxu0
  %5791 = vdwg.mxu0
  %5792 = vmatprep.subr.bf16.mxu0 0
  %5793 = vmatpush1.bf16.msra.mxu0 %v3938
  %5794 = vmatprep.subr.bf16.mxu0 0
  %5795 = vmatpush1.bf16.msra.mxu0 %v3943
  %5796 = vmatprep.subr.bf16.mxu0 0
  %5797 = vmatpush1.bf16.msra.mxu0 %v3948
  %5798 = vmatprep.subr.bf16.mxu0 0
  %5799 = vmatpush1.bf16.msra.mxu0 %v3953
  %5800 = vmatprep.subr.bf16.mxu0 0
  %5801 = vmatpush1.bf16.msra.mxu0 %v3958
  %5802 = vmatprep.subr.bf16.mxu0 0
  %5803 = vmatpush1.bf16.msra.mxu0 %v3963
  %5804 = vmatprep.subr.bf16.mxu0 0
  %5805 = vmatpush1.bf16.msra.mxu0 %v3968
  %5806 = vmatprep.subr.bf16.mxu0 0
  %5807 = vmatpush1.bf16.msra.mxu0 %v3973
  %5808 = vmatprep.subr.bf16.mxu0 0
  %5809 = vmatpush1.bf16.msra.mxu0 %v3978
  %5810 = vmatprep.subr.bf16.mxu0 0
  %5811 = vmatpush1.bf16.msra.mxu0 %v3983
  %5812 = vmatprep.subr.bf16.mxu0 0
  %5813 = vmatpush1.bf16.msra.mxu0 %v3988
  %5814 = vmatprep.subr.bf16.mxu0 0
  %5815 = vmatpush1.bf16.msra.mxu0 %v3993
  %5816 = vmatprep.subr.bf16.mxu0 0
  %5817 = vmatpush1.bf16.msra.mxu0 %v3998
  %5818 = vmatprep.subr.bf16.mxu0 0
  %5819 = vmatpush1.bf16.msra.mxu0 %v4003
  %5820 = vmatprep.subr.bf16.mxu0 0
  %5821 = vmatpush1.bf16.msra.mxu0 %v4008
  %5822 = vmatprep.subr.bf16.mxu0 0
  %5823 = vmatpush1.bf16.msra.mxu0 %v4013
  %5824 = vmatprep.mubr.bf16.mxu0 %v971
  %5825 = vmatmul.mubr.bf16.gmra.mrb[0].mxu0 %v970
  %v5826 = vpop.f32.mrb[0].mxu0
  %v5827 = vadd.f32 %v5787, %v5826
  %v5828 = vpop.f32.mrb[0].mxu0
  %v5829 = vpop.f32.mrb[0].mxu0
  %v5830 = vpop.f32.mrb[0].mxu0
  %5831 = vdwg.mxu0
  %v5832 = vpack.c.bf16 %v5097, %v5097
  %v5833 = vpack.c.bf16 %v5099, %v5099
  %v5834 = vpack.c.bf16 %v5466, %v5466
  %v5835 = vpack.c.bf16 %v5468, %v5468
  %v5836 = vpack.c.bf16 %v5827, %v5827
  %v5837 = vld [vmem:[%s3] sm:$0xf]
  %v5838 = vld [vmem:[%s3 + $0x4] sm:$0xf]
  %v5839 = vld [vmem:[%s3 + $0x8] sm:$0xf]
  %v5840 = vld [vmem:[%s3 + $0xc] sm:$0xf]
  %v5841 = vld [vmem:[%s3 + $0x10] sm:$0xf]
  %v5842 = vld [vmem:[%s3 + $0x14] sm:$0xf]
  %v5843 = vld [vmem:[%s3 + $0x18] sm:$0xf]
  %v5844 = vld [vmem:[%s3 + $0x1c] sm:$0xf]
  %v5845 = vld [vmem:[%s3 + $0x20] sm:$0xf]
  %v5846 = vld [vmem:[%s3 + $0x24] sm:$0xf]
  %v5847 = vld [vmem:[%s3 + $0x28] sm:$0xf]
  %v5848 = vld [vmem:[%s3 + $0x2c] sm:$0xf]
  %v5849 = vld [vmem:[%s3 + $0x30] sm:$0xf]
  %v5850 = vld [vmem:[%s3 + $0x34] sm:$0xf]
  %v5851 = vld [vmem:[%s3 + $0x38] sm:$0xf]
  %v5852 = vld [vmem:[%s3 + $0x3c] sm:$0xf]
  %v5853 = vld [vmem:[%s3 + $0x40] sm:$0xf]
  %v5854 = vld [vmem:[%s3 + $0x44] sm:$0xf]
  %v5855 = vld [vmem:[%s3 + $0x48] sm:$0xf]
  %v5856 = vld [vmem:[%s3 + $0x4c] sm:$0xf]
  %v5857 = vld [vmem:[%s3 + $0x50] sm:$0xf]
  %v5858 = vld [vmem:[%s3 + $0x54] sm:$0xf]
  %v5859 = vld [vmem:[%s3 + $0x58] sm:$0xf]
  %v5860 = vld [vmem:[%s3 + $0x5c] sm:$0xf]
  %v5861 = vld [vmem:[%s3 + $0x60] sm:$0xf]
  %v5862 = vld [vmem:[%s3 + $0x64] sm:$0xf]
  %v5863 = vld [vmem:[%s3 + $0x68] sm:$0xf]
  %v5864 = vld [vmem:[%s3 + $0x6c] sm:$0xf]
  %v5865 = vld [vmem:[%s3 + $0x70] sm:$0xf]
  %v5866 = vld [vmem:[%s3 + $0x74] sm:$0xf]
  %v5867 = vld [vmem:[%s3 + $0x78] sm:$0xf]
  %v5868 = vld [vmem:[%s3 + $0x7c] sm:$0xf]
  %v5869 = vld [vmem:[%s3 + $0x80] sm:$0xf]
  %v5870 = vld [vmem:[%s3 + $0x84] sm:$0xf]
  %v5871 = vld [vmem:[%s3 + $0x88] sm:$0xf]
  %v5872 = vld [vmem:[%s3 + $0x8c] sm:$0xf]
  %v5873 = vld [vmem:[%s3 + $0x90] sm:$0xf]
  %v5874 = vld [vmem:[%s3 + $0x94] sm:$0xf]
  %v5875 = vld [vmem:[%s3 + $0x98] sm:$0xf]
  %v5876 = vld [vmem:[%s3 + $0x9c] sm:$0xf]
  %v5877 = vld [vmem:[%s3 + $0xa0] sm:$0xf]
  %v5878 = vld [vmem:[%s3 + $0xa4] sm:$0xf]
  %v5879 = vld [vmem:[%s3 + $0xa8] sm:$0xf]
  %v5880 = vld [vmem:[%s3 + $0xac] sm:$0xf]
  %v5881 = vld [vmem:[%s3 + $0xb0] sm:$0xf]
  %v5882 = vld [vmem:[%s3 + $0xb4] sm:$0xf]
  %v5883 = vld [vmem:[%s3 + $0xb8] sm:$0xf]
  %v5884 = vld [vmem:[%s3 + $0xbc] sm:$0xf]
  %v5885 = vld [vmem:[%s3 + $0xc0] sm:$0xf]
  %v5886 = vld [vmem:[%s3 + $0xc4] sm:$0xf]
  %v5887 = vld [vmem:[%s3 + $0xc8] sm:$0xf]
  %v5888 = vld [vmem:[%s3 + $0xcc] sm:$0xf]
  %v5889 = vld [vmem:[%s3 + $0xd0] sm:$0xf]
  %v5890 = vld [vmem:[%s3 + $0xd4] sm:$0xf]
  %v5891 = vld [vmem:[%s3 + $0xd8] sm:$0xf]
  %v5892 = vld [vmem:[%s3 + $0xdc] sm:$0xf]
  %v5893 = vld [vmem:[%s3 + $0xe0] sm:$0xf]
  %v5894 = vld [vmem:[%s3 + $0xe4] sm:$0xf]
  %v5895 = vld [vmem:[%s3 + $0xe8] sm:$0xf]
  %v5896 = vld [vmem:[%s3 + $0xec] sm:$0xf]
  %v5897 = vld [vmem:[%s3 + $0xf0] sm:$0xf]
  %v5898 = vld [vmem:[%s3 + $0xf4] sm:$0xf]
  %v5899 = vld [vmem:[%s3 + $0xf8] sm:$0xf]
  %v5900 = vld [vmem:[%s3 + $0xfc] sm:$0xf]
  %v5901 = vld [vmem:[%s3 + $0x100] sm:$0xf]
  %v5902 = vld [vmem:[%s3 + $0x104] sm:$0xf]
  %v5903 = vld [vmem:[%s3 + $0x108] sm:$0xf]
  %v5904 = vld [vmem:[%s3 + $0x10c] sm:$0xf]
  %v5905 = vld [vmem:[%s3 + $0x110] sm:$0xf]
  %v5906 = vld [vmem:[%s3 + $0x114] sm:$0xf]
  %v5907 = vld [vmem:[%s3 + $0x118] sm:$0xf]
  %v5908 = vld [vmem:[%s3 + $0x11c] sm:$0xf]
  %v5909 = vld [vmem:[%s3 + $0x120] sm:$0xf]
  %v5910 = vld [vmem:[%s3 + $0x124] sm:$0xf]
  %v5911 = vld [vmem:[%s3 + $0x128] sm:$0xf]
  %v5912 = vld [vmem:[%s3 + $0x12c] sm:$0xf]
  %v5913 = vld [vmem:[%s3 + $0x130] sm:$0xf]
  %v5914 = vld [vmem:[%s3 + $0x134] sm:$0xf]
  %v5915 = vld [vmem:[%s3 + $0x138] sm:$0xf]
  %v5916 = vld [vmem:[%s3 + $0x13c] sm:$0xf]
  %v5917 = vld [vmem:[%s4] sm:$0x1]
  %v5919 = vlaneseq
  %v5920 = vshrl.u32 %v5919, 7
  %v5921 = vsub.s32 0, %v5920
  %v5922 = vrot.slane %v5917, %v5921
  %v6004 = vunpack.c.l.b16 %v5837
  %v6005 = vunpack.c.l.b16 %v5838
  %v6006 = vunpack.c.l.b16 %v5839
  %v6007 = vunpack.c.l.b16 %v5840
  %v6008 = vunpack.c.l.b16 %v5841
  %v6009 = vunpack.c.l.b16 %v5842
  %v6010 = vunpack.c.l.b16 %v5843
  %v6011 = vunpack.c.l.b16 %v5844
  %v6012 = vunpack.c.l.b16 %v5845
  %v6013 = vunpack.c.l.b16 %v5846
  %v6014 = vunpack.c.l.b16 %v5847
  %v6015 = vunpack.c.l.b16 %v5848
  %v6016 = vunpack.c.l.b16 %v5849
  %v6017 = vunpack.c.l.b16 %v5850
  %v6018 = vunpack.c.l.b16 %v5851
  %v6019 = vunpack.c.l.b16 %v5852
  %v6020 = vunpack.c.l.b16 %v5853
  %v6021 = vunpack.c.l.b16 %v5854
  %v6022 = vunpack.c.l.b16 %v5855
  %v6023 = vunpack.c.l.b16 %v5856
  %v6024 = vunpack.c.l.b16 %v5857
  %v6025 = vunpack.c.l.b16 %v5858
  %v6026 = vunpack.c.l.b16 %v5859
  %v6027 = vunpack.c.l.b16 %v5860
  %v6028 = vunpack.c.l.b16 %v5861
  %v6029 = vunpack.c.l.b16 %v5862
  %v6030 = vunpack.c.l.b16 %v5863
  %v6031 = vunpack.c.l.b16 %v5864
  %v6032 = vunpack.c.l.b16 %v5865
  %v6033 = vunpack.c.l.b16 %v5866
  %v6034 = vunpack.c.l.b16 %v5867
  %v6035 = vunpack.c.l.b16 %v5868
  %v6036 = vunpack.c.l.b16 %v5869
  %v6037 = vunpack.c.l.b16 %v5870
  %v6038 = vunpack.c.l.b16 %v5871
  %v6039 = vunpack.c.l.b16 %v5872
  %v6040 = vunpack.c.l.b16 %v5873
  %v6041 = vunpack.c.l.b16 %v5874
  %v6042 = vunpack.c.l.b16 %v5875
  %v6043 = vunpack.c.l.b16 %v5876
  %v6044 = vunpack.c.l.b16 %v5877
  %v6045 = vunpack.c.l.b16 %v5878
  %v6046 = vunpack.c.l.b16 %v5879
  %v6047 = vunpack.c.l.b16 %v5880
  %v6048 = vunpack.c.l.b16 %v5881
  %v6049 = vunpack.c.l.b16 %v5882
  %v6050 = vunpack.c.l.b16 %v5883
  %v6051 = vunpack.c.l.b16 %v5884
  %v6052 = vunpack.c.l.b16 %v5885
  %v6053 = vunpack.c.l.b16 %v5886
  %v6054 = vunpack.c.l.b16 %v5887
  %v6055 = vunpack.c.l.b16 %v5888
  %v6056 = vunpack.c.l.b16 %v5889
  %v6057 = vunpack.c.l.b16 %v5890
  %v6058 = vunpack.c.l.b16 %v5891
  %v6059 = vunpack.c.l.b16 %v5892
  %v6060 = vunpack.c.l.b16 %v5893
  %v6061 = vunpack.c.l.b16 %v5894
  %v6062 = vunpack.c.l.b16 %v5895
  %v6063 = vunpack.c.l.b16 %v5896
  %v6064 = vunpack.c.l.b16 %v5897
  %v6065 = vunpack.c.l.b16 %v5898
  %v6066 = vunpack.c.l.b16 %v5899
  %v6067 = vunpack.c.l.b16 %v5900
  %v6068 = vunpack.c.l.b16 %v5901
  %v6069 = vunpack.c.l.b16 %v5902
  %v6070 = vunpack.c.l.b16 %v5903
  %v6071 = vunpack.c.l.b16 %v5904
  %v6072 = vunpack.c.l.b16 %v5905
  %v6073 = vunpack.c.l.b16 %v5906
  %v6074 = vunpack.c.l.b16 %v5907
  %v6075 = vunpack.c.l.b16 %v5908
  %v6076 = vunpack.c.l.b16 %v5909
  %v6077 = vunpack.c.l.b16 %v5910
  %v6078 = vunpack.c.l.b16 %v5911
  %v6079 = vunpack.c.l.b16 %v5912
  %v6080 = vunpack.c.l.b16 %v5913
  %v6081 = vunpack.c.l.b16 %v5914
  %v6082 = vunpack.c.l.b16 %v5915
  %v6083 = vunpack.c.l.b16 %v5916
  %v6084 = vpack.c.b16 %v6005, %v6004
  %v6085 = vpack.c.b16 %v6007, %v6006
  %v6086 = vpack.c.b16 %v6009, %v6008
  %v6087 = vpack.c.b16 %v6011, %v6010
  %v6088 = vpack.c.b16 %v6013, %v6012
  %v6089 = vpack.c.b16 %v6015, %v6014
  %v6090 = vpack.c.b16 %v6017, %v6016
  %v6091 = vpack.c.b16 %v6019, %v6018
  %v6092 = vpack.c.b16 %v6021, %v6020
  %v6093 = vpack.c.b16 %v6023, %v6022
  %v6094 = vpack.c.b16 %v6025, %v6024
  %v6095 = vpack.c.b16 %v6027, %v6026
  %v6096 = vpack.c.b16 %v6029, %v6028
  %v6097 = vpack.c.b16 %v6031, %v6030
  %v6098 = vpack.c.b16 %v6033, %v6032
  %v6099 = vpack.c.b16 %v6035, %v6034
  %v6100 = vpack.c.b16 %v6037, %v6036
  %v6101 = vpack.c.b16 %v6039, %v6038
  %v6102 = vpack.c.b16 %v6041, %v6040
  %v6103 = vpack.c.b16 %v6043, %v6042
  %v6104 = vpack.c.b16 %v6045, %v6044
  %v6105 = vpack.c.b16 %v6047, %v6046
  %v6106 = vpack.c.b16 %v6049, %v6048
  %v6107 = vpack.c.b16 %v6051, %v6050
  %v6108 = vpack.c.b16 %v6053, %v6052
  %v6109 = vpack.c.b16 %v6055, %v6054
  %v6110 = vpack.c.b16 %v6057, %v6056
  %v6111 = vpack.c.b16 %v6059, %v6058
  %v6112 = vpack.c.b16 %v6061, %v6060
  %v6113 = vpack.c.b16 %v6063, %v6062
  %v6114 = vpack.c.b16 %v6065, %v6064
  %v6115 = vpack.c.b16 %v6067, %v6066
  %v6116 = vpack.c.b16 %v6069, %v6068
  %v6117 = vpack.c.b16 %v6071, %v6070
  %v6118 = vpack.c.b16 %v6073, %v6072
  %v6119 = vpack.c.b16 %v6075, %v6074
  %v6120 = vpack.c.b16 %v6077, %v6076
  %v6121 = vpack.c.b16 %v6079, %v6078
  %v6122 = vpack.c.b16 %v6081, %v6080
  %v6123 = vpack.c.b16 %v6083, %v6082
  %6164 = vmatprep.subr.bf16.mxu0 0
  %6165 = vmatpush1.bf16.msra.mxu0 %v6084
  %6166 = vmatprep.subr.bf16.mxu0 0
  %6167 = vmatpush1.bf16.msra.mxu0 %v6085
  %6168 = vmatprep.subr.bf16.mxu0 0
  %6169 = vmatpush1.bf16.msra.mxu0 %v6086
  %6170 = vmatprep.subr.bf16.mxu0 0
  %6171 = vmatpush1.bf16.msra.mxu0 %v6087
  %6172 = vmatprep.subr.bf16.mxu0 0
  %6173 = vmatpush1.bf16.msra.mxu0 %v6088
  %6174 = vmatprep.subr.bf16.mxu0 0
  %6175 = vmatpush1.bf16.msra.mxu0 %v6089
  %6176 = vmatprep.subr.bf16.mxu0 0
  %6177 = vmatpush1.bf16.msra.mxu0 %v6090
  %6178 = vmatprep.subr.bf16.mxu0 0
  %6179 = vmatpush1.bf16.msra.mxu0 %v6091
  %6180 = vmatprep.subr.bf16.mxu0 0
  %6181 = vmatpush1.bf16.msra.mxu0 %v6092
  %6182 = vmatprep.subr.bf16.mxu0 0
  %6183 = vmatpush1.bf16.msra.mxu0 %v6093
  %6184 = vmatprep.subr.bf16.mxu0 0
  %6185 = vmatpush1.bf16.msra.mxu0 %v6094
  %6186 = vmatprep.subr.bf16.mxu0 0
  %6187 = vmatpush1.bf16.msra.mxu0 %v6095
  %6188 = vmatprep.subr.bf16.mxu0 0
  %6189 = vmatpush1.bf16.msra.mxu0 %v6096
  %6190 = vmatprep.subr.bf16.mxu0 0
  %6191 = vmatpush1.bf16.msra.mxu0 %v6097
  %6192 = vmatprep.subr.bf16.mxu0 0
  %6193 = vmatpush1.bf16.msra.mxu0 %v6098
  %6194 = vmatprep.subr.bf16.mxu0 0
  %6195 = vmatpush1.bf16.msra.mxu0 %v6099
  %6196 = vmatprep.mubr.bf16.mxu0 %v5833
  %6197 = vmatmul.mubr.bf16.gmra.mrb[0].mxu0 %v5832
  %v6198 = vpop.f32.mrb[0].mxu0
  %v6199 = vadd.f32 %v5922, %v6198
  %v6200 = vpop.f32.mrb[0].mxu0
  %v6201 = vpop.f32.mrb[0].mxu0
  %v6202 = vpop.f32.mrb[0].mxu0
  %6203 = vdwg.mxu0
  %6204 = vmatprep.subr.bf16.mxu0 0
  %6205 = vmatpush1.bf16.msra.mxu0 %v6100
  %6206 = vmatprep.subr.bf16.mxu0 0
  %6207 = vmatpush1.bf16.msra.mxu0 %v6101
  %6208 = vmatprep.subr.bf16.mxu0 0
  %6209 = vmatpush1.bf16.msra.mxu0 %v6102
  %6210 = vmatprep.subr.bf16.mxu0 0
  %6211 = vmatpush1.bf16.msra.mxu0 %v6103
  %6212 = vmatprep.subr.bf16.mxu0 0
  %6213 = vmatpush1.bf16.msra.mxu0 %v6104
  %6214 = vmatprep.subr.bf16.mxu0 0
  %6215 = vmatpush1.bf16.msra.mxu0 %v6105
  %6216 = vmatprep.subr.bf16.mxu0 0
  %6217 = vmatpush1.bf16.msra.mxu0 %v6106
  %6218 = vmatprep.subr.bf16.mxu0 0
  %6219 = vmatpush1.bf16.msra.mxu0 %v6107
  %6220 = vmatprep.subr.bf16.mxu0 0
  %6221 = vmatpush1.bf16.msra.mxu0 %v6108
  %6222 = vmatprep.subr.bf16.mxu0 0
  %6223 = vmatpush1.bf16.msra.mxu0 %v6109
  %6224 = vmatprep.subr.bf16.mxu0 0
  %6225 = vmatpush1.bf16.msra.mxu0 %v6110
  %6226 = vmatprep.subr.bf16.mxu0 0
  %6227 = vmatpush1.bf16.msra.mxu0 %v6111
  %6228 = vmatprep.subr.bf16.mxu0 0
  %6229 = vmatpush1.bf16.msra.mxu0 %v6112
  %6230 = vmatprep.subr.bf16.mxu0 0
  %6231 = vmatpush1.bf16.msra.mxu0 %v6113
  %6232 = vmatprep.subr.bf16.mxu0 0
  %6233 = vmatpush1.bf16.msra.mxu0 %v6114
  %6234 = vmatprep.subr.bf16.mxu0 0
  %6235 = vmatpush1.bf16.msra.mxu0 %v6115
  %6236 = vmatprep.mubr.bf16.mxu0 %v5835
  %6237 = vmatmul.mubr.bf16.gmra.mrb[0].mxu0 %v5834
  %v6238 = vpop.f32.mrb[0].mxu0
  %v6239 = vadd.f32 %v6199, %v6238
  %v6240 = vpop.f32.mrb[0].mxu0
  %v6241 = vpop.f32.mrb[0].mxu0
  %v6242 = vpop.f32.mrb[0].mxu0
  %6243 = vdwg.mxu0
  %6244 = vmatprep.subr.bf16.mxu0 0
  %6245 = vmatpush1.bf16.msra.mxu0 %v6116
  %6246 = vmatprep.subr.bf16.mxu0 0
  %6247 = vmatpush1.bf16.msra.mxu0 %v6117
  %6248 = vmatprep.subr.bf16.mxu0 0
  %6249 = vmatpush1.bf16.msra.mxu0 %v6118
  %6250 = vmatprep.subr.bf16.mxu0 0
  %6251 = vmatpush1.bf16.msra.mxu0 %v6119
  %6252 = vmatprep.subr.bf16.mxu0 0
  %6253 = vmatpush1.bf16.msra.mxu0 %v6120
  %6254 = vmatprep.subr.bf16.mxu0 0
  %6255 = vmatpush1.bf16.msra.mxu0 %v6121
  %6256 = vmatprep.subr.bf16.mxu0 0
  %6257 = vmatpush1.bf16.msra.mxu0 %v6122
  %6258 = vmatprep.subr.bf16.mxu0 0
  %6259 = vmatpush1.bf16.msra.mxu0 %v6123
  %6260 = vmatprep.subr.bf16.mxu0 0
  %6261 = vmatpush1.bf16.msra.mxu0 0
  %6262 = vmatprep.subr.bf16.mxu0 0
  %6263 = vmatpush1.bf16.msra.mxu0 0
  %6264 = vmatprep.subr.bf16.mxu0 0
  %6265 = vmatpush1.bf16.msra.mxu0 0
  %6266 = vmatprep.subr.bf16.mxu0 0
  %6267 = vmatpush1.bf16.msra.mxu0 0
  %6268 = vmatprep.subr.bf16.mxu0 0
  %6269 = vmatpush1.bf16.msra.mxu0 0
  %6270 = vmatprep.subr.bf16.mxu0 0
  %6271 = vmatpush1.bf16.msra.mxu0 0
  %6272 = vmatprep.subr.bf16.mxu0 0
  %6273 = vmatpush1.bf16.msra.mxu0 0
  %6274 = vmatprep.subr.bf16.mxu0 0
  %6275 = vmatpush1.bf16.msra.mxu0 0
  %6276 = vmatprep.mubr.bf16.mxu0 0
  %6277 = vmatmul.mubr.bf16.gmra.mrb[0].mxu0 %v5836
  %v6278 = vpop.f32.mrb[0].mxu0
  %v6279 = vadd.f32 %v6239, %v6278
  %v6280 = vpop.f32.mrb[0].mxu0
  %v6281 = vpop.f32.mrb[0].mxu0
  %v6282 = vpop.f32.mrb[0].mxu0
  %6283 = vdwg.mxu0
  %v6284 = vpack.c.bf16 %v6279, %v6279
  %v6285 = vld [vmem:[%s5] sm:$0xf]
  %v6286 = vld [vmem:[%s5 + $0x4] sm:$0xf]
  %v6287 = vld [vmem:[%s5 + $0x8] sm:$0xf]
  %v6288 = vld [vmem:[%s5 + $0xc] sm:$0xf]
  %v6289 = vld [vmem:[%s5 + $0x10] sm:$0xf]
  %v6290 = vld [vmem:[%s5 + $0x14] sm:$0xf]
  %v6291 = vld [vmem:[%s5 + $0x18] sm:$0xf]
  %v6292 = vld [vmem:[%s5 + $0x1c] sm:$0xf]
  %v6293 = vld [vmem:[%s5 + $0x20] sm:$0xf]
  %v6294 = vld [vmem:[%s5 + $0x24] sm:$0xf]
  %v6295 = vld [vmem:[%s5 + $0x28] sm:$0xf]
  %v6296 = vld [vmem:[%s5 + $0x2c] sm:$0xf]
  %v6297 = vld [vmem:[%s5 + $0x30] sm:$0xf]
  %v6298 = vld [vmem:[%s5 + $0x34] sm:$0xf]
  %v6299 = vld [vmem:[%s5 + $0x38] sm:$0xf]
  %v6300 = vld [vmem:[%s5 + $0x3c] sm:$0xf]
  %v6301 = vld [vmem:[%s6] sm:$0x1]
  %v6303 = vlaneseq
  %v6304 = vshrl.u32 %v6303, 7
  %v6305 = vsub.s32 0, %v6304
  %v6306 = vrot.slane %v6301, %v6305
  %v6324 = vunpack.c.l.b16 %v6285
  %v6325 = vunpack.c.l.b16 %v6286
  %v6326 = vunpack.c.l.b16 %v6287
  %v6327 = vunpack.c.l.b16 %v6288
  %v6328 = vunpack.c.l.b16 %v6289
  %v6329 = vunpack.c.l.b16 %v6290
  %v6330 = vunpack.c.l.b16 %v6291
  %v6331 = vunpack.c.l.b16 %v6292
  %v6332 = vunpack.c.l.b16 %v6293
  %v6333 = vunpack.c.l.b16 %v6294
  %v6334 = vunpack.c.l.b16 %v6295
  %v6335 = vunpack.c.l.b16 %v6296
  %v6336 = vunpack.c.l.b16 %v6297
  %v6337 = vunpack.c.l.b16 %v6298
  %v6338 = vunpack.c.l.b16 %v6299
  %v6339 = vunpack.c.l.b16 %v6300
  %v6340 = vpack.c.b16 %v6325, %v6324
  %v6341 = vpack.c.b16 %v6327, %v6326
  %v6342 = vpack.c.b16 %v6329, %v6328
  %v6343 = vpack.c.b16 %v6331, %v6330
  %v6344 = vpack.c.b16 %v6333, %v6332
  %v6345 = vpack.c.b16 %v6335, %v6334
  %v6346 = vpack.c.b16 %v6337, %v6336
  %v6347 = vpack.c.b16 %v6339, %v6338
  %6356 = vmatprep.subr.bf16.mxu0 0
  %6357 = vmatpush1.bf16.msra.mxu0 %v6340
  %6358 = vmatprep.subr.bf16.mxu0 0
  %6359 = vmatpush1.bf16.msra.mxu0 %v6341
  %6360 = vmatprep.subr.bf16.mxu0 0
  %6361 = vmatpush1.bf16.msra.mxu0 %v6342
  %6362 = vmatprep.subr.bf16.mxu0 0
  %6363 = vmatpush1.bf16.msra.mxu0 %v6343
  %6364 = vmatprep.subr.bf16.mxu0 0
  %6365 = vmatpush1.bf16.msra.mxu0 %v6344
  %6366 = vmatprep.subr.bf16.mxu0 0
  %6367 = vmatpush1.bf16.msra.mxu0 %v6345
  %6368 = vmatprep.subr.bf16.mxu0 0
  %6369 = vmatpush1.bf16.msra.mxu0 %v6346
  %6370 = vmatprep.subr.bf16.mxu0 0
  %6371 = vmatpush1.bf16.msra.mxu0 %v6347
  %6372 = vmatprep.subr.bf16.mxu0 0
  %6373 = vmatpush1.bf16.msra.mxu0 0
  %6374 = vmatprep.subr.bf16.mxu0 0
  %6375 = vmatpush1.bf16.msra.mxu0 0
  %6376 = vmatprep.subr.bf16.mxu0 0
  %6377 = vmatpush1.bf16.msra.mxu0 0
  %6378 = vmatprep.subr.bf16.mxu0 0
  %6379 = vmatpush1.bf16.msra.mxu0 0
  %6380 = vmatprep.subr.bf16.mxu0 0
  %6381 = vmatpush1.bf16.msra.mxu0 0
  %6382 = vmatprep.subr.bf16.mxu0 0
  %6383 = vmatpush1.bf16.msra.mxu0 0
  %6384 = vmatprep.subr.bf16.mxu0 0
  %6385 = vmatpush1.bf16.msra.mxu0 0
  %6386 = vmatprep.subr.bf16.mxu0 0
  %6387 = vmatpush1.bf16.msra.mxu0 0
  %6388 = vmatprep.mubr.bf16.mxu0 0
  %6389 = vmatmul.mubr.bf16.gmra.mrb[0].mxu0 %v6284
  %v6390 = vpop.f32.mrb[0].mxu0
  %v6391 = vadd.f32 %v6306, %v6390
  %v6392 = vpop.f32.mrb[0].mxu0
  %v6393 = vpop.f32.mrb[0].mxu0
  %v6394 = vpop.f32.mrb[0].mxu0
  %6395 = vdwg.mxu0
  %6396 = vst [vmem:[%s7] sm:$0xff] %v6391
  // Predicated region
  $region30: #{mnist_cnn_forward.5} parent=0 // pred_check
    _
  $region31: #{mnist_cnn_forward.5} parent=0 // pred_check_branch
    %6398 = sbr.rel (0) target = $region33
  $region32: #{mnist_cnn_forward.5} parent=0 // pred_region
    _
  $region33: #{mnist_cnn_forward.5} parent=0 // pred_fallthru
    _
  // Predicated region
  $region34: #{mnist_cnn_forward.5} parent=0 // pred_check
    _
  $region35: #{mnist_cnn_forward.5} parent=0 // pred_check_branch
    %6400 = sbr.rel (0) target = $region37
  $region36: #{mnist_cnn_forward.5} parent=0 // pred_region
    _
  $region37: #{mnist_cnn_forward.5} parent=0 // pred_fallthru
    _

</llo_original>
